<compile_context>
chip_gen: v7x
topology: tpu7x:2x2x1
jax: 0.10.0
libtpu: 0.0.40
codegen_flags: <defaults>
</compile_context>

<pallas_src>
import math
from functools import partial

import jax
import jax.numpy as jnp
from jax.experimental import pallas as pl
from jax.experimental.pallas import tpu as pltpu


# ----------------------------- hyperparameters ------------------------------
class hp:
    use_spk_embed = False
    use_emo_embed = False
    vocab_size = 40
    max_seq_len = 64
    encoder_hidden = 32
    decoder_hidden = 32
    encoder_layer = 1
    decoder_layer = 1
    encoder_head = 2
    decoder_head = 2
    fft_conv1d_filter_size = 64
    fft_conv1d_kernel = (9, 1)
    fft_conv1d_padding = (4, 0)
    variance_predictor_filter_size = 32
    variance_predictor_kernel_size = 3
    n_bins = 16
    f0_min = 71.0
    f0_max = 795.8
    energy_min = 0.0
    energy_max = 315.0
    log_offset = 1.0
    n_mel_channels = 16
    postnet_embedding_dim = 32
    postnet_kernel_size = 5
    postnet_n_convolutions = 5


# ------------------------------ in-kernel helpers ----------------------------
def _ln(y, g, b):
    # f32 LayerNorm (elementwise math in f32: v5e VPU/EUP has no bf16 path).
    mean = jnp.mean(y, axis=-1, keepdims=True)
    var = jnp.mean(jnp.square(y - mean), axis=-1, keepdims=True)
    return (y - mean) * jax.lax.rsqrt(var + 1e-5) * g + b


def _bf16(x):
    return x.astype(jnp.bfloat16)


def _im2col(x_f32, k, pad):
    """Zero-pad (T, C) along time, lay the k taps side-by-side on the lane axis.

    A k-tap conv then becomes ONE MXU matmul with K = k*C (fills the 256-deep MXU
    on v6e/v7x instead of k separate K=C pushes).  Built in f32 and cast once to
    bf16 at the end (single cast pass, robust lowering).
    """
    T, C = x_f32.shape
    z = jnp.zeros((pad, C), jnp.float32)
    xp = jnp.concatenate([z, x_f32, z], axis=0)                      # (T + 2*pad, C)
    cols = jnp.concatenate([xp[tau:tau + T, :] for tau in range(k)], axis=-1)
    return _bf16(cols)                                               # (T, k*C) bf16


# ------------------------------ Pallas kernels ------------------------------
def _fft_block_kernel(len_ref, x_ref, wqkv_ref, bqkv_ref, wfc_ref, bfc_ref,
                      g1_ref, be1_ref, w1_ref, b1_ref, w2_ref, b2_ref,
                      g2_ref, be2_ref, *rest,
                      n_head, d_k, scale, k, pad, mel_proj):
    """Fused FFT block (MHA + FFN) for one batch element; optional mel projection."""
    if mel_proj:
        wmel_ref, bmel_ref, o_ref, mel_ref = rest
    else:
        (o_ref,) = rest

    b_idx = pl.program_id(0)
    length = len_ref[b_idx]

    x = x_ref[0]                                                     # (S, D) f32
    S, D = x.shape

    # -------- multi-head self-attention --------
    qkv = jnp.dot(_bf16(x), wqkv_ref[...],
                  preferred_element_type=jnp.float32) + bqkv_ref[...]   # (S, 3D)
    key_ids = jax.lax.broadcasted_iota(jnp.int32, (S, S), 1)
    pad_mask = key_ids >= length                                     # True at padded keys

    heads = []
    for h in range(n_head):
        q = qkv[:, h * d_k:(h + 1) * d_k]
        kk = qkv[:, D + h * d_k:D + (h + 1) * d_k]
        v = qkv[:, 2 * D + h * d_k:2 * D + (h + 1) * d_k]
        # q @ k^T via dot_general contracting last dims (no in-kernel transpose)
        s = jax.lax.dot_general(_bf16(q), _bf16(kk), (((1,), (1,)), ((), ())),
                                preferred_element_type=jnp.float32) * scale
        s = jnp.where(pad_mask, -1e30, s)
        m = jnp.max(s, axis=-1, keepdims=True)
        p = jnp.exp(s - m)
        p = p * pl.reciprocal(jnp.sum(p, axis=-1, keepdims=True), approx=True)
        heads.append(jnp.dot(_bf16(p), _bf16(v), preferred_element_type=jnp.float32))

    o_cat = jnp.concatenate(heads, axis=-1)                          # (S, H*d_k) = (S, D)
    y = jnp.dot(_bf16(o_cat), wfc_ref[...],
                preferred_element_type=jnp.float32) + bfc_ref[...]   # single fc matmul
    y = _ln(y + x, g1_ref[...], be1_ref[...])
    q_ids = jax.lax.broadcasted_iota(jnp.int32, (S, 1), 0)
    attn_out = jnp.where(q_ids >= length, 0.0, y)                    # masked_fill after slf_attn

    # -------- position-wise FFN: conv(k) im2col + ReLU + 1x1 conv + residual + LN --------
    cols = _im2col(attn_out, k, pad)                                 # (S, k*D) bf16
    h1 = jax.nn.relu(jnp.dot(cols, w1_ref[...],
                             preferred_element_type=jnp.float32) + b1_ref[...])
    y2 = jnp.dot(_bf16(h1), w2_ref[...],
                 preferred_element_type=jnp.float32) + b2_ref[...]
    y2 = _ln(y2 + attn_out, g2_ref[...], be2_ref[...])
    out = jnp.where(q_ids >= length, 0.0, y2)                        # masked_fill after pos_ffn
    o_ref[0] = out

    if mel_proj:
        # mel_linear folded into the decoder's last block (applied to masked output,
        # matching nn.Linear on the masked decoder output).
        mel_ref[0] = jnp.dot(_bf16(out), wmel_ref[...],
                             preferred_element_type=jnp.float32) + bmel_ref[...]


def _varpred_kernel(len_ref, x_ref, w1_ref, b1_ref, g1_ref, be1_ref,
                    w2_ref, b2_ref, g2_ref, be2_ref, wo_ref, bo_ref,
                    o_ref, *, k, pad, n_pred):
    """n_pred fused variance predictors over the same input; lane-dense output."""
    b_idx = pl.program_id(0)
    length = len_ref[b_idx]

    x = x_ref[0]                                                     # (T, D) f32
    T = x.shape[0]
    cols = _im2col(x, k, pad)                                        # (T, k*D) bf16, shared
    lane_ids = jax.lax.broadcasted_iota(jnp.int32, (1, T), 1)

    rows = []
    for i in range(n_pred):                                          # static unroll (1 or 2)
        y = jax.nn.relu(jnp.dot(cols, w1_ref[i],
                                preferred_element_type=jnp.float32) + b1_ref[i])
        y = _ln(y, g1_ref[i], be1_ref[i])
        cols2 = _im2col(y, k, pad)                                   # padding done in registers
        y2 = jax.nn.relu(jnp.dot(cols2, w2_ref[i],
                                 preferred_element_type=jnp.float32) + b2_ref[i])
        y2 = _ln(y2, g2_ref[i], be2_ref[i])
        # Fv -> 1 projection emitted lane-dense as (1, T): wo (1,Fv) x y2 (T,Fv)^T
        pred = jax.lax.dot_general(_bf16(wo_ref[i]), _bf16(y2),
                                   (((1,), (1,)), ((), ())),
                                   preferred_element_type=jnp.float32) + bo_ref[i]
        rows.append(jnp.where(lane_ids >= length, 0.0, pred))
    o_ref[0] = jnp.concatenate(rows, axis=0) if n_pred > 1 else rows[0]


def _postnet_kernel(*refs, k, pad, n_layers):
    """All postnet layers (BN folded into weights) + tanh + '+ mel' residual, fused."""
    mel_ref = refs[0]
    o_ref = refs[1 + 2 * n_layers]
    mel = mel_ref[0]                                                 # (T, n_mel) f32
    x = mel
    for i in range(n_layers):
        w_ref = refs[1 + 2 * i]
        b_ref = refs[2 + 2 * i]
        cols = _im2col(x, k, pad)                                    # (T, k*Cin) bf16
        y = jnp.dot(cols, w_ref[...], preferred_element_type=jnp.float32) + b_ref[...]
        x = jnp.tanh(y) if i < n_layers - 1 else y                   # EUP, f32
    o_ref[0] = x + mel                                               # fold '+ mel_output'


# ------------------------------ kernel wrappers ------------------------------
def fft_block_pallas(x, lengths, p, n_head, d_k, mel_p=None):
    B, S, D = x.shape
    k = hp.fft_conv1d_kernel[0]
    pad = hp.fft_conv1d_padding[0]
    sa, ffn = p["slf_attn"], p["pos_ffn"]
    F = ffn["conv1"]["w"].shape[-1]

    # weights pre-cast to bf16; biases / LN params stay f32
    wqkv = _bf16(jnp.concatenate([sa["w_qs"]["w"], sa["w_ks"]["w"], sa["w_vs"]["w"]], axis=1))
    bqkv = jnp.concatenate([sa["w_qs"]["b"], sa["w_ks"]["b"], sa["w_vs"]["b"]]).reshape(1, 3 * D)
    wfc = _bf16(sa["fc"]["w"])                                       # (D, D) full fc weight
    w1 = _bf16(ffn["conv1"]["w"].reshape(k * D, F))                  # im2col weight
    w2 = _bf16(ffn["conv2"]["w"].reshape(F, D))                      # 1x1 conv

    operands = [x.astype(jnp.float32), wqkv, bqkv, wfc, sa["fc"]["b"].reshape(1, D),
                sa["ln"]["g"].reshape(1, D), sa["ln"]["b"].reshape(1, D),
                w1, ffn["conv1"]["b"].reshape(1, F), w2, ffn["conv2"]["b"].reshape(1, D),
                ffn["ln"]["g"].reshape(1, D), ffn["ln"]["b"].reshape(1, D)]

    def rep(shape):  # grid-invariant (replicated) operand
        nd = len(shape)
        return pl.BlockSpec(shape, (lambda b, lens: (0,) * nd))

    in_specs = [
        pl.BlockSpec((1, S, D), lambda b, lens: (b, 0, 0)),
        rep((D, 3 * D)), rep((1, 3 * D)), rep((D, D)), rep((1, D)),
        rep((1, D)), rep((1, D)),
        rep((k * D, F)), rep((1, F)), rep((F, D)), rep((1, D)),
        rep((1, D)), rep((1, D)),
    ]

    mel_proj = mel_p is not None
    if mel_proj:
        n_mel = mel_p["w"].shape[-1]
        operands += [_bf16(mel_p["w"]), mel_p["b"].reshape(1, n_mel)]
        in_specs += [rep((D, n_mel)), rep((1, n_mel))]
        out_shape = (jax.ShapeDtypeStruct((B, S, D), jnp.float32),
                     jax.ShapeDtypeStruct((B, S, n_mel), jnp.float32))
        out_specs = (pl.BlockSpec((1, S, D), lambda b, lens: (b, 0, 0)),
                     pl.BlockSpec((1, S, n_mel), lambda b, lens: (b, 0, 0)))
    else:
        out_shape = jax.ShapeDtypeStruct((B, S, D), jnp.float32)
        out_specs = pl.BlockSpec((1, S, D), lambda b, lens: (b, 0, 0))

    kern = partial(_fft_block_kernel, n_head=n_head, d_k=d_k,
                   scale=1.0 / math.sqrt(d_k), k=k, pad=pad, mel_proj=mel_proj)
    return pl.pallas_call(
        kern,
        out_shape=out_shape,
        grid_spec=pltpu.PrefetchScalarGridSpec(
            num_scalar_prefetch=1, grid=(B,), in_specs=in_specs, out_specs=out_specs),
        compiler_params=pltpu.CompilerParams(dimension_semantics=("parallel",)),
    )(lengths.astype(jnp.int32), *operands)


def variance_predictor_pallas(x, lengths, plist):
    """Run len(plist) variance predictors over the SAME input in one fused kernel."""
    B, T, D = x.shape
    k = hp.variance_predictor_kernel_size
    pad = (k - 1) // 2
    Fv = hp.variance_predictor_filter_size
    n_pred = len(plist)

    w1 = _bf16(jnp.stack([p["conv1"]["w"].reshape(k * D, Fv) for p in plist]))
    b1 = jnp.stack([p["conv1"]["b"].reshape(1, Fv) for p in plist])
    g1 = jnp.stack([p["ln1"]["g"].reshape(1, Fv) for p in plist])
    be1 = jnp.stack([p["ln1"]["b"].reshape(1, Fv) for p in plist])
    w2 = _bf16(jnp.stack([p["conv2"]["w"].reshape(k * Fv, Fv) for p in plist]))
    b2 = jnp.stack([p["conv2"]["b"].reshape(1, Fv) for p in plist])
    g2 = jnp.stack([p["ln2"]["g"].reshape(1, Fv) for p in plist])
    be2 = jnp.stack([p["ln2"]["b"].reshape(1, Fv) for p in plist])
    wo = jnp.stack([p["out"]["w"].reshape(1, Fv) for p in plist])
    bo = jnp.stack([p["out"]["b"].reshape(1, 1) for p in plist])

    def rep(shape):
        nd = len(shape)
        return pl.BlockSpec(shape, (lambda b, lens: (0,) * nd))

    kern = partial(_varpred_kernel, k=k, pad=pad, n_pred=n_pred)
    out = pl.pallas_call(
        kern,
        out_shape=jax.ShapeDtypeStruct((B, n_pred, T), jnp.float32),  # lane-dense (T on lanes)
        grid_spec=pltpu.PrefetchScalarGridSpec(
            num_scalar_prefetch=1, grid=(B,),
            in_specs=[
                pl.BlockSpec((1, T, D), lambda b, lens: (b, 0, 0)),
                rep((n_pred, k * D, Fv)), rep((n_pred, 1, Fv)),
                rep((n_pred, 1, Fv)), rep((n_pred, 1, Fv)),
                rep((n_pred, k * Fv, Fv)), rep((n_pred, 1, Fv)),
                rep((n_pred, 1, Fv)), rep((n_pred, 1, Fv)),
                rep((n_pred, 1, Fv)), rep((n_pred, 1, 1)),
            ],
            out_specs=pl.BlockSpec((1, n_pred, T), lambda b, lens: (b, 0, 0)),
        ),
        compiler_params=pltpu.CompilerParams(dimension_semantics=("parallel",)),
    )(lengths.astype(jnp.int32), x.astype(jnp.float32),
      w1, b1, g1, be1, w2, b2, g2, be2, wo, bo)
    return [out[:, i, :] for i in range(n_pred)]                     # each (B, T)


def postnet_pallas(mel, layers):
    """All postnet conv(BN-folded)+tanh layers and the '+ mel' residual in one kernel."""
    B, T, n_mel = mel.shape
    k = hp.postnet_kernel_size
    pad = (k - 1) // 2
    n_layers = len(layers)

    operands = [mel.astype(jnp.float32)]
    in_specs = [pl.BlockSpec((1, T, n_mel), lambda b: (b, 0, 0))]
    for lp in layers:
        w, b = fold_bn_into_conv(lp["conv"]["w"], lp["conv"]["b"], lp["bn"])
        cin, cout = w.shape[1], w.shape[2]
        operands.append(_bf16(w.reshape(k * cin, cout)))
        operands.append(b.reshape(1, cout))
        in_specs.append(pl.BlockSpec((k * cin, cout), lambda b: (0, 0)))
        in_specs.append(pl.BlockSpec((1, cout), lambda b: (0, 0)))

    kern = partial(_postnet_kernel, k=k, pad=pad, n_layers=n_layers)
    return pl.pallas_call(
        kern,
        out_shape=jax.ShapeDtypeStruct((B, T, n_mel), jnp.float32),
        grid=(B,),
        in_specs=in_specs,
        out_specs=pl.BlockSpec((1, T, n_mel), lambda b: (b, 0, 0)),
        compiler_params=pltpu.CompilerParams(dimension_semantics=("parallel",)),
    )(*operands)


# ------------------------------ module helpers ------------------------------
def get_mask_from_lengths(lengths, max_len):
    ids = jnp.arange(max_len, dtype=jnp.int32)
    return ids[None, :] >= lengths[:, None]                          # True at padded positions


def get_sinusoid_encoding_table(n_position, d_hid):
    position = jnp.arange(n_position, dtype=jnp.float32)[:, None]
    hid_idx = jnp.arange(d_hid)
    angle_rates = 1.0 / jnp.power(10000.0, (2 * (hid_idx // 2)).astype(jnp.float32) / d_hid)
    angles = position * angle_rates[None, :]
    return jnp.where(hid_idx[None, :] % 2 == 0, jnp.sin(angles), jnp.cos(angles)).astype(
        jnp.float32)


def fold_bn_into_conv(w, b, bn):
    # BatchNorm1d (eval) folded into conv: y = conv(x)*s + (b*s + beta - mean*s)
    s = bn["g"] * jax.lax.rsqrt(bn["var"] + 1e-5)
    return w * s[None, None, :], b * s + bn["b"] - bn["mean"] * s


# ------------------------------- transformer --------------------------------
def encoder_fwd(params, src_seq, src_len, max_src_len):
    D = hp.encoder_hidden
    x = params["src_word_emb"][src_seq] + params["position_enc"][:max_src_len][None, :, :]
    dh = D // hp.encoder_head
    for lp in params["layers"]:
        x = fft_block_pallas(x, src_len, lp, hp.encoder_head, dh)
    return x


def decoder_fwd(params, x, mel_len, max_mel_len, mel_linear_p):
    D = hp.decoder_hidden
    x = x + params["position_enc"][:max_mel_len][None, :, :]
    dh = D // hp.decoder_head
    n = len(params["layers"])
    mel = None
    for i, lp in enumerate(params["layers"]):
        if i == n - 1:      # mel_linear folded into the last decoder block's epilogue
            x, mel = fft_block_pallas(x, mel_len, lp, hp.decoder_head, dh, mel_p=mel_linear_p)
        else:
            x = fft_block_pallas(x, mel_len, lp, hp.decoder_head, dh)
    return x, mel


# ----------------------------- variance adaptor ------------------------------
def length_regulator(x, durations, max_len):
    # x: (B, T, D), durations: (B, T) int32; expand token i for durations[i] frames.
    B, T, D = x.shape
    cum = jnp.cumsum(durations, axis=1)                              # (B, T)
    mel_len = cum[:, -1]
    t_idx = jnp.arange(max_len, dtype=jnp.int32)
    idx = jnp.sum(t_idx[None, :, None] >= cum[:, None, :], axis=-1)  # (B, max_len)
    idx = jnp.clip(idx, 0, T - 1)
    out = jnp.take_along_axis(x, idx[..., None], axis=1)
    valid = t_idx[None, :] < mel_len[:, None]
    out = jnp.where(valid[..., None], out, 0.0)
    return out, mel_len


def variance_adaptor_fwd(params, x, src_len, mel_len, d_target, p_target, e_target, max_mel_len):
    (log_d_pred,) = variance_predictor_pallas(x, src_len, [params["duration_predictor"]])
    x, mel_len_calc = length_regulator(x, d_target, max_mel_len)
    # pitch & energy predictors read the same x -> one fused kernel invocation
    pitch_pred, energy_pred = variance_predictor_pallas(
        x, mel_len, [params["pitch_predictor"], params["energy_predictor"]])
    pitch_idx = jnp.searchsorted(params["pitch_bins"], p_target, side="left")
    pitch_emb = params["pitch_embedding"][pitch_idx]
    energy_idx = jnp.searchsorted(params["energy_bins"], e_target, side="left")
    energy_emb = params["energy_embedding"][energy_idx]
    x = x + pitch_emb + energy_emb
    return x, log_d_pred, pitch_pred, energy_pred, mel_len_calc


# ------------------------------- full forward -------------------------------
def fastspeech2_forward(params, src_seq, src_len, mel_len, d_target, p_target, e_target,
                        max_src_len, max_mel_len):
    src_mask = get_mask_from_lengths(src_len, max_src_len)
    mel_mask = get_mask_from_lengths(mel_len, max_mel_len)

    encoder_output = encoder_fwd(params["encoder"], src_seq, src_len, max_src_len)
    va_out, d_pred, p_pred, e_pred, _ = variance_adaptor_fwd(
        params["variance_adaptor"], encoder_output, src_len, mel_len,
        d_target, p_target, e_target, max_mel_len)
    _, mel_output = decoder_fwd(params["decoder"], va_out, mel_len, max_mel_len,
                                params["mel_linear"])
    mel_output_postnet = postnet_pallas(mel_output, params["postnet"])  # '+ mel' folded in
    return (mel_output, mel_output_postnet, d_pred, p_pred, e_pred,
            src_mask, mel_mask, mel_len)


# --------------------------- parameter construction -------------------------
class KeyGen:
    def __init__(self, seed):
        self.key = jax.random.PRNGKey(seed)

    def __call__(self):
        self.key, k = jax.random.split(self.key)
        return k


def _lin_init(kg, k_in, n_out):
    return {"w": jax.random.normal(kg(), (k_in, n_out), jnp.float32) * 0.1,
            "b": jnp.zeros((n_out,), jnp.float32)}


def _conv_init(kg, c_in, c_out, kernel):
    # conv weights stored tap-major: (k, c_in, c_out)
    return {"w": jax.random.normal(kg(), (kernel, c_in, c_out), jnp.float32) * 0.1,
            "b": jnp.zeros((c_out,), jnp.float32)}


def _ln_init(d):
    return {"g": jnp.ones((d,), jnp.float32), "b": jnp.zeros((d,), jnp.float32)}


def _bn_init(c):
    return {"g": jnp.ones((c,), jnp.float32), "b": jnp.zeros((c,), jnp.float32),
            "mean": jnp.zeros((c,), jnp.float32), "var": jnp.ones((c,), jnp.float32)}


def init_params(seed=0):
    kg = KeyGen(seed)
    D = hp.encoder_hidden
    H = hp.encoder_head
    dk = D // H
    F = hp.fft_conv1d_filter_size

    def fft_layer():
        return {
            "slf_attn": {
                "w_qs": _lin_init(kg, D, H * dk),
                "w_ks": _lin_init(kg, D, H * dk),
                "w_vs": _lin_init(kg, D, H * dk),
                "fc": _lin_init(kg, H * dk, D),
                "ln": _ln_init(D),
            },
            "pos_ffn": {
                "conv1": _conv_init(kg, D, F, hp.fft_conv1d_kernel[0]),
                "conv2": _conv_init(kg, F, D, hp.fft_conv1d_kernel[1]),
                "ln": _ln_init(D),
            },
        }

    def vp_init():
        Fv = hp.variance_predictor_filter_size
        k = hp.variance_predictor_kernel_size
        return {
            "conv1": _conv_init(kg, D, Fv, k),
            "ln1": _ln_init(Fv),
            "conv2": _conv_init(kg, Fv, Fv, k),
            "ln2": _ln_init(Fv),
            "out": _lin_init(kg, Fv, 1),
        }

    src_emb = jax.random.normal(kg(), (hp.vocab_size, D), jnp.float32) * 0.1
    src_emb = src_emb.at[0].set(0.0)  # padding_idx = 0
    pos_table = get_sinusoid_encoding_table(hp.max_seq_len + 1, D)

    postnet_layers = []
    cin = hp.n_mel_channels
    for i in range(hp.postnet_n_convolutions):
        cout = hp.n_mel_channels if i == hp.postnet_n_convolutions - 1 else hp.postnet_embedding_dim
        postnet_layers.append({"conv": _conv_init(kg, cin, cout, hp.postnet_kernel_size),
                               "bn": _bn_init(cout)})
        cin = cout

    return {
        "encoder": {
            "src_word_emb": src_emb,
            "position_enc": pos_table,
            "layers": [fft_layer() for _ in range(hp.encoder_layer)],
        },
        "decoder": {
            "position_enc": pos_table,
            "layers": [fft_layer() for _ in range(hp.decoder_layer)],
        },
        "variance_adaptor": {
            "duration_predictor": vp_init(),
            "pitch_predictor": vp_init(),
            "energy_predictor": vp_init(),
            "pitch_bins": jnp.exp(jnp.linspace(math.log(hp.f0_min), math.log(hp.f0_max),
                                               hp.n_bins - 1)).astype(jnp.float32),
            "energy_bins": jnp.linspace(hp.energy_min, hp.energy_max, hp.n_bins - 1).astype(jnp.float32),
            "pitch_embedding": jax.random.normal(kg(), (hp.n_bins, D), jnp.float32) * 0.1,
            "energy_embedding": jax.random.normal(kg(), (hp.n_bins, D), jnp.float32) * 0.1,
        },
        "mel_linear": _lin_init(kg, hp.decoder_hidden, hp.n_mel_channels),
        "postnet": postnet_layers,
    }


# ----------------------------------- main ------------------------------------
if __name__ == "__main__":
    params = init_params(seed=0)

    B = 2
    max_src_len = 8
    max_mel_len = 16

    key = jax.random.PRNGKey(0)
    k_tok, k_pitch, k_energy = jax.random.split(key, 3)

    src_len = jnp.array([8, 6], dtype=jnp.int32)
    mel_len = jnp.array([16, 12], dtype=jnp.int32)
    src_seq = jax.random.randint(k_tok, (B, max_src_len), 1, hp.vocab_size).astype(jnp.int32)
    src_seq = jnp.where(get_mask_from_lengths(src_len, max_src_len), 0, src_seq)

    d_target = jnp.array([[2, 2, 2, 2, 2, 2, 2, 2],
                          [2, 2, 2, 2, 2, 2, 0, 0]], dtype=jnp.int32)  # sums = mel_len
    p_target = jax.random.uniform(k_pitch, (B, max_mel_len),
                                  minval=hp.f0_min, maxval=hp.f0_max).astype(jnp.float32)
    e_target = jax.random.uniform(k_energy, (B, max_mel_len),
                                  minval=hp.energy_min, maxval=hp.energy_max).astype(jnp.float32)

    fwd = jax.jit(fastspeech2_forward, static_argnums=(7, 8))
    outs = fwd(params, src_seq, src_len, mel_len, d_target, p_target, e_target,
               max_src_len, max_mel_len)
    outs = jax.block_until_ready(outs)

    mel_output, mel_output_postnet, d_pred, p_pred, e_pred = outs[0], outs[1], outs[2], outs[3], outs[4]
    assert mel_output.shape == (B, max_mel_len, hp.n_mel_channels)
    assert mel_output_postnet.shape == (B, max_mel_len, hp.n_mel_channels)
    assert d_pred.shape == (B, max_src_len)
    assert p_pred.shape == (B, max_mel_len) and e_pred.shape == (B, max_mel_len)
    assert bool(jnp.all(jnp.isfinite(mel_output)))
    assert bool(jnp.all(jnp.isfinite(mel_output_postnet)))
    assert bool(jnp.all(jnp.isfinite(d_pred)))
    assert bool(jnp.all(jnp.isfinite(p_pred))) and bool(jnp.all(jnp.isfinite(e_pred)))
    print("KERNEL_OK")
</pallas_src>

<mosaic_0001>
module attributes {stable_mosaic.version = 11 : i64} {
  func.func @_fft_block_kernel(%arg0: i32, %arg1: memref<2xi32, #tpu.memory_space<smem>>, %arg2: memref<1x8x32xf32, #tpu.memory_space<vmem>>, %arg3: memref<32x96xbf16, #tpu.memory_space<vmem>>, %arg4: memref<1x96xf32, #tpu.memory_space<vmem>>, %arg5: memref<32x32xbf16, #tpu.memory_space<vmem>>, %arg6: memref<1x32xf32, #tpu.memory_space<vmem>>, %arg7: memref<1x32xf32, #tpu.memory_space<vmem>>, %arg8: memref<1x32xf32, #tpu.memory_space<vmem>>, %arg9: memref<288x64xbf16, #tpu.memory_space<vmem>>, %arg10: memref<1x64xf32, #tpu.memory_space<vmem>>, %arg11: memref<64x32xbf16, #tpu.memory_space<vmem>>, %arg12: memref<1x32xf32, #tpu.memory_space<vmem>>, %arg13: memref<1x32xf32, #tpu.memory_space<vmem>>, %arg14: memref<1x32xf32, #tpu.memory_space<vmem>>, %arg15: memref<1x8x32xf32, #tpu.memory_space<vmem>>) attributes {dimension_semantics = [#tpu.dimension_semantics<parallel>], iteration_bounds = array<i64: 2>, scalar_prefetch = 1 : i64, scratch_operands = 0 : i64, tpu.core_type = #tpu.core_type<tc>, window_params = [{transform_indices = @transform_0, window_bounds = array<i64: 1, 8, 32>}, {pipeline_mode = #tpu.pipeline_mode<synchronous>, transform_indices = @transform_1, window_bounds = array<i64: 32, 96>}, {pipeline_mode = #tpu.pipeline_mode<synchronous>, transform_indices = @transform_2, window_bounds = array<i64: 1, 96>}, {pipeline_mode = #tpu.pipeline_mode<synchronous>, transform_indices = @transform_3, window_bounds = array<i64: 32, 32>}, {pipeline_mode = #tpu.pipeline_mode<synchronous>, transform_indices = @transform_4, window_bounds = array<i64: 1, 32>}, {pipeline_mode = #tpu.pipeline_mode<synchronous>, transform_indices = @transform_5, window_bounds = array<i64: 1, 32>}, {pipeline_mode = #tpu.pipeline_mode<synchronous>, transform_indices = @transform_6, window_bounds = array<i64: 1, 32>}, {pipeline_mode = #tpu.pipeline_mode<synchronous>, transform_indices = @transform_7, window_bounds = array<i64: 288, 64>}, {pipeline_mode = #tpu.pipeline_mode<synchronous>, transform_indices = @transform_8, window_bounds = array<i64: 1, 64>}, {pipeline_mode = #tpu.pipeline_mode<synchronous>, transform_indices = @transform_9, window_bounds = array<i64: 64, 32>}, {pipeline_mode = #tpu.pipeline_mode<synchronous>, transform_indices = @transform_10, window_bounds = array<i64: 1, 32>}, {pipeline_mode = #tpu.pipeline_mode<synchronous>, transform_indices = @transform_11, window_bounds = array<i64: 1, 32>}, {pipeline_mode = #tpu.pipeline_mode<synchronous>, transform_indices = @transform_12, window_bounds = array<i64: 1, 32>}, {transform_indices = @transform_13, window_bounds = array<i64: 1, 8, 32>}]} {
    %0 = arith.index_cast %arg0 : i32 to index
    %1 = memref.load %arg1[%0] : memref<2xi32, #tpu.memory_space<smem>>
    %c0 = arith.constant 0 : index
    %c0_0 = arith.constant 0 : index
    %c0_1 = arith.constant 0 : index
    %2 = vector.load %arg2[%c0, %c0_0, %c0_1] : memref<1x8x32xf32, #tpu.memory_space<vmem>>, vector<1x8x32xf32>
    %3 = vector.shape_cast %2 : vector<1x8x32xf32> to vector<8x32xf32>
    %4 = arith.truncf %3 : vector<8x32xf32> to vector<8x32xbf16>
    %c0_2 = arith.constant 0 : index
    %c0_3 = arith.constant 0 : index
    %5 = vector.load %arg3[%c0_2, %c0_3] : memref<32x96xbf16, #tpu.memory_space<vmem>>, vector<32x96xbf16>
    %cst = arith.constant dense<0.000000e+00> : vector<8x96xf32>
    %6 = tpu.matmul %4, %5, %cst {dimension_numbers = #tpu.dot_dimension_numbers<[1], [0], [0], [1], [0, 0, 1, 1], [], []>} : vector<8x32xbf16>, vector<32x96xbf16>, vector<8x96xf32> -> vector<8x96xf32>
    %c0_4 = arith.constant 0 : index
    %c0_5 = arith.constant 0 : index
    %7 = vector.load %arg4[%c0_4, %c0_5] : memref<1x96xf32, #tpu.memory_space<vmem>>, vector<1x96xf32>
    %8 = vector.broadcast %7 : vector<1x96xf32> to vector<8x96xf32>
    %9 = arith.addf %6, %8 : vector<8x96xf32>
    %10 = tpu.iota {dimensions = array<i32: 1>} : vector<8x8xi32>
    %11 = vector.broadcast %1 : i32 to vector<8x8xi32>
    %12 = arith.cmpi sge, %10, %11 : vector<8x8xi32>
    %13 = vector.extract_strided_slice %9 {offsets = [0, 0], sizes = [8, 16], strides = [1, 1]} : vector<8x96xf32> to vector<8x16xf32>
    %14 = vector.extract_strided_slice %9 {offsets = [0, 32], sizes = [8, 16], strides = [1, 1]} : vector<8x96xf32> to vector<8x16xf32>
    %15 = vector.extract_strided_slice %9 {offsets = [0, 64], sizes = [8, 16], strides = [1, 1]} : vector<8x96xf32> to vector<8x16xf32>
    %16 = arith.truncf %13 : vector<8x16xf32> to vector<8x16xbf16>
    %17 = arith.truncf %14 : vector<8x16xf32> to vector<8x16xbf16>
    %cst_6 = arith.constant dense<0.000000e+00> : vector<8x8xf32>
    %18 = tpu.matmul %16, %17, %cst_6 {dimension_numbers = #tpu.dot_dimension_numbers<[1], [1], [0], [0], [0, 0, 1, 0], [], []>} : vector<8x16xbf16>, vector<8x16xbf16>, vector<8x8xf32> -> vector<8x8xf32>
    %cst_7 = arith.constant 2.500000e-01 : f32
    %19 = vector.broadcast %cst_7 : f32 to vector<8x8xf32>
    %20 = arith.mulf %18, %19 : vector<8x8xf32>
    %cst_8 = arith.constant -1.000000e+30 : f32
    %21 = vector.broadcast %cst_8 : f32 to vector<8x8xf32>
    %22 = arith.select %12, %21, %20 : vector<8x8xi1>, vector<8x8xf32>
    %cst_9 = arith.constant dense<0xFF800000> : vector<8xf32>
    %23 = vector.multi_reduction <maximumf>, %22, %cst_9 [1] : vector<8x8xf32> to vector<8xf32>
    %24 = vector.shape_cast %23 : vector<8xf32> to vector<8x1xf32>
    %25 = vector.broadcast %24 : vector<8x1xf32> to vector<8x8xf32>
    %26 = arith.subf %22, %25 : vector<8x8xf32>
    %27 = math.exp %26 : vector<8x8xf32>
    %cst_10 = arith.constant dense<0.000000e+00> : vector<8xf32>
    %28 = vector.multi_reduction <add>, %27, %cst_10 [1] : vector<8x8xf32> to vector<8xf32>
    %29 = vector.shape_cast %28 : vector<8xf32> to vector<8x1xf32>
    %30 = tpu.reciprocal %29 {approx = true} : vector<8x1xf32> -> vector<8x1xf32>
    %31 = vector.broadcast %30 : vector<8x1xf32> to vector<8x8xf32>
    %32 = arith.mulf %27, %31 : vector<8x8xf32>
    %33 = arith.truncf %32 : vector<8x8xf32> to vector<8x8xbf16>
    %34 = arith.truncf %15 : vector<8x16xf32> to vector<8x16xbf16>
    %cst_11 = arith.constant dense<0.000000e+00> : vector<8x16xf32>
    %35 = tpu.matmul %33, %34, %cst_11 {dimension_numbers = #tpu.dot_dimension_numbers<[1], [0], [0], [1], [0, 0, 1, 1], [], []>} : vector<8x8xbf16>, vector<8x16xbf16>, vector<8x16xf32> -> vector<8x16xf32>
    %36 = vector.extract_strided_slice %9 {offsets = [0, 16], sizes = [8, 16], strides = [1, 1]} : vector<8x96xf32> to vector<8x16xf32>
    %37 = vector.extract_strided_slice %9 {offsets = [0, 48], sizes = [8, 16], strides = [1, 1]} : vector<8x96xf32> to vector<8x16xf32>
    %38 = vector.extract_strided_slice %9 {offsets = [0, 80], sizes = [8, 16], strides = [1, 1]} : vector<8x96xf32> to vector<8x16xf32>
    %39 = arith.truncf %36 : vector<8x16xf32> to vector<8x16xbf16>
    %40 = arith.truncf %37 : vector<8x16xf32> to vector<8x16xbf16>
    %cst_12 = arith.constant dense<0.000000e+00> : vector<8x8xf32>
    %41 = tpu.matmul %39, %40, %cst_12 {dimension_numbers = #tpu.dot_dimension_numbers<[1], [1], [0], [0], [0, 0, 1, 0], [], []>} : vector<8x16xbf16>, vector<8x16xbf16>, vector<8x8xf32> -> vector<8x8xf32>
    %cst_13 = arith.constant 2.500000e-01 : f32
    %42 = vector.broadcast %cst_13 : f32 to vector<8x8xf32>
    %43 = arith.mulf %41, %42 : vector<8x8xf32>
    %cst_14 = arith.constant -1.000000e+30 : f32
    %44 = vector.broadcast %cst_14 : f32 to vector<8x8xf32>
    %45 = arith.select %12, %44, %43 : vector<8x8xi1>, vector<8x8xf32>
    %cst_15 = arith.constant dense<0xFF800000> : vector<8xf32>
    %46 = vector.multi_reduction <maximumf>, %45, %cst_15 [1] : vector<8x8xf32> to vector<8xf32>
    %47 = vector.shape_cast %46 : vector<8xf32> to vector<8x1xf32>
    %48 = vector.broadcast %47 : vector<8x1xf32> to vector<8x8xf32>
    %49 = arith.subf %45, %48 : vector<8x8xf32>
    %50 = math.exp %49 : vector<8x8xf32>
    %cst_16 = arith.constant dense<0.000000e+00> : vector<8xf32>
    %51 = vector.multi_reduction <add>, %50, %cst_16 [1] : vector<8x8xf32> to vector<8xf32>
    %52 = vector.shape_cast %51 : vector<8xf32> to vector<8x1xf32>
    %53 = tpu.reciprocal %52 {approx = true} : vector<8x1xf32> -> vector<8x1xf32>
    %54 = vector.broadcast %53 : vector<8x1xf32> to vector<8x8xf32>
    %55 = arith.mulf %50, %54 : vector<8x8xf32>
    %56 = arith.truncf %55 : vector<8x8xf32> to vector<8x8xbf16>
    %57 = arith.truncf %38 : vector<8x16xf32> to vector<8x16xbf16>
    %cst_17 = arith.constant dense<0.000000e+00> : vector<8x16xf32>
    %58 = tpu.matmul %56, %57, %cst_17 {dimension_numbers = #tpu.dot_dimension_numbers<[1], [0], [0], [1], [0, 0, 1, 1], [], []>} : vector<8x8xbf16>, vector<8x16xbf16>, vector<8x16xf32> -> vector<8x16xf32>
    %59 = tpu.concatenate %35, %58 in 1 : vector<8x16xf32>, vector<8x16xf32> -> vector<8x32xf32>
    %60 = arith.truncf %59 : vector<8x32xf32> to vector<8x32xbf16>
    %c0_18 = arith.constant 0 : index
    %c0_19 = arith.constant 0 : index
    %61 = vector.load %arg5[%c0_18, %c0_19] : memref<32x32xbf16, #tpu.memory_space<vmem>>, vector<32x32xbf16>
    %cst_20 = arith.constant dense<0.000000e+00> : vector<8x32xf32>
    %62 = tpu.matmul %60, %61, %cst_20 {dimension_numbers = #tpu.dot_dimension_numbers<[1], [0], [0], [1], [0, 0, 1, 1], [], []>} : vector<8x32xbf16>, vector<32x32xbf16>, vector<8x32xf32> -> vector<8x32xf32>
    %c0_21 = arith.constant 0 : index
    %c0_22 = arith.constant 0 : index
    %63 = vector.load %arg6[%c0_21, %c0_22] : memref<1x32xf32, #tpu.memory_space<vmem>>, vector<1x32xf32>
    %64 = vector.broadcast %63 : vector<1x32xf32> to vector<8x32xf32>
    %65 = arith.addf %62, %64 : vector<8x32xf32>
    %66 = arith.addf %65, %3 : vector<8x32xf32>
    %c0_23 = arith.constant 0 : index
    %c0_24 = arith.constant 0 : index
    %67 = vector.load %arg7[%c0_23, %c0_24] : memref<1x32xf32, #tpu.memory_space<vmem>>, vector<1x32xf32>
    %c0_25 = arith.constant 0 : index
    %c0_26 = arith.constant 0 : index
    %68 = vector.load %arg8[%c0_25, %c0_26] : memref<1x32xf32, #tpu.memory_space<vmem>>, vector<1x32xf32>
    %cst_27 = arith.constant dense<0.000000e+00> : vector<8xf32>
    %69 = vector.multi_reduction <add>, %66, %cst_27 [1] : vector<8x32xf32> to vector<8xf32>
    %70 = vector.shape_cast %69 : vector<8xf32> to vector<8x1xf32>
    %cst_28 = arith.constant 3.200000e+01 : f32
    %71 = vector.broadcast %cst_28 : f32 to vector<8x1xf32>
    %72 = arith.divf %70, %71 : vector<8x1xf32>
    %73 = vector.broadcast %72 : vector<8x1xf32> to vector<8x32xf32>
    %74 = arith.subf %66, %73 : vector<8x32xf32>
    %75 = arith.mulf %74, %74 : vector<8x32xf32>
    %cst_29 = arith.constant dense<0.000000e+00> : vector<8xf32>
    %76 = vector.multi_reduction <add>, %75, %cst_29 [1] : vector<8x32xf32> to vector<8xf32>
    %77 = vector.shape_cast %76 : vector<8xf32> to vector<8x1xf32>
    %cst_30 = arith.constant 3.200000e+01 : f32
    %78 = vector.broadcast %cst_30 : f32 to vector<8x1xf32>
    %79 = arith.divf %77, %78 : vector<8x1xf32>
    %80 = vector.broadcast %72 : vector<8x1xf32> to vector<8x32xf32>
    %81 = arith.subf %66, %80 : vector<8x32xf32>
    %cst_31 = arith.constant 9.99999974E-6 : f32
    %82 = vector.broadcast %cst_31 : f32 to vector<8x1xf32>
    %83 = arith.addf %79, %82 : vector<8x1xf32>
    %84 = math.rsqrt %83 : vector<8x1xf32>
    %85 = vector.broadcast %84 : vector<8x1xf32> to vector<8x32xf32>
    %86 = arith.mulf %81, %85 : vector<8x32xf32>
    %87 = vector.broadcast %67 : vector<1x32xf32> to vector<8x32xf32>
    %88 = arith.mulf %86, %87 : vector<8x32xf32>
    %89 = vector.broadcast %68 : vector<1x32xf32> to vector<8x32xf32>
    %90 = arith.addf %88, %89 : vector<8x32xf32>
    %91 = tpu.iota {dimensions = array<i32: 0>} : vector<8x1xi32>
    %92 = vector.broadcast %1 : i32 to vector<8x1xi32>
    %93 = arith.cmpi sge, %91, %92 : vector<8x1xi32>
    %cst_32 = arith.constant 0.000000e+00 : f32
    %94 = vector.shape_cast %93 : vector<8x1xi1> to vector<8x1xi1>
    %95 = vector.broadcast %94 : vector<8x1xi1> to vector<8x32xi1>
    %96 = vector.broadcast %cst_32 : f32 to vector<8x32xf32>
    %97 = arith.select %95, %96, %90 : vector<8x32xi1>, vector<8x32xf32>
    %cst_33 = arith.constant 0.000000e+00 : f32
    %98 = vector.broadcast %cst_33 : f32 to vector<4x32xf32>
    %99 = tpu.concatenate %98, %97, %98 in 0 : vector<4x32xf32>, vector<8x32xf32>, vector<4x32xf32> -> vector<16x32xf32>
    %100 = vector.extract_strided_slice %99 {offsets = [0, 0], sizes = [8, 32], strides = [1, 1]} : vector<16x32xf32> to vector<8x32xf32>
    %101 = vector.extract_strided_slice %99 {offsets = [1, 0], sizes = [8, 32], strides = [1, 1]} : vector<16x32xf32> to vector<8x32xf32>
    %102 = vector.extract_strided_slice %99 {offsets = [2, 0], sizes = [8, 32], strides = [1, 1]} : vector<16x32xf32> to vector<8x32xf32>
    %103 = vector.extract_strided_slice %99 {offsets = [3, 0], sizes = [8, 32], strides = [1, 1]} : vector<16x32xf32> to vector<8x32xf32>
    %104 = vector.extract_strided_slice %99 {offsets = [4, 0], sizes = [8, 32], strides = [1, 1]} : vector<16x32xf32> to vector<8x32xf32>
    %105 = vector.extract_strided_slice %99 {offsets = [5, 0], sizes = [8, 32], strides = [1, 1]} : vector<16x32xf32> to vector<8x32xf32>
    %106 = vector.extract_strided_slice %99 {offsets = [6, 0], sizes = [8, 32], strides = [1, 1]} : vector<16x32xf32> to vector<8x32xf32>
    %107 = vector.extract_strided_slice %99 {offsets = [7, 0], sizes = [8, 32], strides = [1, 1]} : vector<16x32xf32> to vector<8x32xf32>
    %108 = vector.extract_strided_slice %99 {offsets = [8, 0], sizes = [8, 32], strides = [1, 1]} : vector<16x32xf32> to vector<8x32xf32>
    %109 = tpu.concatenate %100, %101, %102, %103, %104, %105, %106, %107, %108 in 1 : vector<8x32xf32>, vector<8x32xf32>, vector<8x32xf32>, vector<8x32xf32>, vector<8x32xf32>, vector<8x32xf32>, vector<8x32xf32>, vector<8x32xf32>, vector<8x32xf32> -> vector<8x288xf32>
    %110 = arith.truncf %109 : vector<8x288xf32> to vector<8x288xbf16>
    %c0_34 = arith.constant 0 : index
    %c0_35 = arith.constant 0 : index
    %111 = vector.load %arg9[%c0_34, %c0_35] : memref<288x64xbf16, #tpu.memory_space<vmem>>, vector<288x64xbf16>
    %cst_36 = arith.constant dense<0.000000e+00> : vector<8x64xf32>
    %112 = tpu.matmul %110, %111, %cst_36 {dimension_numbers = #tpu.dot_dimension_numbers<[1], [0], [0], [1], [0, 0, 1, 1], [], []>} : vector<8x288xbf16>, vector<288x64xbf16>, vector<8x64xf32> -> vector<8x64xf32>
    %c0_37 = arith.constant 0 : index
    %c0_38 = arith.constant 0 : index
    %113 = vector.load %arg10[%c0_37, %c0_38] : memref<1x64xf32, #tpu.memory_space<vmem>>, vector<1x64xf32>
    %114 = vector.broadcast %113 : vector<1x64xf32> to vector<8x64xf32>
    %115 = arith.addf %112, %114 : vector<8x64xf32>
    %cst_39 = arith.constant 0.000000e+00 : f32
    %116 = vector.broadcast %cst_39 : f32 to vector<8x64xf32>
    %117 = arith.maximumf %115, %116 : vector<8x64xf32>
    %118 = arith.truncf %117 : vector<8x64xf32> to vector<8x64xbf16>
    %c0_40 = arith.constant 0 : index
    %c0_41 = arith.constant 0 : index
    %119 = vector.load %arg11[%c0_40, %c0_41] : memref<64x32xbf16, #tpu.memory_space<vmem>>, vector<64x32xbf16>
    %cst_42 = arith.constant dense<0.000000e+00> : vector<8x32xf32>
    %120 = tpu.matmul %118, %119, %cst_42 {dimension_numbers = #tpu.dot_dimension_numbers<[1], [0], [0], [1], [0, 0, 1, 1], [], []>} : vector<8x64xbf16>, vector<64x32xbf16>, vector<8x32xf32> -> vector<8x32xf32>
    %c0_43 = arith.constant 0 : index
    %c0_44 = arith.constant 0 : index
    %121 = vector.load %arg12[%c0_43, %c0_44] : memref<1x32xf32, #tpu.memory_space<vmem>>, vector<1x32xf32>
    %122 = vector.broadcast %121 : vector<1x32xf32> to vector<8x32xf32>
    %123 = arith.addf %120, %122 : vector<8x32xf32>
    %124 = arith.addf %123, %97 : vector<8x32xf32>
    %c0_45 = arith.constant 0 : index
    %c0_46 = arith.constant 0 : index
    %125 = vector.load %arg13[%c0_45, %c0_46] : memref<1x32xf32, #tpu.memory_space<vmem>>, vector<1x32xf32>
    %c0_47 = arith.constant 0 : index
    %c0_48 = arith.constant 0 : index
    %126 = vector.load %arg14[%c0_47, %c0_48] : memref<1x32xf32, #tpu.memory_space<vmem>>, vector<1x32xf32>
    %cst_49 = arith.constant dense<0.000000e+00> : vector<8xf32>
    %127 = vector.multi_reduction <add>, %124, %cst_49 [1] : vector<8x32xf32> to vector<8xf32>
    %128 = vector.shape_cast %127 : vector<8xf32> to vector<8x1xf32>
    %cst_50 = arith.constant 3.200000e+01 : f32
    %129 = vector.broadcast %cst_50 : f32 to vector<8x1xf32>
    %130 = arith.divf %128, %129 : vector<8x1xf32>
    %131 = vector.broadcast %130 : vector<8x1xf32> to vector<8x32xf32>
    %132 = arith.subf %124, %131 : vector<8x32xf32>
    %133 = arith.mulf %132, %132 : vector<8x32xf32>
    %cst_51 = arith.constant dense<0.000000e+00> : vector<8xf32>
    %134 = vector.multi_reduction <add>, %133, %cst_51 [1] : vector<8x32xf32> to vector<8xf32>
    %135 = vector.shape_cast %134 : vector<8xf32> to vector<8x1xf32>
    %cst_52 = arith.constant 3.200000e+01 : f32
    %136 = vector.broadcast %cst_52 : f32 to vector<8x1xf32>
    %137 = arith.divf %135, %136 : vector<8x1xf32>
    %138 = vector.broadcast %130 : vector<8x1xf32> to vector<8x32xf32>
    %139 = arith.subf %124, %138 : vector<8x32xf32>
    %cst_53 = arith.constant 9.99999974E-6 : f32
    %140 = vector.broadcast %cst_53 : f32 to vector<8x1xf32>
    %141 = arith.addf %137, %140 : vector<8x1xf32>
    %142 = math.rsqrt %141 : vector<8x1xf32>
    %143 = vector.broadcast %142 : vector<8x1xf32> to vector<8x32xf32>
    %144 = arith.mulf %139, %143 : vector<8x32xf32>
    %145 = vector.broadcast %125 : vector<1x32xf32> to vector<8x32xf32>
    %146 = arith.mulf %144, %145 : vector<8x32xf32>
    %147 = vector.broadcast %126 : vector<1x32xf32> to vector<8x32xf32>
    %148 = arith.addf %146, %147 : vector<8x32xf32>
    %149 = vector.broadcast %1 : i32 to vector<8x1xi32>
    %150 = arith.cmpi sge, %91, %149 : vector<8x1xi32>
    %cst_54 = arith.constant 0.000000e+00 : f32
    %151 = vector.shape_cast %150 : vector<8x1xi1> to vector<8x1xi1>
    %152 = vector.broadcast %151 : vector<8x1xi1> to vector<8x32xi1>
    %153 = vector.broadcast %cst_54 : f32 to vector<8x32xf32>
    %154 = arith.select %152, %153, %148 : vector<8x32xi1>, vector<8x32xf32>
    %c0_55 = arith.constant 0 : index
    %c0_56 = arith.constant 0 : index
    %c0_57 = arith.constant 0 : index
    %155 = vector.load %arg15[%c0_55, %c0_56, %c0_57] : memref<1x8x32xf32, #tpu.memory_space<vmem>>, vector<1x8x32xf32>
    %156 = vector.shape_cast %155 : vector<1x8x32xf32> to vector<8x32xf32>
    %157 = vector.shape_cast %154 : vector<8x32xf32> to vector<1x8x32xf32>
    tpu.vector_store %arg15[%c0_55, %c0_56, %c0_57], %157 {strides = array<i32>} : memref<1x8x32xf32, #tpu.memory_space<vmem>>, vector<1x8x32xf32>,
    return
  }
  func.func @transform_0(%arg0: i32, %arg1: memref<2xi32, #tpu.memory_space<smem>>) -> (i32, i32, i32) {
    %c0_i32 = arith.constant 0 : i32
    %c0_i32_0 = arith.constant 0 : i32
    %c0_i32_1 = arith.constant 0 : i32
    return %arg0, %c0_i32, %c0_i32_0 : i32, i32, i32
  }
  func.func @transform_1(%arg0: i32, %arg1: memref<2xi32, #tpu.memory_space<smem>>) -> (i32, i32) {
    %c0_i32 = arith.constant 0 : i32
    %c0_i32_0 = arith.constant 0 : i32
    %c0_i32_1 = arith.constant 0 : i32
    return %c0_i32, %c0_i32_0 : i32, i32
  }
  func.func @transform_2(%arg0: i32, %arg1: memref<2xi32, #tpu.memory_space<smem>>) -> (i32, i32) {
    %c0_i32 = arith.constant 0 : i32
    %c0_i32_0 = arith.constant 0 : i32
    %c0_i32_1 = arith.constant 0 : i32
    return %c0_i32, %c0_i32_0 : i32, i32
  }
  func.func @transform_3(%arg0: i32, %arg1: memref<2xi32, #tpu.memory_space<smem>>) -> (i32, i32) {
    %c0_i32 = arith.constant 0 : i32
    %c0_i32_0 = arith.constant 0 : i32
    %c0_i32_1 = arith.constant 0 : i32
    return %c0_i32, %c0_i32_0 : i32, i32
  }
  func.func @transform_4(%arg0: i32, %arg1: memref<2xi32, #tpu.memory_space<smem>>) -> (i32, i32) {
    %c0_i32 = arith.constant 0 : i32
    %c0_i32_0 = arith.constant 0 : i32
    %c0_i32_1 = arith.constant 0 : i32
    return %c0_i32, %c0_i32_0 : i32, i32
  }
  func.func @transform_5(%arg0: i32, %arg1: memref<2xi32, #tpu.memory_space<smem>>) -> (i32, i32) {
    %c0_i32 = arith.constant 0 : i32
    %c0_i32_0 = arith.constant 0 : i32
    %c0_i32_1 = arith.constant 0 : i32
    return %c0_i32, %c0_i32_0 : i32, i32
  }
  func.func @transform_6(%arg0: i32, %arg1: memref<2xi32, #tpu.memory_space<smem>>) -> (i32, i32) {
    %c0_i32 = arith.constant 0 : i32
    %c0_i32_0 = arith.constant 0 : i32
    %c0_i32_1 = arith.constant 0 : i32
    return %c0_i32, %c0_i32_0 : i32, i32
  }
  func.func @transform_7(%arg0: i32, %arg1: memref<2xi32, #tpu.memory_space<smem>>) -> (i32, i32) {
    %c0_i32 = arith.constant 0 : i32
    %c0_i32_0 = arith.constant 0 : i32
    %c0_i32_1 = arith.constant 0 : i32
    return %c0_i32, %c0_i32_0 : i32, i32
  }
  func.func @transform_8(%arg0: i32, %arg1: memref<2xi32, #tpu.memory_space<smem>>) -> (i32, i32) {
    %c0_i32 = arith.constant 0 : i32
    %c0_i32_0 = arith.constant 0 : i32
    %c0_i32_1 = arith.constant 0 : i32
    return %c0_i32, %c0_i32_0 : i32, i32
  }
  func.func @transform_9(%arg0: i32, %arg1: memref<2xi32, #tpu.memory_space<smem>>) -> (i32, i32) {
    %c0_i32 = arith.constant 0 : i32
    %c0_i32_0 = arith.constant 0 : i32
    %c0_i32_1 = arith.constant 0 : i32
    return %c0_i32, %c0_i32_0 : i32, i32
  }
  func.func @transform_10(%arg0: i32, %arg1: memref<2xi32, #tpu.memory_space<smem>>) -> (i32, i32) {
    %c0_i32 = arith.constant 0 : i32
    %c0_i32_0 = arith.constant 0 : i32
    %c0_i32_1 = arith.constant 0 : i32
    return %c0_i32, %c0_i32_0 : i32, i32
  }
  func.func @transform_11(%arg0: i32, %arg1: memref<2xi32, #tpu.memory_space<smem>>) -> (i32, i32) {
    %c0_i32 = arith.constant 0 : i32
    %c0_i32_0 = arith.constant 0 : i32
    %c0_i32_1 = arith.constant 0 : i32
    return %c0_i32, %c0_i32_0 : i32, i32
  }
  func.func @transform_12(%arg0: i32, %arg1: memref<2xi32, #tpu.memory_space<smem>>) -> (i32, i32) {
    %c0_i32 = arith.constant 0 : i32
    %c0_i32_0 = arith.constant 0 : i32
    %c0_i32_1 = arith.constant 0 : i32
    return %c0_i32, %c0_i32_0 : i32, i32
  }
  func.func @transform_13(%arg0: i32, %arg1: memref<2xi32, #tpu.memory_space<smem>>) -> (i32, i32, i32) {
    %c0_i32 = arith.constant 0 : i32
    %c0_i32_0 = arith.constant 0 : i32
    %c0_i32_1 = arith.constant 0 : i32
    return %arg0, %c0_i32, %c0_i32_0 : i32, i32, i32
  }
}

module attributes {stable_mosaic.version = 11 : i64} {
  func.func @_fft_block_kernel(%arg0: i32, %arg1: memref<2xi32, #tpu.memory_space<smem>>, %arg2: memref<1x16x32xf32, #tpu.memory_space<vmem>>, %arg3: memref<32x96xbf16, #tpu.memory_space<vmem>>, %arg4: memref<1x96xf32, #tpu.memory_space<vmem>>, %arg5: memref<32x32xbf16, #tpu.memory_space<vmem>>, %arg6: memref<1x32xf32, #tpu.memory_space<vmem>>, %arg7: memref<1x32xf32, #tpu.memory_space<vmem>>, %arg8: memref<1x32xf32, #tpu.memory_space<vmem>>, %arg9: memref<288x64xbf16, #tpu.memory_space<vmem>>, %arg10: memref<1x64xf32, #tpu.memory_space<vmem>>, %arg11: memref<64x32xbf16, #tpu.memory_space<vmem>>, %arg12: memref<1x32xf32, #tpu.memory_space<vmem>>, %arg13: memref<1x32xf32, #tpu.memory_space<vmem>>, %arg14: memref<1x32xf32, #tpu.memory_space<vmem>>, %arg15: memref<32x16xbf16, #tpu.memory_space<vmem>>, %arg16: memref<1x16xf32, #tpu.memory_space<vmem>>, %arg17: memref<1x16x32xf32, #tpu.memory_space<vmem>>, %arg18: memref<1x16x16xf32, #tpu.memory_space<vmem>>) attributes {dimension_semantics = [#tpu.dimension_semantics<parallel>], iteration_bounds = array<i64: 2>, scalar_prefetch = 1 : i64, scratch_operands = 0 : i64, tpu.core_type = #tpu.core_type<tc>, window_params = [{transform_indices = @transform_0, window_bounds = array<i64: 1, 16, 32>}, {pipeline_mode = #tpu.pipeline_mode<synchronous>, transform_indices = @transform_1, window_bounds = array<i64: 32, 96>}, {pipeline_mode = #tpu.pipeline_mode<synchronous>, transform_indices = @transform_2, window_bounds = array<i64: 1, 96>}, {pipeline_mode = #tpu.pipeline_mode<synchronous>, transform_indices = @transform_3, window_bounds = array<i64: 32, 32>}, {pipeline_mode = #tpu.pipeline_mode<synchronous>, transform_indices = @transform_4, window_bounds = array<i64: 1, 32>}, {pipeline_mode = #tpu.pipeline_mode<synchronous>, transform_indices = @transform_5, window_bounds = array<i64: 1, 32>}, {pipeline_mode = #tpu.pipeline_mode<synchronous>, transform_indices = @transform_6, window_bounds = array<i64: 1, 32>}, {pipeline_mode = #tpu.pipeline_mode<synchronous>, transform_indices = @transform_7, window_bounds = array<i64: 288, 64>}, {pipeline_mode = #tpu.pipeline_mode<synchronous>, transform_indices = @transform_8, window_bounds = array<i64: 1, 64>}, {pipeline_mode = #tpu.pipeline_mode<synchronous>, transform_indices = @transform_9, window_bounds = array<i64: 64, 32>}, {pipeline_mode = #tpu.pipeline_mode<synchronous>, transform_indices = @transform_10, window_bounds = array<i64: 1, 32>}, {pipeline_mode = #tpu.pipeline_mode<synchronous>, transform_indices = @transform_11, window_bounds = array<i64: 1, 32>}, {pipeline_mode = #tpu.pipeline_mode<synchronous>, transform_indices = @transform_12, window_bounds = array<i64: 1, 32>}, {pipeline_mode = #tpu.pipeline_mode<synchronous>, transform_indices = @transform_13, window_bounds = array<i64: 32, 16>}, {pipeline_mode = #tpu.pipeline_mode<synchronous>, transform_indices = @transform_14, window_bounds = array<i64: 1, 16>}, {transform_indices = @transform_15, window_bounds = array<i64: 1, 16, 32>}, {transform_indices = @transform_16, window_bounds = array<i64: 1, 16, 16>}]} {
    %0 = arith.index_cast %arg0 : i32 to index
    %1 = memref.load %arg1[%0] : memref<2xi32, #tpu.memory_space<smem>>
    %c0 = arith.constant 0 : index
    %c0_0 = arith.constant 0 : index
    %c0_1 = arith.constant 0 : index
    %2 = vector.load %arg2[%c0, %c0_0, %c0_1] : memref<1x16x32xf32, #tpu.memory_space<vmem>>, vector<1x16x32xf32>
    %3 = vector.shape_cast %2 : vector<1x16x32xf32> to vector<16x32xf32>
    %4 = arith.truncf %3 : vector<16x32xf32> to vector<16x32xbf16>
    %c0_2 = arith.constant 0 : index
    %c0_3 = arith.constant 0 : index
    %5 = vector.load %arg3[%c0_2, %c0_3] : memref<32x96xbf16, #tpu.memory_space<vmem>>, vector<32x96xbf16>
    %cst = arith.constant dense<0.000000e+00> : vector<16x96xf32>
    %6 = tpu.matmul %4, %5, %cst {dimension_numbers = #tpu.dot_dimension_numbers<[1], [0], [0], [1], [0, 0, 1, 1], [], []>} : vector<16x32xbf16>, vector<32x96xbf16>, vector<16x96xf32> -> vector<16x96xf32>
    %c0_4 = arith.constant 0 : index
    %c0_5 = arith.constant 0 : index
    %7 = vector.load %arg4[%c0_4, %c0_5] : memref<1x96xf32, #tpu.memory_space<vmem>>, vector<1x96xf32>
    %8 = vector.broadcast %7 : vector<1x96xf32> to vector<16x96xf32>
    %9 = arith.addf %6, %8 : vector<16x96xf32>
    %10 = tpu.iota {dimensions = array<i32: 1>} : vector<16x16xi32>
    %11 = vector.broadcast %1 : i32 to vector<16x16xi32>
    %12 = arith.cmpi sge, %10, %11 : vector<16x16xi32>
    %13 = vector.extract_strided_slice %9 {offsets = [0, 0], sizes = [16, 16], strides = [1, 1]} : vector<16x96xf32> to vector<16x16xf32>
    %14 = vector.extract_strided_slice %9 {offsets = [0, 32], sizes = [16, 16], strides = [1, 1]} : vector<16x96xf32> to vector<16x16xf32>
    %15 = vector.extract_strided_slice %9 {offsets = [0, 64], sizes = [16, 16], strides = [1, 1]} : vector<16x96xf32> to vector<16x16xf32>
    %16 = arith.truncf %13 : vector<16x16xf32> to vector<16x16xbf16>
    %17 = arith.truncf %14 : vector<16x16xf32> to vector<16x16xbf16>
    %cst_6 = arith.constant dense<0.000000e+00> : vector<16x16xf32>
    %18 = tpu.matmul %16, %17, %cst_6 {dimension_numbers = #tpu.dot_dimension_numbers<[1], [1], [0], [0], [0, 0, 1, 0], [], []>} : vector<16x16xbf16>, vector<16x16xbf16>, vector<16x16xf32> -> vector<16x16xf32>
    %cst_7 = arith.constant 2.500000e-01 : f32
    %19 = vector.broadcast %cst_7 : f32 to vector<16x16xf32>
    %20 = arith.mulf %18, %19 : vector<16x16xf32>
    %cst_8 = arith.constant -1.000000e+30 : f32
    %21 = vector.broadcast %cst_8 : f32 to vector<16x16xf32>
    %22 = arith.select %12, %21, %20 : vector<16x16xi1>, vector<16x16xf32>
    %cst_9 = arith.constant dense<0xFF800000> : vector<16xf32>
    %23 = vector.multi_reduction <maximumf>, %22, %cst_9 [1] : vector<16x16xf32> to vector<16xf32>
    %24 = vector.shape_cast %23 : vector<16xf32> to vector<16x1xf32>
    %25 = vector.broadcast %24 : vector<16x1xf32> to vector<16x16xf32>
    %26 = arith.subf %22, %25 : vector<16x16xf32>
    %27 = math.exp %26 : vector<16x16xf32>
    %cst_10 = arith.constant dense<0.000000e+00> : vector<16xf32>
    %28 = vector.multi_reduction <add>, %27, %cst_10 [1] : vector<16x16xf32> to vector<16xf32>
    %29 = vector.shape_cast %28 : vector<16xf32> to vector<16x1xf32>
    %30 = tpu.reciprocal %29 {approx = true} : vector<16x1xf32> -> vector<16x1xf32>
    %31 = vector.broadcast %30 : vector<16x1xf32> to vector<16x16xf32>
    %32 = arith.mulf %27, %31 : vector<16x16xf32>
    %33 = arith.truncf %32 : vector<16x16xf32> to vector<16x16xbf16>
    %34 = arith.truncf %15 : vector<16x16xf32> to vector<16x16xbf16>
    %cst_11 = arith.constant dense<0.000000e+00> : vector<16x16xf32>
    %35 = tpu.matmul %33, %34, %cst_11 {dimension_numbers = #tpu.dot_dimension_numbers<[1], [0], [0], [1], [0, 0, 1, 1], [], []>} : vector<16x16xbf16>, vector<16x16xbf16>, vector<16x16xf32> -> vector<16x16xf32>
    %36 = vector.extract_strided_slice %9 {offsets = [0, 16], sizes = [16, 16], strides = [1, 1]} : vector<16x96xf32> to vector<16x16xf32>
    %37 = vector.extract_strided_slice %9 {offsets = [0, 48], sizes = [16, 16], strides = [1, 1]} : vector<16x96xf32> to vector<16x16xf32>
    %38 = vector.extract_strided_slice %9 {offsets = [0, 80], sizes = [16, 16], strides = [1, 1]} : vector<16x96xf32> to vector<16x16xf32>
    %39 = arith.truncf %36 : vector<16x16xf32> to vector<16x16xbf16>
    %40 = arith.truncf %37 : vector<16x16xf32> to vector<16x16xbf16>
    %cst_12 = arith.constant dense<0.000000e+00> : vector<16x16xf32>
    %41 = tpu.matmul %39, %40, %cst_12 {dimension_numbers = #tpu.dot_dimension_numbers<[1], [1], [0], [0], [0, 0, 1, 0], [], []>} : vector<16x16xbf16>, vector<16x16xbf16>, vector<16x16xf32> -> vector<16x16xf32>
    %cst_13 = arith.constant 2.500000e-01 : f32
    %42 = vector.broadcast %cst_13 : f32 to vector<16x16xf32>
    %43 = arith.mulf %41, %42 : vector<16x16xf32>
    %cst_14 = arith.constant -1.000000e+30 : f32
    %44 = vector.broadcast %cst_14 : f32 to vector<16x16xf32>
    %45 = arith.select %12, %44, %43 : vector<16x16xi1>, vector<16x16xf32>
    %cst_15 = arith.constant dense<0xFF800000> : vector<16xf32>
    %46 = vector.multi_reduction <maximumf>, %45, %cst_15 [1] : vector<16x16xf32> to vector<16xf32>
    %47 = vector.shape_cast %46 : vector<16xf32> to vector<16x1xf32>
    %48 = vector.broadcast %47 : vector<16x1xf32> to vector<16x16xf32>
    %49 = arith.subf %45, %48 : vector<16x16xf32>
    %50 = math.exp %49 : vector<16x16xf32>
    %cst_16 = arith.constant dense<0.000000e+00> : vector<16xf32>
    %51 = vector.multi_reduction <add>, %50, %cst_16 [1] : vector<16x16xf32> to vector<16xf32>
    %52 = vector.shape_cast %51 : vector<16xf32> to vector<16x1xf32>
    %53 = tpu.reciprocal %52 {approx = true} : vector<16x1xf32> -> vector<16x1xf32>
    %54 = vector.broadcast %53 : vector<16x1xf32> to vector<16x16xf32>
    %55 = arith.mulf %50, %54 : vector<16x16xf32>
    %56 = arith.truncf %55 : vector<16x16xf32> to vector<16x16xbf16>
    %57 = arith.truncf %38 : vector<16x16xf32> to vector<16x16xbf16>
    %cst_17 = arith.constant dense<0.000000e+00> : vector<16x16xf32>
    %58 = tpu.matmul %56, %57, %cst_17 {dimension_numbers = #tpu.dot_dimension_numbers<[1], [0], [0], [1], [0, 0, 1, 1], [], []>} : vector<16x16xbf16>, vector<16x16xbf16>, vector<16x16xf32> -> vector<16x16xf32>
    %59 = tpu.concatenate %35, %58 in 1 : vector<16x16xf32>, vector<16x16xf32> -> vector<16x32xf32>
    %60 = arith.truncf %59 : vector<16x32xf32> to vector<16x32xbf16>
    %c0_18 = arith.constant 0 : index
    %c0_19 = arith.constant 0 : index
    %61 = vector.load %arg5[%c0_18, %c0_19] : memref<32x32xbf16, #tpu.memory_space<vmem>>, vector<32x32xbf16>
    %cst_20 = arith.constant dense<0.000000e+00> : vector<16x32xf32>
    %62 = tpu.matmul %60, %61, %cst_20 {dimension_numbers = #tpu.dot_dimension_numbers<[1], [0], [0], [1], [0, 0, 1, 1], [], []>} : vector<16x32xbf16>, vector<32x32xbf16>, vector<16x32xf32> -> vector<16x32xf32>
    %c0_21 = arith.constant 0 : index
    %c0_22 = arith.constant 0 : index
    %63 = vector.load %arg6[%c0_21, %c0_22] : memref<1x32xf32, #tpu.memory_space<vmem>>, vector<1x32xf32>
    %64 = vector.broadcast %63 : vector<1x32xf32> to vector<16x32xf32>
    %65 = arith.addf %62, %64 : vector<16x32xf32>
    %66 = arith.addf %65, %3 : vector<16x32xf32>
    %c0_23 = arith.constant 0 : index
    %c0_24 = arith.constant 0 : index
    %67 = vector.load %arg7[%c0_23, %c0_24] : memref<1x32xf32, #tpu.memory_space<vmem>>, vector<1x32xf32>
    %c0_25 = arith.constant 0 : index
    %c0_26 = arith.constant 0 : index
    %68 = vector.load %arg8[%c0_25, %c0_26] : memref<1x32xf32, #tpu.memory_space<vmem>>, vector<1x32xf32>
    %cst_27 = arith.constant dense<0.000000e+00> : vector<16xf32>
    %69 = vector.multi_reduction <add>, %66, %cst_27 [1] : vector<16x32xf32> to vector<16xf32>
    %70 = vector.shape_cast %69 : vector<16xf32> to vector<16x1xf32>
    %cst_28 = arith.constant 3.200000e+01 : f32
    %71 = vector.broadcast %cst_28 : f32 to vector<16x1xf32>
    %72 = arith.divf %70, %71 : vector<16x1xf32>
    %73 = vector.broadcast %72 : vector<16x1xf32> to vector<16x32xf32>
    %74 = arith.subf %66, %73 : vector<16x32xf32>
    %75 = arith.mulf %74, %74 : vector<16x32xf32>
    %cst_29 = arith.constant dense<0.000000e+00> : vector<16xf32>
    %76 = vector.multi_reduction <add>, %75, %cst_29 [1] : vector<16x32xf32> to vector<16xf32>
    %77 = vector.shape_cast %76 : vector<16xf32> to vector<16x1xf32>
    %cst_30 = arith.constant 3.200000e+01 : f32
    %78 = vector.broadcast %cst_30 : f32 to vector<16x1xf32>
    %79 = arith.divf %77, %78 : vector<16x1xf32>
    %80 = vector.broadcast %72 : vector<16x1xf32> to vector<16x32xf32>
    %81 = arith.subf %66, %80 : vector<16x32xf32>
    %cst_31 = arith.constant 9.99999974E-6 : f32
    %82 = vector.broadcast %cst_31 : f32 to vector<16x1xf32>
    %83 = arith.addf %79, %82 : vector<16x1xf32>
    %84 = math.rsqrt %83 : vector<16x1xf32>
    %85 = vector.broadcast %84 : vector<16x1xf32> to vector<16x32xf32>
    %86 = arith.mulf %81, %85 : vector<16x32xf32>
    %87 = vector.broadcast %67 : vector<1x32xf32> to vector<16x32xf32>
    %88 = arith.mulf %86, %87 : vector<16x32xf32>
    %89 = vector.broadcast %68 : vector<1x32xf32> to vector<16x32xf32>
    %90 = arith.addf %88, %89 : vector<16x32xf32>
    %91 = tpu.iota {dimensions = array<i32: 0>} : vector<16x1xi32>
    %92 = vector.broadcast %1 : i32 to vector<16x1xi32>
    %93 = arith.cmpi sge, %91, %92 : vector<16x1xi32>
    %cst_32 = arith.constant 0.000000e+00 : f32
    %94 = vector.shape_cast %93 : vector<16x1xi1> to vector<16x1xi1>
    %95 = vector.broadcast %94 : vector<16x1xi1> to vector<16x32xi1>
    %96 = vector.broadcast %cst_32 : f32 to vector<16x32xf32>
    %97 = arith.select %95, %96, %90 : vector<16x32xi1>, vector<16x32xf32>
    %cst_33 = arith.constant 0.000000e+00 : f32
    %98 = vector.broadcast %cst_33 : f32 to vector<4x32xf32>
    %99 = tpu.concatenate %98, %97, %98 in 0 : vector<4x32xf32>, vector<16x32xf32>, vector<4x32xf32> -> vector<24x32xf32>
    %100 = vector.extract_strided_slice %99 {offsets = [0, 0], sizes = [16, 32], strides = [1, 1]} : vector<24x32xf32> to vector<16x32xf32>
    %101 = vector.extract_strided_slice %99 {offsets = [1, 0], sizes = [16, 32], strides = [1, 1]} : vector<24x32xf32> to vector<16x32xf32>
    %102 = vector.extract_strided_slice %99 {offsets = [2, 0], sizes = [16, 32], strides = [1, 1]} : vector<24x32xf32> to vector<16x32xf32>
    %103 = vector.extract_strided_slice %99 {offsets = [3, 0], sizes = [16, 32], strides = [1, 1]} : vector<24x32xf32> to vector<16x32xf32>
    %104 = vector.extract_strided_slice %99 {offsets = [4, 0], sizes = [16, 32], strides = [1, 1]} : vector<24x32xf32> to vector<16x32xf32>
    %105 = vector.extract_strided_slice %99 {offsets = [5, 0], sizes = [16, 32], strides = [1, 1]} : vector<24x32xf32> to vector<16x32xf32>
    %106 = vector.extract_strided_slice %99 {offsets = [6, 0], sizes = [16, 32], strides = [1, 1]} : vector<24x32xf32> to vector<16x32xf32>
    %107 = vector.extract_strided_slice %99 {offsets = [7, 0], sizes = [16, 32], strides = [1, 1]} : vector<24x32xf32> to vector<16x32xf32>
    %108 = vector.extract_strided_slice %99 {offsets = [8, 0], sizes = [16, 32], strides = [1, 1]} : vector<24x32xf32> to vector<16x32xf32>
    %109 = tpu.concatenate %100, %101, %102, %103, %104, %105, %106, %107, %108 in 1 : vector<16x32xf32>, vector<16x32xf32>, vector<16x32xf32>, vector<16x32xf32>, vector<16x32xf32>, vector<16x32xf32>, vector<16x32xf32>, vector<16x32xf32>, vector<16x32xf32> -> vector<16x288xf32>
    %110 = arith.truncf %109 : vector<16x288xf32> to vector<16x288xbf16>
    %c0_34 = arith.constant 0 : index
    %c0_35 = arith.constant 0 : index
    %111 = vector.load %arg9[%c0_34, %c0_35] : memref<288x64xbf16, #tpu.memory_space<vmem>>, vector<288x64xbf16>
    %cst_36 = arith.constant dense<0.000000e+00> : vector<16x64xf32>
    %112 = tpu.matmul %110, %111, %cst_36 {dimension_numbers = #tpu.dot_dimension_numbers<[1], [0], [0], [1], [0, 0, 1, 1], [], []>} : vector<16x288xbf16>, vector<288x64xbf16>, vector<16x64xf32> -> vector<16x64xf32>
    %c0_37 = arith.constant 0 : index
    %c0_38 = arith.constant 0 : index
    %113 = vector.load %arg10[%c0_37, %c0_38] : memref<1x64xf32, #tpu.memory_space<vmem>>, vector<1x64xf32>
    %114 = vector.broadcast %113 : vector<1x64xf32> to vector<16x64xf32>
    %115 = arith.addf %112, %114 : vector<16x64xf32>
    %cst_39 = arith.constant 0.000000e+00 : f32
    %116 = vector.broadcast %cst_39 : f32 to vector<16x64xf32>
    %117 = arith.maximumf %115, %116 : vector<16x64xf32>
    %118 = arith.truncf %117 : vector<16x64xf32> to vector<16x64xbf16>
    %c0_40 = arith.constant 0 : index
    %c0_41 = arith.constant 0 : index
    %119 = vector.load %arg11[%c0_40, %c0_41] : memref<64x32xbf16, #tpu.memory_space<vmem>>, vector<64x32xbf16>
    %cst_42 = arith.constant dense<0.000000e+00> : vector<16x32xf32>
    %120 = tpu.matmul %118, %119, %cst_42 {dimension_numbers = #tpu.dot_dimension_numbers<[1], [0], [0], [1], [0, 0, 1, 1], [], []>} : vector<16x64xbf16>, vector<64x32xbf16>, vector<16x32xf32> -> vector<16x32xf32>
    %c0_43 = arith.constant 0 : index
    %c0_44 = arith.constant 0 : index
    %121 = vector.load %arg12[%c0_43, %c0_44] : memref<1x32xf32, #tpu.memory_space<vmem>>, vector<1x32xf32>
    %122 = vector.broadcast %121 : vector<1x32xf32> to vector<16x32xf32>
    %123 = arith.addf %120, %122 : vector<16x32xf32>
    %124 = arith.addf %123, %97 : vector<16x32xf32>
    %c0_45 = arith.constant 0 : index
    %c0_46 = arith.constant 0 : index
    %125 = vector.load %arg13[%c0_45, %c0_46] : memref<1x32xf32, #tpu.memory_space<vmem>>, vector<1x32xf32>
    %c0_47 = arith.constant 0 : index
    %c0_48 = arith.constant 0 : index
    %126 = vector.load %arg14[%c0_47, %c0_48] : memref<1x32xf32, #tpu.memory_space<vmem>>, vector<1x32xf32>
    %cst_49 = arith.constant dense<0.000000e+00> : vector<16xf32>
    %127 = vector.multi_reduction <add>, %124, %cst_49 [1] : vector<16x32xf32> to vector<16xf32>
    %128 = vector.shape_cast %127 : vector<16xf32> to vector<16x1xf32>
    %cst_50 = arith.constant 3.200000e+01 : f32
    %129 = vector.broadcast %cst_50 : f32 to vector<16x1xf32>
    %130 = arith.divf %128, %129 : vector<16x1xf32>
    %131 = vector.broadcast %130 : vector<16x1xf32> to vector<16x32xf32>
    %132 = arith.subf %124, %131 : vector<16x32xf32>
    %133 = arith.mulf %132, %132 : vector<16x32xf32>
    %cst_51 = arith.constant dense<0.000000e+00> : vector<16xf32>
    %134 = vector.multi_reduction <add>, %133, %cst_51 [1] : vector<16x32xf32> to vector<16xf32>
    %135 = vector.shape_cast %134 : vector<16xf32> to vector<16x1xf32>
    %cst_52 = arith.constant 3.200000e+01 : f32
    %136 = vector.broadcast %cst_52 : f32 to vector<16x1xf32>
    %137 = arith.divf %135, %136 : vector<16x1xf32>
    %138 = vector.broadcast %130 : vector<16x1xf32> to vector<16x32xf32>
    %139 = arith.subf %124, %138 : vector<16x32xf32>
    %cst_53 = arith.constant 9.99999974E-6 : f32
    %140 = vector.broadcast %cst_53 : f32 to vector<16x1xf32>
    %141 = arith.addf %137, %140 : vector<16x1xf32>
    %142 = math.rsqrt %141 : vector<16x1xf32>
    %143 = vector.broadcast %142 : vector<16x1xf32> to vector<16x32xf32>
    %144 = arith.mulf %139, %143 : vector<16x32xf32>
    %145 = vector.broadcast %125 : vector<1x32xf32> to vector<16x32xf32>
    %146 = arith.mulf %144, %145 : vector<16x32xf32>
    %147 = vector.broadcast %126 : vector<1x32xf32> to vector<16x32xf32>
    %148 = arith.addf %146, %147 : vector<16x32xf32>
    %149 = vector.broadcast %1 : i32 to vector<16x1xi32>
    %150 = arith.cmpi sge, %91, %149 : vector<16x1xi32>
    %cst_54 = arith.constant 0.000000e+00 : f32
    %151 = vector.shape_cast %150 : vector<16x1xi1> to vector<16x1xi1>
    %152 = vector.broadcast %151 : vector<16x1xi1> to vector<16x32xi1>
    %153 = vector.broadcast %cst_54 : f32 to vector<16x32xf32>
    %154 = arith.select %152, %153, %148 : vector<16x32xi1>, vector<16x32xf32>
    %c0_55 = arith.constant 0 : index
    %c0_56 = arith.constant 0 : index
    %c0_57 = arith.constant 0 : index
    %155 = vector.load %arg17[%c0_55, %c0_56, %c0_57] : memref<1x16x32xf32, #tpu.memory_space<vmem>>, vector<1x16x32xf32>
    %156 = vector.shape_cast %155 : vector<1x16x32xf32> to vector<16x32xf32>
    %157 = vector.shape_cast %154 : vector<16x32xf32> to vector<1x16x32xf32>
    tpu.vector_store %arg17[%c0_55, %c0_56, %c0_57], %157 {strides = array<i32>} : memref<1x16x32xf32, #tpu.memory_space<vmem>>, vector<1x16x32xf32>,
    %158 = arith.truncf %154 : vector<16x32xf32> to vector<16x32xbf16>
    %c0_58 = arith.constant 0 : index
    %c0_59 = arith.constant 0 : index
    %159 = vector.load %arg15[%c0_58, %c0_59] : memref<32x16xbf16, #tpu.memory_space<vmem>>, vector<32x16xbf16>
    %cst_60 = arith.constant dense<0.000000e+00> : vector<16x16xf32>
    %160 = tpu.matmul %158, %159, %cst_60 {dimension_numbers = #tpu.dot_dimension_numbers<[1], [0], [0], [1], [0, 0, 1, 1], [], []>} : vector<16x32xbf16>, vector<32x16xbf16>, vector<16x16xf32> -> vector<16x16xf32>
    %c0_61 = arith.constant 0 : index
    %c0_62 = arith.constant 0 : index
    %161 = vector.load %arg16[%c0_61, %c0_62] : memref<1x16xf32, #tpu.memory_space<vmem>>, vector<1x16xf32>
    %162 = vector.broadcast %161 : vector<1x16xf32> to vector<16x16xf32>
    %163 = arith.addf %160, %162 : vector<16x16xf32>
    %c0_63 = arith.constant 0 : index
    %c0_64 = arith.constant 0 : index
    %c0_65 = arith.constant 0 : index
    %164 = vector.load %arg18[%c0_63, %c0_64, %c0_65] : memref<1x16x16xf32, #tpu.memory_space<vmem>>, vector<1x16x16xf32>
    %165 = vector.shape_cast %164 : vector<1x16x16xf32> to vector<16x16xf32>
    %166 = vector.shape_cast %163 : vector<16x16xf32> to vector<1x16x16xf32>
    tpu.vector_store %arg18[%c0_63, %c0_64, %c0_65], %166 {strides = array<i32>} : memref<1x16x16xf32, #tpu.memory_space<vmem>>, vector<1x16x16xf32>,
    return
  }
  func.func @transform_0(%arg0: i32, %arg1: memref<2xi32, #tpu.memory_space<smem>>) -> (i32, i32, i32) {
    %c0_i32 = arith.constant 0 : i32
    %c0_i32_0 = arith.constant 0 : i32
    %c0_i32_1 = arith.constant 0 : i32
    return %arg0, %c0_i32, %c0_i32_0 : i32, i32, i32
  }
  func.func @transform_1(%arg0: i32, %arg1: memref<2xi32, #tpu.memory_space<smem>>) -> (i32, i32) {
    %c0_i32 = arith.constant 0 : i32
    %c0_i32_0 = arith.constant 0 : i32
    %c0_i32_1 = arith.constant 0 : i32
    return %c0_i32, %c0_i32_0 : i32, i32
  }
  func.func @transform_2(%arg0: i32, %arg1: memref<2xi32, #tpu.memory_space<smem>>) -> (i32, i32) {
    %c0_i32 = arith.constant 0 : i32
    %c0_i32_0 = arith.constant 0 : i32
    %c0_i32_1 = arith.constant 0 : i32
    return %c0_i32, %c0_i32_0 : i32, i32
  }
  func.func @transform_3(%arg0: i32, %arg1: memref<2xi32, #tpu.memory_space<smem>>) -> (i32, i32) {
    %c0_i32 = arith.constant 0 : i32
    %c0_i32_0 = arith.constant 0 : i32
    %c0_i32_1 = arith.constant 0 : i32
    return %c0_i32, %c0_i32_0 : i32, i32
  }
  func.func @transform_4(%arg0: i32, %arg1: memref<2xi32, #tpu.memory_space<smem>>) -> (i32, i32) {
    %c0_i32 = arith.constant 0 : i32
    %c0_i32_0 = arith.constant 0 : i32
    %c0_i32_1 = arith.constant 0 : i32
    return %c0_i32, %c0_i32_0 : i32, i32
  }
  func.func @transform_5(%arg0: i32, %arg1: memref<2xi32, #tpu.memory_space<smem>>) -> (i32, i32) {
    %c0_i32 = arith.constant 0 : i32
    %c0_i32_0 = arith.constant 0 : i32
    %c0_i32_1 = arith.constant 0 : i32
    return %c0_i32, %c0_i32_0 : i32, i32
  }
  func.func @transform_6(%arg0: i32, %arg1: memref<2xi32, #tpu.memory_space<smem>>) -> (i32, i32) {
    %c0_i32 = arith.constant 0 : i32
    %c0_i32_0 = arith.constant 0 : i32
    %c0_i32_1 = arith.constant 0 : i32
    return %c0_i32, %c0_i32_0 : i32, i32
  }
  func.func @transform_7(%arg0: i32, %arg1: memref<2xi32, #tpu.memory_space<smem>>) -> (i32, i32) {
    %c0_i32 = arith.constant 0 : i32
    %c0_i32_0 = arith.constant 0 : i32
    %c0_i32_1 = arith.constant 0 : i32
    return %c0_i32, %c0_i32_0 : i32, i32
  }
  func.func @transform_8(%arg0: i32, %arg1: memref<2xi32, #tpu.memory_space<smem>>) -> (i32, i32) {
    %c0_i32 = arith.constant 0 : i32
    %c0_i32_0 = arith.constant 0 : i32
    %c0_i32_1 = arith.constant 0 : i32
    return %c0_i32, %c0_i32_0 : i32, i32
  }
  func.func @transform_9(%arg0: i32, %arg1: memref<2xi32, #tpu.memory_space<smem>>) -> (i32, i32) {
    %c0_i32 = arith.constant 0 : i32
    %c0_i32_0 = arith.constant 0 : i32
    %c0_i32_1 = arith.constant 0 : i32
    return %c0_i32, %c0_i32_0 : i32, i32
  }
  func.func @transform_10(%arg0: i32, %arg1: memref<2xi32, #tpu.memory_space<smem>>) -> (i32, i32) {
    %c0_i32 = arith.constant 0 : i32
    %c0_i32_0 = arith.constant 0 : i32
    %c0_i32_1 = arith.constant 0 : i32
    return %c0_i32, %c0_i32_0 : i32, i32
  }
  func.func @transform_11(%arg0: i32, %arg1: memref<2xi32, #tpu.memory_space<smem>>) -> (i32, i32) {
    %c0_i32 = arith.constant 0 : i32
    %c0_i32_0 = arith.constant 0 : i32
    %c0_i32_1 = arith.constant 0 : i32
    return %c0_i32, %c0_i32_0 : i32, i32
  }
  func.func @transform_12(%arg0: i32, %arg1: memref<2xi32, #tpu.memory_space<smem>>) -> (i32, i32) {
    %c0_i32 = arith.constant 0 : i32
    %c0_i32_0 = arith.constant 0 : i32
    %c0_i32_1 = arith.constant 0 : i32
    return %c0_i32, %c0_i32_0 : i32, i32
  }
  func.func @transform_13(%arg0: i32, %arg1: memref<2xi32, #tpu.memory_space<smem>>) -> (i32, i32) {
    %c0_i32 = arith.constant 0 : i32
    %c0_i32_0 = arith.constant 0 : i32
    %c0_i32_1 = arith.constant 0 : i32
    return %c0_i32, %c0_i32_0 : i32, i32
  }
  func.func @transform_14(%arg0: i32, %arg1: memref<2xi32, #tpu.memory_space<smem>>) -> (i32, i32) {
    %c0_i32 = arith.constant 0 : i32
    %c0_i32_0 = arith.constant 0 : i32
    %c0_i32_1 = arith.constant 0 : i32
    return %c0_i32, %c0_i32_0 : i32, i32
  }
  func.func @transform_15(%arg0: i32, %arg1: memref<2xi32, #tpu.memory_space<smem>>) -> (i32, i32, i32) {
    %c0_i32 = arith.constant 0 : i32
    %c0_i32_0 = arith.constant 0 : i32
    %c0_i32_1 = arith.constant 0 : i32
    return %arg0, %c0_i32, %c0_i32_0 : i32, i32, i32
  }
  func.func @transform_16(%arg0: i32, %arg1: memref<2xi32, #tpu.memory_space<smem>>) -> (i32, i32, i32) {
    %c0_i32 = arith.constant 0 : i32
    %c0_i32_0 = arith.constant 0 : i32
    %c0_i32_1 = arith.constant 0 : i32
    return %arg0, %c0_i32, %c0_i32_0 : i32, i32, i32
  }
}

module attributes {stable_mosaic.version = 11 : i64} {
  func.func @_postnet_kernel(%arg0: i32, %arg1: memref<1x16x16xf32, #tpu.memory_space<vmem>>, %arg2: memref<80x32xbf16, #tpu.memory_space<vmem>>, %arg3: memref<1x32xf32, #tpu.memory_space<vmem>>, %arg4: memref<160x32xbf16, #tpu.memory_space<vmem>>, %arg5: memref<1x32xf32, #tpu.memory_space<vmem>>, %arg6: memref<160x32xbf16, #tpu.memory_space<vmem>>, %arg7: memref<1x32xf32, #tpu.memory_space<vmem>>, %arg8: memref<160x32xbf16, #tpu.memory_space<vmem>>, %arg9: memref<1x32xf32, #tpu.memory_space<vmem>>, %arg10: memref<160x16xbf16, #tpu.memory_space<vmem>>, %arg11: memref<1x16xf32, #tpu.memory_space<vmem>>, %arg12: memref<1x16x16xf32, #tpu.memory_space<vmem>>) attributes {dimension_semantics = [#tpu.dimension_semantics<parallel>], iteration_bounds = array<i64: 2>, scalar_prefetch = 0 : i64, scratch_operands = 0 : i64, tpu.core_type = #tpu.core_type<tc>, window_params = [{transform_indices = @transform_0, window_bounds = array<i64: 1, 16, 16>}, {pipeline_mode = #tpu.pipeline_mode<synchronous>, transform_indices = @transform_1, window_bounds = array<i64: 80, 32>}, {pipeline_mode = #tpu.pipeline_mode<synchronous>, transform_indices = @transform_2, window_bounds = array<i64: 1, 32>}, {pipeline_mode = #tpu.pipeline_mode<synchronous>, transform_indices = @transform_3, window_bounds = array<i64: 160, 32>}, {pipeline_mode = #tpu.pipeline_mode<synchronous>, transform_indices = @transform_4, window_bounds = array<i64: 1, 32>}, {pipeline_mode = #tpu.pipeline_mode<synchronous>, transform_indices = @transform_5, window_bounds = array<i64: 160, 32>}, {pipeline_mode = #tpu.pipeline_mode<synchronous>, transform_indices = @transform_6, window_bounds = array<i64: 1, 32>}, {pipeline_mode = #tpu.pipeline_mode<synchronous>, transform_indices = @transform_7, window_bounds = array<i64: 160, 32>}, {pipeline_mode = #tpu.pipeline_mode<synchronous>, transform_indices = @transform_8, window_bounds = array<i64: 1, 32>}, {pipeline_mode = #tpu.pipeline_mode<synchronous>, transform_indices = @transform_9, window_bounds = array<i64: 160, 16>}, {pipeline_mode = #tpu.pipeline_mode<synchronous>, transform_indices = @transform_10, window_bounds = array<i64: 1, 16>}, {transform_indices = @transform_11, window_bounds = array<i64: 1, 16, 16>}]} {
    %c0 = arith.constant 0 : index
    %c0_0 = arith.constant 0 : index
    %c0_1 = arith.constant 0 : index
    %0 = vector.load %arg1[%c0, %c0_0, %c0_1] : memref<1x16x16xf32, #tpu.memory_space<vmem>>, vector<1x16x16xf32>
    %1 = vector.shape_cast %0 : vector<1x16x16xf32> to vector<16x16xf32>
    %cst = arith.constant 0.000000e+00 : f32
    %2 = vector.broadcast %cst : f32 to vector<2x16xf32>
    %3 = tpu.concatenate %2, %1, %2 in 0 : vector<2x16xf32>, vector<16x16xf32>, vector<2x16xf32> -> vector<20x16xf32>
    %4 = vector.extract_strided_slice %3 {offsets = [0, 0], sizes = [16, 16], strides = [1, 1]} : vector<20x16xf32> to vector<16x16xf32>
    %5 = vector.extract_strided_slice %3 {offsets = [1, 0], sizes = [16, 16], strides = [1, 1]} : vector<20x16xf32> to vector<16x16xf32>
    %6 = vector.extract_strided_slice %3 {offsets = [2, 0], sizes = [16, 16], strides = [1, 1]} : vector<20x16xf32> to vector<16x16xf32>
    %7 = vector.extract_strided_slice %3 {offsets = [3, 0], sizes = [16, 16], strides = [1, 1]} : vector<20x16xf32> to vector<16x16xf32>
    %8 = vector.extract_strided_slice %3 {offsets = [4, 0], sizes = [16, 16], strides = [1, 1]} : vector<20x16xf32> to vector<16x16xf32>
    %9 = tpu.concatenate %4, %5, %6, %7, %8 in 1 : vector<16x16xf32>, vector<16x16xf32>, vector<16x16xf32>, vector<16x16xf32>, vector<16x16xf32> -> vector<16x80xf32>
    %10 = arith.truncf %9 : vector<16x80xf32> to vector<16x80xbf16>
    %c0_2 = arith.constant 0 : index
    %c0_3 = arith.constant 0 : index
    %11 = vector.load %arg2[%c0_2, %c0_3] : memref<80x32xbf16, #tpu.memory_space<vmem>>, vector<80x32xbf16>
    %cst_4 = arith.constant dense<0.000000e+00> : vector<16x32xf32>
    %12 = tpu.matmul %10, %11, %cst_4 {dimension_numbers = #tpu.dot_dimension_numbers<[1], [0], [0], [1], [0, 0, 1, 1], [], []>} : vector<16x80xbf16>, vector<80x32xbf16>, vector<16x32xf32> -> vector<16x32xf32>
    %c0_5 = arith.constant 0 : index
    %c0_6 = arith.constant 0 : index
    %13 = vector.load %arg3[%c0_5, %c0_6] : memref<1x32xf32, #tpu.memory_space<vmem>>, vector<1x32xf32>
    %14 = vector.broadcast %13 : vector<1x32xf32> to vector<16x32xf32>
    %15 = arith.addf %12, %14 : vector<16x32xf32>
    %16 = math.tanh %15 : vector<16x32xf32>
    %cst_7 = arith.constant 0.000000e+00 : f32
    %17 = vector.broadcast %cst_7 : f32 to vector<2x32xf32>
    %18 = tpu.concatenate %17, %16, %17 in 0 : vector<2x32xf32>, vector<16x32xf32>, vector<2x32xf32> -> vector<20x32xf32>
    %19 = vector.extract_strided_slice %18 {offsets = [0, 0], sizes = [16, 32], strides = [1, 1]} : vector<20x32xf32> to vector<16x32xf32>
    %20 = vector.extract_strided_slice %18 {offsets = [1, 0], sizes = [16, 32], strides = [1, 1]} : vector<20x32xf32> to vector<16x32xf32>
    %21 = vector.extract_strided_slice %18 {offsets = [2, 0], sizes = [16, 32], strides = [1, 1]} : vector<20x32xf32> to vector<16x32xf32>
    %22 = vector.extract_strided_slice %18 {offsets = [3, 0], sizes = [16, 32], strides = [1, 1]} : vector<20x32xf32> to vector<16x32xf32>
    %23 = vector.extract_strided_slice %18 {offsets = [4, 0], sizes = [16, 32], strides = [1, 1]} : vector<20x32xf32> to vector<16x32xf32>
    %24 = tpu.concatenate %19, %20, %21, %22, %23 in 1 : vector<16x32xf32>, vector<16x32xf32>, vector<16x32xf32>, vector<16x32xf32>, vector<16x32xf32> -> vector<16x160xf32>
    %25 = arith.truncf %24 : vector<16x160xf32> to vector<16x160xbf16>
    %c0_8 = arith.constant 0 : index
    %c0_9 = arith.constant 0 : index
    %26 = vector.load %arg4[%c0_8, %c0_9] : memref<160x32xbf16, #tpu.memory_space<vmem>>, vector<160x32xbf16>
    %cst_10 = arith.constant dense<0.000000e+00> : vector<16x32xf32>
    %27 = tpu.matmul %25, %26, %cst_10 {dimension_numbers = #tpu.dot_dimension_numbers<[1], [0], [0], [1], [0, 0, 1, 1], [], []>} : vector<16x160xbf16>, vector<160x32xbf16>, vector<16x32xf32> -> vector<16x32xf32>
    %c0_11 = arith.constant 0 : index
    %c0_12 = arith.constant 0 : index
    %28 = vector.load %arg5[%c0_11, %c0_12] : memref<1x32xf32, #tpu.memory_space<vmem>>, vector<1x32xf32>
    %29 = vector.broadcast %28 : vector<1x32xf32> to vector<16x32xf32>
    %30 = arith.addf %27, %29 : vector<16x32xf32>
    %31 = math.tanh %30 : vector<16x32xf32>
    %cst_13 = arith.constant 0.000000e+00 : f32
    %32 = vector.broadcast %cst_13 : f32 to vector<2x32xf32>
    %33 = tpu.concatenate %32, %31, %32 in 0 : vector<2x32xf32>, vector<16x32xf32>, vector<2x32xf32> -> vector<20x32xf32>
    %34 = vector.extract_strided_slice %33 {offsets = [0, 0], sizes = [16, 32], strides = [1, 1]} : vector<20x32xf32> to vector<16x32xf32>
    %35 = vector.extract_strided_slice %33 {offsets = [1, 0], sizes = [16, 32], strides = [1, 1]} : vector<20x32xf32> to vector<16x32xf32>
    %36 = vector.extract_strided_slice %33 {offsets = [2, 0], sizes = [16, 32], strides = [1, 1]} : vector<20x32xf32> to vector<16x32xf32>
    %37 = vector.extract_strided_slice %33 {offsets = [3, 0], sizes = [16, 32], strides = [1, 1]} : vector<20x32xf32> to vector<16x32xf32>
    %38 = vector.extract_strided_slice %33 {offsets = [4, 0], sizes = [16, 32], strides = [1, 1]} : vector<20x32xf32> to vector<16x32xf32>
    %39 = tpu.concatenate %34, %35, %36, %37, %38 in 1 : vector<16x32xf32>, vector<16x32xf32>, vector<16x32xf32>, vector<16x32xf32>, vector<16x32xf32> -> vector<16x160xf32>
    %40 = arith.truncf %39 : vector<16x160xf32> to vector<16x160xbf16>
    %c0_14 = arith.constant 0 : index
    %c0_15 = arith.constant 0 : index
    %41 = vector.load %arg6[%c0_14, %c0_15] : memref<160x32xbf16, #tpu.memory_space<vmem>>, vector<160x32xbf16>
    %cst_16 = arith.constant dense<0.000000e+00> : vector<16x32xf32>
    %42 = tpu.matmul %40, %41, %cst_16 {dimension_numbers = #tpu.dot_dimension_numbers<[1], [0], [0], [1], [0, 0, 1, 1], [], []>} : vector<16x160xbf16>, vector<160x32xbf16>, vector<16x32xf32> -> vector<16x32xf32>
    %c0_17 = arith.constant 0 : index
    %c0_18 = arith.constant 0 : index
    %43 = vector.load %arg7[%c0_17, %c0_18] : memref<1x32xf32, #tpu.memory_space<vmem>>, vector<1x32xf32>
    %44 = vector.broadcast %43 : vector<1x32xf32> to vector<16x32xf32>
    %45 = arith.addf %42, %44 : vector<16x32xf32>
    %46 = math.tanh %45 : vector<16x32xf32>
    %cst_19 = arith.constant 0.000000e+00 : f32
    %47 = vector.broadcast %cst_19 : f32 to vector<2x32xf32>
    %48 = tpu.concatenate %47, %46, %47 in 0 : vector<2x32xf32>, vector<16x32xf32>, vector<2x32xf32> -> vector<20x32xf32>
    %49 = vector.extract_strided_slice %48 {offsets = [0, 0], sizes = [16, 32], strides = [1, 1]} : vector<20x32xf32> to vector<16x32xf32>
    %50 = vector.extract_strided_slice %48 {offsets = [1, 0], sizes = [16, 32], strides = [1, 1]} : vector<20x32xf32> to vector<16x32xf32>
    %51 = vector.extract_strided_slice %48 {offsets = [2, 0], sizes = [16, 32], strides = [1, 1]} : vector<20x32xf32> to vector<16x32xf32>
    %52 = vector.extract_strided_slice %48 {offsets = [3, 0], sizes = [16, 32], strides = [1, 1]} : vector<20x32xf32> to vector<16x32xf32>
    %53 = vector.extract_strided_slice %48 {offsets = [4, 0], sizes = [16, 32], strides = [1, 1]} : vector<20x32xf32> to vector<16x32xf32>
    %54 = tpu.concatenate %49, %50, %51, %52, %53 in 1 : vector<16x32xf32>, vector<16x32xf32>, vector<16x32xf32>, vector<16x32xf32>, vector<16x32xf32> -> vector<16x160xf32>
    %55 = arith.truncf %54 : vector<16x160xf32> to vector<16x160xbf16>
    %c0_20 = arith.constant 0 : index
    %c0_21 = arith.constant 0 : index
    %56 = vector.load %arg8[%c0_20, %c0_21] : memref<160x32xbf16, #tpu.memory_space<vmem>>, vector<160x32xbf16>
    %cst_22 = arith.constant dense<0.000000e+00> : vector<16x32xf32>
    %57 = tpu.matmul %55, %56, %cst_22 {dimension_numbers = #tpu.dot_dimension_numbers<[1], [0], [0], [1], [0, 0, 1, 1], [], []>} : vector<16x160xbf16>, vector<160x32xbf16>, vector<16x32xf32> -> vector<16x32xf32>
    %c0_23 = arith.constant 0 : index
    %c0_24 = arith.constant 0 : index
    %58 = vector.load %arg9[%c0_23, %c0_24] : memref<1x32xf32, #tpu.memory_space<vmem>>, vector<1x32xf32>
    %59 = vector.broadcast %58 : vector<1x32xf32> to vector<16x32xf32>
    %60 = arith.addf %57, %59 : vector<16x32xf32>
    %61 = math.tanh %60 : vector<16x32xf32>
    %cst_25 = arith.constant 0.000000e+00 : f32
    %62 = vector.broadcast %cst_25 : f32 to vector<2x32xf32>
    %63 = tpu.concatenate %62, %61, %62 in 0 : vector<2x32xf32>, vector<16x32xf32>, vector<2x32xf32> -> vector<20x32xf32>
    %64 = vector.extract_strided_slice %63 {offsets = [0, 0], sizes = [16, 32], strides = [1, 1]} : vector<20x32xf32> to vector<16x32xf32>
    %65 = vector.extract_strided_slice %63 {offsets = [1, 0], sizes = [16, 32], strides = [1, 1]} : vector<20x32xf32> to vector<16x32xf32>
    %66 = vector.extract_strided_slice %63 {offsets = [2, 0], sizes = [16, 32], strides = [1, 1]} : vector<20x32xf32> to vector<16x32xf32>
    %67 = vector.extract_strided_slice %63 {offsets = [3, 0], sizes = [16, 32], strides = [1, 1]} : vector<20x32xf32> to vector<16x32xf32>
    %68 = vector.extract_strided_slice %63 {offsets = [4, 0], sizes = [16, 32], strides = [1, 1]} : vector<20x32xf32> to vector<16x32xf32>
    %69 = tpu.concatenate %64, %65, %66, %67, %68 in 1 : vector<16x32xf32>, vector<16x32xf32>, vector<16x32xf32>, vector<16x32xf32>, vector<16x32xf32> -> vector<16x160xf32>
    %70 = arith.truncf %69 : vector<16x160xf32> to vector<16x160xbf16>
    %c0_26 = arith.constant 0 : index
    %c0_27 = arith.constant 0 : index
    %71 = vector.load %arg10[%c0_26, %c0_27] : memref<160x16xbf16, #tpu.memory_space<vmem>>, vector<160x16xbf16>
    %cst_28 = arith.constant dense<0.000000e+00> : vector<16x16xf32>
    %72 = tpu.matmul %70, %71, %cst_28 {dimension_numbers = #tpu.dot_dimension_numbers<[1], [0], [0], [1], [0, 0, 1, 1], [], []>} : vector<16x160xbf16>, vector<160x16xbf16>, vector<16x16xf32> -> vector<16x16xf32>
    %c0_29 = arith.constant 0 : index
    %c0_30 = arith.constant 0 : index
    %73 = vector.load %arg11[%c0_29, %c0_30] : memref<1x16xf32, #tpu.memory_space<vmem>>, vector<1x16xf32>
    %74 = vector.broadcast %73 : vector<1x16xf32> to vector<16x16xf32>
    %75 = arith.addf %72, %74 : vector<16x16xf32>
    %76 = arith.addf %75, %1 : vector<16x16xf32>
    %c0_31 = arith.constant 0 : index
    %c0_32 = arith.constant 0 : index
    %c0_33 = arith.constant 0 : index
    %77 = vector.load %arg12[%c0_31, %c0_32, %c0_33] : memref<1x16x16xf32, #tpu.memory_space<vmem>>, vector<1x16x16xf32>
    %78 = vector.shape_cast %77 : vector<1x16x16xf32> to vector<16x16xf32>
    %79 = vector.shape_cast %76 : vector<16x16xf32> to vector<1x16x16xf32>
    tpu.vector_store %arg12[%c0_31, %c0_32, %c0_33], %79 {strides = array<i32>} : memref<1x16x16xf32, #tpu.memory_space<vmem>>, vector<1x16x16xf32>,
    return
  }
  func.func @transform_0(%arg0: i32) -> (i32, i32, i32) {
    %c0_i32 = arith.constant 0 : i32
    %c0_i32_0 = arith.constant 0 : i32
    %c0_i32_1 = arith.constant 0 : i32
    return %arg0, %c0_i32, %c0_i32_0 : i32, i32, i32
  }
  func.func @transform_1(%arg0: i32) -> (i32, i32) {
    %c0_i32 = arith.constant 0 : i32
    %c0_i32_0 = arith.constant 0 : i32
    %c0_i32_1 = arith.constant 0 : i32
    return %c0_i32, %c0_i32_0 : i32, i32
  }
  func.func @transform_2(%arg0: i32) -> (i32, i32) {
    %c0_i32 = arith.constant 0 : i32
    %c0_i32_0 = arith.constant 0 : i32
    %c0_i32_1 = arith.constant 0 : i32
    return %c0_i32, %c0_i32_0 : i32, i32
  }
  func.func @transform_3(%arg0: i32) -> (i32, i32) {
    %c0_i32 = arith.constant 0 : i32
    %c0_i32_0 = arith.constant 0 : i32
    %c0_i32_1 = arith.constant 0 : i32
    return %c0_i32, %c0_i32_0 : i32, i32
  }
  func.func @transform_4(%arg0: i32) -> (i32, i32) {
    %c0_i32 = arith.constant 0 : i32
    %c0_i32_0 = arith.constant 0 : i32
    %c0_i32_1 = arith.constant 0 : i32
    return %c0_i32, %c0_i32_0 : i32, i32
  }
  func.func @transform_5(%arg0: i32) -> (i32, i32) {
    %c0_i32 = arith.constant 0 : i32
    %c0_i32_0 = arith.constant 0 : i32
    %c0_i32_1 = arith.constant 0 : i32
    return %c0_i32, %c0_i32_0 : i32, i32
  }
  func.func @transform_6(%arg0: i32) -> (i32, i32) {
    %c0_i32 = arith.constant 0 : i32
    %c0_i32_0 = arith.constant 0 : i32
    %c0_i32_1 = arith.constant 0 : i32
    return %c0_i32, %c0_i32_0 : i32, i32
  }
  func.func @transform_7(%arg0: i32) -> (i32, i32) {
    %c0_i32 = arith.constant 0 : i32
    %c0_i32_0 = arith.constant 0 : i32
    %c0_i32_1 = arith.constant 0 : i32
    return %c0_i32, %c0_i32_0 : i32, i32
  }
  func.func @transform_8(%arg0: i32) -> (i32, i32) {
    %c0_i32 = arith.constant 0 : i32
    %c0_i32_0 = arith.constant 0 : i32
    %c0_i32_1 = arith.constant 0 : i32
    return %c0_i32, %c0_i32_0 : i32, i32
  }
  func.func @transform_9(%arg0: i32) -> (i32, i32) {
    %c0_i32 = arith.constant 0 : i32
    %c0_i32_0 = arith.constant 0 : i32
    %c0_i32_1 = arith.constant 0 : i32
    return %c0_i32, %c0_i32_0 : i32, i32
  }
  func.func @transform_10(%arg0: i32) -> (i32, i32) {
    %c0_i32 = arith.constant 0 : i32
    %c0_i32_0 = arith.constant 0 : i32
    %c0_i32_1 = arith.constant 0 : i32
    return %c0_i32, %c0_i32_0 : i32, i32
  }
  func.func @transform_11(%arg0: i32) -> (i32, i32, i32) {
    %c0_i32 = arith.constant 0 : i32
    %c0_i32_0 = arith.constant 0 : i32
    %c0_i32_1 = arith.constant 0 : i32
    return %arg0, %c0_i32, %c0_i32_0 : i32, i32, i32
  }
}

module attributes {stable_mosaic.version = 11 : i64} {
  func.func @_varpred_kernel(%arg0: i32, %arg1: memref<2xi32, #tpu.memory_space<smem>>, %arg2: memref<1x16x32xf32, #tpu.memory_space<vmem>>, %arg3: memref<2x96x32xbf16, #tpu.memory_space<vmem>>, %arg4: memref<2x1x32xf32, #tpu.memory_space<vmem>>, %arg5: memref<2x1x32xf32, #tpu.memory_space<vmem>>, %arg6: memref<2x1x32xf32, #tpu.memory_space<vmem>>, %arg7: memref<2x96x32xbf16, #tpu.memory_space<vmem>>, %arg8: memref<2x1x32xf32, #tpu.memory_space<vmem>>, %arg9: memref<2x1x32xf32, #tpu.memory_space<vmem>>, %arg10: memref<2x1x32xf32, #tpu.memory_space<vmem>>, %arg11: memref<2x1x32xf32, #tpu.memory_space<vmem>>, %arg12: memref<2x1x1xf32, #tpu.memory_space<vmem>>, %arg13: memref<1x2x16xf32, #tpu.memory_space<vmem>>) attributes {dimension_semantics = [#tpu.dimension_semantics<parallel>], iteration_bounds = array<i64: 2>, scalar_prefetch = 1 : i64, scratch_operands = 0 : i64, tpu.core_type = #tpu.core_type<tc>, window_params = [{transform_indices = @transform_0, window_bounds = array<i64: 1, 16, 32>}, {pipeline_mode = #tpu.pipeline_mode<synchronous>, transform_indices = @transform_1, window_bounds = array<i64: 2, 96, 32>}, {pipeline_mode = #tpu.pipeline_mode<synchronous>, transform_indices = @transform_2, window_bounds = array<i64: 2, 1, 32>}, {pipeline_mode = #tpu.pipeline_mode<synchronous>, transform_indices = @transform_3, window_bounds = array<i64: 2, 1, 32>}, {pipeline_mode = #tpu.pipeline_mode<synchronous>, transform_indices = @transform_4, window_bounds = array<i64: 2, 1, 32>}, {pipeline_mode = #tpu.pipeline_mode<synchronous>, transform_indices = @transform_5, window_bounds = array<i64: 2, 96, 32>}, {pipeline_mode = #tpu.pipeline_mode<synchronous>, transform_indices = @transform_6, window_bounds = array<i64: 2, 1, 32>}, {pipeline_mode = #tpu.pipeline_mode<synchronous>, transform_indices = @transform_7, window_bounds = array<i64: 2, 1, 32>}, {pipeline_mode = #tpu.pipeline_mode<synchronous>, transform_indices = @transform_8, window_bounds = array<i64: 2, 1, 32>}, {pipeline_mode = #tpu.pipeline_mode<synchronous>, transform_indices = @transform_9, window_bounds = array<i64: 2, 1, 32>}, {pipeline_mode = #tpu.pipeline_mode<synchronous>, transform_indices = @transform_10, window_bounds = array<i64: 2, 1, 1>}, {transform_indices = @transform_11, window_bounds = array<i64: 1, 2, 16>}]} {
    %0 = arith.index_cast %arg0 : i32 to index
    %1 = memref.load %arg1[%0] : memref<2xi32, #tpu.memory_space<smem>>
    %c0 = arith.constant 0 : index
    %c0_0 = arith.constant 0 : index
    %c0_1 = arith.constant 0 : index
    %2 = vector.load %arg2[%c0, %c0_0, %c0_1] : memref<1x16x32xf32, #tpu.memory_space<vmem>>, vector<1x16x32xf32>
    %3 = vector.shape_cast %2 : vector<1x16x32xf32> to vector<16x32xf32>
    %cst = arith.constant 0.000000e+00 : f32
    %4 = vector.broadcast %cst : f32 to vector<1x32xf32>
    %5 = tpu.concatenate %4, %3, %4 in 0 : vector<1x32xf32>, vector<16x32xf32>, vector<1x32xf32> -> vector<18x32xf32>
    %6 = vector.extract_strided_slice %5 {offsets = [0, 0], sizes = [16, 32], strides = [1, 1]} : vector<18x32xf32> to vector<16x32xf32>
    %7 = vector.extract_strided_slice %5 {offsets = [1, 0], sizes = [16, 32], strides = [1, 1]} : vector<18x32xf32> to vector<16x32xf32>
    %8 = vector.extract_strided_slice %5 {offsets = [2, 0], sizes = [16, 32], strides = [1, 1]} : vector<18x32xf32> to vector<16x32xf32>
    %9 = tpu.concatenate %6, %7, %8 in 1 : vector<16x32xf32>, vector<16x32xf32>, vector<16x32xf32> -> vector<16x96xf32>
    %10 = arith.truncf %9 : vector<16x96xf32> to vector<16x96xbf16>
    %11 = tpu.iota {dimensions = array<i32: 1>} : vector<1x16xi32>
    %c0_2 = arith.constant 0 : index
    %c0_3 = arith.constant 0 : index
    %c0_4 = arith.constant 0 : index
    %12 = vector.load %arg3[%c0_2, %c0_3, %c0_4] : memref<2x96x32xbf16, #tpu.memory_space<vmem>>, vector<1x96x32xbf16>
    %13 = vector.shape_cast %12 : vector<1x96x32xbf16> to vector<96x32xbf16>
    %cst_5 = arith.constant dense<0.000000e+00> : vector<16x32xf32>
    %14 = tpu.matmul %10, %13, %cst_5 {dimension_numbers = #tpu.dot_dimension_numbers<[1], [0], [0], [1], [0, 0, 1, 1], [], []>} : vector<16x96xbf16>, vector<96x32xbf16>, vector<16x32xf32> -> vector<16x32xf32>
    %c0_6 = arith.constant 0 : index
    %c0_7 = arith.constant 0 : index
    %c0_8 = arith.constant 0 : index
    %15 = vector.load %arg4[%c0_6, %c0_7, %c0_8] : memref<2x1x32xf32, #tpu.memory_space<vmem>>, vector<1x1x32xf32>
    %16 = vector.shape_cast %15 : vector<1x1x32xf32> to vector<1x32xf32>
    %17 = vector.broadcast %16 : vector<1x32xf32> to vector<16x32xf32>
    %18 = arith.addf %14, %17 : vector<16x32xf32>
    %cst_9 = arith.constant 0.000000e+00 : f32
    %19 = vector.broadcast %cst_9 : f32 to vector<16x32xf32>
    %20 = arith.maximumf %18, %19 : vector<16x32xf32>
    %c0_10 = arith.constant 0 : index
    %c0_11 = arith.constant 0 : index
    %c0_12 = arith.constant 0 : index
    %21 = vector.load %arg5[%c0_10, %c0_11, %c0_12] : memref<2x1x32xf32, #tpu.memory_space<vmem>>, vector<1x1x32xf32>
    %22 = vector.shape_cast %21 : vector<1x1x32xf32> to vector<1x32xf32>
    %c0_13 = arith.constant 0 : index
    %c0_14 = arith.constant 0 : index
    %c0_15 = arith.constant 0 : index
    %23 = vector.load %arg6[%c0_13, %c0_14, %c0_15] : memref<2x1x32xf32, #tpu.memory_space<vmem>>, vector<1x1x32xf32>
    %24 = vector.shape_cast %23 : vector<1x1x32xf32> to vector<1x32xf32>
    %cst_16 = arith.constant dense<0.000000e+00> : vector<16xf32>
    %25 = vector.multi_reduction <add>, %20, %cst_16 [1] : vector<16x32xf32> to vector<16xf32>
    %26 = vector.shape_cast %25 : vector<16xf32> to vector<16x1xf32>
    %cst_17 = arith.constant 3.200000e+01 : f32
    %27 = vector.broadcast %cst_17 : f32 to vector<16x1xf32>
    %28 = arith.divf %26, %27 : vector<16x1xf32>
    %29 = vector.broadcast %28 : vector<16x1xf32> to vector<16x32xf32>
    %30 = arith.subf %20, %29 : vector<16x32xf32>
    %31 = arith.mulf %30, %30 : vector<16x32xf32>
    %cst_18 = arith.constant dense<0.000000e+00> : vector<16xf32>
    %32 = vector.multi_reduction <add>, %31, %cst_18 [1] : vector<16x32xf32> to vector<16xf32>
    %33 = vector.shape_cast %32 : vector<16xf32> to vector<16x1xf32>
    %cst_19 = arith.constant 3.200000e+01 : f32
    %34 = vector.broadcast %cst_19 : f32 to vector<16x1xf32>
    %35 = arith.divf %33, %34 : vector<16x1xf32>
    %36 = vector.broadcast %28 : vector<16x1xf32> to vector<16x32xf32>
    %37 = arith.subf %20, %36 : vector<16x32xf32>
    %cst_20 = arith.constant 9.99999974E-6 : f32
    %38 = vector.broadcast %cst_20 : f32 to vector<16x1xf32>
    %39 = arith.addf %35, %38 : vector<16x1xf32>
    %40 = math.rsqrt %39 : vector<16x1xf32>
    %41 = vector.broadcast %40 : vector<16x1xf32> to vector<16x32xf32>
    %42 = arith.mulf %37, %41 : vector<16x32xf32>
    %43 = vector.broadcast %22 : vector<1x32xf32> to vector<16x32xf32>
    %44 = arith.mulf %42, %43 : vector<16x32xf32>
    %45 = vector.broadcast %24 : vector<1x32xf32> to vector<16x32xf32>
    %46 = arith.addf %44, %45 : vector<16x32xf32>
    %cst_21 = arith.constant 0.000000e+00 : f32
    %47 = vector.broadcast %cst_21 : f32 to vector<1x32xf32>
    %48 = tpu.concatenate %47, %46, %47 in 0 : vector<1x32xf32>, vector<16x32xf32>, vector<1x32xf32> -> vector<18x32xf32>
    %49 = vector.extract_strided_slice %48 {offsets = [0, 0], sizes = [16, 32], strides = [1, 1]} : vector<18x32xf32> to vector<16x32xf32>
    %50 = vector.extract_strided_slice %48 {offsets = [1, 0], sizes = [16, 32], strides = [1, 1]} : vector<18x32xf32> to vector<16x32xf32>
    %51 = vector.extract_strided_slice %48 {offsets = [2, 0], sizes = [16, 32], strides = [1, 1]} : vector<18x32xf32> to vector<16x32xf32>
    %52 = tpu.concatenate %49, %50, %51 in 1 : vector<16x32xf32>, vector<16x32xf32>, vector<16x32xf32> -> vector<16x96xf32>
    %53 = arith.truncf %52 : vector<16x96xf32> to vector<16x96xbf16>
    %c0_22 = arith.constant 0 : index
    %c0_23 = arith.constant 0 : index
    %c0_24 = arith.constant 0 : index
    %54 = vector.load %arg7[%c0_22, %c0_23, %c0_24] : memref<2x96x32xbf16, #tpu.memory_space<vmem>>, vector<1x96x32xbf16>
    %55 = vector.shape_cast %54 : vector<1x96x32xbf16> to vector<96x32xbf16>
    %cst_25 = arith.constant dense<0.000000e+00> : vector<16x32xf32>
    %56 = tpu.matmul %53, %55, %cst_25 {dimension_numbers = #tpu.dot_dimension_numbers<[1], [0], [0], [1], [0, 0, 1, 1], [], []>} : vector<16x96xbf16>, vector<96x32xbf16>, vector<16x32xf32> -> vector<16x32xf32>
    %c0_26 = arith.constant 0 : index
    %c0_27 = arith.constant 0 : index
    %c0_28 = arith.constant 0 : index
    %57 = vector.load %arg8[%c0_26, %c0_27, %c0_28] : memref<2x1x32xf32, #tpu.memory_space<vmem>>, vector<1x1x32xf32>
    %58 = vector.shape_cast %57 : vector<1x1x32xf32> to vector<1x32xf32>
    %59 = vector.broadcast %58 : vector<1x32xf32> to vector<16x32xf32>
    %60 = arith.addf %56, %59 : vector<16x32xf32>
    %cst_29 = arith.constant 0.000000e+00 : f32
    %61 = vector.broadcast %cst_29 : f32 to vector<16x32xf32>
    %62 = arith.maximumf %60, %61 : vector<16x32xf32>
    %c0_30 = arith.constant 0 : index
    %c0_31 = arith.constant 0 : index
    %c0_32 = arith.constant 0 : index
    %63 = vector.load %arg9[%c0_30, %c0_31, %c0_32] : memref<2x1x32xf32, #tpu.memory_space<vmem>>, vector<1x1x32xf32>
    %64 = vector.shape_cast %63 : vector<1x1x32xf32> to vector<1x32xf32>
    %c0_33 = arith.constant 0 : index
    %c0_34 = arith.constant 0 : index
    %c0_35 = arith.constant 0 : index
    %65 = vector.load %arg10[%c0_33, %c0_34, %c0_35] : memref<2x1x32xf32, #tpu.memory_space<vmem>>, vector<1x1x32xf32>
    %66 = vector.shape_cast %65 : vector<1x1x32xf32> to vector<1x32xf32>
    %cst_36 = arith.constant dense<0.000000e+00> : vector<16xf32>
    %67 = vector.multi_reduction <add>, %62, %cst_36 [1] : vector<16x32xf32> to vector<16xf32>
    %68 = vector.shape_cast %67 : vector<16xf32> to vector<16x1xf32>
    %cst_37 = arith.constant 3.200000e+01 : f32
    %69 = vector.broadcast %cst_37 : f32 to vector<16x1xf32>
    %70 = arith.divf %68, %69 : vector<16x1xf32>
    %71 = vector.broadcast %70 : vector<16x1xf32> to vector<16x32xf32>
    %72 = arith.subf %62, %71 : vector<16x32xf32>
    %73 = arith.mulf %72, %72 : vector<16x32xf32>
    %cst_38 = arith.constant dense<0.000000e+00> : vector<16xf32>
    %74 = vector.multi_reduction <add>, %73, %cst_38 [1] : vector<16x32xf32> to vector<16xf32>
    %75 = vector.shape_cast %74 : vector<16xf32> to vector<16x1xf32>
    %cst_39 = arith.constant 3.200000e+01 : f32
    %76 = vector.broadcast %cst_39 : f32 to vector<16x1xf32>
    %77 = arith.divf %75, %76 : vector<16x1xf32>
    %78 = vector.broadcast %70 : vector<16x1xf32> to vector<16x32xf32>
    %79 = arith.subf %62, %78 : vector<16x32xf32>
    %cst_40 = arith.constant 9.99999974E-6 : f32
    %80 = vector.broadcast %cst_40 : f32 to vector<16x1xf32>
    %81 = arith.addf %77, %80 : vector<16x1xf32>
    %82 = math.rsqrt %81 : vector<16x1xf32>
    %83 = vector.broadcast %82 : vector<16x1xf32> to vector<16x32xf32>
    %84 = arith.mulf %79, %83 : vector<16x32xf32>
    %85 = vector.broadcast %64 : vector<1x32xf32> to vector<16x32xf32>
    %86 = arith.mulf %84, %85 : vector<16x32xf32>
    %87 = vector.broadcast %66 : vector<1x32xf32> to vector<16x32xf32>
    %88 = arith.addf %86, %87 : vector<16x32xf32>
    %c0_41 = arith.constant 0 : index
    %c0_42 = arith.constant 0 : index
    %c0_43 = arith.constant 0 : index
    %89 = vector.load %arg11[%c0_41, %c0_42, %c0_43] : memref<2x1x32xf32, #tpu.memory_space<vmem>>, vector<1x1x32xf32>
    %90 = vector.shape_cast %89 : vector<1x1x32xf32> to vector<1x32xf32>
    %91 = arith.truncf %90 : vector<1x32xf32> to vector<1x32xbf16>
    %92 = arith.truncf %88 : vector<16x32xf32> to vector<16x32xbf16>
    %cst_44 = arith.constant dense<0.000000e+00> : vector<1x16xf32>
    %93 = tpu.matmul %91, %92, %cst_44 {dimension_numbers = #tpu.dot_dimension_numbers<[1], [1], [0], [0], [0, 0, 1, 0], [], []>} : vector<1x32xbf16>, vector<16x32xbf16>, vector<1x16xf32> -> vector<1x16xf32>
    %c0_45 = arith.constant 0 : index
    %c0_46 = arith.constant 0 : index
    %c0_47 = arith.constant 0 : index
    %94 = vector.load %arg12[%c0_45, %c0_46, %c0_47] : memref<2x1x1xf32, #tpu.memory_space<vmem>>, vector<1x1x1xf32>
    %95 = vector.shape_cast %94 : vector<1x1x1xf32> to vector<1x1xf32>
    %96 = vector.broadcast %95 : vector<1x1xf32> to vector<1x16xf32>
    %97 = arith.addf %93, %96 : vector<1x16xf32>
    %98 = vector.broadcast %1 : i32 to vector<1x16xi32>
    %99 = arith.cmpi sge, %11, %98 : vector<1x16xi32>
    %cst_48 = arith.constant 0.000000e+00 : f32
    %100 = vector.broadcast %cst_48 : f32 to vector<1x16xf32>
    %101 = arith.select %99, %100, %97 : vector<1x16xi1>, vector<1x16xf32>
    %c1 = arith.constant 1 : index
    %c0_49 = arith.constant 0 : index
    %c0_50 = arith.constant 0 : index
    %102 = vector.load %arg3[%c1, %c0_49, %c0_50] : memref<2x96x32xbf16, #tpu.memory_space<vmem>>, vector<1x96x32xbf16>
    %103 = vector.shape_cast %102 : vector<1x96x32xbf16> to vector<96x32xbf16>
    %cst_51 = arith.constant dense<0.000000e+00> : vector<16x32xf32>
    %104 = tpu.matmul %10, %103, %cst_51 {dimension_numbers = #tpu.dot_dimension_numbers<[1], [0], [0], [1], [0, 0, 1, 1], [], []>} : vector<16x96xbf16>, vector<96x32xbf16>, vector<16x32xf32> -> vector<16x32xf32>
    %c1_52 = arith.constant 1 : index
    %c0_53 = arith.constant 0 : index
    %c0_54 = arith.constant 0 : index
    %105 = vector.load %arg4[%c1_52, %c0_53, %c0_54] : memref<2x1x32xf32, #tpu.memory_space<vmem>>, vector<1x1x32xf32>
    %106 = vector.shape_cast %105 : vector<1x1x32xf32> to vector<1x32xf32>
    %107 = vector.broadcast %106 : vector<1x32xf32> to vector<16x32xf32>
    %108 = arith.addf %104, %107 : vector<16x32xf32>
    %cst_55 = arith.constant 0.000000e+00 : f32
    %109 = vector.broadcast %cst_55 : f32 to vector<16x32xf32>
    %110 = arith.maximumf %108, %109 : vector<16x32xf32>
    %c1_56 = arith.constant 1 : index
    %c0_57 = arith.constant 0 : index
    %c0_58 = arith.constant 0 : index
    %111 = vector.load %arg5[%c1_56, %c0_57, %c0_58] : memref<2x1x32xf32, #tpu.memory_space<vmem>>, vector<1x1x32xf32>
    %112 = vector.shape_cast %111 : vector<1x1x32xf32> to vector<1x32xf32>
    %c1_59 = arith.constant 1 : index
    %c0_60 = arith.constant 0 : index
    %c0_61 = arith.constant 0 : index
    %113 = vector.load %arg6[%c1_59, %c0_60, %c0_61] : memref<2x1x32xf32, #tpu.memory_space<vmem>>, vector<1x1x32xf32>
    %114 = vector.shape_cast %113 : vector<1x1x32xf32> to vector<1x32xf32>
    %cst_62 = arith.constant dense<0.000000e+00> : vector<16xf32>
    %115 = vector.multi_reduction <add>, %110, %cst_62 [1] : vector<16x32xf32> to vector<16xf32>
    %116 = vector.shape_cast %115 : vector<16xf32> to vector<16x1xf32>
    %cst_63 = arith.constant 3.200000e+01 : f32
    %117 = vector.broadcast %cst_63 : f32 to vector<16x1xf32>
    %118 = arith.divf %116, %117 : vector<16x1xf32>
    %119 = vector.broadcast %118 : vector<16x1xf32> to vector<16x32xf32>
    %120 = arith.subf %110, %119 : vector<16x32xf32>
    %121 = arith.mulf %120, %120 : vector<16x32xf32>
    %cst_64 = arith.constant dense<0.000000e+00> : vector<16xf32>
    %122 = vector.multi_reduction <add>, %121, %cst_64 [1] : vector<16x32xf32> to vector<16xf32>
    %123 = vector.shape_cast %122 : vector<16xf32> to vector<16x1xf32>
    %cst_65 = arith.constant 3.200000e+01 : f32
    %124 = vector.broadcast %cst_65 : f32 to vector<16x1xf32>
    %125 = arith.divf %123, %124 : vector<16x1xf32>
    %126 = vector.broadcast %118 : vector<16x1xf32> to vector<16x32xf32>
    %127 = arith.subf %110, %126 : vector<16x32xf32>
    %cst_66 = arith.constant 9.99999974E-6 : f32
    %128 = vector.broadcast %cst_66 : f32 to vector<16x1xf32>
    %129 = arith.addf %125, %128 : vector<16x1xf32>
    %130 = math.rsqrt %129 : vector<16x1xf32>
    %131 = vector.broadcast %130 : vector<16x1xf32> to vector<16x32xf32>
    %132 = arith.mulf %127, %131 : vector<16x32xf32>
    %133 = vector.broadcast %112 : vector<1x32xf32> to vector<16x32xf32>
    %134 = arith.mulf %132, %133 : vector<16x32xf32>
    %135 = vector.broadcast %114 : vector<1x32xf32> to vector<16x32xf32>
    %136 = arith.addf %134, %135 : vector<16x32xf32>
    %cst_67 = arith.constant 0.000000e+00 : f32
    %137 = vector.broadcast %cst_67 : f32 to vector<1x32xf32>
    %138 = tpu.concatenate %137, %136, %137 in 0 : vector<1x32xf32>, vector<16x32xf32>, vector<1x32xf32> -> vector<18x32xf32>
    %139 = vector.extract_strided_slice %138 {offsets = [0, 0], sizes = [16, 32], strides = [1, 1]} : vector<18x32xf32> to vector<16x32xf32>
    %140 = vector.extract_strided_slice %138 {offsets = [1, 0], sizes = [16, 32], strides = [1, 1]} : vector<18x32xf32> to vector<16x32xf32>
    %141 = vector.extract_strided_slice %138 {offsets = [2, 0], sizes = [16, 32], strides = [1, 1]} : vector<18x32xf32> to vector<16x32xf32>
    %142 = tpu.concatenate %139, %140, %141 in 1 : vector<16x32xf32>, vector<16x32xf32>, vector<16x32xf32> -> vector<16x96xf32>
    %143 = arith.truncf %142 : vector<16x96xf32> to vector<16x96xbf16>
    %c1_68 = arith.constant 1 : index
    %c0_69 = arith.constant 0 : index
    %c0_70 = arith.constant 0 : index
    %144 = vector.load %arg7[%c1_68, %c0_69, %c0_70] : memref<2x96x32xbf16, #tpu.memory_space<vmem>>, vector<1x96x32xbf16>
    %145 = vector.shape_cast %144 : vector<1x96x32xbf16> to vector<96x32xbf16>
    %cst_71 = arith.constant dense<0.000000e+00> : vector<16x32xf32>
    %146 = tpu.matmul %143, %145, %cst_71 {dimension_numbers = #tpu.dot_dimension_numbers<[1], [0], [0], [1], [0, 0, 1, 1], [], []>} : vector<16x96xbf16>, vector<96x32xbf16>, vector<16x32xf32> -> vector<16x32xf32>
    %c1_72 = arith.constant 1 : index
    %c0_73 = arith.constant 0 : index
    %c0_74 = arith.constant 0 : index
    %147 = vector.load %arg8[%c1_72, %c0_73, %c0_74] : memref<2x1x32xf32, #tpu.memory_space<vmem>>, vector<1x1x32xf32>
    %148 = vector.shape_cast %147 : vector<1x1x32xf32> to vector<1x32xf32>
    %149 = vector.broadcast %148 : vector<1x32xf32> to vector<16x32xf32>
    %150 = arith.addf %146, %149 : vector<16x32xf32>
    %cst_75 = arith.constant 0.000000e+00 : f32
    %151 = vector.broadcast %cst_75 : f32 to vector<16x32xf32>
    %152 = arith.maximumf %150, %151 : vector<16x32xf32>
    %c1_76 = arith.constant 1 : index
    %c0_77 = arith.constant 0 : index
    %c0_78 = arith.constant 0 : index
    %153 = vector.load %arg9[%c1_76, %c0_77, %c0_78] : memref<2x1x32xf32, #tpu.memory_space<vmem>>, vector<1x1x32xf32>
    %154 = vector.shape_cast %153 : vector<1x1x32xf32> to vector<1x32xf32>
    %c1_79 = arith.constant 1 : index
    %c0_80 = arith.constant 0 : index
    %c0_81 = arith.constant 0 : index
    %155 = vector.load %arg10[%c1_79, %c0_80, %c0_81] : memref<2x1x32xf32, #tpu.memory_space<vmem>>, vector<1x1x32xf32>
    %156 = vector.shape_cast %155 : vector<1x1x32xf32> to vector<1x32xf32>
    %cst_82 = arith.constant dense<0.000000e+00> : vector<16xf32>
    %157 = vector.multi_reduction <add>, %152, %cst_82 [1] : vector<16x32xf32> to vector<16xf32>
    %158 = vector.shape_cast %157 : vector<16xf32> to vector<16x1xf32>
    %cst_83 = arith.constant 3.200000e+01 : f32
    %159 = vector.broadcast %cst_83 : f32 to vector<16x1xf32>
    %160 = arith.divf %158, %159 : vector<16x1xf32>
    %161 = vector.broadcast %160 : vector<16x1xf32> to vector<16x32xf32>
    %162 = arith.subf %152, %161 : vector<16x32xf32>
    %163 = arith.mulf %162, %162 : vector<16x32xf32>
    %cst_84 = arith.constant dense<0.000000e+00> : vector<16xf32>
    %164 = vector.multi_reduction <add>, %163, %cst_84 [1] : vector<16x32xf32> to vector<16xf32>
    %165 = vector.shape_cast %164 : vector<16xf32> to vector<16x1xf32>
    %cst_85 = arith.constant 3.200000e+01 : f32
    %166 = vector.broadcast %cst_85 : f32 to vector<16x1xf32>
    %167 = arith.divf %165, %166 : vector<16x1xf32>
    %168 = vector.broadcast %160 : vector<16x1xf32> to vector<16x32xf32>
    %169 = arith.subf %152, %168 : vector<16x32xf32>
    %cst_86 = arith.constant 9.99999974E-6 : f32
    %170 = vector.broadcast %cst_86 : f32 to vector<16x1xf32>
    %171 = arith.addf %167, %170 : vector<16x1xf32>
    %172 = math.rsqrt %171 : vector<16x1xf32>
    %173 = vector.broadcast %172 : vector<16x1xf32> to vector<16x32xf32>
    %174 = arith.mulf %169, %173 : vector<16x32xf32>
    %175 = vector.broadcast %154 : vector<1x32xf32> to vector<16x32xf32>
    %176 = arith.mulf %174, %175 : vector<16x32xf32>
    %177 = vector.broadcast %156 : vector<1x32xf32> to vector<16x32xf32>
    %178 = arith.addf %176, %177 : vector<16x32xf32>
    %c1_87 = arith.constant 1 : index
    %c0_88 = arith.constant 0 : index
    %c0_89 = arith.constant 0 : index
    %179 = vector.load %arg11[%c1_87, %c0_88, %c0_89] : memref<2x1x32xf32, #tpu.memory_space<vmem>>, vector<1x1x32xf32>
    %180 = vector.shape_cast %179 : vector<1x1x32xf32> to vector<1x32xf32>
    %181 = arith.truncf %180 : vector<1x32xf32> to vector<1x32xbf16>
    %182 = arith.truncf %178 : vector<16x32xf32> to vector<16x32xbf16>
    %cst_90 = arith.constant dense<0.000000e+00> : vector<1x16xf32>
    %183 = tpu.matmul %181, %182, %cst_90 {dimension_numbers = #tpu.dot_dimension_numbers<[1], [1], [0], [0], [0, 0, 1, 0], [], []>} : vector<1x32xbf16>, vector<16x32xbf16>, vector<1x16xf32> -> vector<1x16xf32>
    %c1_91 = arith.constant 1 : index
    %c0_92 = arith.constant 0 : index
    %c0_93 = arith.constant 0 : index
    %184 = vector.load %arg12[%c1_91, %c0_92, %c0_93] : memref<2x1x1xf32, #tpu.memory_space<vmem>>, vector<1x1x1xf32>
    %185 = vector.shape_cast %184 : vector<1x1x1xf32> to vector<1x1xf32>
    %186 = vector.broadcast %185 : vector<1x1xf32> to vector<1x16xf32>
    %187 = arith.addf %183, %186 : vector<1x16xf32>
    %188 = vector.broadcast %1 : i32 to vector<1x16xi32>
    %189 = arith.cmpi sge, %11, %188 : vector<1x16xi32>
    %cst_94 = arith.constant 0.000000e+00 : f32
    %190 = vector.broadcast %cst_94 : f32 to vector<1x16xf32>
    %191 = arith.select %189, %190, %187 : vector<1x16xi1>, vector<1x16xf32>
    %192 = tpu.concatenate %101, %191 in 0 : vector<1x16xf32>, vector<1x16xf32> -> vector<2x16xf32>
    %c0_95 = arith.constant 0 : index
    %c0_96 = arith.constant 0 : index
    %c0_97 = arith.constant 0 : index
    %193 = vector.load %arg13[%c0_95, %c0_96, %c0_97] : memref<1x2x16xf32, #tpu.memory_space<vmem>>, vector<1x2x16xf32>
    %194 = vector.shape_cast %193 : vector<1x2x16xf32> to vector<2x16xf32>
    %195 = vector.shape_cast %192 : vector<2x16xf32> to vector<1x2x16xf32>
    tpu.vector_store %arg13[%c0_95, %c0_96, %c0_97], %195 {strides = array<i32>} : memref<1x2x16xf32, #tpu.memory_space<vmem>>, vector<1x2x16xf32>,
    return
  }
  func.func @transform_0(%arg0: i32, %arg1: memref<2xi32, #tpu.memory_space<smem>>) -> (i32, i32, i32) {
    %c0_i32 = arith.constant 0 : i32
    %c0_i32_0 = arith.constant 0 : i32
    %c0_i32_1 = arith.constant 0 : i32
    return %arg0, %c0_i32, %c0_i32_0 : i32, i32, i32
  }
  func.func @transform_1(%arg0: i32, %arg1: memref<2xi32, #tpu.memory_space<smem>>) -> (i32, i32, i32) {
    %c0_i32 = arith.constant 0 : i32
    %c0_i32_0 = arith.constant 0 : i32
    %c0_i32_1 = arith.constant 0 : i32
    %c0_i32_2 = arith.constant 0 : i32
    return %c0_i32, %c0_i32_0, %c0_i32_1 : i32, i32, i32
  }
  func.func @transform_2(%arg0: i32, %arg1: memref<2xi32, #tpu.memory_space<smem>>) -> (i32, i32, i32) {
    %c0_i32 = arith.constant 0 : i32
    %c0_i32_0 = arith.constant 0 : i32
    %c0_i32_1 = arith.constant 0 : i32
    %c0_i32_2 = arith.constant 0 : i32
    return %c0_i32, %c0_i32_0, %c0_i32_1 : i32, i32, i32
  }
  func.func @transform_3(%arg0: i32, %arg1: memref<2xi32, #tpu.memory_space<smem>>) -> (i32, i32, i32) {
    %c0_i32 = arith.constant 0 : i32
    %c0_i32_0 = arith.constant 0 : i32
    %c0_i32_1 = arith.constant 0 : i32
    %c0_i32_2 = arith.constant 0 : i32
    return %c0_i32, %c0_i32_0, %c0_i32_1 : i32, i32, i32
  }
  func.func @transform_4(%arg0: i32, %arg1: memref<2xi32, #tpu.memory_space<smem>>) -> (i32, i32, i32) {
    %c0_i32 = arith.constant 0 : i32
    %c0_i32_0 = arith.constant 0 : i32
    %c0_i32_1 = arith.constant 0 : i32
    %c0_i32_2 = arith.constant 0 : i32
    return %c0_i32, %c0_i32_0, %c0_i32_1 : i32, i32, i32
  }
  func.func @transform_5(%arg0: i32, %arg1: memref<2xi32, #tpu.memory_space<smem>>) -> (i32, i32, i32) {
    %c0_i32 = arith.constant 0 : i32
    %c0_i32_0 = arith.constant 0 : i32
    %c0_i32_1 = arith.constant 0 : i32
    %c0_i32_2 = arith.constant 0 : i32
    return %c0_i32, %c0_i32_0, %c0_i32_1 : i32, i32, i32
  }
  func.func @transform_6(%arg0: i32, %arg1: memref<2xi32, #tpu.memory_space<smem>>) -> (i32, i32, i32) {
    %c0_i32 = arith.constant 0 : i32
    %c0_i32_0 = arith.constant 0 : i32
    %c0_i32_1 = arith.constant 0 : i32
    %c0_i32_2 = arith.constant 0 : i32
    return %c0_i32, %c0_i32_0, %c0_i32_1 : i32, i32, i32
  }
  func.func @transform_7(%arg0: i32, %arg1: memref<2xi32, #tpu.memory_space<smem>>) -> (i32, i32, i32) {
    %c0_i32 = arith.constant 0 : i32
    %c0_i32_0 = arith.constant 0 : i32
    %c0_i32_1 = arith.constant 0 : i32
    %c0_i32_2 = arith.constant 0 : i32
    return %c0_i32, %c0_i32_0, %c0_i32_1 : i32, i32, i32
  }
  func.func @transform_8(%arg0: i32, %arg1: memref<2xi32, #tpu.memory_space<smem>>) -> (i32, i32, i32) {
    %c0_i32 = arith.constant 0 : i32
    %c0_i32_0 = arith.constant 0 : i32
    %c0_i32_1 = arith.constant 0 : i32
    %c0_i32_2 = arith.constant 0 : i32
    return %c0_i32, %c0_i32_0, %c0_i32_1 : i32, i32, i32
  }
  func.func @transform_9(%arg0: i32, %arg1: memref<2xi32, #tpu.memory_space<smem>>) -> (i32, i32, i32) {
    %c0_i32 = arith.constant 0 : i32
    %c0_i32_0 = arith.constant 0 : i32
    %c0_i32_1 = arith.constant 0 : i32
    %c0_i32_2 = arith.constant 0 : i32
    return %c0_i32, %c0_i32_0, %c0_i32_1 : i32, i32, i32
  }
  func.func @transform_10(%arg0: i32, %arg1: memref<2xi32, #tpu.memory_space<smem>>) -> (i32, i32, i32) {
    %c0_i32 = arith.constant 0 : i32
    %c0_i32_0 = arith.constant 0 : i32
    %c0_i32_1 = arith.constant 0 : i32
    %c0_i32_2 = arith.constant 0 : i32
    return %c0_i32, %c0_i32_0, %c0_i32_1 : i32, i32, i32
  }
  func.func @transform_11(%arg0: i32, %arg1: memref<2xi32, #tpu.memory_space<smem>>) -> (i32, i32, i32) {
    %c0_i32 = arith.constant 0 : i32
    %c0_i32_0 = arith.constant 0 : i32
    %c0_i32_1 = arith.constant 0 : i32
    return %arg0, %c0_i32, %c0_i32_0 : i32, i32, i32
  }
}

module attributes {stable_mosaic.version = 11 : i64} {
  func.func @_varpred_kernel(%arg0: i32, %arg1: memref<2xi32, #tpu.memory_space<smem>>, %arg2: memref<1x8x32xf32, #tpu.memory_space<vmem>>, %arg3: memref<1x96x32xbf16, #tpu.memory_space<vmem>>, %arg4: memref<1x1x32xf32, #tpu.memory_space<vmem>>, %arg5: memref<1x1x32xf32, #tpu.memory_space<vmem>>, %arg6: memref<1x1x32xf32, #tpu.memory_space<vmem>>, %arg7: memref<1x96x32xbf16, #tpu.memory_space<vmem>>, %arg8: memref<1x1x32xf32, #tpu.memory_space<vmem>>, %arg9: memref<1x1x32xf32, #tpu.memory_space<vmem>>, %arg10: memref<1x1x32xf32, #tpu.memory_space<vmem>>, %arg11: memref<1x1x32xf32, #tpu.memory_space<vmem>>, %arg12: memref<1x1x1xf32, #tpu.memory_space<vmem>>, %arg13: memref<1x1x8xf32, #tpu.memory_space<vmem>>) attributes {dimension_semantics = [#tpu.dimension_semantics<parallel>], iteration_bounds = array<i64: 2>, scalar_prefetch = 1 : i64, scratch_operands = 0 : i64, tpu.core_type = #tpu.core_type<tc>, window_params = [{transform_indices = @transform_0, window_bounds = array<i64: 1, 8, 32>}, {pipeline_mode = #tpu.pipeline_mode<synchronous>, transform_indices = @transform_1, window_bounds = array<i64: 1, 96, 32>}, {pipeline_mode = #tpu.pipeline_mode<synchronous>, transform_indices = @transform_2, window_bounds = array<i64: 1, 1, 32>}, {pipeline_mode = #tpu.pipeline_mode<synchronous>, transform_indices = @transform_3, window_bounds = array<i64: 1, 1, 32>}, {pipeline_mode = #tpu.pipeline_mode<synchronous>, transform_indices = @transform_4, window_bounds = array<i64: 1, 1, 32>}, {pipeline_mode = #tpu.pipeline_mode<synchronous>, transform_indices = @transform_5, window_bounds = array<i64: 1, 96, 32>}, {pipeline_mode = #tpu.pipeline_mode<synchronous>, transform_indices = @transform_6, window_bounds = array<i64: 1, 1, 32>}, {pipeline_mode = #tpu.pipeline_mode<synchronous>, transform_indices = @transform_7, window_bounds = array<i64: 1, 1, 32>}, {pipeline_mode = #tpu.pipeline_mode<synchronous>, transform_indices = @transform_8, window_bounds = array<i64: 1, 1, 32>}, {pipeline_mode = #tpu.pipeline_mode<synchronous>, transform_indices = @transform_9, window_bounds = array<i64: 1, 1, 32>}, {pipeline_mode = #tpu.pipeline_mode<synchronous>, transform_indices = @transform_10, window_bounds = array<i64: 1, 1, 1>}, {transform_indices = @transform_11, window_bounds = array<i64: 1, 1, 8>}]} {
    %0 = arith.index_cast %arg0 : i32 to index
    %1 = memref.load %arg1[%0] : memref<2xi32, #tpu.memory_space<smem>>
    %c0 = arith.constant 0 : index
    %c0_0 = arith.constant 0 : index
    %c0_1 = arith.constant 0 : index
    %2 = vector.load %arg2[%c0, %c0_0, %c0_1] : memref<1x8x32xf32, #tpu.memory_space<vmem>>, vector<1x8x32xf32>
    %3 = vector.shape_cast %2 : vector<1x8x32xf32> to vector<8x32xf32>
    %cst = arith.constant 0.000000e+00 : f32
    %4 = vector.broadcast %cst : f32 to vector<1x32xf32>
    %5 = tpu.concatenate %4, %3, %4 in 0 : vector<1x32xf32>, vector<8x32xf32>, vector<1x32xf32> -> vector<10x32xf32>
    %6 = vector.extract_strided_slice %5 {offsets = [0, 0], sizes = [8, 32], strides = [1, 1]} : vector<10x32xf32> to vector<8x32xf32>
    %7 = vector.extract_strided_slice %5 {offsets = [1, 0], sizes = [8, 32], strides = [1, 1]} : vector<10x32xf32> to vector<8x32xf32>
    %8 = vector.extract_strided_slice %5 {offsets = [2, 0], sizes = [8, 32], strides = [1, 1]} : vector<10x32xf32> to vector<8x32xf32>
    %9 = tpu.concatenate %6, %7, %8 in 1 : vector<8x32xf32>, vector<8x32xf32>, vector<8x32xf32> -> vector<8x96xf32>
    %10 = arith.truncf %9 : vector<8x96xf32> to vector<8x96xbf16>
    %11 = tpu.iota {dimensions = array<i32: 1>} : vector<1x8xi32>
    %c0_2 = arith.constant 0 : index
    %c0_3 = arith.constant 0 : index
    %c0_4 = arith.constant 0 : index
    %12 = vector.load %arg3[%c0_2, %c0_3, %c0_4] : memref<1x96x32xbf16, #tpu.memory_space<vmem>>, vector<1x96x32xbf16>
    %13 = vector.shape_cast %12 : vector<1x96x32xbf16> to vector<96x32xbf16>
    %cst_5 = arith.constant dense<0.000000e+00> : vector<8x32xf32>
    %14 = tpu.matmul %10, %13, %cst_5 {dimension_numbers = #tpu.dot_dimension_numbers<[1], [0], [0], [1], [0, 0, 1, 1], [], []>} : vector<8x96xbf16>, vector<96x32xbf16>, vector<8x32xf32> -> vector<8x32xf32>
    %c0_6 = arith.constant 0 : index
    %c0_7 = arith.constant 0 : index
    %c0_8 = arith.constant 0 : index
    %15 = vector.load %arg4[%c0_6, %c0_7, %c0_8] : memref<1x1x32xf32, #tpu.memory_space<vmem>>, vector<1x1x32xf32>
    %16 = vector.shape_cast %15 : vector<1x1x32xf32> to vector<1x32xf32>
    %17 = vector.broadcast %16 : vector<1x32xf32> to vector<8x32xf32>
    %18 = arith.addf %14, %17 : vector<8x32xf32>
    %cst_9 = arith.constant 0.000000e+00 : f32
    %19 = vector.broadcast %cst_9 : f32 to vector<8x32xf32>
    %20 = arith.maximumf %18, %19 : vector<8x32xf32>
    %c0_10 = arith.constant 0 : index
    %c0_11 = arith.constant 0 : index
    %c0_12 = arith.constant 0 : index
    %21 = vector.load %arg5[%c0_10, %c0_11, %c0_12] : memref<1x1x32xf32, #tpu.memory_space<vmem>>, vector<1x1x32xf32>
    %22 = vector.shape_cast %21 : vector<1x1x32xf32> to vector<1x32xf32>
    %c0_13 = arith.constant 0 : index
    %c0_14 = arith.constant 0 : index
    %c0_15 = arith.constant 0 : index
    %23 = vector.load %arg6[%c0_13, %c0_14, %c0_15] : memref<1x1x32xf32, #tpu.memory_space<vmem>>, vector<1x1x32xf32>
    %24 = vector.shape_cast %23 : vector<1x1x32xf32> to vector<1x32xf32>
    %cst_16 = arith.constant dense<0.000000e+00> : vector<8xf32>
    %25 = vector.multi_reduction <add>, %20, %cst_16 [1] : vector<8x32xf32> to vector<8xf32>
    %26 = vector.shape_cast %25 : vector<8xf32> to vector<8x1xf32>
    %cst_17 = arith.constant 3.200000e+01 : f32
    %27 = vector.broadcast %cst_17 : f32 to vector<8x1xf32>
    %28 = arith.divf %26, %27 : vector<8x1xf32>
    %29 = vector.broadcast %28 : vector<8x1xf32> to vector<8x32xf32>
    %30 = arith.subf %20, %29 : vector<8x32xf32>
    %31 = arith.mulf %30, %30 : vector<8x32xf32>
    %cst_18 = arith.constant dense<0.000000e+00> : vector<8xf32>
    %32 = vector.multi_reduction <add>, %31, %cst_18 [1] : vector<8x32xf32> to vector<8xf32>
    %33 = vector.shape_cast %32 : vector<8xf32> to vector<8x1xf32>
    %cst_19 = arith.constant 3.200000e+01 : f32
    %34 = vector.broadcast %cst_19 : f32 to vector<8x1xf32>
    %35 = arith.divf %33, %34 : vector<8x1xf32>
    %36 = vector.broadcast %28 : vector<8x1xf32> to vector<8x32xf32>
    %37 = arith.subf %20, %36 : vector<8x32xf32>
    %cst_20 = arith.constant 9.99999974E-6 : f32
    %38 = vector.broadcast %cst_20 : f32 to vector<8x1xf32>
    %39 = arith.addf %35, %38 : vector<8x1xf32>
    %40 = math.rsqrt %39 : vector<8x1xf32>
    %41 = vector.broadcast %40 : vector<8x1xf32> to vector<8x32xf32>
    %42 = arith.mulf %37, %41 : vector<8x32xf32>
    %43 = vector.broadcast %22 : vector<1x32xf32> to vector<8x32xf32>
    %44 = arith.mulf %42, %43 : vector<8x32xf32>
    %45 = vector.broadcast %24 : vector<1x32xf32> to vector<8x32xf32>
    %46 = arith.addf %44, %45 : vector<8x32xf32>
    %cst_21 = arith.constant 0.000000e+00 : f32
    %47 = vector.broadcast %cst_21 : f32 to vector<1x32xf32>
    %48 = tpu.concatenate %47, %46, %47 in 0 : vector<1x32xf32>, vector<8x32xf32>, vector<1x32xf32> -> vector<10x32xf32>
    %49 = vector.extract_strided_slice %48 {offsets = [0, 0], sizes = [8, 32], strides = [1, 1]} : vector<10x32xf32> to vector<8x32xf32>
    %50 = vector.extract_strided_slice %48 {offsets = [1, 0], sizes = [8, 32], strides = [1, 1]} : vector<10x32xf32> to vector<8x32xf32>
    %51 = vector.extract_strided_slice %48 {offsets = [2, 0], sizes = [8, 32], strides = [1, 1]} : vector<10x32xf32> to vector<8x32xf32>
    %52 = tpu.concatenate %49, %50, %51 in 1 : vector<8x32xf32>, vector<8x32xf32>, vector<8x32xf32> -> vector<8x96xf32>
    %53 = arith.truncf %52 : vector<8x96xf32> to vector<8x96xbf16>
    %c0_22 = arith.constant 0 : index
    %c0_23 = arith.constant 0 : index
    %c0_24 = arith.constant 0 : index
    %54 = vector.load %arg7[%c0_22, %c0_23, %c0_24] : memref<1x96x32xbf16, #tpu.memory_space<vmem>>, vector<1x96x32xbf16>
    %55 = vector.shape_cast %54 : vector<1x96x32xbf16> to vector<96x32xbf16>
    %cst_25 = arith.constant dense<0.000000e+00> : vector<8x32xf32>
    %56 = tpu.matmul %53, %55, %cst_25 {dimension_numbers = #tpu.dot_dimension_numbers<[1], [0], [0], [1], [0, 0, 1, 1], [], []>} : vector<8x96xbf16>, vector<96x32xbf16>, vector<8x32xf32> -> vector<8x32xf32>
    %c0_26 = arith.constant 0 : index
    %c0_27 = arith.constant 0 : index
    %c0_28 = arith.constant 0 : index
    %57 = vector.load %arg8[%c0_26, %c0_27, %c0_28] : memref<1x1x32xf32, #tpu.memory_space<vmem>>, vector<1x1x32xf32>
    %58 = vector.shape_cast %57 : vector<1x1x32xf32> to vector<1x32xf32>
    %59 = vector.broadcast %58 : vector<1x32xf32> to vector<8x32xf32>
    %60 = arith.addf %56, %59 : vector<8x32xf32>
    %cst_29 = arith.constant 0.000000e+00 : f32
    %61 = vector.broadcast %cst_29 : f32 to vector<8x32xf32>
    %62 = arith.maximumf %60, %61 : vector<8x32xf32>
    %c0_30 = arith.constant 0 : index
    %c0_31 = arith.constant 0 : index
    %c0_32 = arith.constant 0 : index
    %63 = vector.load %arg9[%c0_30, %c0_31, %c0_32] : memref<1x1x32xf32, #tpu.memory_space<vmem>>, vector<1x1x32xf32>
    %64 = vector.shape_cast %63 : vector<1x1x32xf32> to vector<1x32xf32>
    %c0_33 = arith.constant 0 : index
    %c0_34 = arith.constant 0 : index
    %c0_35 = arith.constant 0 : index
    %65 = vector.load %arg10[%c0_33, %c0_34, %c0_35] : memref<1x1x32xf32, #tpu.memory_space<vmem>>, vector<1x1x32xf32>
    %66 = vector.shape_cast %65 : vector<1x1x32xf32> to vector<1x32xf32>
    %cst_36 = arith.constant dense<0.000000e+00> : vector<8xf32>
    %67 = vector.multi_reduction <add>, %62, %cst_36 [1] : vector<8x32xf32> to vector<8xf32>
    %68 = vector.shape_cast %67 : vector<8xf32> to vector<8x1xf32>
    %cst_37 = arith.constant 3.200000e+01 : f32
    %69 = vector.broadcast %cst_37 : f32 to vector<8x1xf32>
    %70 = arith.divf %68, %69 : vector<8x1xf32>
    %71 = vector.broadcast %70 : vector<8x1xf32> to vector<8x32xf32>
    %72 = arith.subf %62, %71 : vector<8x32xf32>
    %73 = arith.mulf %72, %72 : vector<8x32xf32>
    %cst_38 = arith.constant dense<0.000000e+00> : vector<8xf32>
    %74 = vector.multi_reduction <add>, %73, %cst_38 [1] : vector<8x32xf32> to vector<8xf32>
    %75 = vector.shape_cast %74 : vector<8xf32> to vector<8x1xf32>
    %cst_39 = arith.constant 3.200000e+01 : f32
    %76 = vector.broadcast %cst_39 : f32 to vector<8x1xf32>
    %77 = arith.divf %75, %76 : vector<8x1xf32>
    %78 = vector.broadcast %70 : vector<8x1xf32> to vector<8x32xf32>
    %79 = arith.subf %62, %78 : vector<8x32xf32>
    %cst_40 = arith.constant 9.99999974E-6 : f32
    %80 = vector.broadcast %cst_40 : f32 to vector<8x1xf32>
    %81 = arith.addf %77, %80 : vector<8x1xf32>
    %82 = math.rsqrt %81 : vector<8x1xf32>
    %83 = vector.broadcast %82 : vector<8x1xf32> to vector<8x32xf32>
    %84 = arith.mulf %79, %83 : vector<8x32xf32>
    %85 = vector.broadcast %64 : vector<1x32xf32> to vector<8x32xf32>
    %86 = arith.mulf %84, %85 : vector<8x32xf32>
    %87 = vector.broadcast %66 : vector<1x32xf32> to vector<8x32xf32>
    %88 = arith.addf %86, %87 : vector<8x32xf32>
    %c0_41 = arith.constant 0 : index
    %c0_42 = arith.constant 0 : index
    %c0_43 = arith.constant 0 : index
    %89 = vector.load %arg11[%c0_41, %c0_42, %c0_43] : memref<1x1x32xf32, #tpu.memory_space<vmem>>, vector<1x1x32xf32>
    %90 = vector.shape_cast %89 : vector<1x1x32xf32> to vector<1x32xf32>
    %91 = arith.truncf %90 : vector<1x32xf32> to vector<1x32xbf16>
    %92 = arith.truncf %88 : vector<8x32xf32> to vector<8x32xbf16>
    %cst_44 = arith.constant dense<0.000000e+00> : vector<1x8xf32>
    %93 = tpu.matmul %91, %92, %cst_44 {dimension_numbers = #tpu.dot_dimension_numbers<[1], [1], [0], [0], [0, 0, 1, 0], [], []>} : vector<1x32xbf16>, vector<8x32xbf16>, vector<1x8xf32> -> vector<1x8xf32>
    %c0_45 = arith.constant 0 : index
    %c0_46 = arith.constant 0 : index
    %c0_47 = arith.constant 0 : index
    %94 = vector.load %arg12[%c0_45, %c0_46, %c0_47] : memref<1x1x1xf32, #tpu.memory_space<vmem>>, vector<1x1x1xf32>
    %95 = vector.shape_cast %94 : vector<1x1x1xf32> to vector<1x1xf32>
    %96 = vector.broadcast %95 : vector<1x1xf32> to vector<1x8xf32>
    %97 = arith.addf %93, %96 : vector<1x8xf32>
    %98 = vector.broadcast %1 : i32 to vector<1x8xi32>
    %99 = arith.cmpi sge, %11, %98 : vector<1x8xi32>
    %cst_48 = arith.constant 0.000000e+00 : f32
    %100 = vector.broadcast %cst_48 : f32 to vector<1x8xf32>
    %101 = arith.select %99, %100, %97 : vector<1x8xi1>, vector<1x8xf32>
    %c0_49 = arith.constant 0 : index
    %c0_50 = arith.constant 0 : index
    %c0_51 = arith.constant 0 : index
    %102 = vector.load %arg13[%c0_49, %c0_50, %c0_51] : memref<1x1x8xf32, #tpu.memory_space<vmem>>, vector<1x1x8xf32>
    %103 = vector.shape_cast %102 : vector<1x1x8xf32> to vector<1x8xf32>
    %104 = vector.shape_cast %101 : vector<1x8xf32> to vector<1x1x8xf32>
    tpu.vector_store %arg13[%c0_49, %c0_50, %c0_51], %104 {strides = array<i32>} : memref<1x1x8xf32, #tpu.memory_space<vmem>>, vector<1x1x8xf32>,
    return
  }
  func.func @transform_0(%arg0: i32, %arg1: memref<2xi32, #tpu.memory_space<smem>>) -> (i32, i32, i32) {
    %c0_i32 = arith.constant 0 : i32
    %c0_i32_0 = arith.constant 0 : i32
    %c0_i32_1 = arith.constant 0 : i32
    return %arg0, %c0_i32, %c0_i32_0 : i32, i32, i32
  }
  func.func @transform_1(%arg0: i32, %arg1: memref<2xi32, #tpu.memory_space<smem>>) -> (i32, i32, i32) {
    %c0_i32 = arith.constant 0 : i32
    %c0_i32_0 = arith.constant 0 : i32
    %c0_i32_1 = arith.constant 0 : i32
    %c0_i32_2 = arith.constant 0 : i32
    return %c0_i32, %c0_i32_0, %c0_i32_1 : i32, i32, i32
  }
  func.func @transform_2(%arg0: i32, %arg1: memref<2xi32, #tpu.memory_space<smem>>) -> (i32, i32, i32) {
    %c0_i32 = arith.constant 0 : i32
    %c0_i32_0 = arith.constant 0 : i32
    %c0_i32_1 = arith.constant 0 : i32
    %c0_i32_2 = arith.constant 0 : i32
    return %c0_i32, %c0_i32_0, %c0_i32_1 : i32, i32, i32
  }
  func.func @transform_3(%arg0: i32, %arg1: memref<2xi32, #tpu.memory_space<smem>>) -> (i32, i32, i32) {
    %c0_i32 = arith.constant 0 : i32
    %c0_i32_0 = arith.constant 0 : i32
    %c0_i32_1 = arith.constant 0 : i32
    %c0_i32_2 = arith.constant 0 : i32
    return %c0_i32, %c0_i32_0, %c0_i32_1 : i32, i32, i32
  }
  func.func @transform_4(%arg0: i32, %arg1: memref<2xi32, #tpu.memory_space<smem>>) -> (i32, i32, i32) {
    %c0_i32 = arith.constant 0 : i32
    %c0_i32_0 = arith.constant 0 : i32
    %c0_i32_1 = arith.constant 0 : i32
    %c0_i32_2 = arith.constant 0 : i32
    return %c0_i32, %c0_i32_0, %c0_i32_1 : i32, i32, i32
  }
  func.func @transform_5(%arg0: i32, %arg1: memref<2xi32, #tpu.memory_space<smem>>) -> (i32, i32, i32) {
    %c0_i32 = arith.constant 0 : i32
    %c0_i32_0 = arith.constant 0 : i32
    %c0_i32_1 = arith.constant 0 : i32
    %c0_i32_2 = arith.constant 0 : i32
    return %c0_i32, %c0_i32_0, %c0_i32_1 : i32, i32, i32
  }
  func.func @transform_6(%arg0: i32, %arg1: memref<2xi32, #tpu.memory_space<smem>>) -> (i32, i32, i32) {
    %c0_i32 = arith.constant 0 : i32
    %c0_i32_0 = arith.constant 0 : i32
    %c0_i32_1 = arith.constant 0 : i32
    %c0_i32_2 = arith.constant 0 : i32
    return %c0_i32, %c0_i32_0, %c0_i32_1 : i32, i32, i32
  }
  func.func @transform_7(%arg0: i32, %arg1: memref<2xi32, #tpu.memory_space<smem>>) -> (i32, i32, i32) {
    %c0_i32 = arith.constant 0 : i32
    %c0_i32_0 = arith.constant 0 : i32
    %c0_i32_1 = arith.constant 0 : i32
    %c0_i32_2 = arith.constant 0 : i32
    return %c0_i32, %c0_i32_0, %c0_i32_1 : i32, i32, i32
  }
  func.func @transform_8(%arg0: i32, %arg1: memref<2xi32, #tpu.memory_space<smem>>) -> (i32, i32, i32) {
    %c0_i32 = arith.constant 0 : i32
    %c0_i32_0 = arith.constant 0 : i32
    %c0_i32_1 = arith.constant 0 : i32
    %c0_i32_2 = arith.constant 0 : i32
    return %c0_i32, %c0_i32_0, %c0_i32_1 : i32, i32, i32
  }
  func.func @transform_9(%arg0: i32, %arg1: memref<2xi32, #tpu.memory_space<smem>>) -> (i32, i32, i32) {
    %c0_i32 = arith.constant 0 : i32
    %c0_i32_0 = arith.constant 0 : i32
    %c0_i32_1 = arith.constant 0 : i32
    %c0_i32_2 = arith.constant 0 : i32
    return %c0_i32, %c0_i32_0, %c0_i32_1 : i32, i32, i32
  }
  func.func @transform_10(%arg0: i32, %arg1: memref<2xi32, #tpu.memory_space<smem>>) -> (i32, i32, i32) {
    %c0_i32 = arith.constant 0 : i32
    %c0_i32_0 = arith.constant 0 : i32
    %c0_i32_1 = arith.constant 0 : i32
    %c0_i32_2 = arith.constant 0 : i32
    return %c0_i32, %c0_i32_0, %c0_i32_1 : i32, i32, i32
  }
  func.func @transform_11(%arg0: i32, %arg1: memref<2xi32, #tpu.memory_space<smem>>) -> (i32, i32, i32) {
    %c0_i32 = arith.constant 0 : i32
    %c0_i32_0 = arith.constant 0 : i32
    %c0_i32_1 = arith.constant 0 : i32
    return %arg0, %c0_i32, %c0_i32_0 : i32, i32, i32
  }
}

</mosaic_0001>

<llo_original>
// kernel: custom-call.2
$region0: #{custom-call.2}
  %s0 = inlined_call_operand.vmem [shape: u32[2,16], index: 0, kind: output, shape index: {}]

// kernel: ne.4
$region0: #{ne.4}
  #allocation0 [shape = 's32[1]{0}', space=sflag, size = 0x4, scoped, tag = 'scoped memory for ne.4']
  %s0 = inlined_call_operand.vmem [shape: f32[2,16], index: 0, kind: input, shape index: {}, may-alias: {0,1}]
  %s1 = inlined_call_operand.vmem [shape: f32[2,16], index: 1, kind: input, shape index: {}, may-alias: {0,1}]
  %s2 = inlined_call_operand.vmem [shape: pred[2,16], index: 2, kind: output, shape index: {}]
  %v3 = vld [vmem:[%s0] sm:$0x3]
  %v4 = vld [vmem:[%s1] sm:$0x3]
  %5 = xla_tuple %v3, %v4
  %6 = xla_tuple %5
  %vm7 = vcmp.ne.f32.partialorder %v3, %v4
  %v8 = vsel %vm7, 1, 0
  %9 = xla_tuple %v8
  %v10 = vpack.c.b16 0, %v8
  %v11 = vpack.c.b8 0, %v10
  %13 = vst [vmem:[%s2] sm:$0x1] %v11

// kernel: squeeze.15
$region0: #{squeeze.15}
  %s0 = inlined_call_operand.vmem [shape: f32[32], index: 0, kind: input, shape index: {}]
  %s1 = inlined_call_operand.vmem [shape: f32[2,16], index: 1, kind: output, shape index: {}]
  $region1: #{squeeze.15} parent=0
    #allocation0 [shape = 'u8[4096]{0}', space=vmem, size = 0x1000, scoped, tag = 'scoped mem for output reshape']
    #allocation1 [shape = 'u8[4096]{0}', space=vmem, size = 0x1000, scoped, tag = 'scoped mem for input reshape']
    %s3 = sshllo.u32 0, 1
    %v4 = vld [vmem:[%s0] sm:%s3]
    %5 = vst [vmem:[#allocation1] sm:%s3] %v4
    %v6 = vld [vmem:[#allocation1] sm:$0x1]
    %vm7 = vcmask 130048
    %8 = vst.msk [vmem:[#allocation0] sm:$0x1] %vm7, %v6
    %v9 = vld [vmem:[#allocation1] sm:$0x1]
    %10 = vrot.lane.b32.xlu0 %v9, 112
    %v11 = vpop.permute.xlu0 %10
    %vm12 = vcmask 130048
    %s13 = scalar_lea.vmem [#allocation0], 1
    %14 = vst.msk [vmem:[%s13] sm:$0x1] %vm12, %v11
    %s16 = sshllo.u32 0, 2
    %v18 = vld [vmem:[#allocation0] sm:%s16]
    %s19 = sshllo.u32 0, 2
    %20 = vst [vmem:[%s1] sm:%s19] %v18

// kernel: fastspeech2_forward.5
$region0: #{fastspeech2_forward.5}
  #allocation0 [shape = 'u32[]', space=smem, size = 0x4, offset = 0x4, fixed_abs, tag = 'smem constant byte address 0x4 - core index']
  #allocation1 [shape = 'u32[144,128]{1,0:T(1,128)}', space=vmem, size = 0x12000, scoped, tag = 'internal scratch']
  #allocation2 [shape = 's32[1]{0}', space=sflag, size = 0x4, scoped, tag = 'scoped memory for fastspeech2_forward.5']
  #allocation3 [shape = 'u8[512]{0}', space=smem, size = 0x200, scoped, tag = 'prefetched SMEM operand 0']
  %s0 = inlined_call_operand.vmem [shape: s32[2], index: 0, kind: input, shape index: {}]
  %s1 = inlined_call_operand.vmem [shape: f32[2,8,32], index: 1, kind: input, shape index: {}]
  %s2 = inlined_call_operand.vmem [shape: bf16[32,96], index: 2, kind: input, shape index: {}]
  %s3 = inlined_call_operand.vmem [shape: f32[1,96], index: 3, kind: input, shape index: {}]
  %s4 = inlined_call_operand.vmem [shape: bf16[32,32], index: 4, kind: input, shape index: {}]
  %s5 = inlined_call_operand.vmem [shape: f32[1,32], index: 5, kind: input, shape index: {}]
  %s6 = inlined_call_operand.vmem [shape: f32[1,32], index: 6, kind: input, shape index: {}]
  %s7 = inlined_call_operand.vmem [shape: f32[1,32], index: 7, kind: input, shape index: {}]
  %s8 = inlined_call_operand.vmem [shape: bf16[288,64], index: 8, kind: input, shape index: {}]
  %s9 = inlined_call_operand.vmem [shape: f32[1,64], index: 9, kind: input, shape index: {}]
  %s10 = inlined_call_operand.vmem [shape: bf16[64,32], index: 10, kind: input, shape index: {}]
  %s11 = inlined_call_operand.vmem [shape: f32[1,32], index: 11, kind: input, shape index: {}]
  %s12 = inlined_call_operand.vmem [shape: f32[1,32], index: 12, kind: input, shape index: {}]
  %s13 = inlined_call_operand.vmem [shape: f32[1,32], index: 13, kind: input, shape index: {}]
  %s14 = inlined_call_operand.vmem [shape: f32[2,8,32], index: 14, kind: output, shape index: {}]
  %s15 = sld [smem:[#allocation0]]
  $region85: #{fastspeech2_forward.5} parent=0
    _
  %s17 = ssub.s32 1, %s15
  %s18 = scalar_select 0, %s17, %s15
  %s19 = sshll.u32 %s0, 4
  %s20 = int_to_ptr.vmem [resolvable:$true] %s19
  %22 = dma.vmem_to_smem %s20, 16, [#allocation3], [#allocation2]
  %23 = dma.done [#allocation2], 16
  %24 = sfence
  loop: start=0, step=1, limit=4
  $region2: #{fastspeech2_forward.5} parent=0 // loop_pre_header
    _
  $region3: #{fastspeech2_forward.5} parent=0 // loop_header
    %s26 = sphi 0, %s30
    %p27 = scmp.ge.s32.totalorder %s26, 4
    %s36 = sphi 0, %s38
    %s39 = sphi 0, %s36
    %s40 = sphi 0, %s39
    %s56 = sphi 0, %s40
    %s60 = sphi 0, %s60
    %s62 = sphi 0, %s60
    %s63 = sphi 0, %s62
    %s77 = sphi 0, %s63
    %s81 = sphi 0, %s81
    %s83 = sphi 0, %s81
    %s84 = sphi 0, %s83
    %s98 = sphi 0, %s84
    %s102 = sphi 0, %s102
    %s104 = sphi 0, %s102
    %s105 = sphi 0, %s104
    %s119 = sphi 0, %s105
    %s123 = sphi 0, %s123
    %s125 = sphi 0, %s123
    %s126 = sphi 0, %s125
    %s140 = sphi 0, %s126
    %s144 = sphi 0, %s144
    %s146 = sphi 0, %s144
    %s147 = sphi 0, %s146
    %s161 = sphi 0, %s147
    %s165 = sphi 0, %s165
    %s167 = sphi 0, %s165
    %s168 = sphi 0, %s167
    %s182 = sphi 0, %s168
    %s186 = sphi 0, %s186
    %s188 = sphi 0, %s186
    %s189 = sphi 0, %s188
    %s203 = sphi 0, %s189
    %s207 = sphi 0, %s207
    %s209 = sphi 0, %s207
    %s210 = sphi 0, %s209
    %s224 = sphi 0, %s210
    %s228 = sphi 0, %s228
    %s230 = sphi 0, %s228
    %s231 = sphi 0, %s230
    %s245 = sphi 0, %s231
    %s249 = sphi 0, %s249
    %s251 = sphi 0, %s249
    %s252 = sphi 0, %s251
    %s266 = sphi 0, %s252
    %s270 = sphi 0, %s270
    %s272 = sphi 0, %s270
    %s273 = sphi 0, %s272
    %s287 = sphi 0, %s273
    %s291 = sphi 0, %s291
    %s293 = sphi 0, %s291
    %s294 = sphi 0, %s293
    %s308 = sphi 0, %s294
    %s314 = sphi 0, %s316
    %s317 = sphi 0, %s314
    %s318 = sphi 0, %s317
    %s334 = sphi 0, %s318
  $region4: #{fastspeech2_forward.5} parent=0 // loop_header_branch
    %29 = sbr.rel (%p27) target = $region8
  $region5: #{fastspeech2_forward.5} parent=0 // loop_body
    %s31 = ssub.s32 %s26, 1
    %s32 = ssub.s32 %s26, 2
    %s33 = sadd.s32 %s26, 1
    %s34 = ssub.s32 %s26, %s33
    %p35 = scmp.eq.s32.totalorder %s34, 0
    %s37 = sadd.s32 %s36, 1
    %s38 = scalar_select %p35, %s36, %s37
    %p41 = pneg %p35
    %p42 = scmp.eq.s32.totalorder %s26, 1
    %p43 = por %p41, %p42
    %p44 = scmp.ne.s32.totalorder %s36, %s39
    %p45 = scmp.eq.s32.totalorder %s26, 0
    %p46 = por %p44, %p45
    %p47 = scmp.ne.s32.totalorder %s36, %s39
    %p48 = scmp.eq.s32.totalorder %s31, 1
    %p49 = por %p47, %p48
    %p50 = scmp.ne.s32.totalorder %s39, %s40
    %p51 = scmp.eq.s32.totalorder %s31, 0
    %p52 = por %p50, %p51
    %p53 = scmp.ne.s32.totalorder %s39, %s40
    %p54 = scmp.eq.s32.totalorder %s32, 1
    %p55 = por %p53, %p54
    %p57 = scmp.ne.s32.totalorder %s40, %s56
    %p58 = scmp.eq.s32.totalorder %s32, 0
    %p59 = por %p57, %p58
    %s61 = sadd.s32 %s60, 1
    %p64 = scmp.eq.s32.totalorder %s26, 1
    %p65 = scmp.ne.s32.totalorder %s60, %s62
    %p66 = scmp.eq.s32.totalorder %s26, 0
    %p67 = por %p65, %p66
    %p68 = scmp.ne.s32.totalorder %s60, %s62
    %p69 = scmp.eq.s32.totalorder %s31, 1
    %p70 = por %p68, %p69
    %p71 = scmp.ne.s32.totalorder %s62, %s63
    %p72 = scmp.eq.s32.totalorder %s31, 0
    %p73 = por %p71, %p72
    %p74 = scmp.ne.s32.totalorder %s62, %s63
    %p75 = scmp.eq.s32.totalorder %s32, 1
    %p76 = por %p74, %p75
    %p78 = scmp.ne.s32.totalorder %s63, %s77
    %p79 = scmp.eq.s32.totalorder %s32, 0
    %p80 = por %p78, %p79
    %s82 = sadd.s32 %s81, 1
    %p85 = scmp.eq.s32.totalorder %s26, 1
    %p86 = scmp.ne.s32.totalorder %s81, %s83
    %p87 = scmp.eq.s32.totalorder %s26, 0
    %p88 = por %p86, %p87
    %p89 = scmp.ne.s32.totalorder %s81, %s83
    %p90 = scmp.eq.s32.totalorder %s31, 1
    %p91 = por %p89, %p90
    %p92 = scmp.ne.s32.totalorder %s83, %s84
    %p93 = scmp.eq.s32.totalorder %s31, 0
    %p94 = por %p92, %p93
    %p95 = scmp.ne.s32.totalorder %s83, %s84
    %p96 = scmp.eq.s32.totalorder %s32, 1
    %p97 = por %p95, %p96
    %p99 = scmp.ne.s32.totalorder %s84, %s98
    %p100 = scmp.eq.s32.totalorder %s32, 0
    %p101 = por %p99, %p100
    %s103 = sadd.s32 %s102, 1
    %p106 = scmp.eq.s32.totalorder %s26, 1
    %p107 = scmp.ne.s32.totalorder %s102, %s104
    %p108 = scmp.eq.s32.totalorder %s26, 0
    %p109 = por %p107, %p108
    %p110 = scmp.ne.s32.totalorder %s102, %s104
    %p111 = scmp.eq.s32.totalorder %s31, 1
    %p112 = por %p110, %p111
    %p113 = scmp.ne.s32.totalorder %s104, %s105
    %p114 = scmp.eq.s32.totalorder %s31, 0
    %p115 = por %p113, %p114
    %p116 = scmp.ne.s32.totalorder %s104, %s105
    %p117 = scmp.eq.s32.totalorder %s32, 1
    %p118 = por %p116, %p117
    %p120 = scmp.ne.s32.totalorder %s105, %s119
    %p121 = scmp.eq.s32.totalorder %s32, 0
    %p122 = por %p120, %p121
    %s124 = sadd.s32 %s123, 1
    %p127 = scmp.eq.s32.totalorder %s26, 1
    %p128 = scmp.ne.s32.totalorder %s123, %s125
    %p129 = scmp.eq.s32.totalorder %s26, 0
    %p130 = por %p128, %p129
    %p131 = scmp.ne.s32.totalorder %s123, %s125
    %p132 = scmp.eq.s32.totalorder %s31, 1
    %p133 = por %p131, %p132
    %p134 = scmp.ne.s32.totalorder %s125, %s126
    %p135 = scmp.eq.s32.totalorder %s31, 0
    %p136 = por %p134, %p135
    %p137 = scmp.ne.s32.totalorder %s125, %s126
    %p138 = scmp.eq.s32.totalorder %s32, 1
    %p139 = por %p137, %p138
    %p141 = scmp.ne.s32.totalorder %s126, %s140
    %p142 = scmp.eq.s32.totalorder %s32, 0
    %p143 = por %p141, %p142
    %s145 = sadd.s32 %s144, 1
    %p148 = scmp.eq.s32.totalorder %s26, 1
    %p149 = scmp.ne.s32.totalorder %s144, %s146
    %p150 = scmp.eq.s32.totalorder %s26, 0
    %p151 = por %p149, %p150
    %p152 = scmp.ne.s32.totalorder %s144, %s146
    %p153 = scmp.eq.s32.totalorder %s31, 1
    %p154 = por %p152, %p153
    %p155 = scmp.ne.s32.totalorder %s146, %s147
    %p156 = scmp.eq.s32.totalorder %s31, 0
    %p157 = por %p155, %p156
    %p158 = scmp.ne.s32.totalorder %s146, %s147
    %p159 = scmp.eq.s32.totalorder %s32, 1
    %p160 = por %p158, %p159
    %p162 = scmp.ne.s32.totalorder %s147, %s161
    %p163 = scmp.eq.s32.totalorder %s32, 0
    %p164 = por %p162, %p163
    %s166 = sadd.s32 %s165, 1
    %p169 = scmp.eq.s32.totalorder %s26, 1
    %p170 = scmp.ne.s32.totalorder %s165, %s167
    %p171 = scmp.eq.s32.totalorder %s26, 0
    %p172 = por %p170, %p171
    %p173 = scmp.ne.s32.totalorder %s165, %s167
    %p174 = scmp.eq.s32.totalorder %s31, 1
    %p175 = por %p173, %p174
    %p176 = scmp.ne.s32.totalorder %s167, %s168
    %p177 = scmp.eq.s32.totalorder %s31, 0
    %p178 = por %p176, %p177
    %p179 = scmp.ne.s32.totalorder %s167, %s168
    %p180 = scmp.eq.s32.totalorder %s32, 1
    %p181 = por %p179, %p180
    %p183 = scmp.ne.s32.totalorder %s168, %s182
    %p184 = scmp.eq.s32.totalorder %s32, 0
    %p185 = por %p183, %p184
    %s187 = sadd.s32 %s186, 1
    %p190 = scmp.eq.s32.totalorder %s26, 1
    %p191 = scmp.ne.s32.totalorder %s186, %s188
    %p192 = scmp.eq.s32.totalorder %s26, 0
    %p193 = por %p191, %p192
    %p194 = scmp.ne.s32.totalorder %s186, %s188
    %p195 = scmp.eq.s32.totalorder %s31, 1
    %p196 = por %p194, %p195
    %p197 = scmp.ne.s32.totalorder %s188, %s189
    %p198 = scmp.eq.s32.totalorder %s31, 0
    %p199 = por %p197, %p198
    %p200 = scmp.ne.s32.totalorder %s188, %s189
    %p201 = scmp.eq.s32.totalorder %s32, 1
    %p202 = por %p200, %p201
    %p204 = scmp.ne.s32.totalorder %s189, %s203
    %p205 = scmp.eq.s32.totalorder %s32, 0
    %p206 = por %p204, %p205
    %s208 = sadd.s32 %s207, 1
    %p211 = scmp.eq.s32.totalorder %s26, 1
    %p212 = scmp.ne.s32.totalorder %s207, %s209
    %p213 = scmp.eq.s32.totalorder %s26, 0
    %p214 = por %p212, %p213
    %p215 = scmp.ne.s32.totalorder %s207, %s209
    %p216 = scmp.eq.s32.totalorder %s31, 1
    %p217 = por %p215, %p216
    %p218 = scmp.ne.s32.totalorder %s209, %s210
    %p219 = scmp.eq.s32.totalorder %s31, 0
    %p220 = por %p218, %p219
    %p221 = scmp.ne.s32.totalorder %s209, %s210
    %p222 = scmp.eq.s32.totalorder %s32, 1
    %p223 = por %p221, %p222
    %p225 = scmp.ne.s32.totalorder %s210, %s224
    %p226 = scmp.eq.s32.totalorder %s32, 0
    %p227 = por %p225, %p226
    %s229 = sadd.s32 %s228, 1
    %p232 = scmp.eq.s32.totalorder %s26, 1
    %p233 = scmp.ne.s32.totalorder %s228, %s230
    %p234 = scmp.eq.s32.totalorder %s26, 0
    %p235 = por %p233, %p234
    %p236 = scmp.ne.s32.totalorder %s228, %s230
    %p237 = scmp.eq.s32.totalorder %s31, 1
    %p238 = por %p236, %p237
    %p239 = scmp.ne.s32.totalorder %s230, %s231
    %p240 = scmp.eq.s32.totalorder %s31, 0
    %p241 = por %p239, %p240
    %p242 = scmp.ne.s32.totalorder %s230, %s231
    %p243 = scmp.eq.s32.totalorder %s32, 1
    %p244 = por %p242, %p243
    %p246 = scmp.ne.s32.totalorder %s231, %s245
    %p247 = scmp.eq.s32.totalorder %s32, 0
    %p248 = por %p246, %p247
    %s250 = sadd.s32 %s249, 1
    %p253 = scmp.eq.s32.totalorder %s26, 1
    %p254 = scmp.ne.s32.totalorder %s249, %s251
    %p255 = scmp.eq.s32.totalorder %s26, 0
    %p256 = por %p254, %p255
    %p257 = scmp.ne.s32.totalorder %s249, %s251
    %p258 = scmp.eq.s32.totalorder %s31, 1
    %p259 = por %p257, %p258
    %p260 = scmp.ne.s32.totalorder %s251, %s252
    %p261 = scmp.eq.s32.totalorder %s31, 0
    %p262 = por %p260, %p261
    %p263 = scmp.ne.s32.totalorder %s251, %s252
    %p264 = scmp.eq.s32.totalorder %s32, 1
    %p265 = por %p263, %p264
    %p267 = scmp.ne.s32.totalorder %s252, %s266
    %p268 = scmp.eq.s32.totalorder %s32, 0
    %p269 = por %p267, %p268
    %s271 = sadd.s32 %s270, 1
    %p274 = scmp.eq.s32.totalorder %s26, 1
    %p275 = scmp.ne.s32.totalorder %s270, %s272
    %p276 = scmp.eq.s32.totalorder %s26, 0
    %p277 = por %p275, %p276
    %p278 = scmp.ne.s32.totalorder %s270, %s272
    %p279 = scmp.eq.s32.totalorder %s31, 1
    %p280 = por %p278, %p279
    %p281 = scmp.ne.s32.totalorder %s272, %s273
    %p282 = scmp.eq.s32.totalorder %s31, 0
    %p283 = por %p281, %p282
    %p284 = scmp.ne.s32.totalorder %s272, %s273
    %p285 = scmp.eq.s32.totalorder %s32, 1
    %p286 = por %p284, %p285
    %p288 = scmp.ne.s32.totalorder %s273, %s287
    %p289 = scmp.eq.s32.totalorder %s32, 0
    %p290 = por %p288, %p289
    %s292 = sadd.s32 %s291, 1
    %p295 = scmp.eq.s32.totalorder %s26, 1
    %p296 = scmp.ne.s32.totalorder %s291, %s293
    %p297 = scmp.eq.s32.totalorder %s26, 0
    %p298 = por %p296, %p297
    %p299 = scmp.ne.s32.totalorder %s291, %s293
    %p300 = scmp.eq.s32.totalorder %s31, 1
    %p301 = por %p299, %p300
    %p302 = scmp.ne.s32.totalorder %s293, %s294
    %p303 = scmp.eq.s32.totalorder %s31, 0
    %p304 = por %p302, %p303
    %p305 = scmp.ne.s32.totalorder %s293, %s294
    %p306 = scmp.eq.s32.totalorder %s32, 1
    %p307 = por %p305, %p306
    %p309 = scmp.ne.s32.totalorder %s294, %s308
    %p310 = scmp.eq.s32.totalorder %s32, 0
    %p311 = por %p309, %p310
    %s312 = ssub.s32 %s26, %s33
    %p313 = scmp.eq.s32.totalorder %s312, 0
    %s315 = sadd.s32 %s314, 1
    %s316 = scalar_select %p313, %s314, %s315
    %p319 = pneg %p313
    %p320 = scmp.eq.s32.totalorder %s26, 1
    %p321 = por %p319, %p320
    %p322 = scmp.ne.s32.totalorder %s314, %s317
    %p323 = scmp.eq.s32.totalorder %s26, 0
    %p324 = por %p322, %p323
    %p325 = scmp.ne.s32.totalorder %s314, %s317
    %p326 = scmp.eq.s32.totalorder %s31, 1
    %p327 = por %p325, %p326
    %p328 = scmp.ne.s32.totalorder %s317, %s318
    %p329 = scmp.eq.s32.totalorder %s31, 0
    %p330 = por %p328, %p329
    %p331 = scmp.ne.s32.totalorder %s317, %s318
    %p332 = scmp.eq.s32.totalorder %s32, 1
    %p333 = por %p331, %p332
    %p335 = scmp.ne.s32.totalorder %s318, %s334
    %p336 = scmp.eq.s32.totalorder %s32, 0
    %p337 = por %p335, %p336
    %p338 = scmp.le.s32.totalorder 1, %s26
    %p339 = scmp.lt.s32.totalorder %s26, 3
    %p340 = pnand %p338, %p339
    %p341 = pneg %p340
    // Predicated region
    $region9: #{fastspeech2_forward.5} parent=5 // pred_check
      _
    $region10: #{fastspeech2_forward.5} parent=5 // pred_check_branch
      %343 = sbr.rel (%p340) target = $region12
    $region11: #{fastspeech2_forward.5} parent=5 // pred_region
      %s344 = ssub.s32 %s26, 1
      // Predicated region
      $region13: #{fastspeech2_forward.5} parent=11 // pred_check
        %p345 = pneg %p73
      $region14: #{fastspeech2_forward.5} parent=11 // pred_check_branch
        %347 = sbr.rel (%p345) target = $region16
      $region15: #{fastspeech2_forward.5} parent=11 // pred_region
        _
      $region16: #{fastspeech2_forward.5} parent=11 // pred_fallthru
        _
      // Predicated region
      $region17: #{fastspeech2_forward.5} parent=11 // pred_check
        %p348 = pneg %p94
      $region18: #{fastspeech2_forward.5} parent=11 // pred_check_branch
        %350 = sbr.rel (%p348) target = $region20
      $region19: #{fastspeech2_forward.5} parent=11 // pred_region
        _
      $region20: #{fastspeech2_forward.5} parent=11 // pred_fallthru
        _
      // Predicated region
      $region21: #{fastspeech2_forward.5} parent=11 // pred_check
        %p351 = pneg %p115
      $region22: #{fastspeech2_forward.5} parent=11 // pred_check_branch
        %353 = sbr.rel (%p351) target = $region24
      $region23: #{fastspeech2_forward.5} parent=11 // pred_region
        _
      $region24: #{fastspeech2_forward.5} parent=11 // pred_fallthru
        _
      // Predicated region
      $region25: #{fastspeech2_forward.5} parent=11 // pred_check
        %p354 = pneg %p136
      $region26: #{fastspeech2_forward.5} parent=11 // pred_check_branch
        %356 = sbr.rel (%p354) target = $region28
      $region27: #{fastspeech2_forward.5} parent=11 // pred_region
        _
      $region28: #{fastspeech2_forward.5} parent=11 // pred_fallthru
        _
      // Predicated region
      $region29: #{fastspeech2_forward.5} parent=11 // pred_check
        %p357 = pneg %p157
      $region30: #{fastspeech2_forward.5} parent=11 // pred_check_branch
        %359 = sbr.rel (%p357) target = $region32
      $region31: #{fastspeech2_forward.5} parent=11 // pred_region
        _
      $region32: #{fastspeech2_forward.5} parent=11 // pred_fallthru
        _
      // Predicated region
      $region33: #{fastspeech2_forward.5} parent=11 // pred_check
        %p360 = pneg %p178
      $region34: #{fastspeech2_forward.5} parent=11 // pred_check_branch
        %362 = sbr.rel (%p360) target = $region36
      $region35: #{fastspeech2_forward.5} parent=11 // pred_region
        _
      $region36: #{fastspeech2_forward.5} parent=11 // pred_fallthru
        _
      // Predicated region
      $region37: #{fastspeech2_forward.5} parent=11 // pred_check
        %p363 = pneg %p199
      $region38: #{fastspeech2_forward.5} parent=11 // pred_check_branch
        %365 = sbr.rel (%p363) target = $region40
      $region39: #{fastspeech2_forward.5} parent=11 // pred_region
        _
      $region40: #{fastspeech2_forward.5} parent=11 // pred_fallthru
        _
      // Predicated region
      $region41: #{fastspeech2_forward.5} parent=11 // pred_check
        %p366 = pneg %p220
      $region42: #{fastspeech2_forward.5} parent=11 // pred_check_branch
        %368 = sbr.rel (%p366) target = $region44
      $region43: #{fastspeech2_forward.5} parent=11 // pred_region
        _
      $region44: #{fastspeech2_forward.5} parent=11 // pred_fallthru
        _
      // Predicated region
      $region45: #{fastspeech2_forward.5} parent=11 // pred_check
        %p369 = pneg %p241
      $region46: #{fastspeech2_forward.5} parent=11 // pred_check_branch
        %371 = sbr.rel (%p369) target = $region48
      $region47: #{fastspeech2_forward.5} parent=11 // pred_region
        _
      $region48: #{fastspeech2_forward.5} parent=11 // pred_fallthru
        _
      // Predicated region
      $region49: #{fastspeech2_forward.5} parent=11 // pred_check
        %p372 = pneg %p262
      $region50: #{fastspeech2_forward.5} parent=11 // pred_check_branch
        %374 = sbr.rel (%p372) target = $region52
      $region51: #{fastspeech2_forward.5} parent=11 // pred_region
        _
      $region52: #{fastspeech2_forward.5} parent=11 // pred_fallthru
        _
      // Predicated region
      $region53: #{fastspeech2_forward.5} parent=11 // pred_check
        %p375 = pneg %p283
      $region54: #{fastspeech2_forward.5} parent=11 // pred_check_branch
        %377 = sbr.rel (%p375) target = $region56
      $region55: #{fastspeech2_forward.5} parent=11 // pred_region
        _
      $region56: #{fastspeech2_forward.5} parent=11 // pred_fallthru
        _
      // Predicated region
      $region57: #{fastspeech2_forward.5} parent=11 // pred_check
        %p378 = pneg %p304
      $region58: #{fastspeech2_forward.5} parent=11 // pred_check_branch
        %380 = sbr.rel (%p378) target = $region60
      $region59: #{fastspeech2_forward.5} parent=11 // pred_region
        _
      $region60: #{fastspeech2_forward.5} parent=11 // pred_fallthru
        _
    $region12: #{fastspeech2_forward.5} parent=5 // pred_fallthru
      _
    %p381 = scmp.lt.s32.totalorder %s26, 2
    // Predicated region
    $region61: #{fastspeech2_forward.5} parent=5 // pred_check
      %p382 = pneg %p381
    $region62: #{fastspeech2_forward.5} parent=5 // pred_check_branch
      %384 = sbr.rel (%p382) target = $region64
    $region63: #{fastspeech2_forward.5} parent=5 // pred_region
      // Predicated region
      $region65: #{fastspeech2_forward.5} parent=63 // pred_check
        %p385 = pneg %p46
      $region66: #{fastspeech2_forward.5} parent=63 // pred_check_branch
        %387 = sbr.rel (%p385) target = $region68
      $region67: #{fastspeech2_forward.5} parent=63 // pred_region
        %p388 = scmp.lt.s32.totalorder %s26, 1
        %s389 = scalar_select %p388, %s26, 1
        %s390 = smul.addr %s389, 8
        %s391 = scalar_lea.vmem %s1, %s390
      $region68: #{fastspeech2_forward.5} parent=63 // pred_fallthru
        _
    $region64: #{fastspeech2_forward.5} parent=5 // pred_fallthru
      _
    %p392 = scmp.le.s32.totalorder 1, %s26
    %p393 = scmp.lt.s32.totalorder %s26, 3
    %p394 = pnand %p392, %p393
    %p395 = pneg %p394
    // Predicated region
    $region69: #{fastspeech2_forward.5} parent=5 // pred_check
      _
    $region70: #{fastspeech2_forward.5} parent=5 // pred_check_branch
      %397 = sbr.rel (%p394) target = $region72
    $region71: #{fastspeech2_forward.5} parent=5 // pred_region
      %s398 = ssub.s32 %s26, 1
      %p399 = scmp.lt.s32.totalorder %s31, 1
      %s400 = scalar_select %p399, %s31, 1
      %s401 = smul.addr %s400, 8
      %s402 = scalar_lea.vmem %s1, %s401
      %p403 = pneg %p52
      %p404 = pneg %p49
      %p405 = pneg %p73
      %p406 = pneg %p70
      %p407 = pneg %p94
      %p408 = pneg %p91
      %p409 = pneg %p115
      %p410 = pneg %p112
      %p411 = pneg %p136
      %p412 = pneg %p133
      %p413 = pneg %p157
      %p414 = pneg %p154
      %p415 = pneg %p178
      %p416 = pneg %p175
      %p417 = pneg %p199
      %p418 = pneg %p196
      %p419 = pneg %p220
      %p420 = pneg %p217
      %p421 = pneg %p241
      %p422 = pneg %p238
      %p423 = pneg %p262
      %p424 = pneg %p259
      %p425 = pneg %p283
      %p426 = pneg %p280
      %p427 = pneg %p304
      %p428 = pneg %p301
      %p429 = pneg %p330
      %p430 = pneg %p327
      %p431 = scmp.lt.s32.totalorder %s31, 1
      %s432 = scalar_select %p431, %s31, 1
      %s433 = smul.addr %s432, 8
      %s434 = scalar_lea.vmem %s14, %s433
      %p435 = scmp.lt.s32.totalorder %s31, 1
      %s436 = scalar_select %p435, %s31, 1
      %s437 = smul.addr %s436, 8
      %s438 = scalar_lea.vmem %s1, %s437
      %p439 = scmp.lt.s32.totalorder %s31, 1
      %s440 = scalar_select %p439, %s31, 1
      %s441 = smul.addr %s440, 8
      %s442 = scalar_lea.vmem %s14, %s441
      %s444 = sld [smem:[#allocation3 + %s31]]
      %v445 = vld [vmem:[%s438] sm:$0xff]
      %v446 = vpack.c.bf16 %v445, %v445
      %v447 = vld [vmem:[%s2] sm:$0xf]
      %v448 = vld [vmem:[%s2 + $0x4] sm:$0xf]
      %v449 = vld [vmem:[%s2 + $0x8] sm:$0xf]
      %v450 = vld [vmem:[%s2 + $0xc] sm:$0xf]
      %v451 = vld [vmem:[%s3] sm:$0x1]
      %v453 = vlaneseq
      %v454 = vshrl.u32 %v453, 7
      %v455 = vsub.s32 0, %v454
      %v456 = vrot.slane %v451, %v455
      %v462 = vunpack.c.l.b16 %v447
      %v463 = vunpack.c.l.b16 %v448
      %v464 = vunpack.c.l.b16 %v449
      %v465 = vunpack.c.l.b16 %v450
      %v466 = vpack.c.b16 %v463, %v462
      %v467 = vpack.c.b16 %v465, %v464
      %vm470 = vcmask 261120
      %v472 = vsel %vm470, %v446, 0
      %474 = vmatprep.subr.bf16.mxu0 0
      %475 = vmatpush1.bf16.msra.mxu0 %v466
      %476 = vmatprep.subr.bf16.mxu0 0
      %477 = vmatpush1.bf16.msra.mxu0 %v467
      %478 = vmatprep.subr.bf16.mxu0 0
      %479 = vmatpush1.bf16.msra.mxu0 0
      %480 = vmatprep.subr.bf16.mxu0 0
      %481 = vmatpush1.bf16.msra.mxu0 0
      %482 = vmatprep.subr.bf16.mxu0 0
      %483 = vmatpush1.bf16.msra.mxu0 0
      %484 = vmatprep.subr.bf16.mxu0 0
      %485 = vmatpush1.bf16.msra.mxu0 0
      %486 = vmatprep.subr.bf16.mxu0 0
      %487 = vmatpush1.bf16.msra.mxu0 0
      %488 = vmatprep.subr.bf16.mxu0 0
      %489 = vmatpush1.bf16.msra.mxu0 0
      %490 = vmatprep.subr.bf16.mxu0 0
      %491 = vmatpush1.bf16.msra.mxu0 0
      %492 = vmatprep.subr.bf16.mxu0 0
      %493 = vmatpush1.bf16.msra.mxu0 0
      %494 = vmatprep.subr.bf16.mxu0 0
      %495 = vmatpush1.bf16.msra.mxu0 0
      %496 = vmatprep.subr.bf16.mxu0 0
      %497 = vmatpush1.bf16.msra.mxu0 0
      %498 = vmatprep.subr.bf16.mxu0 0
      %499 = vmatpush1.bf16.msra.mxu0 0
      %500 = vmatprep.subr.bf16.mxu0 0
      %501 = vmatpush1.bf16.msra.mxu0 0
      %502 = vmatprep.subr.bf16.mxu0 0
      %503 = vmatpush1.bf16.msra.mxu0 0
      %504 = vmatprep.subr.bf16.mxu0 0
      %505 = vmatpush1.bf16.msra.mxu0 0
      %506 = vmatprep.mubr.bf16.mxu0 0
      %507 = vmatmul.mubr.bf16.gmra.mrb[0].mxu0 %v472
      %v508 = vpop.f32.mrb[0].mxu0
      %v509 = vadd.f32 %v456, %v508
      %v510 = vpop.f32.mrb[0].mxu0
      %v511 = vpop.f32.mrb[0].mxu0
      %v512 = vpop.f32.mrb[0].mxu0
      %513 = vdwg.mxu0
      %v514 = vlaneseq
      %v515 = vand.u32 %v514, 127
      %v516 = vstv %s444
      %vm517 = vcmp.ge.s32.totalorder %v515, %v516
      %v518 = vpack.c.bf16 %v509, %v509
      %520 = vrot.lane.b32.xlu0 %v518, 96
      %v521 = vpop.permute.xlu0 %520
      %vm522 = vcmask 130048
      %v524 = vsel %vm522, %v518, 0
      %v527 = vsel %vm522, %v521, 0
      %529 = vmatprep.subr.bf16.mxu0 0
      %530 = vmatpush1.bf16.xpose.msra.mxu0 %v527
      %531 = vmatprep.subr.bf16.mxu0 0
      %532 = vmatpush1.bf16.xpose.msra.mxu0 0
      %533 = vmatprep.subr.bf16.mxu0 0
      %534 = vmatpush1.bf16.xpose.msra.mxu0 0
      %535 = vmatprep.subr.bf16.mxu0 0
      %536 = vmatpush1.bf16.xpose.msra.mxu0 0
      %537 = vmatprep.subr.bf16.mxu0 0
      %538 = vmatpush1.bf16.xpose.msra.mxu0 0
      %539 = vmatprep.subr.bf16.mxu0 0
      %540 = vmatpush1.bf16.xpose.msra.mxu0 0
      %541 = vmatprep.subr.bf16.mxu0 0
      %542 = vmatpush1.bf16.xpose.msra.mxu0 0
      %543 = vmatprep.subr.bf16.mxu0 0
      %544 = vmatpush1.bf16.xpose.msra.mxu0 0
      %545 = vmatprep.subr.bf16.mxu0 0
      %546 = vmatpush1.bf16.xpose.msra.mxu0 0
      %547 = vmatprep.subr.bf16.mxu0 0
      %548 = vmatpush1.bf16.xpose.msra.mxu0 0
      %549 = vmatprep.subr.bf16.mxu0 0
      %550 = vmatpush1.bf16.xpose.msra.mxu0 0
      %551 = vmatprep.subr.bf16.mxu0 0
      %552 = vmatpush1.bf16.xpose.msra.mxu0 0
      %553 = vmatprep.subr.bf16.mxu0 0
      %554 = vmatpush1.bf16.xpose.msra.mxu0 0
      %555 = vmatprep.subr.bf16.mxu0 0
      %556 = vmatpush1.bf16.xpose.msra.mxu0 0
      %557 = vmatprep.subr.bf16.mxu0 0
      %558 = vmatpush1.bf16.xpose.msra.mxu0 0
      %559 = vmatprep.subr.bf16.mxu0 0
      %560 = vmatpush1.bf16.xpose.msra.mxu0 0
      %561 = vmatprep.mubr.bf16.mxu0 0
      %562 = vmatmul.mubr.bf16.gmra.mrb[0].mxu0 %v524
      %v563 = vpop.f32.mrb[0].mxu0
      %v564 = vadd.f32 0.0, %v563
      %v565 = vpop.f32.mrb[0].mxu0
      %v566 = vpop.f32.mrb[0].mxu0
      %v567 = vpop.f32.mrb[0].mxu0
      %568 = vdwg.mxu0
      %v569 = vmul.f32 %v564, 0.25
      %v570 = vsel %vm517, -1e+30, %v569
      %vm571 = vcmask 64512
      %v572 = vsel %vm571, %v570, -inf
      %573 = vmax.xlane.f32.xlu0 %v572
      %v574 = vpop.xlane.xlu0 %573
      %v575 = vsub.f32 %v570, %v574
      %v576 = vmul.f32 %v575, 1.442695
      %v577 = vpow.pop %v576
      %v578 = vsel %vm571, %v577, 0.0
      %579 = vadd.xlane.f32.xlu0 %v578
      %v580 = vpop.xlane.xlu0 %579
      %v581 = vrcp.pop %v580
      %v582 = vmul.f32 %v577, %v581
      %v583 = vpack.c.bf16 %v582, %v582
      %584 = vrot.lane.b32.xlu0 %v518, 64
      %v585 = vpop.permute.xlu0 %584
      %v587 = vsel %vm571, %v583, 0
      %vm589 = vcmask 1043456
      %v591 = vsel %vm589, %v585, 0
      %593 = vmatprep.subr.bf16.mxu0 0
      %594 = vmatpush1.bf16.msra.mxu0 %v591
      %595 = vmatprep.subr.bf16.mxu0 0
      %596 = vmatpush1.bf16.msra.mxu0 0
      %597 = vmatprep.subr.bf16.mxu0 0
      %598 = vmatpush1.bf16.msra.mxu0 0
      %599 = vmatprep.subr.bf16.mxu0 0
      %600 = vmatpush1.bf16.msra.mxu0 0
      %601 = vmatprep.subr.bf16.mxu0 0
      %602 = vmatpush1.bf16.msra.mxu0 0
      %603 = vmatprep.subr.bf16.mxu0 0
      %604 = vmatpush1.bf16.msra.mxu0 0
      %605 = vmatprep.subr.bf16.mxu0 0
      %606 = vmatpush1.bf16.msra.mxu0 0
      %607 = vmatprep.subr.bf16.mxu0 0
      %608 = vmatpush1.bf16.msra.mxu0 0
      %609 = vmatprep.subr.bf16.mxu0 0
      %610 = vmatpush1.bf16.msra.mxu0 0
      %611 = vmatprep.subr.bf16.mxu0 0
      %612 = vmatpush1.bf16.msra.mxu0 0
      %613 = vmatprep.subr.bf16.mxu0 0
      %614 = vmatpush1.bf16.msra.mxu0 0
      %615 = vmatprep.subr.bf16.mxu0 0
      %616 = vmatpush1.bf16.msra.mxu0 0
      %617 = vmatprep.subr.bf16.mxu0 0
      %618 = vmatpush1.bf16.msra.mxu0 0
      %619 = vmatprep.subr.bf16.mxu0 0
      %620 = vmatpush1.bf16.msra.mxu0 0
      %621 = vmatprep.subr.bf16.mxu0 0
      %622 = vmatpush1.bf16.msra.mxu0 0
      %623 = vmatprep.subr.bf16.mxu0 0
      %624 = vmatpush1.bf16.msra.mxu0 0
      %625 = vmatprep.mubr.bf16.mxu0 0
      %626 = vmatmul.mubr.bf16.gmra.mrb[0].mxu0 %v587
      %v627 = vpop.f32.mrb[0].mxu0
      %v628 = vadd.f32 0.0, %v627
      %v629 = vpop.f32.mrb[0].mxu0
      %v630 = vpop.f32.mrb[0].mxu0
      %v631 = vpop.f32.mrb[0].mxu0
      %632 = vdwg.mxu0
      %633 = vrot.lane.b32.xlu0 %v518, 112
      %v634 = vpop.permute.xlu0 %633
      %635 = vrot.lane.b32.xlu0 %v518, 80
      %v636 = vpop.permute.xlu0 %635
      %v638 = vsel %vm522, %v634, 0
      %v641 = vsel %vm522, %v636, 0
      %643 = vmatprep.subr.bf16.mxu0 0
      %644 = vmatpush1.bf16.xpose.msra.mxu0 %v641
      %645 = vmatprep.subr.bf16.mxu0 0
      %646 = vmatpush1.bf16.xpose.msra.mxu0 0
      %647 = vmatprep.subr.bf16.mxu0 0
      %648 = vmatpush1.bf16.xpose.msra.mxu0 0
      %649 = vmatprep.subr.bf16.mxu0 0
      %650 = vmatpush1.bf16.xpose.msra.mxu0 0
      %651 = vmatprep.subr.bf16.mxu0 0
      %652 = vmatpush1.bf16.xpose.msra.mxu0 0
      %653 = vmatprep.subr.bf16.mxu0 0
      %654 = vmatpush1.bf16.xpose.msra.mxu0 0
      %655 = vmatprep.subr.bf16.mxu0 0
      %656 = vmatpush1.bf16.xpose.msra.mxu0 0
      %657 = vmatprep.subr.bf16.mxu0 0
      %658 = vmatpush1.bf16.xpose.msra.mxu0 0
      %659 = vmatprep.subr.bf16.mxu0 0
      %660 = vmatpush1.bf16.xpose.msra.mxu0 0
      %661 = vmatprep.subr.bf16.mxu0 0
      %662 = vmatpush1.bf16.xpose.msra.mxu0 0
      %663 = vmatprep.subr.bf16.mxu0 0
      %664 = vmatpush1.bf16.xpose.msra.mxu0 0
      %665 = vmatprep.subr.bf16.mxu0 0
      %666 = vmatpush1.bf16.xpose.msra.mxu0 0
      %667 = vmatprep.subr.bf16.mxu0 0
      %668 = vmatpush1.bf16.xpose.msra.mxu0 0
      %669 = vmatprep.subr.bf16.mxu0 0
      %670 = vmatpush1.bf16.xpose.msra.mxu0 0
      %671 = vmatprep.subr.bf16.mxu0 0
      %672 = vmatpush1.bf16.xpose.msra.mxu0 0
      %673 = vmatprep.subr.bf16.mxu0 0
      %674 = vmatpush1.bf16.xpose.msra.mxu0 0
      %675 = vmatprep.mubr.bf16.mxu0 0
      %676 = vmatmul.mubr.bf16.gmra.mrb[0].mxu0 %v638
      %v677 = vpop.f32.mrb[0].mxu0
      %v678 = vadd.f32 0.0, %v677
      %v679 = vpop.f32.mrb[0].mxu0
      %v680 = vpop.f32.mrb[0].mxu0
      %v681 = vpop.f32.mrb[0].mxu0
      %682 = vdwg.mxu0
      %v683 = vmul.f32 %v678, 0.25
      %v684 = vsel %vm517, -1e+30, %v683
      %v685 = vsel %vm571, %v684, -inf
      %686 = vmax.xlane.f32.xlu0 %v685
      %v687 = vpop.xlane.xlu0 %686
      %v688 = vsub.f32 %v684, %v687
      %v689 = vmul.f32 %v688, 1.442695
      %v690 = vpow.pop %v689
      %v691 = vsel %vm571, %v690, 0.0
      %692 = vadd.xlane.f32.xlu0 %v691
      %v693 = vpop.xlane.xlu0 %692
      %v694 = vrcp.pop %v693
      %v695 = vmul.f32 %v690, %v694
      %v696 = vpack.c.bf16 %v695, %v695
      %697 = vrot.lane.b32.xlu0 %v518, 48
      %v698 = vpop.permute.xlu0 %697
      %v700 = vsel %vm571, %v696, 0
      %v703 = vsel %vm589, %v698, 0
      %705 = vmatprep.subr.bf16.mxu0 0
      %706 = vmatpush1.bf16.msra.mxu0 %v703
      %707 = vmatprep.subr.bf16.mxu0 0
      %708 = vmatpush1.bf16.msra.mxu0 0
      %709 = vmatprep.subr.bf16.mxu0 0
      %710 = vmatpush1.bf16.msra.mxu0 0
      %711 = vmatprep.subr.bf16.mxu0 0
      %712 = vmatpush1.bf16.msra.mxu0 0
      %713 = vmatprep.subr.bf16.mxu0 0
      %714 = vmatpush1.bf16.msra.mxu0 0
      %715 = vmatprep.subr.bf16.mxu0 0
      %716 = vmatpush1.bf16.msra.mxu0 0
      %717 = vmatprep.subr.bf16.mxu0 0
      %718 = vmatpush1.bf16.msra.mxu0 0
      %719 = vmatprep.subr.bf16.mxu0 0
      %720 = vmatpush1.bf16.msra.mxu0 0
      %721 = vmatprep.subr.bf16.mxu0 0
      %722 = vmatpush1.bf16.msra.mxu0 0
      %723 = vmatprep.subr.bf16.mxu0 0
      %724 = vmatpush1.bf16.msra.mxu0 0
      %725 = vmatprep.subr.bf16.mxu0 0
      %726 = vmatpush1.bf16.msra.mxu0 0
      %727 = vmatprep.subr.bf16.mxu0 0
      %728 = vmatpush1.bf16.msra.mxu0 0
      %729 = vmatprep.subr.bf16.mxu0 0
      %730 = vmatpush1.bf16.msra.mxu0 0
      %731 = vmatprep.subr.bf16.mxu0 0
      %732 = vmatpush1.bf16.msra.mxu0 0
      %733 = vmatprep.subr.bf16.mxu0 0
      %734 = vmatpush1.bf16.msra.mxu0 0
      %735 = vmatprep.subr.bf16.mxu0 0
      %736 = vmatpush1.bf16.msra.mxu0 0
      %737 = vmatprep.mubr.bf16.mxu0 0
      %738 = vmatmul.mubr.bf16.gmra.mrb[0].mxu0 %v700
      %v739 = vpop.f32.mrb[0].mxu0
      %v740 = vadd.f32 0.0, %v739
      %v741 = vpop.f32.mrb[0].mxu0
      %v742 = vpop.f32.mrb[0].mxu0
      %v743 = vpop.f32.mrb[0].mxu0
      %744 = vdwg.mxu0
      %746 = vrot.lane.b32.xlu0 %v740, 16
      %v747 = vpop.permute.xlu0 %746
      %v749 = vsel %vm522, %v628, %v747
      %v750 = vpack.c.bf16 %v749, %v749
      %v751 = vld [vmem:[%s4] sm:$0xf]
      %v752 = vld [vmem:[%s4 + $0x4] sm:$0xf]
      %v753 = vld [vmem:[%s4 + $0x8] sm:$0xf]
      %v754 = vld [vmem:[%s4 + $0xc] sm:$0xf]
      %v755 = vld [vmem:[%s5] sm:$0x1]
      %v757 = vlaneseq
      %v758 = vshrl.u32 %v757, 7
      %v759 = vsub.s32 0, %v758
      %v760 = vrot.slane %v755, %v759
      %v766 = vunpack.c.l.b16 %v751
      %v767 = vunpack.c.l.b16 %v752
      %v768 = vunpack.c.l.b16 %v753
      %v769 = vunpack.c.l.b16 %v754
      %v770 = vpack.c.b16 %v767, %v766
      %v771 = vpack.c.b16 %v769, %v768
      %v775 = vsel %vm470, %v750, 0
      %777 = vmatprep.subr.bf16.mxu0 0
      %778 = vmatpush1.bf16.msra.mxu0 %v770
      %779 = vmatprep.subr.bf16.mxu0 0
      %780 = vmatpush1.bf16.msra.mxu0 %v771
      %781 = vmatprep.subr.bf16.mxu0 0
      %782 = vmatpush1.bf16.msra.mxu0 0
      %783 = vmatprep.subr.bf16.mxu0 0
      %784 = vmatpush1.bf16.msra.mxu0 0
      %785 = vmatprep.subr.bf16.mxu0 0
      %786 = vmatpush1.bf16.msra.mxu0 0
      %787 = vmatprep.subr.bf16.mxu0 0
      %788 = vmatpush1.bf16.msra.mxu0 0
      %789 = vmatprep.subr.bf16.mxu0 0
      %790 = vmatpush1.bf16.msra.mxu0 0
      %791 = vmatprep.subr.bf16.mxu0 0
      %792 = vmatpush1.bf16.msra.mxu0 0
      %793 = vmatprep.subr.bf16.mxu0 0
      %794 = vmatpush1.bf16.msra.mxu0 0
      %795 = vmatprep.subr.bf16.mxu0 0
      %796 = vmatpush1.bf16.msra.mxu0 0
      %797 = vmatprep.subr.bf16.mxu0 0
      %798 = vmatpush1.bf16.msra.mxu0 0
      %799 = vmatprep.subr.bf16.mxu0 0
      %800 = vmatpush1.bf16.msra.mxu0 0
      %801 = vmatprep.subr.bf16.mxu0 0
      %802 = vmatpush1.bf16.msra.mxu0 0
      %803 = vmatprep.subr.bf16.mxu0 0
      %804 = vmatpush1.bf16.msra.mxu0 0
      %805 = vmatprep.subr.bf16.mxu0 0
      %806 = vmatpush1.bf16.msra.mxu0 0
      %807 = vmatprep.subr.bf16.mxu0 0
      %808 = vmatpush1.bf16.msra.mxu0 0
      %809 = vmatprep.mubr.bf16.mxu0 0
      %810 = vmatmul.mubr.bf16.gmra.mrb[0].mxu0 %v775
      %v811 = vpop.f32.mrb[0].mxu0
      %v812 = vadd.f32 %v760, %v811
      %v813 = vpop.f32.mrb[0].mxu0
      %v814 = vpop.f32.mrb[0].mxu0
      %v815 = vpop.f32.mrb[0].mxu0
      %816 = vdwg.mxu0
      %v817 = vadd.f32 %v812, %v445
      %v818 = vld [vmem:[%s6] sm:$0x1]
      %v819 = vld [vmem:[%s7] sm:$0x1]
      %v820 = vsel %vm470, %v817, 0.0
      %821 = vadd.xlane.f32.xlu0 %v820
      %v822 = vpop.xlane.xlu0 %821
      %v823 = vrcp.pop 32.0
      %v824 = vmul.f32 %v822, %v823
      %v825 = vsub.f32 %v817, %v824
      %v826 = vmul.f32 %v825, %v825
      %v827 = vsel %vm470, %v826, 0.0
      %828 = vadd.xlane.f32.xlu0 %v827
      %v829 = vpop.xlane.xlu0 %828
      %v830 = vmul.f32 %v829, %v823
      %v831 = vadd.f32 %v830, 1e-05
      %v832 = vrsqrt.pop %v831
      %v833 = vmul.f32 %v825, %v832
      %v835 = vlaneseq
      %v836 = vshrl.u32 %v835, 7
      %v837 = vsub.s32 0, %v836
      %v838 = vrot.slane %v818, %v837
      %v840 = vmul.f32 %v833, %v838
      %v842 = vlaneseq
      %v843 = vshrl.u32 %v842, 7
      %v844 = vsub.s32 0, %v843
      %v845 = vrot.slane %v819, %v844
      %v847 = vadd.f32 %v840, %v845
      %v848 = vlaneseq
      %v849 = vshrl.u32 %v848, 7
      %vm850 = vcmp.ge.s32.totalorder %v849, %v516
      %v851 = vsel %vm850, 1, 0
      %vm852 = vcmp.eq.s32.totalorder %v851, 1
      %v853 = vsel %vm852, 0.0, %v847
      %v855 = vrot.slane %v853, 4
      %v857 = vsel %vm589, 0.0, %v855
      %v858 = vsel %vm589, %v855, 0.0
      %vm861 = vcmask 1046528
      %v862 = vrot.slane %v857, 1
      %v863 = vrot.slane %v858, 1
      %v864 = vsel %vm861, %v862, %v863
      %865 = vrot.lane.b32.xlu0 %v864, 32
      %v866 = vpop.permute.xlu0 %865
      %vm868 = vcmask 1045504
      %v869 = vrot.slane %v857, 2
      %v870 = vrot.slane %v858, 2
      %v871 = vsel %vm868, %v869, %v870
      %872 = vrot.lane.b32.xlu0 %v871, 64
      %v873 = vpop.permute.xlu0 %872
      %vm875 = vcmask 1044480
      %v876 = vrot.slane %v857, 3
      %v877 = vrot.slane %v858, 3
      %v878 = vsel %vm875, %v876, %v877
      %879 = vrot.lane.b32.xlu0 %v878, 96
      %v880 = vpop.permute.xlu0 %879
      %v882 = vrot.slane %v857, 4
      %v883 = vrot.slane %v858, 4
      %v884 = vsel %vm589, %v882, %v883
      %vm886 = vcmask 1042432
      %v887 = vrot.slane %v857, 5
      %v888 = vrot.slane %v858, 5
      %v889 = vsel %vm886, %v887, %v888
      %890 = vrot.lane.b32.xlu0 %v889, 32
      %v891 = vpop.permute.xlu0 %890
      %vm893 = vcmask 1041408
      %v894 = vrot.slane %v857, 6
      %v895 = vrot.slane %v858, 6
      %v896 = vsel %vm893, %v894, %v895
      %897 = vrot.lane.b32.xlu0 %v896, 64
      %v898 = vpop.permute.xlu0 %897
      %vm900 = vcmask 1040384
      %v901 = vrot.slane %v857, 7
      %v902 = vrot.slane %v858, 7
      %v903 = vsel %vm900, %v901, %v902
      %904 = vrot.lane.b32.xlu0 %v903, 96
      %v905 = vpop.permute.xlu0 %904
      %v907 = vsel %vm470, %v857, %v866
      %vm908 = vcmask 523264
      %v909 = vsel %vm908, %v907, %v873
      %vm910 = vcmask 785408
      %v911 = vsel %vm910, %v909, %v880
      %v912 = vsel %vm470, %v884, %v891
      %v913 = vsel %vm908, %v912, %v898
      %v914 = vsel %vm910, %v913, %v905
      %v915 = vpack.c.bf16 %v911, %v911
      %v916 = vpack.c.bf16 %v914, %v914
      %v917 = vpack.c.bf16 %v858, %v858
      %v918 = vld [vmem:[%s8] sm:$0xf]
      %v919 = vld [vmem:[%s8 + $0x4] sm:$0xf]
      %v920 = vld [vmem:[%s8 + $0x8] sm:$0xf]
      %v921 = vld [vmem:[%s8 + $0xc] sm:$0xf]
      %v922 = vld [vmem:[%s8 + $0x10] sm:$0xf]
      %v923 = vld [vmem:[%s8 + $0x14] sm:$0xf]
      %v924 = vld [vmem:[%s8 + $0x18] sm:$0xf]
      %v925 = vld [vmem:[%s8 + $0x1c] sm:$0xf]
      %v926 = vld [vmem:[%s8 + $0x20] sm:$0xf]
      %v927 = vld [vmem:[%s8 + $0x24] sm:$0xf]
      %v928 = vld [vmem:[%s8 + $0x28] sm:$0xf]
      %v929 = vld [vmem:[%s8 + $0x2c] sm:$0xf]
      %v930 = vld [vmem:[%s8 + $0x30] sm:$0xf]
      %v931 = vld [vmem:[%s8 + $0x34] sm:$0xf]
      %v932 = vld [vmem:[%s8 + $0x38] sm:$0xf]
      %v933 = vld [vmem:[%s8 + $0x3c] sm:$0xf]
      %v934 = vld [vmem:[%s8 + $0x40] sm:$0xf]
      %v935 = vld [vmem:[%s8 + $0x44] sm:$0xf]
      %v936 = vld [vmem:[%s8 + $0x48] sm:$0xf]
      %v937 = vld [vmem:[%s8 + $0x4c] sm:$0xf]
      %v938 = vld [vmem:[%s8 + $0x50] sm:$0xf]
      %v939 = vld [vmem:[%s8 + $0x54] sm:$0xf]
      %v940 = vld [vmem:[%s8 + $0x58] sm:$0xf]
      %v941 = vld [vmem:[%s8 + $0x5c] sm:$0xf]
      %v942 = vld [vmem:[%s8 + $0x60] sm:$0xf]
      %v943 = vld [vmem:[%s8 + $0x64] sm:$0xf]
      %v944 = vld [vmem:[%s8 + $0x68] sm:$0xf]
      %v945 = vld [vmem:[%s8 + $0x6c] sm:$0xf]
      %v946 = vld [vmem:[%s8 + $0x70] sm:$0xf]
      %v947 = vld [vmem:[%s8 + $0x74] sm:$0xf]
      %v948 = vld [vmem:[%s8 + $0x78] sm:$0xf]
      %v949 = vld [vmem:[%s8 + $0x7c] sm:$0xf]
      %v950 = vld [vmem:[%s8 + $0x80] sm:$0xf]
      %v951 = vld [vmem:[%s8 + $0x84] sm:$0xf]
      %v952 = vld [vmem:[%s8 + $0x88] sm:$0xf]
      %v953 = vld [vmem:[%s8 + $0x8c] sm:$0xf]
      %v954 = vld [vmem:[%s9] sm:$0x1]
      %v956 = vlaneseq
      %v957 = vshrl.u32 %v956, 7
      %v958 = vsub.s32 0, %v957
      %v959 = vrot.slane %v954, %v958
      %v997 = vunpack.c.l.b16 %v918
      %v998 = vunpack.c.l.b16 %v919
      %v999 = vunpack.c.l.b16 %v920
      %v1000 = vunpack.c.l.b16 %v921
      %v1001 = vunpack.c.l.b16 %v922
      %v1002 = vunpack.c.l.b16 %v923
      %v1003 = vunpack.c.l.b16 %v924
      %v1004 = vunpack.c.l.b16 %v925
      %v1005 = vunpack.c.l.b16 %v926
      %v1006 = vunpack.c.l.b16 %v927
      %v1007 = vunpack.c.l.b16 %v928
      %v1008 = vunpack.c.l.b16 %v929
      %v1009 = vunpack.c.l.b16 %v930
      %v1010 = vunpack.c.l.b16 %v931
      %v1011 = vunpack.c.l.b16 %v932
      %v1012 = vunpack.c.l.b16 %v933
      %v1013 = vunpack.c.l.b16 %v934
      %v1014 = vunpack.c.l.b16 %v935
      %v1015 = vunpack.c.l.b16 %v936
      %v1016 = vunpack.c.l.b16 %v937
      %v1017 = vunpack.c.l.b16 %v938
      %v1018 = vunpack.c.l.b16 %v939
      %v1019 = vunpack.c.l.b16 %v940
      %v1020 = vunpack.c.l.b16 %v941
      %v1021 = vunpack.c.l.b16 %v942
      %v1022 = vunpack.c.l.b16 %v943
      %v1023 = vunpack.c.l.b16 %v944
      %v1024 = vunpack.c.l.b16 %v945
      %v1025 = vunpack.c.l.b16 %v946
      %v1026 = vunpack.c.l.b16 %v947
      %v1027 = vunpack.c.l.b16 %v948
      %v1028 = vunpack.c.l.b16 %v949
      %v1029 = vunpack.c.l.b16 %v950
      %v1030 = vunpack.c.l.b16 %v951
      %v1031 = vunpack.c.l.b16 %v952
      %v1032 = vunpack.c.l.b16 %v953
      %v1033 = vpack.c.b16 %v998, %v997
      %v1034 = vpack.c.b16 %v1000, %v999
      %v1035 = vpack.c.b16 %v1002, %v1001
      %v1036 = vpack.c.b16 %v1004, %v1003
      %v1037 = vpack.c.b16 %v1006, %v1005
      %v1038 = vpack.c.b16 %v1008, %v1007
      %v1039 = vpack.c.b16 %v1010, %v1009
      %v1040 = vpack.c.b16 %v1012, %v1011
      %v1041 = vpack.c.b16 %v1014, %v1013
      %v1042 = vpack.c.b16 %v1016, %v1015
      %v1043 = vpack.c.b16 %v1018, %v1017
      %v1044 = vpack.c.b16 %v1020, %v1019
      %v1045 = vpack.c.b16 %v1022, %v1021
      %v1046 = vpack.c.b16 %v1024, %v1023
      %v1047 = vpack.c.b16 %v1026, %v1025
      %v1048 = vpack.c.b16 %v1028, %v1027
      %v1049 = vpack.c.b16 %v1030, %v1029
      %v1050 = vpack.c.b16 %v1032, %v1031
      %v1070 = vsel %vm470, %v917, 0
      %1072 = vmatprep.subr.bf16.mxu0 0
      %1073 = vmatpush1.bf16.msra.mxu0 %v1033
      %1074 = vmatprep.subr.bf16.mxu0 0
      %1075 = vmatpush1.bf16.msra.mxu0 %v1034
      %1076 = vmatprep.subr.bf16.mxu0 0
      %1077 = vmatpush1.bf16.msra.mxu0 %v1035
      %1078 = vmatprep.subr.bf16.mxu0 0
      %1079 = vmatpush1.bf16.msra.mxu0 %v1036
      %1080 = vmatprep.subr.bf16.mxu0 0
      %1081 = vmatpush1.bf16.msra.mxu0 %v1037
      %1082 = vmatprep.subr.bf16.mxu0 0
      %1083 = vmatpush1.bf16.msra.mxu0 %v1038
      %1084 = vmatprep.subr.bf16.mxu0 0
      %1085 = vmatpush1.bf16.msra.mxu0 %v1039
      %1086 = vmatprep.subr.bf16.mxu0 0
      %1087 = vmatpush1.bf16.msra.mxu0 %v1040
      %1088 = vmatprep.subr.bf16.mxu0 0
      %1089 = vmatpush1.bf16.msra.mxu0 %v1041
      %1090 = vmatprep.subr.bf16.mxu0 0
      %1091 = vmatpush1.bf16.msra.mxu0 %v1042
      %1092 = vmatprep.subr.bf16.mxu0 0
      %1093 = vmatpush1.bf16.msra.mxu0 %v1043
      %1094 = vmatprep.subr.bf16.mxu0 0
      %1095 = vmatpush1.bf16.msra.mxu0 %v1044
      %1096 = vmatprep.subr.bf16.mxu0 0
      %1097 = vmatpush1.bf16.msra.mxu0 %v1045
      %1098 = vmatprep.subr.bf16.mxu0 0
      %1099 = vmatpush1.bf16.msra.mxu0 %v1046
      %1100 = vmatprep.subr.bf16.mxu0 0
      %1101 = vmatpush1.bf16.msra.mxu0 %v1047
      %1102 = vmatprep.subr.bf16.mxu0 0
      %1103 = vmatpush1.bf16.msra.mxu0 %v1048
      %1104 = vmatprep.mubr.bf16.mxu0 %v916
      %1105 = vmatmul.mubr.bf16.gmra.mrb[0].mxu0 %v915
      %v1106 = vpop.f32.mrb[0].mxu0
      %v1107 = vadd.f32 %v959, %v1106
      %v1108 = vpop.f32.mrb[0].mxu0
      %v1109 = vpop.f32.mrb[0].mxu0
      %v1110 = vpop.f32.mrb[0].mxu0
      %1111 = vdwg.mxu0
      %1112 = vmatprep.subr.bf16.mxu0 0
      %1113 = vmatpush1.bf16.msra.mxu0 %v1049
      %1114 = vmatprep.subr.bf16.mxu0 0
      %1115 = vmatpush1.bf16.msra.mxu0 %v1050
      %1116 = vmatprep.subr.bf16.mxu0 0
      %1117 = vmatpush1.bf16.msra.mxu0 0
      %1118 = vmatprep.subr.bf16.mxu0 0
      %1119 = vmatpush1.bf16.msra.mxu0 0
      %1120 = vmatprep.subr.bf16.mxu0 0
      %1121 = vmatpush1.bf16.msra.mxu0 0
      %1122 = vmatprep.subr.bf16.mxu0 0
      %1123 = vmatpush1.bf16.msra.mxu0 0
      %1124 = vmatprep.subr.bf16.mxu0 0
      %1125 = vmatpush1.bf16.msra.mxu0 0
      %1126 = vmatprep.subr.bf16.mxu0 0
      %1127 = vmatpush1.bf16.msra.mxu0 0
      %1128 = vmatprep.subr.bf16.mxu0 0
      %1129 = vmatpush1.bf16.msra.mxu0 0
      %1130 = vmatprep.subr.bf16.mxu0 0
      %1131 = vmatpush1.bf16.msra.mxu0 0
      %1132 = vmatprep.subr.bf16.mxu0 0
      %1133 = vmatpush1.bf16.msra.mxu0 0
      %1134 = vmatprep.subr.bf16.mxu0 0
      %1135 = vmatpush1.bf16.msra.mxu0 0
      %1136 = vmatprep.subr.bf16.mxu0 0
      %1137 = vmatpush1.bf16.msra.mxu0 0
      %1138 = vmatprep.subr.bf16.mxu0 0
      %1139 = vmatpush1.bf16.msra.mxu0 0
      %1140 = vmatprep.subr.bf16.mxu0 0
      %1141 = vmatpush1.bf16.msra.mxu0 0
      %1142 = vmatprep.subr.bf16.mxu0 0
      %1143 = vmatpush1.bf16.msra.mxu0 0
      %1144 = vmatprep.mubr.bf16.mxu0 0
      %1145 = vmatmul.mubr.bf16.gmra.mrb[0].mxu0 %v1070
      %v1146 = vpop.f32.mrb[0].mxu0
      %v1147 = vadd.f32 %v1107, %v1146
      %v1148 = vpop.f32.mrb[0].mxu0
      %v1149 = vpop.f32.mrb[0].mxu0
      %v1150 = vpop.f32.mrb[0].mxu0
      %1151 = vdwg.mxu0
      %v1152 = vmax.f32 %v1147, 0.0
      %v1153 = vpack.c.bf16 %v1152, %v1152
      %v1154 = vld [vmem:[%s10] sm:$0xf]
      %v1155 = vld [vmem:[%s10 + $0x4] sm:$0xf]
      %v1156 = vld [vmem:[%s10 + $0x8] sm:$0xf]
      %v1157 = vld [vmem:[%s10 + $0xc] sm:$0xf]
      %v1158 = vld [vmem:[%s10 + $0x10] sm:$0xf]
      %v1159 = vld [vmem:[%s10 + $0x14] sm:$0xf]
      %v1160 = vld [vmem:[%s10 + $0x18] sm:$0xf]
      %v1161 = vld [vmem:[%s10 + $0x1c] sm:$0xf]
      %v1162 = vld [vmem:[%s11] sm:$0x1]
      %v1164 = vlaneseq
      %v1165 = vshrl.u32 %v1164, 7
      %v1166 = vsub.s32 0, %v1165
      %v1167 = vrot.slane %v1162, %v1166
      %v1177 = vunpack.c.l.b16 %v1154
      %v1178 = vunpack.c.l.b16 %v1155
      %v1179 = vunpack.c.l.b16 %v1156
      %v1180 = vunpack.c.l.b16 %v1157
      %v1181 = vunpack.c.l.b16 %v1158
      %v1182 = vunpack.c.l.b16 %v1159
      %v1183 = vunpack.c.l.b16 %v1160
      %v1184 = vunpack.c.l.b16 %v1161
      %v1185 = vpack.c.b16 %v1178, %v1177
      %v1186 = vpack.c.b16 %v1180, %v1179
      %v1187 = vpack.c.b16 %v1182, %v1181
      %v1188 = vpack.c.b16 %v1184, %v1183
      %v1194 = vsel %vm908, %v1153, 0
      %1196 = vmatprep.subr.bf16.mxu0 0
      %1197 = vmatpush1.bf16.msra.mxu0 %v1185
      %1198 = vmatprep.subr.bf16.mxu0 0
      %1199 = vmatpush1.bf16.msra.mxu0 %v1186
      %1200 = vmatprep.subr.bf16.mxu0 0
      %1201 = vmatpush1.bf16.msra.mxu0 %v1187
      %1202 = vmatprep.subr.bf16.mxu0 0
      %1203 = vmatpush1.bf16.msra.mxu0 %v1188
      %1204 = vmatprep.subr.bf16.mxu0 0
      %1205 = vmatpush1.bf16.msra.mxu0 0
      %1206 = vmatprep.subr.bf16.mxu0 0
      %1207 = vmatpush1.bf16.msra.mxu0 0
      %1208 = vmatprep.subr.bf16.mxu0 0
      %1209 = vmatpush1.bf16.msra.mxu0 0
      %1210 = vmatprep.subr.bf16.mxu0 0
      %1211 = vmatpush1.bf16.msra.mxu0 0
      %1212 = vmatprep.subr.bf16.mxu0 0
      %1213 = vmatpush1.bf16.msra.mxu0 0
      %1214 = vmatprep.subr.bf16.mxu0 0
      %1215 = vmatpush1.bf16.msra.mxu0 0
      %1216 = vmatprep.subr.bf16.mxu0 0
      %1217 = vmatpush1.bf16.msra.mxu0 0
      %1218 = vmatprep.subr.bf16.mxu0 0
      %1219 = vmatpush1.bf16.msra.mxu0 0
      %1220 = vmatprep.subr.bf16.mxu0 0
      %1221 = vmatpush1.bf16.msra.mxu0 0
      %1222 = vmatprep.subr.bf16.mxu0 0
      %1223 = vmatpush1.bf16.msra.mxu0 0
      %1224 = vmatprep.subr.bf16.mxu0 0
      %1225 = vmatpush1.bf16.msra.mxu0 0
      %1226 = vmatprep.subr.bf16.mxu0 0
      %1227 = vmatpush1.bf16.msra.mxu0 0
      %1228 = vmatprep.mubr.bf16.mxu0 0
      %1229 = vmatmul.mubr.bf16.gmra.mrb[0].mxu0 %v1194
      %v1230 = vpop.f32.mrb[0].mxu0
      %v1231 = vadd.f32 %v1167, %v1230
      %v1232 = vpop.f32.mrb[0].mxu0
      %v1233 = vpop.f32.mrb[0].mxu0
      %v1234 = vpop.f32.mrb[0].mxu0
      %1235 = vdwg.mxu0
      %v1236 = vadd.f32 %v1231, %v853
      %v1237 = vld [vmem:[%s12] sm:$0x1]
      %v1238 = vld [vmem:[%s13] sm:$0x1]
      %v1239 = vsel %vm470, %v1236, 0.0
      %1240 = vadd.xlane.f32.xlu0 %v1239
      %v1241 = vpop.xlane.xlu0 %1240
      %v1242 = vmul.f32 %v1241, %v823
      %v1243 = vsub.f32 %v1236, %v1242
      %v1244 = vmul.f32 %v1243, %v1243
      %v1245 = vsel %vm470, %v1244, 0.0
      %1246 = vadd.xlane.f32.xlu0 %v1245
      %v1247 = vpop.xlane.xlu0 %1246
      %v1248 = vmul.f32 %v1247, %v823
      %v1249 = vadd.f32 %v1248, 1e-05
      %v1250 = vrsqrt.pop %v1249
      %v1251 = vmul.f32 %v1243, %v1250
      %v1253 = vlaneseq
      %v1254 = vshrl.u32 %v1253, 7
      %v1255 = vsub.s32 0, %v1254
      %v1256 = vrot.slane %v1237, %v1255
      %v1258 = vmul.f32 %v1251, %v1256
      %v1260 = vlaneseq
      %v1261 = vshrl.u32 %v1260, 7
      %v1262 = vsub.s32 0, %v1261
      %v1263 = vrot.slane %v1238, %v1262
      %v1265 = vadd.f32 %v1258, %v1263
      %v1266 = vsel %vm852, 0.0, %v1265
      %1267 = vst.msk [vmem:[%s442] sm:$0xff] %vm470, %v1266
      %p1268 = scmp.lt.s32.totalorder %s31, 1
      %s1269 = scalar_select %p1268, %s31, 1
      %s1270 = smul.addr %s1269, 8
      %s1271 = scalar_lea.vmem %s14, %s1270
      // Predicated region
      $region73: #{fastspeech2_forward.5} parent=71 // pred_check
        %p1272 = pneg %p327
      $region74: #{fastspeech2_forward.5} parent=71 // pred_check_branch
        %1274 = sbr.rel (%p1272) target = $region76
      $region75: #{fastspeech2_forward.5} parent=71 // pred_region
        _
      $region76: #{fastspeech2_forward.5} parent=71 // pred_fallthru
        _
    $region72: #{fastspeech2_forward.5} parent=5 // pred_fallthru
      _
    %p1275 = scmp.le.s32.totalorder 2, %s26
    // Predicated region
    $region77: #{fastspeech2_forward.5} parent=5 // pred_check
      %p1276 = pneg %p1275
    $region78: #{fastspeech2_forward.5} parent=5 // pred_check_branch
      %1278 = sbr.rel (%p1276) target = $region80
    $region79: #{fastspeech2_forward.5} parent=5 // pred_region
      %s1279 = ssub.s32 %s26, 2
      // Predicated region
      $region81: #{fastspeech2_forward.5} parent=79 // pred_check
        %p1280 = pneg %p333
      $region82: #{fastspeech2_forward.5} parent=79 // pred_check_branch
        %1282 = sbr.rel (%p1280) target = $region84
      $region83: #{fastspeech2_forward.5} parent=79 // pred_region
        %p1283 = scmp.lt.s32.totalorder %s32, 1
        %s1284 = scalar_select %p1283, %s32, 1
        %s1285 = smul.addr %s1284, 8
        %s1286 = scalar_lea.vmem %s14, %s1285
      $region84: #{fastspeech2_forward.5} parent=79 // pred_fallthru
        _
    $region80: #{fastspeech2_forward.5} parent=5 // pred_fallthru
      _
  $region6: #{fastspeech2_forward.5} parent=0 // loop_footer
    %s30 = sadd.s32 1, %s26
  $region7: #{fastspeech2_forward.5} parent=0 // loop_footer_branch
    %25 = sbr.rel target = $region3
  $region8: #{fastspeech2_forward.5} parent=0 // loop_exit
    _

// kernel: fastspeech2_forward.9
$region0: #{fastspeech2_forward.9}
  #allocation0 [shape = 'u32[]', space=smem, size = 0x4, offset = 0x4, fixed_abs, tag = 'smem constant byte address 0x4 - core index']
  #allocation1 [shape = 'u32[144,128]{1,0:T(1,128)}', space=vmem, size = 0x12000, scoped, tag = 'internal scratch']
  %s0 = inlined_call_operand.vmem [shape: f32[2,16,16], index: 0, kind: input, shape index: {}]
  %s1 = inlined_call_operand.vmem [shape: bf16[80,32], index: 1, kind: input, shape index: {}]
  %s2 = inlined_call_operand.vmem [shape: f32[1,32], index: 2, kind: input, shape index: {}]
  %s3 = inlined_call_operand.vmem [shape: bf16[160,32], index: 3, kind: input, shape index: {}]
  %s4 = inlined_call_operand.vmem [shape: f32[1,32], index: 4, kind: input, shape index: {}]
  %s5 = inlined_call_operand.vmem [shape: bf16[160,32], index: 5, kind: input, shape index: {}]
  %s6 = inlined_call_operand.vmem [shape: f32[1,32], index: 6, kind: input, shape index: {}]
  %s7 = inlined_call_operand.vmem [shape: bf16[160,32], index: 7, kind: input, shape index: {}]
  %s8 = inlined_call_operand.vmem [shape: f32[1,32], index: 8, kind: input, shape index: {}]
  %s9 = inlined_call_operand.vmem [shape: bf16[160,16], index: 9, kind: input, shape index: {}]
  %s10 = inlined_call_operand.vmem [shape: f32[1,16], index: 10, kind: input, shape index: {}]
  %s11 = inlined_call_operand.hbm [shape: f32[2,16,16], index: 11, kind: output, shape index: {}]
  %s12 = sld [smem:[#allocation0]]
  $region77: #{fastspeech2_forward.9} parent=0
    _
  %s14 = ssub.s32 1, %s12
  %s15 = scalar_select 0, %s14, %s12
  $region1: #{fastspeech2_forward.9} parent=0
    #allocation2 [shape = 'u8[16384]{0}', space=vmem, size = 0x4000, scoped, tag = 'output window, operand 0']
    #allocation3 [shape = 's32[2]{0}', space=sflag, size = 0x8, scoped, tag = 'scoped memory for fastspeech2_forward.9']
    %16 = vsyncpa [#allocation3], 0
    %s17 = scalar_lea.sflag [#allocation3], 1
    %18 = vsyncpa %s17, 0
    loop: start=0, step=1, limit=4
    $region2: #{fastspeech2_forward.9} parent=1 // loop_pre_header
      _
    $region3: #{fastspeech2_forward.9} parent=1 // loop_header
      %s20 = sphi 0, %s24
      %p21 = scmp.ge.s32.totalorder %s20, 4
      %s30 = sphi 0, %s32
      %s33 = sphi 0, %s30
      %s34 = sphi 0, %s33
      %s50 = sphi 0, %s34
      %s54 = sphi 0, %s54
      %s56 = sphi 0, %s54
      %s57 = sphi 0, %s56
      %s71 = sphi 0, %s57
      %s75 = sphi 0, %s75
      %s77 = sphi 0, %s75
      %s78 = sphi 0, %s77
      %s92 = sphi 0, %s78
      %s96 = sphi 0, %s96
      %s98 = sphi 0, %s96
      %s99 = sphi 0, %s98
      %s113 = sphi 0, %s99
      %s117 = sphi 0, %s117
      %s119 = sphi 0, %s117
      %s120 = sphi 0, %s119
      %s134 = sphi 0, %s120
      %s138 = sphi 0, %s138
      %s140 = sphi 0, %s138
      %s141 = sphi 0, %s140
      %s155 = sphi 0, %s141
      %s159 = sphi 0, %s159
      %s161 = sphi 0, %s159
      %s162 = sphi 0, %s161
      %s176 = sphi 0, %s162
      %s180 = sphi 0, %s180
      %s182 = sphi 0, %s180
      %s183 = sphi 0, %s182
      %s197 = sphi 0, %s183
      %s201 = sphi 0, %s201
      %s203 = sphi 0, %s201
      %s204 = sphi 0, %s203
      %s218 = sphi 0, %s204
      %s222 = sphi 0, %s222
      %s224 = sphi 0, %s222
      %s225 = sphi 0, %s224
      %s239 = sphi 0, %s225
      %s243 = sphi 0, %s243
      %s245 = sphi 0, %s243
      %s246 = sphi 0, %s245
      %s260 = sphi 0, %s246
      %s266 = sphi 0, %s268
      %s269 = sphi 0, %s266
      %s270 = sphi 0, %s269
      %s286 = sphi 0, %s270
    $region4: #{fastspeech2_forward.9} parent=1 // loop_header_branch
      %23 = sbr.rel (%p21) target = $region8
    $region5: #{fastspeech2_forward.9} parent=1 // loop_body
      %s25 = ssub.s32 %s20, 1
      %s26 = ssub.s32 %s20, 2
      %s27 = sadd.s32 %s20, 1
      %s28 = ssub.s32 %s20, %s27
      %p29 = scmp.eq.s32.totalorder %s28, 0
      %s31 = sadd.s32 %s30, 1
      %s32 = scalar_select %p29, %s30, %s31
      %p35 = pneg %p29
      %p36 = scmp.eq.s32.totalorder %s20, 1
      %p37 = por %p35, %p36
      %p38 = scmp.ne.s32.totalorder %s30, %s33
      %p39 = scmp.eq.s32.totalorder %s20, 0
      %p40 = por %p38, %p39
      %p41 = scmp.ne.s32.totalorder %s30, %s33
      %p42 = scmp.eq.s32.totalorder %s25, 1
      %p43 = por %p41, %p42
      %p44 = scmp.ne.s32.totalorder %s33, %s34
      %p45 = scmp.eq.s32.totalorder %s25, 0
      %p46 = por %p44, %p45
      %p47 = scmp.ne.s32.totalorder %s33, %s34
      %p48 = scmp.eq.s32.totalorder %s26, 1
      %p49 = por %p47, %p48
      %p51 = scmp.ne.s32.totalorder %s34, %s50
      %p52 = scmp.eq.s32.totalorder %s26, 0
      %p53 = por %p51, %p52
      %s55 = sadd.s32 %s54, 1
      %p58 = scmp.eq.s32.totalorder %s20, 1
      %p59 = scmp.ne.s32.totalorder %s54, %s56
      %p60 = scmp.eq.s32.totalorder %s20, 0
      %p61 = por %p59, %p60
      %p62 = scmp.ne.s32.totalorder %s54, %s56
      %p63 = scmp.eq.s32.totalorder %s25, 1
      %p64 = por %p62, %p63
      %p65 = scmp.ne.s32.totalorder %s56, %s57
      %p66 = scmp.eq.s32.totalorder %s25, 0
      %p67 = por %p65, %p66
      %p68 = scmp.ne.s32.totalorder %s56, %s57
      %p69 = scmp.eq.s32.totalorder %s26, 1
      %p70 = por %p68, %p69
      %p72 = scmp.ne.s32.totalorder %s57, %s71
      %p73 = scmp.eq.s32.totalorder %s26, 0
      %p74 = por %p72, %p73
      %s76 = sadd.s32 %s75, 1
      %p79 = scmp.eq.s32.totalorder %s20, 1
      %p80 = scmp.ne.s32.totalorder %s75, %s77
      %p81 = scmp.eq.s32.totalorder %s20, 0
      %p82 = por %p80, %p81
      %p83 = scmp.ne.s32.totalorder %s75, %s77
      %p84 = scmp.eq.s32.totalorder %s25, 1
      %p85 = por %p83, %p84
      %p86 = scmp.ne.s32.totalorder %s77, %s78
      %p87 = scmp.eq.s32.totalorder %s25, 0
      %p88 = por %p86, %p87
      %p89 = scmp.ne.s32.totalorder %s77, %s78
      %p90 = scmp.eq.s32.totalorder %s26, 1
      %p91 = por %p89, %p90
      %p93 = scmp.ne.s32.totalorder %s78, %s92
      %p94 = scmp.eq.s32.totalorder %s26, 0
      %p95 = por %p93, %p94
      %s97 = sadd.s32 %s96, 1
      %p100 = scmp.eq.s32.totalorder %s20, 1
      %p101 = scmp.ne.s32.totalorder %s96, %s98
      %p102 = scmp.eq.s32.totalorder %s20, 0
      %p103 = por %p101, %p102
      %p104 = scmp.ne.s32.totalorder %s96, %s98
      %p105 = scmp.eq.s32.totalorder %s25, 1
      %p106 = por %p104, %p105
      %p107 = scmp.ne.s32.totalorder %s98, %s99
      %p108 = scmp.eq.s32.totalorder %s25, 0
      %p109 = por %p107, %p108
      %p110 = scmp.ne.s32.totalorder %s98, %s99
      %p111 = scmp.eq.s32.totalorder %s26, 1
      %p112 = por %p110, %p111
      %p114 = scmp.ne.s32.totalorder %s99, %s113
      %p115 = scmp.eq.s32.totalorder %s26, 0
      %p116 = por %p114, %p115
      %s118 = sadd.s32 %s117, 1
      %p121 = scmp.eq.s32.totalorder %s20, 1
      %p122 = scmp.ne.s32.totalorder %s117, %s119
      %p123 = scmp.eq.s32.totalorder %s20, 0
      %p124 = por %p122, %p123
      %p125 = scmp.ne.s32.totalorder %s117, %s119
      %p126 = scmp.eq.s32.totalorder %s25, 1
      %p127 = por %p125, %p126
      %p128 = scmp.ne.s32.totalorder %s119, %s120
      %p129 = scmp.eq.s32.totalorder %s25, 0
      %p130 = por %p128, %p129
      %p131 = scmp.ne.s32.totalorder %s119, %s120
      %p132 = scmp.eq.s32.totalorder %s26, 1
      %p133 = por %p131, %p132
      %p135 = scmp.ne.s32.totalorder %s120, %s134
      %p136 = scmp.eq.s32.totalorder %s26, 0
      %p137 = por %p135, %p136
      %s139 = sadd.s32 %s138, 1
      %p142 = scmp.eq.s32.totalorder %s20, 1
      %p143 = scmp.ne.s32.totalorder %s138, %s140
      %p144 = scmp.eq.s32.totalorder %s20, 0
      %p145 = por %p143, %p144
      %p146 = scmp.ne.s32.totalorder %s138, %s140
      %p147 = scmp.eq.s32.totalorder %s25, 1
      %p148 = por %p146, %p147
      %p149 = scmp.ne.s32.totalorder %s140, %s141
      %p150 = scmp.eq.s32.totalorder %s25, 0
      %p151 = por %p149, %p150
      %p152 = scmp.ne.s32.totalorder %s140, %s141
      %p153 = scmp.eq.s32.totalorder %s26, 1
      %p154 = por %p152, %p153
      %p156 = scmp.ne.s32.totalorder %s141, %s155
      %p157 = scmp.eq.s32.totalorder %s26, 0
      %p158 = por %p156, %p157
      %s160 = sadd.s32 %s159, 1
      %p163 = scmp.eq.s32.totalorder %s20, 1
      %p164 = scmp.ne.s32.totalorder %s159, %s161
      %p165 = scmp.eq.s32.totalorder %s20, 0
      %p166 = por %p164, %p165
      %p167 = scmp.ne.s32.totalorder %s159, %s161
      %p168 = scmp.eq.s32.totalorder %s25, 1
      %p169 = por %p167, %p168
      %p170 = scmp.ne.s32.totalorder %s161, %s162
      %p171 = scmp.eq.s32.totalorder %s25, 0
      %p172 = por %p170, %p171
      %p173 = scmp.ne.s32.totalorder %s161, %s162
      %p174 = scmp.eq.s32.totalorder %s26, 1
      %p175 = por %p173, %p174
      %p177 = scmp.ne.s32.totalorder %s162, %s176
      %p178 = scmp.eq.s32.totalorder %s26, 0
      %p179 = por %p177, %p178
      %s181 = sadd.s32 %s180, 1
      %p184 = scmp.eq.s32.totalorder %s20, 1
      %p185 = scmp.ne.s32.totalorder %s180, %s182
      %p186 = scmp.eq.s32.totalorder %s20, 0
      %p187 = por %p185, %p186
      %p188 = scmp.ne.s32.totalorder %s180, %s182
      %p189 = scmp.eq.s32.totalorder %s25, 1
      %p190 = por %p188, %p189
      %p191 = scmp.ne.s32.totalorder %s182, %s183
      %p192 = scmp.eq.s32.totalorder %s25, 0
      %p193 = por %p191, %p192
      %p194 = scmp.ne.s32.totalorder %s182, %s183
      %p195 = scmp.eq.s32.totalorder %s26, 1
      %p196 = por %p194, %p195
      %p198 = scmp.ne.s32.totalorder %s183, %s197
      %p199 = scmp.eq.s32.totalorder %s26, 0
      %p200 = por %p198, %p199
      %s202 = sadd.s32 %s201, 1
      %p205 = scmp.eq.s32.totalorder %s20, 1
      %p206 = scmp.ne.s32.totalorder %s201, %s203
      %p207 = scmp.eq.s32.totalorder %s20, 0
      %p208 = por %p206, %p207
      %p209 = scmp.ne.s32.totalorder %s201, %s203
      %p210 = scmp.eq.s32.totalorder %s25, 1
      %p211 = por %p209, %p210
      %p212 = scmp.ne.s32.totalorder %s203, %s204
      %p213 = scmp.eq.s32.totalorder %s25, 0
      %p214 = por %p212, %p213
      %p215 = scmp.ne.s32.totalorder %s203, %s204
      %p216 = scmp.eq.s32.totalorder %s26, 1
      %p217 = por %p215, %p216
      %p219 = scmp.ne.s32.totalorder %s204, %s218
      %p220 = scmp.eq.s32.totalorder %s26, 0
      %p221 = por %p219, %p220
      %s223 = sadd.s32 %s222, 1
      %p226 = scmp.eq.s32.totalorder %s20, 1
      %p227 = scmp.ne.s32.totalorder %s222, %s224
      %p228 = scmp.eq.s32.totalorder %s20, 0
      %p229 = por %p227, %p228
      %p230 = scmp.ne.s32.totalorder %s222, %s224
      %p231 = scmp.eq.s32.totalorder %s25, 1
      %p232 = por %p230, %p231
      %p233 = scmp.ne.s32.totalorder %s224, %s225
      %p234 = scmp.eq.s32.totalorder %s25, 0
      %p235 = por %p233, %p234
      %p236 = scmp.ne.s32.totalorder %s224, %s225
      %p237 = scmp.eq.s32.totalorder %s26, 1
      %p238 = por %p236, %p237
      %p240 = scmp.ne.s32.totalorder %s225, %s239
      %p241 = scmp.eq.s32.totalorder %s26, 0
      %p242 = por %p240, %p241
      %s244 = sadd.s32 %s243, 1
      %p247 = scmp.eq.s32.totalorder %s20, 1
      %p248 = scmp.ne.s32.totalorder %s243, %s245
      %p249 = scmp.eq.s32.totalorder %s20, 0
      %p250 = por %p248, %p249
      %p251 = scmp.ne.s32.totalorder %s243, %s245
      %p252 = scmp.eq.s32.totalorder %s25, 1
      %p253 = por %p251, %p252
      %p254 = scmp.ne.s32.totalorder %s245, %s246
      %p255 = scmp.eq.s32.totalorder %s25, 0
      %p256 = por %p254, %p255
      %p257 = scmp.ne.s32.totalorder %s245, %s246
      %p258 = scmp.eq.s32.totalorder %s26, 1
      %p259 = por %p257, %p258
      %p261 = scmp.ne.s32.totalorder %s246, %s260
      %p262 = scmp.eq.s32.totalorder %s26, 0
      %p263 = por %p261, %p262
      %s264 = ssub.s32 %s20, %s27
      %p265 = scmp.eq.s32.totalorder %s264, 0
      %s267 = sadd.s32 %s266, 1
      %s268 = scalar_select %p265, %s266, %s267
      %p271 = pneg %p265
      %p272 = scmp.eq.s32.totalorder %s20, 1
      %p273 = por %p271, %p272
      %p274 = scmp.ne.s32.totalorder %s266, %s269
      %p275 = scmp.eq.s32.totalorder %s20, 0
      %p276 = por %p274, %p275
      %p277 = scmp.ne.s32.totalorder %s266, %s269
      %p278 = scmp.eq.s32.totalorder %s25, 1
      %p279 = por %p277, %p278
      %p280 = scmp.ne.s32.totalorder %s269, %s270
      %p281 = scmp.eq.s32.totalorder %s25, 0
      %p282 = por %p280, %p281
      %p283 = scmp.ne.s32.totalorder %s269, %s270
      %p284 = scmp.eq.s32.totalorder %s26, 1
      %p285 = por %p283, %p284
      %p287 = scmp.ne.s32.totalorder %s270, %s286
      %p288 = scmp.eq.s32.totalorder %s26, 0
      %p289 = por %p287, %p288
      %p290 = scmp.le.s32.totalorder 1, %s20
      %p291 = scmp.lt.s32.totalorder %s20, 3
      %p292 = pnand %p290, %p291
      %p293 = pneg %p292
      // Predicated region
      $region9: #{fastspeech2_forward.9} parent=5 // pred_check
        _
      $region10: #{fastspeech2_forward.9} parent=5 // pred_check_branch
        %295 = sbr.rel (%p292) target = $region12
      $region11: #{fastspeech2_forward.9} parent=5 // pred_region
        %s296 = ssub.s32 %s20, 1
        // Predicated region
        $region13: #{fastspeech2_forward.9} parent=11 // pred_check
          %p297 = pneg %p67
        $region14: #{fastspeech2_forward.9} parent=11 // pred_check_branch
          %299 = sbr.rel (%p297) target = $region16
        $region15: #{fastspeech2_forward.9} parent=11 // pred_region
          _
        $region16: #{fastspeech2_forward.9} parent=11 // pred_fallthru
          _
        // Predicated region
        $region17: #{fastspeech2_forward.9} parent=11 // pred_check
          %p300 = pneg %p88
        $region18: #{fastspeech2_forward.9} parent=11 // pred_check_branch
          %302 = sbr.rel (%p300) target = $region20
        $region19: #{fastspeech2_forward.9} parent=11 // pred_region
          _
        $region20: #{fastspeech2_forward.9} parent=11 // pred_fallthru
          _
        // Predicated region
        $region21: #{fastspeech2_forward.9} parent=11 // pred_check
          %p303 = pneg %p109
        $region22: #{fastspeech2_forward.9} parent=11 // pred_check_branch
          %305 = sbr.rel (%p303) target = $region24
        $region23: #{fastspeech2_forward.9} parent=11 // pred_region
          _
        $region24: #{fastspeech2_forward.9} parent=11 // pred_fallthru
          _
        // Predicated region
        $region25: #{fastspeech2_forward.9} parent=11 // pred_check
          %p306 = pneg %p130
        $region26: #{fastspeech2_forward.9} parent=11 // pred_check_branch
          %308 = sbr.rel (%p306) target = $region28
        $region27: #{fastspeech2_forward.9} parent=11 // pred_region
          _
        $region28: #{fastspeech2_forward.9} parent=11 // pred_fallthru
          _
        // Predicated region
        $region29: #{fastspeech2_forward.9} parent=11 // pred_check
          %p309 = pneg %p151
        $region30: #{fastspeech2_forward.9} parent=11 // pred_check_branch
          %311 = sbr.rel (%p309) target = $region32
        $region31: #{fastspeech2_forward.9} parent=11 // pred_region
          _
        $region32: #{fastspeech2_forward.9} parent=11 // pred_fallthru
          _
        // Predicated region
        $region33: #{fastspeech2_forward.9} parent=11 // pred_check
          %p312 = pneg %p172
        $region34: #{fastspeech2_forward.9} parent=11 // pred_check_branch
          %314 = sbr.rel (%p312) target = $region36
        $region35: #{fastspeech2_forward.9} parent=11 // pred_region
          _
        $region36: #{fastspeech2_forward.9} parent=11 // pred_fallthru
          _
        // Predicated region
        $region37: #{fastspeech2_forward.9} parent=11 // pred_check
          %p315 = pneg %p193
        $region38: #{fastspeech2_forward.9} parent=11 // pred_check_branch
          %317 = sbr.rel (%p315) target = $region40
        $region39: #{fastspeech2_forward.9} parent=11 // pred_region
          _
        $region40: #{fastspeech2_forward.9} parent=11 // pred_fallthru
          _
        // Predicated region
        $region41: #{fastspeech2_forward.9} parent=11 // pred_check
          %p318 = pneg %p214
        $region42: #{fastspeech2_forward.9} parent=11 // pred_check_branch
          %320 = sbr.rel (%p318) target = $region44
        $region43: #{fastspeech2_forward.9} parent=11 // pred_region
          _
        $region44: #{fastspeech2_forward.9} parent=11 // pred_fallthru
          _
        // Predicated region
        $region45: #{fastspeech2_forward.9} parent=11 // pred_check
          %p321 = pneg %p235
        $region46: #{fastspeech2_forward.9} parent=11 // pred_check_branch
          %323 = sbr.rel (%p321) target = $region48
        $region47: #{fastspeech2_forward.9} parent=11 // pred_region
          _
        $region48: #{fastspeech2_forward.9} parent=11 // pred_fallthru
          _
        // Predicated region
        $region49: #{fastspeech2_forward.9} parent=11 // pred_check
          %p324 = pneg %p256
        $region50: #{fastspeech2_forward.9} parent=11 // pred_check_branch
          %326 = sbr.rel (%p324) target = $region52
        $region51: #{fastspeech2_forward.9} parent=11 // pred_region
          _
        $region52: #{fastspeech2_forward.9} parent=11 // pred_fallthru
          _
      $region12: #{fastspeech2_forward.9} parent=5 // pred_fallthru
        _
      %p327 = scmp.lt.s32.totalorder %s20, 2
      // Predicated region
      $region53: #{fastspeech2_forward.9} parent=5 // pred_check
        %p328 = pneg %p327
      $region54: #{fastspeech2_forward.9} parent=5 // pred_check_branch
        %330 = sbr.rel (%p328) target = $region56
      $region55: #{fastspeech2_forward.9} parent=5 // pred_region
        // Predicated region
        $region57: #{fastspeech2_forward.9} parent=55 // pred_check
          %p331 = pneg %p40
        $region58: #{fastspeech2_forward.9} parent=55 // pred_check_branch
          %333 = sbr.rel (%p331) target = $region60
        $region59: #{fastspeech2_forward.9} parent=55 // pred_region
          %p334 = scmp.lt.s32.totalorder %s20, 1
          %s335 = scalar_select %p334, %s20, 1
          %s336 = smul.addr %s335, 2
          %s337 = smul.addr %s336, 8
          %s338 = scalar_lea.vmem %s0, %s337
        $region60: #{fastspeech2_forward.9} parent=55 // pred_fallthru
          _
      $region56: #{fastspeech2_forward.9} parent=5 // pred_fallthru
        _
      %p339 = scmp.le.s32.totalorder 1, %s20
      %p340 = scmp.lt.s32.totalorder %s20, 3
      %p341 = pnand %p339, %p340
      %p342 = pneg %p341
      // Predicated region
      $region61: #{fastspeech2_forward.9} parent=5 // pred_check
        _
      $region62: #{fastspeech2_forward.9} parent=5 // pred_check_branch
        %344 = sbr.rel (%p341) target = $region64
      $region63: #{fastspeech2_forward.9} parent=5 // pred_region
        %s345 = ssub.s32 %s20, 1
        %p346 = scmp.lt.s32.totalorder %s25, 1
        %s347 = scalar_select %p346, %s25, 1
        %s348 = smul.addr %s347, 2
        %s349 = smul.addr %s348, 8
        %s350 = scalar_lea.vmem %s0, %s349
        %p351 = pneg %p46
        %p352 = pneg %p43
        %p353 = pneg %p67
        %p354 = pneg %p64
        %p355 = pneg %p88
        %p356 = pneg %p85
        %p357 = pneg %p109
        %p358 = pneg %p106
        %p359 = pneg %p130
        %p360 = pneg %p127
        %p361 = pneg %p151
        %p362 = pneg %p148
        %p363 = pneg %p172
        %p364 = pneg %p169
        %p365 = pneg %p193
        %p366 = pneg %p190
        %p367 = pneg %p214
        %p368 = pneg %p211
        %p369 = pneg %p235
        %p370 = pneg %p232
        %p371 = pneg %p256
        %p372 = pneg %p253
        %p373 = pneg %p282
        %p374 = pneg %p279
        %s375 = sand.u32 %s269, 1
        %s376 = scalar_lea.sflag [#allocation3], %s375
        %s377 = sand.u32 %s269, 1
        %s378 = smul.addr %s377, 16
        %s379 = scalar_lea.vmem [#allocation2], %s378
        %p380 = scmp.lt.s32.totalorder %s25, 1
        %s381 = scalar_select %p380, %s25, 1
        %s382 = smul.addr %s381, 2
        %s383 = smul.addr %s382, 8
        %s384 = scalar_lea.vmem %s0, %s383
        %v386 = vld [vmem:[%s384] sm:$0xff]
        %v387 = vld [vmem:[%s384 + $0x8] sm:$0xff]
        %vm390 = vcmask 1041408
        %v391 = vrot.slane %v386, 6
        %v392 = vrot.slane %v387, 6
        %v393 = vsel %vm390, %v391, %v392
        %v397 = vsel %vm390, 0.0, %v391
        %v398 = vsel %vm390, %v392, 0.0
        %vm401 = vcmask 1046528
        %v402 = vrot.slane %v397, 1
        %v403 = vrot.slane %v393, 1
        %v404 = vsel %vm401, %v402, %v403
        %v405 = vrot.slane %v398, 1
        %v406 = vsel %vm401, %v403, %v405
        %407 = vrot.lane.b32.xlu0 %v404, 16
        %v408 = vpop.permute.xlu0 %407
        %409 = vrot.lane.b32.xlu0 %v406, 16
        %v410 = vpop.permute.xlu0 %409
        %vm413 = vcmask 1045504
        %v414 = vrot.slane %v397, 2
        %v415 = vrot.slane %v393, 2
        %v416 = vsel %vm413, %v414, %v415
        %v417 = vrot.slane %v398, 2
        %v418 = vsel %vm413, %v415, %v417
        %419 = vrot.lane.b32.xlu0 %v416, 32
        %v420 = vpop.permute.xlu0 %419
        %421 = vrot.lane.b32.xlu0 %v418, 32
        %v422 = vpop.permute.xlu0 %421
        %vm425 = vcmask 1044480
        %v426 = vrot.slane %v397, 3
        %v427 = vrot.slane %v393, 3
        %v428 = vsel %vm425, %v426, %v427
        %v429 = vrot.slane %v398, 3
        %v430 = vsel %vm425, %v427, %v429
        %431 = vrot.lane.b32.xlu0 %v428, 48
        %v432 = vpop.permute.xlu0 %431
        %433 = vrot.lane.b32.xlu0 %v430, 48
        %v434 = vpop.permute.xlu0 %433
        %vm437 = vcmask 1043456
        %v438 = vrot.slane %v397, 4
        %v439 = vrot.slane %v393, 4
        %v440 = vsel %vm437, %v438, %v439
        %v441 = vrot.slane %v398, 4
        %v442 = vsel %vm437, %v439, %v441
        %443 = vrot.lane.b32.xlu0 %v440, 64
        %v444 = vpop.permute.xlu0 %443
        %445 = vrot.lane.b32.xlu0 %v442, 64
        %v446 = vpop.permute.xlu0 %445
        %vm449 = vcmask 130048
        %v450 = vsel %vm449, %v397, %v408
        %v451 = vsel %vm449, %v393, %v410
        %vm452 = vcmask 261120
        %v453 = vsel %vm452, %v450, %v420
        %v454 = vsel %vm452, %v451, %v422
        %vm455 = vcmask 392192
        %v456 = vsel %vm455, %v453, %v432
        %v457 = vsel %vm455, %v454, %v434
        %vm458 = vcmask 523264
        %v459 = vsel %vm458, %v456, %v444
        %v460 = vsel %vm458, %v457, %v446
        %v461 = vpack.c.bf16 %v460, %v459
        %v462 = vld [vmem:[%s1] sm:$0xf]
        %v463 = vld [vmem:[%s1 + $0x4] sm:$0xf]
        %v464 = vld [vmem:[%s1 + $0x8] sm:$0xf]
        %v465 = vld [vmem:[%s1 + $0xc] sm:$0xf]
        %v466 = vld [vmem:[%s1 + $0x10] sm:$0xf]
        %v467 = vld [vmem:[%s1 + $0x14] sm:$0xf]
        %v468 = vld [vmem:[%s1 + $0x18] sm:$0xf]
        %v469 = vld [vmem:[%s1 + $0x1c] sm:$0xf]
        %v470 = vld [vmem:[%s1 + $0x20] sm:$0xf]
        %v471 = vld [vmem:[%s1 + $0x24] sm:$0xf]
        %v472 = vld [vmem:[%s2] sm:$0x1]
        %v474 = vlaneseq
        %v475 = vshrl.u32 %v474, 7
        %v476 = vsub.s32 0, %v475
        %v477 = vrot.slane %v472, %v476
        %v489 = vunpack.c.l.b16 %v462
        %v490 = vunpack.c.l.b16 %v463
        %v491 = vunpack.c.l.b16 %v464
        %v492 = vunpack.c.l.b16 %v465
        %v493 = vunpack.c.l.b16 %v466
        %v494 = vunpack.c.l.b16 %v467
        %v495 = vunpack.c.l.b16 %v468
        %v496 = vunpack.c.l.b16 %v469
        %v497 = vunpack.c.l.b16 %v470
        %v498 = vunpack.c.l.b16 %v471
        %v499 = vpack.c.b16 %v490, %v489
        %v500 = vpack.c.b16 %v492, %v491
        %v501 = vpack.c.b16 %v494, %v493
        %v502 = vpack.c.b16 %v496, %v495
        %v503 = vpack.c.b16 %v498, %v497
        %vm509 = vcmask 654336
        %v511 = vsel %vm509, %v461, 0
        %513 = vmatprep.subr.bf16.mxu0 0
        %514 = vmatpush1.bf16.msra.mxu0 %v499
        %515 = vmatprep.subr.bf16.mxu0 0
        %516 = vmatpush1.bf16.msra.mxu0 %v500
        %517 = vmatprep.subr.bf16.mxu0 0
        %518 = vmatpush1.bf16.msra.mxu0 %v501
        %519 = vmatprep.subr.bf16.mxu0 0
        %520 = vmatpush1.bf16.msra.mxu0 %v502
        %521 = vmatprep.subr.bf16.mxu0 0
        %522 = vmatpush1.bf16.msra.mxu0 %v503
        %523 = vmatprep.subr.bf16.mxu0 0
        %524 = vmatpush1.bf16.msra.mxu0 0
        %525 = vmatprep.subr.bf16.mxu0 0
        %526 = vmatpush1.bf16.msra.mxu0 0
        %527 = vmatprep.subr.bf16.mxu0 0
        %528 = vmatpush1.bf16.msra.mxu0 0
        %529 = vmatprep.subr.bf16.mxu0 0
        %530 = vmatpush1.bf16.msra.mxu0 0
        %531 = vmatprep.subr.bf16.mxu0 0
        %532 = vmatpush1.bf16.msra.mxu0 0
        %533 = vmatprep.subr.bf16.mxu0 0
        %534 = vmatpush1.bf16.msra.mxu0 0
        %535 = vmatprep.subr.bf16.mxu0 0
        %536 = vmatpush1.bf16.msra.mxu0 0
        %537 = vmatprep.subr.bf16.mxu0 0
        %538 = vmatpush1.bf16.msra.mxu0 0
        %539 = vmatprep.subr.bf16.mxu0 0
        %540 = vmatpush1.bf16.msra.mxu0 0
        %541 = vmatprep.subr.bf16.mxu0 0
        %542 = vmatpush1.bf16.msra.mxu0 0
        %543 = vmatprep.subr.bf16.mxu0 0
        %544 = vmatpush1.bf16.msra.mxu0 0
        %545 = vmatprep.mubr.bf16.mxu0 0
        %546 = vmatmul.mubr.bf16.gmra.mrb[0].mxu0 %v511
        %v547 = vpop.f32.mrb[0].mxu0
        %v548 = vadd.f32 %v477, %v547
        %v549 = vpop.f32.mrb[0].mxu0
        %v550 = vpop.f32.mrb[0].mxu0
        %v551 = vadd.f32 %v477, %v550
        %v552 = vpop.f32.mrb[0].mxu0
        %553 = vdwg.mxu0
        %v554 = vtanh.pop %v548
        %v555 = vtanh.pop %v551
        %v558 = vrot.slane %v554, 6
        %v559 = vrot.slane %v555, 6
        %v560 = vsel %vm390, %v558, %v559
        %v564 = vsel %vm390, 0.0, %v558
        %v565 = vsel %vm390, %v559, 0.0
        %v568 = vrot.slane %v564, 1
        %v569 = vrot.slane %v560, 1
        %v570 = vsel %vm401, %v568, %v569
        %v571 = vrot.slane %v565, 1
        %v572 = vsel %vm401, %v569, %v571
        %573 = vrot.lane.b32.xlu0 %v570, 32
        %v574 = vpop.permute.xlu0 %573
        %575 = vrot.lane.b32.xlu0 %v572, 32
        %v576 = vpop.permute.xlu0 %575
        %v579 = vrot.slane %v564, 2
        %v580 = vrot.slane %v560, 2
        %v581 = vsel %vm413, %v579, %v580
        %v582 = vrot.slane %v565, 2
        %v583 = vsel %vm413, %v580, %v582
        %584 = vrot.lane.b32.xlu0 %v581, 64
        %v585 = vpop.permute.xlu0 %584
        %586 = vrot.lane.b32.xlu0 %v583, 64
        %v587 = vpop.permute.xlu0 %586
        %v590 = vrot.slane %v564, 3
        %v591 = vrot.slane %v560, 3
        %v592 = vsel %vm425, %v590, %v591
        %v593 = vrot.slane %v565, 3
        %v594 = vsel %vm425, %v591, %v593
        %595 = vrot.lane.b32.xlu0 %v592, 96
        %v596 = vpop.permute.xlu0 %595
        %597 = vrot.lane.b32.xlu0 %v594, 96
        %v598 = vpop.permute.xlu0 %597
        %v601 = vrot.slane %v564, 4
        %v602 = vrot.slane %v560, 4
        %v603 = vsel %vm437, %v601, %v602
        %v604 = vrot.slane %v565, 4
        %v605 = vsel %vm437, %v602, %v604
        %v608 = vsel %vm452, %v564, %v574
        %v609 = vsel %vm452, %v560, %v576
        %v610 = vsel %vm458, %v608, %v585
        %v611 = vsel %vm458, %v609, %v587
        %vm612 = vcmask 785408
        %v613 = vsel %vm612, %v610, %v596
        %v614 = vsel %vm612, %v611, %v598
        %v615 = vpack.c.bf16 %v614, %v613
        %v616 = vpack.c.bf16 %v605, %v603
        %v617 = vld [vmem:[%s3] sm:$0xf]
        %v618 = vld [vmem:[%s3 + $0x4] sm:$0xf]
        %v619 = vld [vmem:[%s3 + $0x8] sm:$0xf]
        %v620 = vld [vmem:[%s3 + $0xc] sm:$0xf]
        %v621 = vld [vmem:[%s3 + $0x10] sm:$0xf]
        %v622 = vld [vmem:[%s3 + $0x14] sm:$0xf]
        %v623 = vld [vmem:[%s3 + $0x18] sm:$0xf]
        %v624 = vld [vmem:[%s3 + $0x1c] sm:$0xf]
        %v625 = vld [vmem:[%s3 + $0x20] sm:$0xf]
        %v626 = vld [vmem:[%s3 + $0x24] sm:$0xf]
        %v627 = vld [vmem:[%s3 + $0x28] sm:$0xf]
        %v628 = vld [vmem:[%s3 + $0x2c] sm:$0xf]
        %v629 = vld [vmem:[%s3 + $0x30] sm:$0xf]
        %v630 = vld [vmem:[%s3 + $0x34] sm:$0xf]
        %v631 = vld [vmem:[%s3 + $0x38] sm:$0xf]
        %v632 = vld [vmem:[%s3 + $0x3c] sm:$0xf]
        %v633 = vld [vmem:[%s3 + $0x40] sm:$0xf]
        %v634 = vld [vmem:[%s3 + $0x44] sm:$0xf]
        %v635 = vld [vmem:[%s3 + $0x48] sm:$0xf]
        %v636 = vld [vmem:[%s3 + $0x4c] sm:$0xf]
        %v637 = vld [vmem:[%s4] sm:$0x1]
        %v639 = vlaneseq
        %v640 = vshrl.u32 %v639, 7
        %v641 = vsub.s32 0, %v640
        %v642 = vrot.slane %v637, %v641
        %v664 = vunpack.c.l.b16 %v617
        %v665 = vunpack.c.l.b16 %v618
        %v666 = vunpack.c.l.b16 %v619
        %v667 = vunpack.c.l.b16 %v620
        %v668 = vunpack.c.l.b16 %v621
        %v669 = vunpack.c.l.b16 %v622
        %v670 = vunpack.c.l.b16 %v623
        %v671 = vunpack.c.l.b16 %v624
        %v672 = vunpack.c.l.b16 %v625
        %v673 = vunpack.c.l.b16 %v626
        %v674 = vunpack.c.l.b16 %v627
        %v675 = vunpack.c.l.b16 %v628
        %v676 = vunpack.c.l.b16 %v629
        %v677 = vunpack.c.l.b16 %v630
        %v678 = vunpack.c.l.b16 %v631
        %v679 = vunpack.c.l.b16 %v632
        %v680 = vunpack.c.l.b16 %v633
        %v681 = vunpack.c.l.b16 %v634
        %v682 = vunpack.c.l.b16 %v635
        %v683 = vunpack.c.l.b16 %v636
        %v684 = vpack.c.b16 %v665, %v664
        %v685 = vpack.c.b16 %v667, %v666
        %v686 = vpack.c.b16 %v669, %v668
        %v687 = vpack.c.b16 %v671, %v670
        %v688 = vpack.c.b16 %v673, %v672
        %v689 = vpack.c.b16 %v675, %v674
        %v690 = vpack.c.b16 %v677, %v676
        %v691 = vpack.c.b16 %v679, %v678
        %v692 = vpack.c.b16 %v681, %v680
        %v693 = vpack.c.b16 %v683, %v682
        %v705 = vsel %vm452, %v616, 0
        %707 = vmatprep.subr.bf16.mxu0 0
        %708 = vmatpush1.bf16.msra.mxu0 %v684
        %709 = vmatprep.subr.bf16.mxu0 0
        %710 = vmatpush1.bf16.msra.mxu0 %v685
        %711 = vmatprep.subr.bf16.mxu0 0
        %712 = vmatpush1.bf16.msra.mxu0 %v686
        %713 = vmatprep.subr.bf16.mxu0 0
        %714 = vmatpush1.bf16.msra.mxu0 %v687
        %715 = vmatprep.subr.bf16.mxu0 0
        %716 = vmatpush1.bf16.msra.mxu0 %v688
        %717 = vmatprep.subr.bf16.mxu0 0
        %718 = vmatpush1.bf16.msra.mxu0 %v689
        %719 = vmatprep.subr.bf16.mxu0 0
        %720 = vmatpush1.bf16.msra.mxu0 %v690
        %721 = vmatprep.subr.bf16.mxu0 0
        %722 = vmatpush1.bf16.msra.mxu0 %v691
        %723 = vmatprep.subr.bf16.mxu0 0
        %724 = vmatpush1.bf16.msra.mxu0 %v692
        %725 = vmatprep.subr.bf16.mxu0 0
        %726 = vmatpush1.bf16.msra.mxu0 %v693
        %727 = vmatprep.subr.bf16.mxu0 0
        %728 = vmatpush1.bf16.msra.mxu0 0
        %729 = vmatprep.subr.bf16.mxu0 0
        %730 = vmatpush1.bf16.msra.mxu0 0
        %731 = vmatprep.subr.bf16.mxu0 0
        %732 = vmatpush1.bf16.msra.mxu0 0
        %733 = vmatprep.subr.bf16.mxu0 0
        %734 = vmatpush1.bf16.msra.mxu0 0
        %735 = vmatprep.subr.bf16.mxu0 0
        %736 = vmatpush1.bf16.msra.mxu0 0
        %737 = vmatprep.subr.bf16.mxu0 0
        %738 = vmatpush1.bf16.msra.mxu0 0
        %739 = vmatprep.mubr.bf16.mxu0 %v705
        %740 = vmatmul.mubr.bf16.gmra.mrb[0].mxu0 %v615
        %v741 = vpop.f32.mrb[0].mxu0
        %v742 = vadd.f32 %v642, %v741
        %v743 = vpop.f32.mrb[0].mxu0
        %v744 = vpop.f32.mrb[0].mxu0
        %v745 = vadd.f32 %v642, %v744
        %v746 = vpop.f32.mrb[0].mxu0
        %747 = vdwg.mxu0
        %v748 = vtanh.pop %v742
        %v749 = vtanh.pop %v745
        %v752 = vrot.slane %v748, 6
        %v753 = vrot.slane %v749, 6
        %v754 = vsel %vm390, %v752, %v753
        %v758 = vsel %vm390, 0.0, %v752
        %v759 = vsel %vm390, %v753, 0.0
        %v762 = vrot.slane %v758, 1
        %v763 = vrot.slane %v754, 1
        %v764 = vsel %vm401, %v762, %v763
        %v765 = vrot.slane %v759, 1
        %v766 = vsel %vm401, %v763, %v765
        %767 = vrot.lane.b32.xlu0 %v764, 32
        %v768 = vpop.permute.xlu0 %767
        %769 = vrot.lane.b32.xlu0 %v766, 32
        %v770 = vpop.permute.xlu0 %769
        %v773 = vrot.slane %v758, 2
        %v774 = vrot.slane %v754, 2
        %v775 = vsel %vm413, %v773, %v774
        %v776 = vrot.slane %v759, 2
        %v777 = vsel %vm413, %v774, %v776
        %778 = vrot.lane.b32.xlu0 %v775, 64
        %v779 = vpop.permute.xlu0 %778
        %780 = vrot.lane.b32.xlu0 %v777, 64
        %v781 = vpop.permute.xlu0 %780
        %v784 = vrot.slane %v758, 3
        %v785 = vrot.slane %v754, 3
        %v786 = vsel %vm425, %v784, %v785
        %v787 = vrot.slane %v759, 3
        %v788 = vsel %vm425, %v785, %v787
        %789 = vrot.lane.b32.xlu0 %v786, 96
        %v790 = vpop.permute.xlu0 %789
        %791 = vrot.lane.b32.xlu0 %v788, 96
        %v792 = vpop.permute.xlu0 %791
        %v795 = vrot.slane %v758, 4
        %v796 = vrot.slane %v754, 4
        %v797 = vsel %vm437, %v795, %v796
        %v798 = vrot.slane %v759, 4
        %v799 = vsel %vm437, %v796, %v798
        %v802 = vsel %vm452, %v758, %v768
        %v803 = vsel %vm452, %v754, %v770
        %v804 = vsel %vm458, %v802, %v779
        %v805 = vsel %vm458, %v803, %v781
        %v806 = vsel %vm612, %v804, %v790
        %v807 = vsel %vm612, %v805, %v792
        %v808 = vpack.c.bf16 %v807, %v806
        %v809 = vpack.c.bf16 %v799, %v797
        %v810 = vld [vmem:[%s5] sm:$0xf]
        %v811 = vld [vmem:[%s5 + $0x4] sm:$0xf]
        %v812 = vld [vmem:[%s5 + $0x8] sm:$0xf]
        %v813 = vld [vmem:[%s5 + $0xc] sm:$0xf]
        %v814 = vld [vmem:[%s5 + $0x10] sm:$0xf]
        %v815 = vld [vmem:[%s5 + $0x14] sm:$0xf]
        %v816 = vld [vmem:[%s5 + $0x18] sm:$0xf]
        %v817 = vld [vmem:[%s5 + $0x1c] sm:$0xf]
        %v818 = vld [vmem:[%s5 + $0x20] sm:$0xf]
        %v819 = vld [vmem:[%s5 + $0x24] sm:$0xf]
        %v820 = vld [vmem:[%s5 + $0x28] sm:$0xf]
        %v821 = vld [vmem:[%s5 + $0x2c] sm:$0xf]
        %v822 = vld [vmem:[%s5 + $0x30] sm:$0xf]
        %v823 = vld [vmem:[%s5 + $0x34] sm:$0xf]
        %v824 = vld [vmem:[%s5 + $0x38] sm:$0xf]
        %v825 = vld [vmem:[%s5 + $0x3c] sm:$0xf]
        %v826 = vld [vmem:[%s5 + $0x40] sm:$0xf]
        %v827 = vld [vmem:[%s5 + $0x44] sm:$0xf]
        %v828 = vld [vmem:[%s5 + $0x48] sm:$0xf]
        %v829 = vld [vmem:[%s5 + $0x4c] sm:$0xf]
        %v830 = vld [vmem:[%s6] sm:$0x1]
        %v832 = vlaneseq
        %v833 = vshrl.u32 %v832, 7
        %v834 = vsub.s32 0, %v833
        %v835 = vrot.slane %v830, %v834
        %v857 = vunpack.c.l.b16 %v810
        %v858 = vunpack.c.l.b16 %v811
        %v859 = vunpack.c.l.b16 %v812
        %v860 = vunpack.c.l.b16 %v813
        %v861 = vunpack.c.l.b16 %v814
        %v862 = vunpack.c.l.b16 %v815
        %v863 = vunpack.c.l.b16 %v816
        %v864 = vunpack.c.l.b16 %v817
        %v865 = vunpack.c.l.b16 %v818
        %v866 = vunpack.c.l.b16 %v819
        %v867 = vunpack.c.l.b16 %v820
        %v868 = vunpack.c.l.b16 %v821
        %v869 = vunpack.c.l.b16 %v822
        %v870 = vunpack.c.l.b16 %v823
        %v871 = vunpack.c.l.b16 %v824
        %v872 = vunpack.c.l.b16 %v825
        %v873 = vunpack.c.l.b16 %v826
        %v874 = vunpack.c.l.b16 %v827
        %v875 = vunpack.c.l.b16 %v828
        %v876 = vunpack.c.l.b16 %v829
        %v877 = vpack.c.b16 %v858, %v857
        %v878 = vpack.c.b16 %v860, %v859
        %v879 = vpack.c.b16 %v862, %v861
        %v880 = vpack.c.b16 %v864, %v863
        %v881 = vpack.c.b16 %v866, %v865
        %v882 = vpack.c.b16 %v868, %v867
        %v883 = vpack.c.b16 %v870, %v869
        %v884 = vpack.c.b16 %v872, %v871
        %v885 = vpack.c.b16 %v874, %v873
        %v886 = vpack.c.b16 %v876, %v875
        %v898 = vsel %vm452, %v809, 0
        %900 = vmatprep.subr.bf16.mxu0 0
        %901 = vmatpush1.bf16.msra.mxu0 %v877
        %902 = vmatprep.subr.bf16.mxu0 0
        %903 = vmatpush1.bf16.msra.mxu0 %v878
        %904 = vmatprep.subr.bf16.mxu0 0
        %905 = vmatpush1.bf16.msra.mxu0 %v879
        %906 = vmatprep.subr.bf16.mxu0 0
        %907 = vmatpush1.bf16.msra.mxu0 %v880
        %908 = vmatprep.subr.bf16.mxu0 0
        %909 = vmatpush1.bf16.msra.mxu0 %v881
        %910 = vmatprep.subr.bf16.mxu0 0
        %911 = vmatpush1.bf16.msra.mxu0 %v882
        %912 = vmatprep.subr.bf16.mxu0 0
        %913 = vmatpush1.bf16.msra.mxu0 %v883
        %914 = vmatprep.subr.bf16.mxu0 0
        %915 = vmatpush1.bf16.msra.mxu0 %v884
        %916 = vmatprep.subr.bf16.mxu0 0
        %917 = vmatpush1.bf16.msra.mxu0 %v885
        %918 = vmatprep.subr.bf16.mxu0 0
        %919 = vmatpush1.bf16.msra.mxu0 %v886
        %920 = vmatprep.subr.bf16.mxu0 0
        %921 = vmatpush1.bf16.msra.mxu0 0
        %922 = vmatprep.subr.bf16.mxu0 0
        %923 = vmatpush1.bf16.msra.mxu0 0
        %924 = vmatprep.subr.bf16.mxu0 0
        %925 = vmatpush1.bf16.msra.mxu0 0
        %926 = vmatprep.subr.bf16.mxu0 0
        %927 = vmatpush1.bf16.msra.mxu0 0
        %928 = vmatprep.subr.bf16.mxu0 0
        %929 = vmatpush1.bf16.msra.mxu0 0
        %930 = vmatprep.subr.bf16.mxu0 0
        %931 = vmatpush1.bf16.msra.mxu0 0
        %932 = vmatprep.mubr.bf16.mxu0 %v898
        %933 = vmatmul.mubr.bf16.gmra.mrb[0].mxu0 %v808
        %v934 = vpop.f32.mrb[0].mxu0
        %v935 = vadd.f32 %v835, %v934
        %v936 = vpop.f32.mrb[0].mxu0
        %v937 = vpop.f32.mrb[0].mxu0
        %v938 = vadd.f32 %v835, %v937
        %v939 = vpop.f32.mrb[0].mxu0
        %940 = vdwg.mxu0
        %v941 = vtanh.pop %v935
        %v942 = vtanh.pop %v938
        %v945 = vrot.slane %v941, 6
        %v946 = vrot.slane %v942, 6
        %v947 = vsel %vm390, %v945, %v946
        %v951 = vsel %vm390, 0.0, %v945
        %v952 = vsel %vm390, %v946, 0.0
        %v955 = vrot.slane %v951, 1
        %v956 = vrot.slane %v947, 1
        %v957 = vsel %vm401, %v955, %v956
        %v958 = vrot.slane %v952, 1
        %v959 = vsel %vm401, %v956, %v958
        %960 = vrot.lane.b32.xlu0 %v957, 32
        %v961 = vpop.permute.xlu0 %960
        %962 = vrot.lane.b32.xlu0 %v959, 32
        %v963 = vpop.permute.xlu0 %962
        %v966 = vrot.slane %v951, 2
        %v967 = vrot.slane %v947, 2
        %v968 = vsel %vm413, %v966, %v967
        %v969 = vrot.slane %v952, 2
        %v970 = vsel %vm413, %v967, %v969
        %971 = vrot.lane.b32.xlu0 %v968, 64
        %v972 = vpop.permute.xlu0 %971
        %973 = vrot.lane.b32.xlu0 %v970, 64
        %v974 = vpop.permute.xlu0 %973
        %v977 = vrot.slane %v951, 3
        %v978 = vrot.slane %v947, 3
        %v979 = vsel %vm425, %v977, %v978
        %v980 = vrot.slane %v952, 3
        %v981 = vsel %vm425, %v978, %v980
        %982 = vrot.lane.b32.xlu0 %v979, 96
        %v983 = vpop.permute.xlu0 %982
        %984 = vrot.lane.b32.xlu0 %v981, 96
        %v985 = vpop.permute.xlu0 %984
        %v988 = vrot.slane %v951, 4
        %v989 = vrot.slane %v947, 4
        %v990 = vsel %vm437, %v988, %v989
        %v991 = vrot.slane %v952, 4
        %v992 = vsel %vm437, %v989, %v991
        %v995 = vsel %vm452, %v951, %v961
        %v996 = vsel %vm452, %v947, %v963
        %v997 = vsel %vm458, %v995, %v972
        %v998 = vsel %vm458, %v996, %v974
        %v999 = vsel %vm612, %v997, %v983
        %v1000 = vsel %vm612, %v998, %v985
        %v1001 = vpack.c.bf16 %v1000, %v999
        %v1002 = vpack.c.bf16 %v992, %v990
        %v1003 = vld [vmem:[%s7] sm:$0xf]
        %v1004 = vld [vmem:[%s7 + $0x4] sm:$0xf]
        %v1005 = vld [vmem:[%s7 + $0x8] sm:$0xf]
        %v1006 = vld [vmem:[%s7 + $0xc] sm:$0xf]
        %v1007 = vld [vmem:[%s7 + $0x10] sm:$0xf]
        %v1008 = vld [vmem:[%s7 + $0x14] sm:$0xf]
        %v1009 = vld [vmem:[%s7 + $0x18] sm:$0xf]
        %v1010 = vld [vmem:[%s7 + $0x1c] sm:$0xf]
        %v1011 = vld [vmem:[%s7 + $0x20] sm:$0xf]
        %v1012 = vld [vmem:[%s7 + $0x24] sm:$0xf]
        %v1013 = vld [vmem:[%s7 + $0x28] sm:$0xf]
        %v1014 = vld [vmem:[%s7 + $0x2c] sm:$0xf]
        %v1015 = vld [vmem:[%s7 + $0x30] sm:$0xf]
        %v1016 = vld [vmem:[%s7 + $0x34] sm:$0xf]
        %v1017 = vld [vmem:[%s7 + $0x38] sm:$0xf]
        %v1018 = vld [vmem:[%s7 + $0x3c] sm:$0xf]
        %v1019 = vld [vmem:[%s7 + $0x40] sm:$0xf]
        %v1020 = vld [vmem:[%s7 + $0x44] sm:$0xf]
        %v1021 = vld [vmem:[%s7 + $0x48] sm:$0xf]
        %v1022 = vld [vmem:[%s7 + $0x4c] sm:$0xf]
        %v1023 = vld [vmem:[%s8] sm:$0x1]
        %v1025 = vlaneseq
        %v1026 = vshrl.u32 %v1025, 7
        %v1027 = vsub.s32 0, %v1026
        %v1028 = vrot.slane %v1023, %v1027
        %v1050 = vunpack.c.l.b16 %v1003
        %v1051 = vunpack.c.l.b16 %v1004
        %v1052 = vunpack.c.l.b16 %v1005
        %v1053 = vunpack.c.l.b16 %v1006
        %v1054 = vunpack.c.l.b16 %v1007
        %v1055 = vunpack.c.l.b16 %v1008
        %v1056 = vunpack.c.l.b16 %v1009
        %v1057 = vunpack.c.l.b16 %v1010
        %v1058 = vunpack.c.l.b16 %v1011
        %v1059 = vunpack.c.l.b16 %v1012
        %v1060 = vunpack.c.l.b16 %v1013
        %v1061 = vunpack.c.l.b16 %v1014
        %v1062 = vunpack.c.l.b16 %v1015
        %v1063 = vunpack.c.l.b16 %v1016
        %v1064 = vunpack.c.l.b16 %v1017
        %v1065 = vunpack.c.l.b16 %v1018
        %v1066 = vunpack.c.l.b16 %v1019
        %v1067 = vunpack.c.l.b16 %v1020
        %v1068 = vunpack.c.l.b16 %v1021
        %v1069 = vunpack.c.l.b16 %v1022
        %v1070 = vpack.c.b16 %v1051, %v1050
        %v1071 = vpack.c.b16 %v1053, %v1052
        %v1072 = vpack.c.b16 %v1055, %v1054
        %v1073 = vpack.c.b16 %v1057, %v1056
        %v1074 = vpack.c.b16 %v1059, %v1058
        %v1075 = vpack.c.b16 %v1061, %v1060
        %v1076 = vpack.c.b16 %v1063, %v1062
        %v1077 = vpack.c.b16 %v1065, %v1064
        %v1078 = vpack.c.b16 %v1067, %v1066
        %v1079 = vpack.c.b16 %v1069, %v1068
        %v1091 = vsel %vm452, %v1002, 0
        %1093 = vmatprep.subr.bf16.mxu0 0
        %1094 = vmatpush1.bf16.msra.mxu0 %v1070
        %1095 = vmatprep.subr.bf16.mxu0 0
        %1096 = vmatpush1.bf16.msra.mxu0 %v1071
        %1097 = vmatprep.subr.bf16.mxu0 0
        %1098 = vmatpush1.bf16.msra.mxu0 %v1072
        %1099 = vmatprep.subr.bf16.mxu0 0
        %1100 = vmatpush1.bf16.msra.mxu0 %v1073
        %1101 = vmatprep.subr.bf16.mxu0 0
        %1102 = vmatpush1.bf16.msra.mxu0 %v1074
        %1103 = vmatprep.subr.bf16.mxu0 0
        %1104 = vmatpush1.bf16.msra.mxu0 %v1075
        %1105 = vmatprep.subr.bf16.mxu0 0
        %1106 = vmatpush1.bf16.msra.mxu0 %v1076
        %1107 = vmatprep.subr.bf16.mxu0 0
        %1108 = vmatpush1.bf16.msra.mxu0 %v1077
        %1109 = vmatprep.subr.bf16.mxu0 0
        %1110 = vmatpush1.bf16.msra.mxu0 %v1078
        %1111 = vmatprep.subr.bf16.mxu0 0
        %1112 = vmatpush1.bf16.msra.mxu0 %v1079
        %1113 = vmatprep.subr.bf16.mxu0 0
        %1114 = vmatpush1.bf16.msra.mxu0 0
        %1115 = vmatprep.subr.bf16.mxu0 0
        %1116 = vmatpush1.bf16.msra.mxu0 0
        %1117 = vmatprep.subr.bf16.mxu0 0
        %1118 = vmatpush1.bf16.msra.mxu0 0
        %1119 = vmatprep.subr.bf16.mxu0 0
        %1120 = vmatpush1.bf16.msra.mxu0 0
        %1121 = vmatprep.subr.bf16.mxu0 0
        %1122 = vmatpush1.bf16.msra.mxu0 0
        %1123 = vmatprep.subr.bf16.mxu0 0
        %1124 = vmatpush1.bf16.msra.mxu0 0
        %1125 = vmatprep.mubr.bf16.mxu0 %v1091
        %1126 = vmatmul.mubr.bf16.gmra.mrb[0].mxu0 %v1001
        %v1127 = vpop.f32.mrb[0].mxu0
        %v1128 = vadd.f32 %v1028, %v1127
        %v1129 = vpop.f32.mrb[0].mxu0
        %v1130 = vpop.f32.mrb[0].mxu0
        %v1131 = vadd.f32 %v1028, %v1130
        %v1132 = vpop.f32.mrb[0].mxu0
        %1133 = vdwg.mxu0
        %v1134 = vtanh.pop %v1128
        %v1135 = vtanh.pop %v1131
        %v1138 = vrot.slane %v1134, 6
        %v1139 = vrot.slane %v1135, 6
        %v1140 = vsel %vm390, %v1138, %v1139
        %v1144 = vsel %vm390, 0.0, %v1138
        %v1145 = vsel %vm390, %v1139, 0.0
        %v1148 = vrot.slane %v1144, 1
        %v1149 = vrot.slane %v1140, 1
        %v1150 = vsel %vm401, %v1148, %v1149
        %v1151 = vrot.slane %v1145, 1
        %v1152 = vsel %vm401, %v1149, %v1151
        %1153 = vrot.lane.b32.xlu0 %v1150, 32
        %v1154 = vpop.permute.xlu0 %1153
        %1155 = vrot.lane.b32.xlu0 %v1152, 32
        %v1156 = vpop.permute.xlu0 %1155
        %v1159 = vrot.slane %v1144, 2
        %v1160 = vrot.slane %v1140, 2
        %v1161 = vsel %vm413, %v1159, %v1160
        %v1162 = vrot.slane %v1145, 2
        %v1163 = vsel %vm413, %v1160, %v1162
        %1164 = vrot.lane.b32.xlu0 %v1161, 64
        %v1165 = vpop.permute.xlu0 %1164
        %1166 = vrot.lane.b32.xlu0 %v1163, 64
        %v1167 = vpop.permute.xlu0 %1166
        %v1170 = vrot.slane %v1144, 3
        %v1171 = vrot.slane %v1140, 3
        %v1172 = vsel %vm425, %v1170, %v1171
        %v1173 = vrot.slane %v1145, 3
        %v1174 = vsel %vm425, %v1171, %v1173
        %1175 = vrot.lane.b32.xlu0 %v1172, 96
        %v1176 = vpop.permute.xlu0 %1175
        %1177 = vrot.lane.b32.xlu0 %v1174, 96
        %v1178 = vpop.permute.xlu0 %1177
        %v1181 = vrot.slane %v1144, 4
        %v1182 = vrot.slane %v1140, 4
        %v1183 = vsel %vm437, %v1181, %v1182
        %v1184 = vrot.slane %v1145, 4
        %v1185 = vsel %vm437, %v1182, %v1184
        %v1188 = vsel %vm452, %v1144, %v1154
        %v1189 = vsel %vm452, %v1140, %v1156
        %v1190 = vsel %vm458, %v1188, %v1165
        %v1191 = vsel %vm458, %v1189, %v1167
        %v1192 = vsel %vm612, %v1190, %v1176
        %v1193 = vsel %vm612, %v1191, %v1178
        %v1194 = vpack.c.bf16 %v1193, %v1192
        %v1195 = vpack.c.bf16 %v1185, %v1183
        %v1196 = vld [vmem:[%s9] sm:$0xf]
        %v1197 = vld [vmem:[%s9 + $0x4] sm:$0xf]
        %v1198 = vld [vmem:[%s9 + $0x8] sm:$0xf]
        %v1199 = vld [vmem:[%s9 + $0xc] sm:$0xf]
        %v1200 = vld [vmem:[%s9 + $0x10] sm:$0xf]
        %v1201 = vld [vmem:[%s9 + $0x14] sm:$0xf]
        %v1202 = vld [vmem:[%s9 + $0x18] sm:$0xf]
        %v1203 = vld [vmem:[%s9 + $0x1c] sm:$0xf]
        %v1204 = vld [vmem:[%s9 + $0x20] sm:$0xf]
        %v1205 = vld [vmem:[%s9 + $0x24] sm:$0xf]
        %v1206 = vld [vmem:[%s9 + $0x28] sm:$0xf]
        %v1207 = vld [vmem:[%s9 + $0x2c] sm:$0xf]
        %v1208 = vld [vmem:[%s9 + $0x30] sm:$0xf]
        %v1209 = vld [vmem:[%s9 + $0x34] sm:$0xf]
        %v1210 = vld [vmem:[%s9 + $0x38] sm:$0xf]
        %v1211 = vld [vmem:[%s9 + $0x3c] sm:$0xf]
        %v1212 = vld [vmem:[%s9 + $0x40] sm:$0xf]
        %v1213 = vld [vmem:[%s9 + $0x44] sm:$0xf]
        %v1214 = vld [vmem:[%s9 + $0x48] sm:$0xf]
        %v1215 = vld [vmem:[%s9 + $0x4c] sm:$0xf]
        %v1216 = vld [vmem:[%s10] sm:$0x1]
        %v1218 = vlaneseq
        %v1219 = vshrl.u32 %v1218, 7
        %v1220 = vsub.s32 0, %v1219
        %v1221 = vrot.slane %v1216, %v1220
        %v1243 = vunpack.c.l.b16 %v1196
        %v1244 = vunpack.c.l.b16 %v1197
        %v1245 = vunpack.c.l.b16 %v1198
        %v1246 = vunpack.c.l.b16 %v1199
        %v1247 = vunpack.c.l.b16 %v1200
        %v1248 = vunpack.c.l.b16 %v1201
        %v1249 = vunpack.c.l.b16 %v1202
        %v1250 = vunpack.c.l.b16 %v1203
        %v1251 = vunpack.c.l.b16 %v1204
        %v1252 = vunpack.c.l.b16 %v1205
        %v1253 = vunpack.c.l.b16 %v1206
        %v1254 = vunpack.c.l.b16 %v1207
        %v1255 = vunpack.c.l.b16 %v1208
        %v1256 = vunpack.c.l.b16 %v1209
        %v1257 = vunpack.c.l.b16 %v1210
        %v1258 = vunpack.c.l.b16 %v1211
        %v1259 = vunpack.c.l.b16 %v1212
        %v1260 = vunpack.c.l.b16 %v1213
        %v1261 = vunpack.c.l.b16 %v1214
        %v1262 = vunpack.c.l.b16 %v1215
        %v1263 = vpack.c.b16 %v1244, %v1243
        %v1264 = vpack.c.b16 %v1246, %v1245
        %v1265 = vpack.c.b16 %v1248, %v1247
        %v1266 = vpack.c.b16 %v1250, %v1249
        %v1267 = vpack.c.b16 %v1252, %v1251
        %v1268 = vpack.c.b16 %v1254, %v1253
        %v1269 = vpack.c.b16 %v1256, %v1255
        %v1270 = vpack.c.b16 %v1258, %v1257
        %v1271 = vpack.c.b16 %v1260, %v1259
        %v1272 = vpack.c.b16 %v1262, %v1261
        %v1284 = vsel %vm452, %v1195, 0
        %1286 = vmatprep.subr.bf16.mxu0 0
        %1287 = vmatpush1.bf16.msra.mxu0 %v1263
        %1288 = vmatprep.subr.bf16.mxu0 0
        %1289 = vmatpush1.bf16.msra.mxu0 %v1264
        %1290 = vmatprep.subr.bf16.mxu0 0
        %1291 = vmatpush1.bf16.msra.mxu0 %v1265
        %1292 = vmatprep.subr.bf16.mxu0 0
        %1293 = vmatpush1.bf16.msra.mxu0 %v1266
        %1294 = vmatprep.subr.bf16.mxu0 0
        %1295 = vmatpush1.bf16.msra.mxu0 %v1267
        %1296 = vmatprep.subr.bf16.mxu0 0
        %1297 = vmatpush1.bf16.msra.mxu0 %v1268
        %1298 = vmatprep.subr.bf16.mxu0 0
        %1299 = vmatpush1.bf16.msra.mxu0 %v1269
        %1300 = vmatprep.subr.bf16.mxu0 0
        %1301 = vmatpush1.bf16.msra.mxu0 %v1270
        %1302 = vmatprep.subr.bf16.mxu0 0
        %1303 = vmatpush1.bf16.msra.mxu0 %v1271
        %1304 = vmatprep.subr.bf16.mxu0 0
        %1305 = vmatpush1.bf16.msra.mxu0 %v1272
        %1306 = vmatprep.subr.bf16.mxu0 0
        %1307 = vmatpush1.bf16.msra.mxu0 0
        %1308 = vmatprep.subr.bf16.mxu0 0
        %1309 = vmatpush1.bf16.msra.mxu0 0
        %1310 = vmatprep.subr.bf16.mxu0 0
        %1311 = vmatpush1.bf16.msra.mxu0 0
        %1312 = vmatprep.subr.bf16.mxu0 0
        %1313 = vmatpush1.bf16.msra.mxu0 0
        %1314 = vmatprep.subr.bf16.mxu0 0
        %1315 = vmatpush1.bf16.msra.mxu0 0
        %1316 = vmatprep.subr.bf16.mxu0 0
        %1317 = vmatpush1.bf16.msra.mxu0 0
        %1318 = vmatprep.mubr.bf16.mxu0 %v1284
        %1319 = vmatmul.mubr.bf16.gmra.mrb[0].mxu0 %v1194
        %v1320 = vpop.f32.mrb[0].mxu0
        %v1321 = vadd.f32 %v1221, %v1320
        %v1322 = vpop.f32.mrb[0].mxu0
        %v1323 = vpop.f32.mrb[0].mxu0
        %v1324 = vadd.f32 %v1221, %v1323
        %v1325 = vpop.f32.mrb[0].mxu0
        %1326 = vdwg.mxu0
        %v1327 = vadd.f32 %v1321, %v386
        %v1328 = vadd.f32 %v1324, %v387
        %1329 = vst.msk [vmem:[%s379] sm:$0xff] %vm449, %v1327
        %1330 = vst.msk [vmem:[%s379 + $0x8] sm:$0xff] %vm449, %v1328
        %s1331 = sand.u32 %s269, 1
        %s1332 = scalar_lea.sflag [#allocation3], %s1331
        %s1333 = sand.u32 %s269, 1
        %s1334 = smul.addr %s1333, 16
        %s1335 = scalar_lea.vmem [#allocation2], %s1334
        // Predicated region
        $region65: #{fastspeech2_forward.9} parent=63 // pred_check
          %p1336 = pneg %p279
        $region66: #{fastspeech2_forward.9} parent=63 // pred_check_branch
          %1338 = sbr.rel (%p1336) target = $region68
        $region67: #{fastspeech2_forward.9} parent=63 // pred_region
          %s1340 = ssub.s32 256, 256
          %1341 = vsyncadd %s1332, %s1340
          %s1342 = smul.addr %s25, 2
          %s1343 = smul.addr %s1342, 128
          %s1344 = scalar_lea.hbm %s11, %s1343
          %s1345 = sshll.u32 %s1335, 4
          %s1346 = int_to_ptr.vmem [resolvable:$true] %s1345
          %1351 = dma.vmem_to_hbm [thread:$0]  %s1346, 256, %s1344, %s1332, 128, 128, 8
        $region68: #{fastspeech2_forward.9} parent=63 // pred_fallthru
          _
      $region64: #{fastspeech2_forward.9} parent=5 // pred_fallthru
        _
      %p1352 = scmp.le.s32.totalorder 2, %s20
      // Predicated region
      $region69: #{fastspeech2_forward.9} parent=5 // pred_check
        %p1353 = pneg %p1352
      $region70: #{fastspeech2_forward.9} parent=5 // pred_check_branch
        %1355 = sbr.rel (%p1353) target = $region72
      $region71: #{fastspeech2_forward.9} parent=5 // pred_region
        %s1356 = ssub.s32 %s20, 2
        // Predicated region
        $region73: #{fastspeech2_forward.9} parent=71 // pred_check
          %p1357 = pneg %p285
        $region74: #{fastspeech2_forward.9} parent=71 // pred_check_branch
          %1359 = sbr.rel (%p1357) target = $region76
        $region75: #{fastspeech2_forward.9} parent=71 // pred_region
          %s1360 = sand.u32 %s270, 1
          %s1361 = scalar_lea.sflag [#allocation3], %s1360
          %s1362 = sand.u32 %s270, 1
          %s1363 = smul.addr %s1362, 16
          %s1364 = scalar_lea.vmem [#allocation2], %s1363
          %1365 = dma.done %s1361, 256
        $region76: #{fastspeech2_forward.9} parent=71 // pred_fallthru
          _
      $region72: #{fastspeech2_forward.9} parent=5 // pred_fallthru
        _
    $region6: #{fastspeech2_forward.9} parent=1 // loop_footer
      %s24 = sadd.s32 1, %s20
    $region7: #{fastspeech2_forward.9} parent=1 // loop_footer_branch
      %19 = sbr.rel target = $region3
    $region8: #{fastspeech2_forward.9} parent=1 // loop_exit
      _
    %1366 = vsyncpa [#allocation3], 1
    %s1367 = scalar_lea.sflag [#allocation3], 1
    %1368 = vsyncpa %s1367, 1

// kernel: fastspeech2_forward.8
$region0: #{fastspeech2_forward.8}
  #allocation0 [shape = 'u32[]', space=smem, size = 0x4, offset = 0x4, fixed_abs, tag = 'smem constant byte address 0x4 - core index']
  #allocation1 [shape = 'u32[144,128]{1,0:T(1,128)}', space=vmem, size = 0x12000, scoped, tag = 'internal scratch']
  #allocation2 [shape = 's32[1]{0}', space=sflag, size = 0x4, scoped, tag = 'scoped memory for fastspeech2_forward.8']
  #allocation3 [shape = 'u8[512]{0}', space=smem, size = 0x200, scoped, tag = 'prefetched SMEM operand 0']
  %s0 = inlined_call_operand.vmem [shape: s32[2], index: 0, kind: input, shape index: {}]
  %s1 = inlined_call_operand.vmem [shape: f32[2,16,32], index: 1, kind: input, shape index: {}]
  %s2 = inlined_call_operand.vmem [shape: bf16[32,96], index: 2, kind: input, shape index: {}]
  %s3 = inlined_call_operand.vmem [shape: f32[1,96], index: 3, kind: input, shape index: {}]
  %s4 = inlined_call_operand.vmem [shape: bf16[32,32], index: 4, kind: input, shape index: {}]
  %s5 = inlined_call_operand.vmem [shape: f32[1,32], index: 5, kind: input, shape index: {}]
  %s6 = inlined_call_operand.vmem [shape: f32[1,32], index: 6, kind: input, shape index: {}]
  %s7 = inlined_call_operand.vmem [shape: f32[1,32], index: 7, kind: input, shape index: {}]
  %s8 = inlined_call_operand.vmem [shape: bf16[288,64], index: 8, kind: input, shape index: {}]
  %s9 = inlined_call_operand.vmem [shape: f32[1,64], index: 9, kind: input, shape index: {}]
  %s10 = inlined_call_operand.vmem [shape: bf16[64,32], index: 10, kind: input, shape index: {}]
  %s11 = inlined_call_operand.vmem [shape: f32[1,32], index: 11, kind: input, shape index: {}]
  %s12 = inlined_call_operand.vmem [shape: f32[1,32], index: 12, kind: input, shape index: {}]
  %s13 = inlined_call_operand.vmem [shape: f32[1,32], index: 13, kind: input, shape index: {}]
  %s14 = inlined_call_operand.vmem [shape: bf16[32,16], index: 14, kind: input, shape index: {}]
  %s15 = inlined_call_operand.vmem [shape: f32[1,16], index: 15, kind: input, shape index: {}]
  %s16 = inlined_call_operand.hbm [shape: f32[2,16,32], index: 16, kind: output, shape index: {0}]
  %s17 = inlined_call_operand.vmem [shape: f32[2,16,16], index: 17, kind: output, shape index: {1}]
  %18 = xla_tuple %s16, %s17
  %s19 = sld [smem:[#allocation0]]
  $region101: #{fastspeech2_forward.8} parent=0
    _
  %s21 = ssub.s32 1, %s19
  %s22 = scalar_select 0, %s21, %s19
  %s23 = sshll.u32 %s0, 4
  %s24 = int_to_ptr.vmem [resolvable:$true] %s23
  %26 = dma.vmem_to_smem %s24, 16, [#allocation3], [#allocation2]
  %27 = dma.done [#allocation2], 16
  %28 = sfence
  $region1: #{fastspeech2_forward.8} parent=0
    #allocation4 [shape = 'u8[16384]{0}', space=vmem, size = 0x4000, scoped, tag = 'output window, operand 0']
    #allocation5 [shape = 's32[2]{0}', space=sflag, size = 0x8, scoped, tag = 'scoped memory for fastspeech2_forward.8']
    %29 = vsyncpa [#allocation5], 0
    %s30 = scalar_lea.sflag [#allocation5], 1
    %31 = vsyncpa %s30, 0
    loop: start=0, step=1, limit=4
    $region2: #{fastspeech2_forward.8} parent=1 // loop_pre_header
      _
    $region3: #{fastspeech2_forward.8} parent=1 // loop_header
      %s33 = sphi 0, %s37
      %p34 = scmp.ge.s32.totalorder %s33, 4
      %s43 = sphi 0, %s45
      %s46 = sphi 0, %s43
      %s47 = sphi 0, %s46
      %s63 = sphi 0, %s47
      %s67 = sphi 0, %s67
      %s69 = sphi 0, %s67
      %s70 = sphi 0, %s69
      %s84 = sphi 0, %s70
      %s88 = sphi 0, %s88
      %s90 = sphi 0, %s88
      %s91 = sphi 0, %s90
      %s105 = sphi 0, %s91
      %s109 = sphi 0, %s109
      %s111 = sphi 0, %s109
      %s112 = sphi 0, %s111
      %s126 = sphi 0, %s112
      %s130 = sphi 0, %s130
      %s132 = sphi 0, %s130
      %s133 = sphi 0, %s132
      %s147 = sphi 0, %s133
      %s151 = sphi 0, %s151
      %s153 = sphi 0, %s151
      %s154 = sphi 0, %s153
      %s168 = sphi 0, %s154
      %s172 = sphi 0, %s172
      %s174 = sphi 0, %s172
      %s175 = sphi 0, %s174
      %s189 = sphi 0, %s175
      %s193 = sphi 0, %s193
      %s195 = sphi 0, %s193
      %s196 = sphi 0, %s195
      %s210 = sphi 0, %s196
      %s214 = sphi 0, %s214
      %s216 = sphi 0, %s214
      %s217 = sphi 0, %s216
      %s231 = sphi 0, %s217
      %s235 = sphi 0, %s235
      %s237 = sphi 0, %s235
      %s238 = sphi 0, %s237
      %s252 = sphi 0, %s238
      %s256 = sphi 0, %s256
      %s258 = sphi 0, %s256
      %s259 = sphi 0, %s258
      %s273 = sphi 0, %s259
      %s277 = sphi 0, %s277
      %s279 = sphi 0, %s277
      %s280 = sphi 0, %s279
      %s294 = sphi 0, %s280
      %s298 = sphi 0, %s298
      %s300 = sphi 0, %s298
      %s301 = sphi 0, %s300
      %s315 = sphi 0, %s301
      %s319 = sphi 0, %s319
      %s321 = sphi 0, %s319
      %s322 = sphi 0, %s321
      %s336 = sphi 0, %s322
      %s340 = sphi 0, %s340
      %s342 = sphi 0, %s340
      %s343 = sphi 0, %s342
      %s357 = sphi 0, %s343
      %s363 = sphi 0, %s365
      %s366 = sphi 0, %s363
      %s367 = sphi 0, %s366
      %s383 = sphi 0, %s367
      %s389 = sphi 0, %s391
      %s392 = sphi 0, %s389
      %s393 = sphi 0, %s392
      %s409 = sphi 0, %s393
    $region4: #{fastspeech2_forward.8} parent=1 // loop_header_branch
      %36 = sbr.rel (%p34) target = $region8
    $region5: #{fastspeech2_forward.8} parent=1 // loop_body
      %s38 = ssub.s32 %s33, 1
      %s39 = ssub.s32 %s33, 2
      %s40 = sadd.s32 %s33, 1
      %s41 = ssub.s32 %s33, %s40
      %p42 = scmp.eq.s32.totalorder %s41, 0
      %s44 = sadd.s32 %s43, 1
      %s45 = scalar_select %p42, %s43, %s44
      %p48 = pneg %p42
      %p49 = scmp.eq.s32.totalorder %s33, 1
      %p50 = por %p48, %p49
      %p51 = scmp.ne.s32.totalorder %s43, %s46
      %p52 = scmp.eq.s32.totalorder %s33, 0
      %p53 = por %p51, %p52
      %p54 = scmp.ne.s32.totalorder %s43, %s46
      %p55 = scmp.eq.s32.totalorder %s38, 1
      %p56 = por %p54, %p55
      %p57 = scmp.ne.s32.totalorder %s46, %s47
      %p58 = scmp.eq.s32.totalorder %s38, 0
      %p59 = por %p57, %p58
      %p60 = scmp.ne.s32.totalorder %s46, %s47
      %p61 = scmp.eq.s32.totalorder %s39, 1
      %p62 = por %p60, %p61
      %p64 = scmp.ne.s32.totalorder %s47, %s63
      %p65 = scmp.eq.s32.totalorder %s39, 0
      %p66 = por %p64, %p65
      %s68 = sadd.s32 %s67, 1
      %p71 = scmp.eq.s32.totalorder %s33, 1
      %p72 = scmp.ne.s32.totalorder %s67, %s69
      %p73 = scmp.eq.s32.totalorder %s33, 0
      %p74 = por %p72, %p73
      %p75 = scmp.ne.s32.totalorder %s67, %s69
      %p76 = scmp.eq.s32.totalorder %s38, 1
      %p77 = por %p75, %p76
      %p78 = scmp.ne.s32.totalorder %s69, %s70
      %p79 = scmp.eq.s32.totalorder %s38, 0
      %p80 = por %p78, %p79
      %p81 = scmp.ne.s32.totalorder %s69, %s70
      %p82 = scmp.eq.s32.totalorder %s39, 1
      %p83 = por %p81, %p82
      %p85 = scmp.ne.s32.totalorder %s70, %s84
      %p86 = scmp.eq.s32.totalorder %s39, 0
      %p87 = por %p85, %p86
      %s89 = sadd.s32 %s88, 1
      %p92 = scmp.eq.s32.totalorder %s33, 1
      %p93 = scmp.ne.s32.totalorder %s88, %s90
      %p94 = scmp.eq.s32.totalorder %s33, 0
      %p95 = por %p93, %p94
      %p96 = scmp.ne.s32.totalorder %s88, %s90
      %p97 = scmp.eq.s32.totalorder %s38, 1
      %p98 = por %p96, %p97
      %p99 = scmp.ne.s32.totalorder %s90, %s91
      %p100 = scmp.eq.s32.totalorder %s38, 0
      %p101 = por %p99, %p100
      %p102 = scmp.ne.s32.totalorder %s90, %s91
      %p103 = scmp.eq.s32.totalorder %s39, 1
      %p104 = por %p102, %p103
      %p106 = scmp.ne.s32.totalorder %s91, %s105
      %p107 = scmp.eq.s32.totalorder %s39, 0
      %p108 = por %p106, %p107
      %s110 = sadd.s32 %s109, 1
      %p113 = scmp.eq.s32.totalorder %s33, 1
      %p114 = scmp.ne.s32.totalorder %s109, %s111
      %p115 = scmp.eq.s32.totalorder %s33, 0
      %p116 = por %p114, %p115
      %p117 = scmp.ne.s32.totalorder %s109, %s111
      %p118 = scmp.eq.s32.totalorder %s38, 1
      %p119 = por %p117, %p118
      %p120 = scmp.ne.s32.totalorder %s111, %s112
      %p121 = scmp.eq.s32.totalorder %s38, 0
      %p122 = por %p120, %p121
      %p123 = scmp.ne.s32.totalorder %s111, %s112
      %p124 = scmp.eq.s32.totalorder %s39, 1
      %p125 = por %p123, %p124
      %p127 = scmp.ne.s32.totalorder %s112, %s126
      %p128 = scmp.eq.s32.totalorder %s39, 0
      %p129 = por %p127, %p128
      %s131 = sadd.s32 %s130, 1
      %p134 = scmp.eq.s32.totalorder %s33, 1
      %p135 = scmp.ne.s32.totalorder %s130, %s132
      %p136 = scmp.eq.s32.totalorder %s33, 0
      %p137 = por %p135, %p136
      %p138 = scmp.ne.s32.totalorder %s130, %s132
      %p139 = scmp.eq.s32.totalorder %s38, 1
      %p140 = por %p138, %p139
      %p141 = scmp.ne.s32.totalorder %s132, %s133
      %p142 = scmp.eq.s32.totalorder %s38, 0
      %p143 = por %p141, %p142
      %p144 = scmp.ne.s32.totalorder %s132, %s133
      %p145 = scmp.eq.s32.totalorder %s39, 1
      %p146 = por %p144, %p145
      %p148 = scmp.ne.s32.totalorder %s133, %s147
      %p149 = scmp.eq.s32.totalorder %s39, 0
      %p150 = por %p148, %p149
      %s152 = sadd.s32 %s151, 1
      %p155 = scmp.eq.s32.totalorder %s33, 1
      %p156 = scmp.ne.s32.totalorder %s151, %s153
      %p157 = scmp.eq.s32.totalorder %s33, 0
      %p158 = por %p156, %p157
      %p159 = scmp.ne.s32.totalorder %s151, %s153
      %p160 = scmp.eq.s32.totalorder %s38, 1
      %p161 = por %p159, %p160
      %p162 = scmp.ne.s32.totalorder %s153, %s154
      %p163 = scmp.eq.s32.totalorder %s38, 0
      %p164 = por %p162, %p163
      %p165 = scmp.ne.s32.totalorder %s153, %s154
      %p166 = scmp.eq.s32.totalorder %s39, 1
      %p167 = por %p165, %p166
      %p169 = scmp.ne.s32.totalorder %s154, %s168
      %p170 = scmp.eq.s32.totalorder %s39, 0
      %p171 = por %p169, %p170
      %s173 = sadd.s32 %s172, 1
      %p176 = scmp.eq.s32.totalorder %s33, 1
      %p177 = scmp.ne.s32.totalorder %s172, %s174
      %p178 = scmp.eq.s32.totalorder %s33, 0
      %p179 = por %p177, %p178
      %p180 = scmp.ne.s32.totalorder %s172, %s174
      %p181 = scmp.eq.s32.totalorder %s38, 1
      %p182 = por %p180, %p181
      %p183 = scmp.ne.s32.totalorder %s174, %s175
      %p184 = scmp.eq.s32.totalorder %s38, 0
      %p185 = por %p183, %p184
      %p186 = scmp.ne.s32.totalorder %s174, %s175
      %p187 = scmp.eq.s32.totalorder %s39, 1
      %p188 = por %p186, %p187
      %p190 = scmp.ne.s32.totalorder %s175, %s189
      %p191 = scmp.eq.s32.totalorder %s39, 0
      %p192 = por %p190, %p191
      %s194 = sadd.s32 %s193, 1
      %p197 = scmp.eq.s32.totalorder %s33, 1
      %p198 = scmp.ne.s32.totalorder %s193, %s195
      %p199 = scmp.eq.s32.totalorder %s33, 0
      %p200 = por %p198, %p199
      %p201 = scmp.ne.s32.totalorder %s193, %s195
      %p202 = scmp.eq.s32.totalorder %s38, 1
      %p203 = por %p201, %p202
      %p204 = scmp.ne.s32.totalorder %s195, %s196
      %p205 = scmp.eq.s32.totalorder %s38, 0
      %p206 = por %p204, %p205
      %p207 = scmp.ne.s32.totalorder %s195, %s196
      %p208 = scmp.eq.s32.totalorder %s39, 1
      %p209 = por %p207, %p208
      %p211 = scmp.ne.s32.totalorder %s196, %s210
      %p212 = scmp.eq.s32.totalorder %s39, 0
      %p213 = por %p211, %p212
      %s215 = sadd.s32 %s214, 1
      %p218 = scmp.eq.s32.totalorder %s33, 1
      %p219 = scmp.ne.s32.totalorder %s214, %s216
      %p220 = scmp.eq.s32.totalorder %s33, 0
      %p221 = por %p219, %p220
      %p222 = scmp.ne.s32.totalorder %s214, %s216
      %p223 = scmp.eq.s32.totalorder %s38, 1
      %p224 = por %p222, %p223
      %p225 = scmp.ne.s32.totalorder %s216, %s217
      %p226 = scmp.eq.s32.totalorder %s38, 0
      %p227 = por %p225, %p226
      %p228 = scmp.ne.s32.totalorder %s216, %s217
      %p229 = scmp.eq.s32.totalorder %s39, 1
      %p230 = por %p228, %p229
      %p232 = scmp.ne.s32.totalorder %s217, %s231
      %p233 = scmp.eq.s32.totalorder %s39, 0
      %p234 = por %p232, %p233
      %s236 = sadd.s32 %s235, 1
      %p239 = scmp.eq.s32.totalorder %s33, 1
      %p240 = scmp.ne.s32.totalorder %s235, %s237
      %p241 = scmp.eq.s32.totalorder %s33, 0
      %p242 = por %p240, %p241
      %p243 = scmp.ne.s32.totalorder %s235, %s237
      %p244 = scmp.eq.s32.totalorder %s38, 1
      %p245 = por %p243, %p244
      %p246 = scmp.ne.s32.totalorder %s237, %s238
      %p247 = scmp.eq.s32.totalorder %s38, 0
      %p248 = por %p246, %p247
      %p249 = scmp.ne.s32.totalorder %s237, %s238
      %p250 = scmp.eq.s32.totalorder %s39, 1
      %p251 = por %p249, %p250
      %p253 = scmp.ne.s32.totalorder %s238, %s252
      %p254 = scmp.eq.s32.totalorder %s39, 0
      %p255 = por %p253, %p254
      %s257 = sadd.s32 %s256, 1
      %p260 = scmp.eq.s32.totalorder %s33, 1
      %p261 = scmp.ne.s32.totalorder %s256, %s258
      %p262 = scmp.eq.s32.totalorder %s33, 0
      %p263 = por %p261, %p262
      %p264 = scmp.ne.s32.totalorder %s256, %s258
      %p265 = scmp.eq.s32.totalorder %s38, 1
      %p266 = por %p264, %p265
      %p267 = scmp.ne.s32.totalorder %s258, %s259
      %p268 = scmp.eq.s32.totalorder %s38, 0
      %p269 = por %p267, %p268
      %p270 = scmp.ne.s32.totalorder %s258, %s259
      %p271 = scmp.eq.s32.totalorder %s39, 1
      %p272 = por %p270, %p271
      %p274 = scmp.ne.s32.totalorder %s259, %s273
      %p275 = scmp.eq.s32.totalorder %s39, 0
      %p276 = por %p274, %p275
      %s278 = sadd.s32 %s277, 1
      %p281 = scmp.eq.s32.totalorder %s33, 1
      %p282 = scmp.ne.s32.totalorder %s277, %s279
      %p283 = scmp.eq.s32.totalorder %s33, 0
      %p284 = por %p282, %p283
      %p285 = scmp.ne.s32.totalorder %s277, %s279
      %p286 = scmp.eq.s32.totalorder %s38, 1
      %p287 = por %p285, %p286
      %p288 = scmp.ne.s32.totalorder %s279, %s280
      %p289 = scmp.eq.s32.totalorder %s38, 0
      %p290 = por %p288, %p289
      %p291 = scmp.ne.s32.totalorder %s279, %s280
      %p292 = scmp.eq.s32.totalorder %s39, 1
      %p293 = por %p291, %p292
      %p295 = scmp.ne.s32.totalorder %s280, %s294
      %p296 = scmp.eq.s32.totalorder %s39, 0
      %p297 = por %p295, %p296
      %s299 = sadd.s32 %s298, 1
      %p302 = scmp.eq.s32.totalorder %s33, 1
      %p303 = scmp.ne.s32.totalorder %s298, %s300
      %p304 = scmp.eq.s32.totalorder %s33, 0
      %p305 = por %p303, %p304
      %p306 = scmp.ne.s32.totalorder %s298, %s300
      %p307 = scmp.eq.s32.totalorder %s38, 1
      %p308 = por %p306, %p307
      %p309 = scmp.ne.s32.totalorder %s300, %s301
      %p310 = scmp.eq.s32.totalorder %s38, 0
      %p311 = por %p309, %p310
      %p312 = scmp.ne.s32.totalorder %s300, %s301
      %p313 = scmp.eq.s32.totalorder %s39, 1
      %p314 = por %p312, %p313
      %p316 = scmp.ne.s32.totalorder %s301, %s315
      %p317 = scmp.eq.s32.totalorder %s39, 0
      %p318 = por %p316, %p317
      %s320 = sadd.s32 %s319, 1
      %p323 = scmp.eq.s32.totalorder %s33, 1
      %p324 = scmp.ne.s32.totalorder %s319, %s321
      %p325 = scmp.eq.s32.totalorder %s33, 0
      %p326 = por %p324, %p325
      %p327 = scmp.ne.s32.totalorder %s319, %s321
      %p328 = scmp.eq.s32.totalorder %s38, 1
      %p329 = por %p327, %p328
      %p330 = scmp.ne.s32.totalorder %s321, %s322
      %p331 = scmp.eq.s32.totalorder %s38, 0
      %p332 = por %p330, %p331
      %p333 = scmp.ne.s32.totalorder %s321, %s322
      %p334 = scmp.eq.s32.totalorder %s39, 1
      %p335 = por %p333, %p334
      %p337 = scmp.ne.s32.totalorder %s322, %s336
      %p338 = scmp.eq.s32.totalorder %s39, 0
      %p339 = por %p337, %p338
      %s341 = sadd.s32 %s340, 1
      %p344 = scmp.eq.s32.totalorder %s33, 1
      %p345 = scmp.ne.s32.totalorder %s340, %s342
      %p346 = scmp.eq.s32.totalorder %s33, 0
      %p347 = por %p345, %p346
      %p348 = scmp.ne.s32.totalorder %s340, %s342
      %p349 = scmp.eq.s32.totalorder %s38, 1
      %p350 = por %p348, %p349
      %p351 = scmp.ne.s32.totalorder %s342, %s343
      %p352 = scmp.eq.s32.totalorder %s38, 0
      %p353 = por %p351, %p352
      %p354 = scmp.ne.s32.totalorder %s342, %s343
      %p355 = scmp.eq.s32.totalorder %s39, 1
      %p356 = por %p354, %p355
      %p358 = scmp.ne.s32.totalorder %s343, %s357
      %p359 = scmp.eq.s32.totalorder %s39, 0
      %p360 = por %p358, %p359
      %s361 = ssub.s32 %s33, %s40
      %p362 = scmp.eq.s32.totalorder %s361, 0
      %s364 = sadd.s32 %s363, 1
      %s365 = scalar_select %p362, %s363, %s364
      %p368 = pneg %p362
      %p369 = scmp.eq.s32.totalorder %s33, 1
      %p370 = por %p368, %p369
      %p371 = scmp.ne.s32.totalorder %s363, %s366
      %p372 = scmp.eq.s32.totalorder %s33, 0
      %p373 = por %p371, %p372
      %p374 = scmp.ne.s32.totalorder %s363, %s366
      %p375 = scmp.eq.s32.totalorder %s38, 1
      %p376 = por %p374, %p375
      %p377 = scmp.ne.s32.totalorder %s366, %s367
      %p378 = scmp.eq.s32.totalorder %s38, 0
      %p379 = por %p377, %p378
      %p380 = scmp.ne.s32.totalorder %s366, %s367
      %p381 = scmp.eq.s32.totalorder %s39, 1
      %p382 = por %p380, %p381
      %p384 = scmp.ne.s32.totalorder %s367, %s383
      %p385 = scmp.eq.s32.totalorder %s39, 0
      %p386 = por %p384, %p385
      %s387 = ssub.s32 %s33, %s40
      %p388 = scmp.eq.s32.totalorder %s387, 0
      %s390 = sadd.s32 %s389, 1
      %s391 = scalar_select %p388, %s389, %s390
      %p394 = pneg %p388
      %p395 = scmp.eq.s32.totalorder %s33, 1
      %p396 = por %p394, %p395
      %p397 = scmp.ne.s32.totalorder %s389, %s392
      %p398 = scmp.eq.s32.totalorder %s33, 0
      %p399 = por %p397, %p398
      %p400 = scmp.ne.s32.totalorder %s389, %s392
      %p401 = scmp.eq.s32.totalorder %s38, 1
      %p402 = por %p400, %p401
      %p403 = scmp.ne.s32.totalorder %s392, %s393
      %p404 = scmp.eq.s32.totalorder %s38, 0
      %p405 = por %p403, %p404
      %p406 = scmp.ne.s32.totalorder %s392, %s393
      %p407 = scmp.eq.s32.totalorder %s39, 1
      %p408 = por %p406, %p407
      %p410 = scmp.ne.s32.totalorder %s393, %s409
      %p411 = scmp.eq.s32.totalorder %s39, 0
      %p412 = por %p410, %p411
      %p413 = scmp.le.s32.totalorder 1, %s33
      %p414 = scmp.lt.s32.totalorder %s33, 3
      %p415 = pnand %p413, %p414
      %p416 = pneg %p415
      // Predicated region
      $region9: #{fastspeech2_forward.8} parent=5 // pred_check
        _
      $region10: #{fastspeech2_forward.8} parent=5 // pred_check_branch
        %418 = sbr.rel (%p415) target = $region12
      $region11: #{fastspeech2_forward.8} parent=5 // pred_region
        %s419 = ssub.s32 %s33, 1
        // Predicated region
        $region13: #{fastspeech2_forward.8} parent=11 // pred_check
          %p420 = pneg %p80
        $region14: #{fastspeech2_forward.8} parent=11 // pred_check_branch
          %422 = sbr.rel (%p420) target = $region16
        $region15: #{fastspeech2_forward.8} parent=11 // pred_region
          _
        $region16: #{fastspeech2_forward.8} parent=11 // pred_fallthru
          _
        // Predicated region
        $region17: #{fastspeech2_forward.8} parent=11 // pred_check
          %p423 = pneg %p101
        $region18: #{fastspeech2_forward.8} parent=11 // pred_check_branch
          %425 = sbr.rel (%p423) target = $region20
        $region19: #{fastspeech2_forward.8} parent=11 // pred_region
          _
        $region20: #{fastspeech2_forward.8} parent=11 // pred_fallthru
          _
        // Predicated region
        $region21: #{fastspeech2_forward.8} parent=11 // pred_check
          %p426 = pneg %p122
        $region22: #{fastspeech2_forward.8} parent=11 // pred_check_branch
          %428 = sbr.rel (%p426) target = $region24
        $region23: #{fastspeech2_forward.8} parent=11 // pred_region
          _
        $region24: #{fastspeech2_forward.8} parent=11 // pred_fallthru
          _
        // Predicated region
        $region25: #{fastspeech2_forward.8} parent=11 // pred_check
          %p429 = pneg %p143
        $region26: #{fastspeech2_forward.8} parent=11 // pred_check_branch
          %431 = sbr.rel (%p429) target = $region28
        $region27: #{fastspeech2_forward.8} parent=11 // pred_region
          _
        $region28: #{fastspeech2_forward.8} parent=11 // pred_fallthru
          _
        // Predicated region
        $region29: #{fastspeech2_forward.8} parent=11 // pred_check
          %p432 = pneg %p164
        $region30: #{fastspeech2_forward.8} parent=11 // pred_check_branch
          %434 = sbr.rel (%p432) target = $region32
        $region31: #{fastspeech2_forward.8} parent=11 // pred_region
          _
        $region32: #{fastspeech2_forward.8} parent=11 // pred_fallthru
          _
        // Predicated region
        $region33: #{fastspeech2_forward.8} parent=11 // pred_check
          %p435 = pneg %p185
        $region34: #{fastspeech2_forward.8} parent=11 // pred_check_branch
          %437 = sbr.rel (%p435) target = $region36
        $region35: #{fastspeech2_forward.8} parent=11 // pred_region
          _
        $region36: #{fastspeech2_forward.8} parent=11 // pred_fallthru
          _
        // Predicated region
        $region37: #{fastspeech2_forward.8} parent=11 // pred_check
          %p438 = pneg %p206
        $region38: #{fastspeech2_forward.8} parent=11 // pred_check_branch
          %440 = sbr.rel (%p438) target = $region40
        $region39: #{fastspeech2_forward.8} parent=11 // pred_region
          _
        $region40: #{fastspeech2_forward.8} parent=11 // pred_fallthru
          _
        // Predicated region
        $region41: #{fastspeech2_forward.8} parent=11 // pred_check
          %p441 = pneg %p227
        $region42: #{fastspeech2_forward.8} parent=11 // pred_check_branch
          %443 = sbr.rel (%p441) target = $region44
        $region43: #{fastspeech2_forward.8} parent=11 // pred_region
          _
        $region44: #{fastspeech2_forward.8} parent=11 // pred_fallthru
          _
        // Predicated region
        $region45: #{fastspeech2_forward.8} parent=11 // pred_check
          %p444 = pneg %p248
        $region46: #{fastspeech2_forward.8} parent=11 // pred_check_branch
          %446 = sbr.rel (%p444) target = $region48
        $region47: #{fastspeech2_forward.8} parent=11 // pred_region
          _
        $region48: #{fastspeech2_forward.8} parent=11 // pred_fallthru
          _
        // Predicated region
        $region49: #{fastspeech2_forward.8} parent=11 // pred_check
          %p447 = pneg %p269
        $region50: #{fastspeech2_forward.8} parent=11 // pred_check_branch
          %449 = sbr.rel (%p447) target = $region52
        $region51: #{fastspeech2_forward.8} parent=11 // pred_region
          _
        $region52: #{fastspeech2_forward.8} parent=11 // pred_fallthru
          _
        // Predicated region
        $region53: #{fastspeech2_forward.8} parent=11 // pred_check
          %p450 = pneg %p290
        $region54: #{fastspeech2_forward.8} parent=11 // pred_check_branch
          %452 = sbr.rel (%p450) target = $region56
        $region55: #{fastspeech2_forward.8} parent=11 // pred_region
          _
        $region56: #{fastspeech2_forward.8} parent=11 // pred_fallthru
          _
        // Predicated region
        $region57: #{fastspeech2_forward.8} parent=11 // pred_check
          %p453 = pneg %p311
        $region58: #{fastspeech2_forward.8} parent=11 // pred_check_branch
          %455 = sbr.rel (%p453) target = $region60
        $region59: #{fastspeech2_forward.8} parent=11 // pred_region
          _
        $region60: #{fastspeech2_forward.8} parent=11 // pred_fallthru
          _
        // Predicated region
        $region61: #{fastspeech2_forward.8} parent=11 // pred_check
          %p456 = pneg %p332
        $region62: #{fastspeech2_forward.8} parent=11 // pred_check_branch
          %458 = sbr.rel (%p456) target = $region64
        $region63: #{fastspeech2_forward.8} parent=11 // pred_region
          _
        $region64: #{fastspeech2_forward.8} parent=11 // pred_fallthru
          _
        // Predicated region
        $region65: #{fastspeech2_forward.8} parent=11 // pred_check
          %p459 = pneg %p353
        $region66: #{fastspeech2_forward.8} parent=11 // pred_check_branch
          %461 = sbr.rel (%p459) target = $region68
        $region67: #{fastspeech2_forward.8} parent=11 // pred_region
          _
        $region68: #{fastspeech2_forward.8} parent=11 // pred_fallthru
          _
      $region12: #{fastspeech2_forward.8} parent=5 // pred_fallthru
        _
      %p462 = scmp.lt.s32.totalorder %s33, 2
      // Predicated region
      $region69: #{fastspeech2_forward.8} parent=5 // pred_check
        %p463 = pneg %p462
      $region70: #{fastspeech2_forward.8} parent=5 // pred_check_branch
        %465 = sbr.rel (%p463) target = $region72
      $region71: #{fastspeech2_forward.8} parent=5 // pred_region
        // Predicated region
        $region73: #{fastspeech2_forward.8} parent=71 // pred_check
          %p466 = pneg %p53
        $region74: #{fastspeech2_forward.8} parent=71 // pred_check_branch
          %468 = sbr.rel (%p466) target = $region76
        $region75: #{fastspeech2_forward.8} parent=71 // pred_region
          %p469 = scmp.lt.s32.totalorder %s33, 1
          %s470 = scalar_select %p469, %s33, 1
          %s471 = smul.addr %s470, 2
          %s472 = smul.addr %s471, 8
          %s473 = scalar_lea.vmem %s1, %s472
        $region76: #{fastspeech2_forward.8} parent=71 // pred_fallthru
          _
      $region72: #{fastspeech2_forward.8} parent=5 // pred_fallthru
        _
      %p474 = scmp.le.s32.totalorder 1, %s33
      %p475 = scmp.lt.s32.totalorder %s33, 3
      %p476 = pnand %p474, %p475
      %p477 = pneg %p476
      // Predicated region
      $region77: #{fastspeech2_forward.8} parent=5 // pred_check
        _
      $region78: #{fastspeech2_forward.8} parent=5 // pred_check_branch
        %479 = sbr.rel (%p476) target = $region80
      $region79: #{fastspeech2_forward.8} parent=5 // pred_region
        %s480 = ssub.s32 %s33, 1
        %p481 = scmp.lt.s32.totalorder %s38, 1
        %s482 = scalar_select %p481, %s38, 1
        %s483 = smul.addr %s482, 2
        %s484 = smul.addr %s483, 8
        %s485 = scalar_lea.vmem %s1, %s484
        %p486 = pneg %p59
        %p487 = pneg %p56
        %p488 = pneg %p80
        %p489 = pneg %p77
        %p490 = pneg %p101
        %p491 = pneg %p98
        %p492 = pneg %p122
        %p493 = pneg %p119
        %p494 = pneg %p143
        %p495 = pneg %p140
        %p496 = pneg %p164
        %p497 = pneg %p161
        %p498 = pneg %p185
        %p499 = pneg %p182
        %p500 = pneg %p206
        %p501 = pneg %p203
        %p502 = pneg %p227
        %p503 = pneg %p224
        %p504 = pneg %p248
        %p505 = pneg %p245
        %p506 = pneg %p269
        %p507 = pneg %p266
        %p508 = pneg %p290
        %p509 = pneg %p287
        %p510 = pneg %p311
        %p511 = pneg %p308
        %p512 = pneg %p332
        %p513 = pneg %p329
        %p514 = pneg %p353
        %p515 = pneg %p350
        %p516 = pneg %p379
        %p517 = pneg %p376
        %s518 = sand.u32 %s366, 1
        %s519 = scalar_lea.sflag [#allocation5], %s518
        %s520 = sand.u32 %s366, 1
        %s521 = smul.addr %s520, 16
        %s522 = scalar_lea.vmem [#allocation4], %s521
        %p523 = pneg %p405
        %p524 = pneg %p402
        %p525 = scmp.lt.s32.totalorder %s38, 1
        %s526 = scalar_select %p525, %s38, 1
        %s527 = smul.addr %s526, 2
        %s528 = smul.addr %s527, 8
        %s529 = scalar_lea.vmem %s17, %s528
        %p530 = scmp.lt.s32.totalorder %s38, 1
        %s531 = scalar_select %p530, %s38, 1
        %s532 = smul.addr %s531, 2
        %s533 = smul.addr %s532, 8
        %s534 = scalar_lea.vmem %s1, %s533
        %p535 = scmp.lt.s32.totalorder %s38, 1
        %s536 = scalar_select %p535, %s38, 1
        %s537 = smul.addr %s536, 2
        %s538 = smul.addr %s537, 8
        %s539 = scalar_lea.vmem %s17, %s538
        %s541 = sld [smem:[#allocation3 + %s38]]
        %v542 = vld [vmem:[%s534] sm:$0xff]
        %v543 = vld [vmem:[%s534 + $0x8] sm:$0xff]
        %v544 = vpack.c.bf16 %v543, %v542
        %v545 = vld [vmem:[%s2] sm:$0xf]
        %v546 = vld [vmem:[%s2 + $0x4] sm:$0xf]
        %v547 = vld [vmem:[%s2 + $0x8] sm:$0xf]
        %v548 = vld [vmem:[%s2 + $0xc] sm:$0xf]
        %v549 = vld [vmem:[%s3] sm:$0x1]
        %v551 = vlaneseq
        %v552 = vshrl.u32 %v551, 7
        %v553 = vsub.s32 0, %v552
        %v554 = vrot.slane %v549, %v553
        %v560 = vunpack.c.l.b16 %v545
        %v561 = vunpack.c.l.b16 %v546
        %v562 = vunpack.c.l.b16 %v547
        %v563 = vunpack.c.l.b16 %v548
        %v564 = vpack.c.b16 %v561, %v560
        %v565 = vpack.c.b16 %v563, %v562
        %vm568 = vcmask 261120
        %v570 = vsel %vm568, %v544, 0
        %572 = vmatprep.subr.bf16.mxu0 0
        %573 = vmatpush1.bf16.msra.mxu0 %v564
        %574 = vmatprep.subr.bf16.mxu0 0
        %575 = vmatpush1.bf16.msra.mxu0 %v565
        %576 = vmatprep.subr.bf16.mxu0 0
        %577 = vmatpush1.bf16.msra.mxu0 0
        %578 = vmatprep.subr.bf16.mxu0 0
        %579 = vmatpush1.bf16.msra.mxu0 0
        %580 = vmatprep.subr.bf16.mxu0 0
        %581 = vmatpush1.bf16.msra.mxu0 0
        %582 = vmatprep.subr.bf16.mxu0 0
        %583 = vmatpush1.bf16.msra.mxu0 0
        %584 = vmatprep.subr.bf16.mxu0 0
        %585 = vmatpush1.bf16.msra.mxu0 0
        %586 = vmatprep.subr.bf16.mxu0 0
        %587 = vmatpush1.bf16.msra.mxu0 0
        %588 = vmatprep.subr.bf16.mxu0 0
        %589 = vmatpush1.bf16.msra.mxu0 0
        %590 = vmatprep.subr.bf16.mxu0 0
        %591 = vmatpush1.bf16.msra.mxu0 0
        %592 = vmatprep.subr.bf16.mxu0 0
        %593 = vmatpush1.bf16.msra.mxu0 0
        %594 = vmatprep.subr.bf16.mxu0 0
        %595 = vmatpush1.bf16.msra.mxu0 0
        %596 = vmatprep.subr.bf16.mxu0 0
        %597 = vmatpush1.bf16.msra.mxu0 0
        %598 = vmatprep.subr.bf16.mxu0 0
        %599 = vmatpush1.bf16.msra.mxu0 0
        %600 = vmatprep.subr.bf16.mxu0 0
        %601 = vmatpush1.bf16.msra.mxu0 0
        %602 = vmatprep.subr.bf16.mxu0 0
        %603 = vmatpush1.bf16.msra.mxu0 0
        %604 = vmatprep.mubr.bf16.mxu0 0
        %605 = vmatmul.mubr.bf16.gmra.mrb[0].mxu0 %v570
        %v606 = vpop.f32.mrb[0].mxu0
        %v607 = vadd.f32 %v554, %v606
        %v608 = vpop.f32.mrb[0].mxu0
        %v609 = vpop.f32.mrb[0].mxu0
        %v610 = vadd.f32 %v554, %v609
        %v611 = vpop.f32.mrb[0].mxu0
        %612 = vdwg.mxu0
        %v613 = vlaneseq
        %v614 = vand.u32 %v613, 127
        %v615 = vstv %s541
        %vm616 = vcmp.ge.s32.totalorder %v614, %v615
        %v617 = vpack.c.bf16 %v610, %v607
        %619 = vrot.lane.b32.xlu0 %v617, 96
        %v620 = vpop.permute.xlu0 %619
        %vm621 = vcmask 130048
        %v623 = vsel %vm621, %v617, 0
        %v626 = vsel %vm621, %v620, 0
        %628 = vmatprep.subr.bf16.mxu0 0
        %629 = vmatpush1.bf16.xpose.msra.mxu0 %v626
        %630 = vmatprep.subr.bf16.mxu0 0
        %631 = vmatpush1.bf16.xpose.msra.mxu0 0
        %632 = vmatprep.subr.bf16.mxu0 0
        %633 = vmatpush1.bf16.xpose.msra.mxu0 0
        %634 = vmatprep.subr.bf16.mxu0 0
        %635 = vmatpush1.bf16.xpose.msra.mxu0 0
        %636 = vmatprep.subr.bf16.mxu0 0
        %637 = vmatpush1.bf16.xpose.msra.mxu0 0
        %638 = vmatprep.subr.bf16.mxu0 0
        %639 = vmatpush1.bf16.xpose.msra.mxu0 0
        %640 = vmatprep.subr.bf16.mxu0 0
        %641 = vmatpush1.bf16.xpose.msra.mxu0 0
        %642 = vmatprep.subr.bf16.mxu0 0
        %643 = vmatpush1.bf16.xpose.msra.mxu0 0
        %644 = vmatprep.subr.bf16.mxu0 0
        %645 = vmatpush1.bf16.xpose.msra.mxu0 0
        %646 = vmatprep.subr.bf16.mxu0 0
        %647 = vmatpush1.bf16.xpose.msra.mxu0 0
        %648 = vmatprep.subr.bf16.mxu0 0
        %649 = vmatpush1.bf16.xpose.msra.mxu0 0
        %650 = vmatprep.subr.bf16.mxu0 0
        %651 = vmatpush1.bf16.xpose.msra.mxu0 0
        %652 = vmatprep.subr.bf16.mxu0 0
        %653 = vmatpush1.bf16.xpose.msra.mxu0 0
        %654 = vmatprep.subr.bf16.mxu0 0
        %655 = vmatpush1.bf16.xpose.msra.mxu0 0
        %656 = vmatprep.subr.bf16.mxu0 0
        %657 = vmatpush1.bf16.xpose.msra.mxu0 0
        %658 = vmatprep.subr.bf16.mxu0 0
        %659 = vmatpush1.bf16.xpose.msra.mxu0 0
        %660 = vmatprep.mubr.bf16.mxu0 0
        %661 = vmatmul.mubr.bf16.gmra.mrb[0].mxu0 %v623
        %v662 = vpop.f32.mrb[0].mxu0
        %v663 = vadd.f32 0.0, %v662
        %v664 = vpop.f32.mrb[0].mxu0
        %v665 = vpop.f32.mrb[0].mxu0
        %v666 = vadd.f32 0.0, %v665
        %v667 = vpop.f32.mrb[0].mxu0
        %668 = vdwg.mxu0
        %v669 = vmul.f32 %v663, 0.25
        %v670 = vmul.f32 %v666, 0.25
        %v671 = vsel %vm616, -1e+30, %v669
        %v672 = vsel %vm616, -1e+30, %v670
        %v673 = vsel %vm621, %v671, -inf
        %674 = vmax.xlane.f32.xlu0 %v673
        %v675 = vpop.xlane.xlu0 %674
        %v676 = vsel %vm621, %v672, -inf
        %677 = vmax.xlane.f32.xlu0 %v676
        %v678 = vpop.xlane.xlu0 %677
        %v679 = vsub.f32 %v671, %v675
        %v680 = vsub.f32 %v672, %v678
        %v681 = vmul.f32 %v679, 1.442695
        %v682 = vpow.pop %v681
        %v683 = vmul.f32 %v680, 1.442695
        %v684 = vpow.pop %v683
        %v685 = vsel %vm621, %v682, 0.0
        %686 = vadd.xlane.f32.xlu0 %v685
        %v687 = vpop.xlane.xlu0 %686
        %v688 = vsel %vm621, %v684, 0.0
        %689 = vadd.xlane.f32.xlu0 %v688
        %v690 = vpop.xlane.xlu0 %689
        %v691 = vrcp.pop %v687
        %v692 = vrcp.pop %v690
        %v693 = vmul.f32 %v682, %v691
        %v694 = vmul.f32 %v684, %v692
        %v695 = vpack.c.bf16 %v694, %v693
        %696 = vrot.lane.b32.xlu0 %v617, 64
        %v697 = vpop.permute.xlu0 %696
        %v700 = vsel %vm621, %v695, 0
        %702 = vmatprep.subr.bf16.mxu0 0
        %703 = vmatpush1.bf16.msra.mxu0 %v697
        %704 = vmatprep.subr.bf16.mxu0 0
        %705 = vmatpush1.bf16.msra.mxu0 0
        %706 = vmatprep.subr.bf16.mxu0 0
        %707 = vmatpush1.bf16.msra.mxu0 0
        %708 = vmatprep.subr.bf16.mxu0 0
        %709 = vmatpush1.bf16.msra.mxu0 0
        %710 = vmatprep.subr.bf16.mxu0 0
        %711 = vmatpush1.bf16.msra.mxu0 0
        %712 = vmatprep.subr.bf16.mxu0 0
        %713 = vmatpush1.bf16.msra.mxu0 0
        %714 = vmatprep.subr.bf16.mxu0 0
        %715 = vmatpush1.bf16.msra.mxu0 0
        %716 = vmatprep.subr.bf16.mxu0 0
        %717 = vmatpush1.bf16.msra.mxu0 0
        %718 = vmatprep.subr.bf16.mxu0 0
        %719 = vmatpush1.bf16.msra.mxu0 0
        %720 = vmatprep.subr.bf16.mxu0 0
        %721 = vmatpush1.bf16.msra.mxu0 0
        %722 = vmatprep.subr.bf16.mxu0 0
        %723 = vmatpush1.bf16.msra.mxu0 0
        %724 = vmatprep.subr.bf16.mxu0 0
        %725 = vmatpush1.bf16.msra.mxu0 0
        %726 = vmatprep.subr.bf16.mxu0 0
        %727 = vmatpush1.bf16.msra.mxu0 0
        %728 = vmatprep.subr.bf16.mxu0 0
        %729 = vmatpush1.bf16.msra.mxu0 0
        %730 = vmatprep.subr.bf16.mxu0 0
        %731 = vmatpush1.bf16.msra.mxu0 0
        %732 = vmatprep.subr.bf16.mxu0 0
        %733 = vmatpush1.bf16.msra.mxu0 0
        %734 = vmatprep.mubr.bf16.mxu0 0
        %735 = vmatmul.mubr.bf16.gmra.mrb[0].mxu0 %v700
        %v736 = vpop.f32.mrb[0].mxu0
        %v737 = vadd.f32 0.0, %v736
        %v738 = vpop.f32.mrb[0].mxu0
        %v739 = vpop.f32.mrb[0].mxu0
        %v740 = vadd.f32 0.0, %v739
        %v741 = vpop.f32.mrb[0].mxu0
        %742 = vdwg.mxu0
        %743 = vrot.lane.b32.xlu0 %v617, 112
        %v744 = vpop.permute.xlu0 %743
        %745 = vrot.lane.b32.xlu0 %v617, 80
        %v746 = vpop.permute.xlu0 %745
        %v748 = vsel %vm621, %v744, 0
        %v751 = vsel %vm621, %v746, 0
        %753 = vmatprep.subr.bf16.mxu0 0
        %754 = vmatpush1.bf16.xpose.msra.mxu0 %v751
        %755 = vmatprep.subr.bf16.mxu0 0
        %756 = vmatpush1.bf16.xpose.msra.mxu0 0
        %757 = vmatprep.subr.bf16.mxu0 0
        %758 = vmatpush1.bf16.xpose.msra.mxu0 0
        %759 = vmatprep.subr.bf16.mxu0 0
        %760 = vmatpush1.bf16.xpose.msra.mxu0 0
        %761 = vmatprep.subr.bf16.mxu0 0
        %762 = vmatpush1.bf16.xpose.msra.mxu0 0
        %763 = vmatprep.subr.bf16.mxu0 0
        %764 = vmatpush1.bf16.xpose.msra.mxu0 0
        %765 = vmatprep.subr.bf16.mxu0 0
        %766 = vmatpush1.bf16.xpose.msra.mxu0 0
        %767 = vmatprep.subr.bf16.mxu0 0
        %768 = vmatpush1.bf16.xpose.msra.mxu0 0
        %769 = vmatprep.subr.bf16.mxu0 0
        %770 = vmatpush1.bf16.xpose.msra.mxu0 0
        %771 = vmatprep.subr.bf16.mxu0 0
        %772 = vmatpush1.bf16.xpose.msra.mxu0 0
        %773 = vmatprep.subr.bf16.mxu0 0
        %774 = vmatpush1.bf16.xpose.msra.mxu0 0
        %775 = vmatprep.subr.bf16.mxu0 0
        %776 = vmatpush1.bf16.xpose.msra.mxu0 0
        %777 = vmatprep.subr.bf16.mxu0 0
        %778 = vmatpush1.bf16.xpose.msra.mxu0 0
        %779 = vmatprep.subr.bf16.mxu0 0
        %780 = vmatpush1.bf16.xpose.msra.mxu0 0
        %781 = vmatprep.subr.bf16.mxu0 0
        %782 = vmatpush1.bf16.xpose.msra.mxu0 0
        %783 = vmatprep.subr.bf16.mxu0 0
        %784 = vmatpush1.bf16.xpose.msra.mxu0 0
        %785 = vmatprep.mubr.bf16.mxu0 0
        %786 = vmatmul.mubr.bf16.gmra.mrb[0].mxu0 %v748
        %v787 = vpop.f32.mrb[0].mxu0
        %v788 = vadd.f32 0.0, %v787
        %v789 = vpop.f32.mrb[0].mxu0
        %v790 = vpop.f32.mrb[0].mxu0
        %v791 = vadd.f32 0.0, %v790
        %v792 = vpop.f32.mrb[0].mxu0
        %793 = vdwg.mxu0
        %v794 = vmul.f32 %v788, 0.25
        %v795 = vmul.f32 %v791, 0.25
        %v796 = vsel %vm616, -1e+30, %v794
        %v797 = vsel %vm616, -1e+30, %v795
        %v798 = vsel %vm621, %v796, -inf
        %799 = vmax.xlane.f32.xlu0 %v798
        %v800 = vpop.xlane.xlu0 %799
        %v801 = vsel %vm621, %v797, -inf
        %802 = vmax.xlane.f32.xlu0 %v801
        %v803 = vpop.xlane.xlu0 %802
        %v804 = vsub.f32 %v796, %v800
        %v805 = vsub.f32 %v797, %v803
        %v806 = vmul.f32 %v804, 1.442695
        %v807 = vpow.pop %v806
        %v808 = vmul.f32 %v805, 1.442695
        %v809 = vpow.pop %v808
        %v810 = vsel %vm621, %v807, 0.0
        %811 = vadd.xlane.f32.xlu0 %v810
        %v812 = vpop.xlane.xlu0 %811
        %v813 = vsel %vm621, %v809, 0.0
        %814 = vadd.xlane.f32.xlu0 %v813
        %v815 = vpop.xlane.xlu0 %814
        %v816 = vrcp.pop %v812
        %v817 = vrcp.pop %v815
        %v818 = vmul.f32 %v807, %v816
        %v819 = vmul.f32 %v809, %v817
        %v820 = vpack.c.bf16 %v819, %v818
        %821 = vrot.lane.b32.xlu0 %v617, 48
        %v822 = vpop.permute.xlu0 %821
        %v825 = vsel %vm621, %v820, 0
        %827 = vmatprep.subr.bf16.mxu0 0
        %828 = vmatpush1.bf16.msra.mxu0 %v822
        %829 = vmatprep.subr.bf16.mxu0 0
        %830 = vmatpush1.bf16.msra.mxu0 0
        %831 = vmatprep.subr.bf16.mxu0 0
        %832 = vmatpush1.bf16.msra.mxu0 0
        %833 = vmatprep.subr.bf16.mxu0 0
        %834 = vmatpush1.bf16.msra.mxu0 0
        %835 = vmatprep.subr.bf16.mxu0 0
        %836 = vmatpush1.bf16.msra.mxu0 0
        %837 = vmatprep.subr.bf16.mxu0 0
        %838 = vmatpush1.bf16.msra.mxu0 0
        %839 = vmatprep.subr.bf16.mxu0 0
        %840 = vmatpush1.bf16.msra.mxu0 0
        %841 = vmatprep.subr.bf16.mxu0 0
        %842 = vmatpush1.bf16.msra.mxu0 0
        %843 = vmatprep.subr.bf16.mxu0 0
        %844 = vmatpush1.bf16.msra.mxu0 0
        %845 = vmatprep.subr.bf16.mxu0 0
        %846 = vmatpush1.bf16.msra.mxu0 0
        %847 = vmatprep.subr.bf16.mxu0 0
        %848 = vmatpush1.bf16.msra.mxu0 0
        %849 = vmatprep.subr.bf16.mxu0 0
        %850 = vmatpush1.bf16.msra.mxu0 0
        %851 = vmatprep.subr.bf16.mxu0 0
        %852 = vmatpush1.bf16.msra.mxu0 0
        %853 = vmatprep.subr.bf16.mxu0 0
        %854 = vmatpush1.bf16.msra.mxu0 0
        %855 = vmatprep.subr.bf16.mxu0 0
        %856 = vmatpush1.bf16.msra.mxu0 0
        %857 = vmatprep.subr.bf16.mxu0 0
        %858 = vmatpush1.bf16.msra.mxu0 0
        %859 = vmatprep.mubr.bf16.mxu0 0
        %860 = vmatmul.mubr.bf16.gmra.mrb[0].mxu0 %v825
        %v861 = vpop.f32.mrb[0].mxu0
        %v862 = vadd.f32 0.0, %v861
        %v863 = vpop.f32.mrb[0].mxu0
        %v864 = vpop.f32.mrb[0].mxu0
        %v865 = vadd.f32 0.0, %v864
        %v866 = vpop.f32.mrb[0].mxu0
        %867 = vdwg.mxu0
        %870 = vrot.lane.b32.xlu0 %v862, 16
        %v871 = vpop.permute.xlu0 %870
        %872 = vrot.lane.b32.xlu0 %v865, 16
        %v873 = vpop.permute.xlu0 %872
        %v876 = vsel %vm621, %v737, %v871
        %v877 = vsel %vm621, %v740, %v873
        %v878 = vpack.c.bf16 %v877, %v876
        %v879 = vld [vmem:[%s4] sm:$0xf]
        %v880 = vld [vmem:[%s4 + $0x4] sm:$0xf]
        %v881 = vld [vmem:[%s4 + $0x8] sm:$0xf]
        %v882 = vld [vmem:[%s4 + $0xc] sm:$0xf]
        %v883 = vld [vmem:[%s5] sm:$0x1]
        %v885 = vlaneseq
        %v886 = vshrl.u32 %v885, 7
        %v887 = vsub.s32 0, %v886
        %v888 = vrot.slane %v883, %v887
        %v894 = vunpack.c.l.b16 %v879
        %v895 = vunpack.c.l.b16 %v880
        %v896 = vunpack.c.l.b16 %v881
        %v897 = vunpack.c.l.b16 %v882
        %v898 = vpack.c.b16 %v895, %v894
        %v899 = vpack.c.b16 %v897, %v896
        %v903 = vsel %vm568, %v878, 0
        %905 = vmatprep.subr.bf16.mxu0 0
        %906 = vmatpush1.bf16.msra.mxu0 %v898
        %907 = vmatprep.subr.bf16.mxu0 0
        %908 = vmatpush1.bf16.msra.mxu0 %v899
        %909 = vmatprep.subr.bf16.mxu0 0
        %910 = vmatpush1.bf16.msra.mxu0 0
        %911 = vmatprep.subr.bf16.mxu0 0
        %912 = vmatpush1.bf16.msra.mxu0 0
        %913 = vmatprep.subr.bf16.mxu0 0
        %914 = vmatpush1.bf16.msra.mxu0 0
        %915 = vmatprep.subr.bf16.mxu0 0
        %916 = vmatpush1.bf16.msra.mxu0 0
        %917 = vmatprep.subr.bf16.mxu0 0
        %918 = vmatpush1.bf16.msra.mxu0 0
        %919 = vmatprep.subr.bf16.mxu0 0
        %920 = vmatpush1.bf16.msra.mxu0 0
        %921 = vmatprep.subr.bf16.mxu0 0
        %922 = vmatpush1.bf16.msra.mxu0 0
        %923 = vmatprep.subr.bf16.mxu0 0
        %924 = vmatpush1.bf16.msra.mxu0 0
        %925 = vmatprep.subr.bf16.mxu0 0
        %926 = vmatpush1.bf16.msra.mxu0 0
        %927 = vmatprep.subr.bf16.mxu0 0
        %928 = vmatpush1.bf16.msra.mxu0 0
        %929 = vmatprep.subr.bf16.mxu0 0
        %930 = vmatpush1.bf16.msra.mxu0 0
        %931 = vmatprep.subr.bf16.mxu0 0
        %932 = vmatpush1.bf16.msra.mxu0 0
        %933 = vmatprep.subr.bf16.mxu0 0
        %934 = vmatpush1.bf16.msra.mxu0 0
        %935 = vmatprep.subr.bf16.mxu0 0
        %936 = vmatpush1.bf16.msra.mxu0 0
        %937 = vmatprep.mubr.bf16.mxu0 0
        %938 = vmatmul.mubr.bf16.gmra.mrb[0].mxu0 %v903
        %v939 = vpop.f32.mrb[0].mxu0
        %v940 = vadd.f32 %v888, %v939
        %v941 = vpop.f32.mrb[0].mxu0
        %v942 = vpop.f32.mrb[0].mxu0
        %v943 = vadd.f32 %v888, %v942
        %v944 = vpop.f32.mrb[0].mxu0
        %945 = vdwg.mxu0
        %v946 = vadd.f32 %v940, %v542
        %v947 = vadd.f32 %v943, %v543
        %v948 = vld [vmem:[%s6] sm:$0x1]
        %v949 = vld [vmem:[%s7] sm:$0x1]
        %v950 = vsel %vm568, %v946, 0.0
        %951 = vadd.xlane.f32.xlu0 %v950
        %v952 = vpop.xlane.xlu0 %951
        %v953 = vsel %vm568, %v947, 0.0
        %954 = vadd.xlane.f32.xlu0 %v953
        %v955 = vpop.xlane.xlu0 %954
        %v956 = vrcp.pop 32.0
        %v957 = vmul.f32 %v952, %v956
        %v958 = vmul.f32 %v955, %v956
        %v959 = vsub.f32 %v946, %v957
        %v960 = vsub.f32 %v947, %v958
        %v961 = vmul.f32 %v959, %v959
        %v962 = vmul.f32 %v960, %v960
        %v963 = vsel %vm568, %v961, 0.0
        %964 = vadd.xlane.f32.xlu0 %v963
        %v965 = vpop.xlane.xlu0 %964
        %v966 = vsel %vm568, %v962, 0.0
        %967 = vadd.xlane.f32.xlu0 %v966
        %v968 = vpop.xlane.xlu0 %967
        %v969 = vmul.f32 %v965, %v956
        %v970 = vmul.f32 %v968, %v956
        %v971 = vadd.f32 %v969, 1e-05
        %v972 = vadd.f32 %v970, 1e-05
        %v973 = vrsqrt.pop %v971
        %v974 = vrsqrt.pop %v972
        %v975 = vmul.f32 %v959, %v973
        %v976 = vmul.f32 %v960, %v974
        %v978 = vlaneseq
        %v979 = vshrl.u32 %v978, 7
        %v980 = vsub.s32 0, %v979
        %v981 = vrot.slane %v948, %v980
        %v983 = vmul.f32 %v975, %v981
        %v984 = vmul.f32 %v976, %v981
        %v986 = vlaneseq
        %v987 = vshrl.u32 %v986, 7
        %v988 = vsub.s32 0, %v987
        %v989 = vrot.slane %v949, %v988
        %v991 = vadd.f32 %v983, %v989
        %v992 = vadd.f32 %v984, %v989
        %v993 = vlaneseq
        %v994 = vshrl.u32 %v993, 7
        %v995 = vadd.s32 %v994, 8
        %vm996 = vcmp.ge.s32.totalorder %v994, %v615
        %vm997 = vcmp.ge.s32.totalorder %v995, %v615
        %v998 = vsel %vm996, 1, 0
        %v999 = vsel %vm997, 1, 0
        %vm1000 = vcmp.eq.s32.totalorder %v998, 1
        %vm1001 = vcmp.eq.s32.totalorder %v999, 1
        %v1002 = vsel %vm1000, 0.0, %v991
        %v1003 = vsel %vm1001, 0.0, %v992
        %vm1006 = vcmask 1043456
        %v1007 = vrot.slane %v1002, 4
        %v1008 = vrot.slane %v1003, 4
        %v1009 = vsel %vm1006, %v1007, %v1008
        %v1013 = vsel %vm1006, 0.0, %v1007
        %v1014 = vsel %vm1006, %v1008, 0.0
        %vm1017 = vcmask 1046528
        %v1018 = vrot.slane %v1013, 1
        %v1019 = vrot.slane %v1009, 1
        %v1020 = vsel %vm1017, %v1018, %v1019
        %v1021 = vrot.slane %v1014, 1
        %v1022 = vsel %vm1017, %v1019, %v1021
        %1023 = vrot.lane.b32.xlu0 %v1020, 32
        %v1024 = vpop.permute.xlu0 %1023
        %1025 = vrot.lane.b32.xlu0 %v1022, 32
        %v1026 = vpop.permute.xlu0 %1025
        %vm1029 = vcmask 1045504
        %v1030 = vrot.slane %v1013, 2
        %v1031 = vrot.slane %v1009, 2
        %v1032 = vsel %vm1029, %v1030, %v1031
        %v1033 = vrot.slane %v1014, 2
        %v1034 = vsel %vm1029, %v1031, %v1033
        %1035 = vrot.lane.b32.xlu0 %v1032, 64
        %v1036 = vpop.permute.xlu0 %1035
        %1037 = vrot.lane.b32.xlu0 %v1034, 64
        %v1038 = vpop.permute.xlu0 %1037
        %vm1041 = vcmask 1044480
        %v1042 = vrot.slane %v1013, 3
        %v1043 = vrot.slane %v1009, 3
        %v1044 = vsel %vm1041, %v1042, %v1043
        %v1045 = vrot.slane %v1014, 3
        %v1046 = vsel %vm1041, %v1043, %v1045
        %1047 = vrot.lane.b32.xlu0 %v1044, 96
        %v1048 = vpop.permute.xlu0 %1047
        %1049 = vrot.lane.b32.xlu0 %v1046, 96
        %v1050 = vpop.permute.xlu0 %1049
        %v1053 = vrot.slane %v1013, 4
        %v1054 = vrot.slane %v1009, 4
        %v1055 = vsel %vm1006, %v1053, %v1054
        %v1056 = vrot.slane %v1014, 4
        %v1057 = vsel %vm1006, %v1054, %v1056
        %vm1060 = vcmask 1042432
        %v1061 = vrot.slane %v1013, 5
        %v1062 = vrot.slane %v1009, 5
        %v1063 = vsel %vm1060, %v1061, %v1062
        %v1064 = vrot.slane %v1014, 5
        %v1065 = vsel %vm1060, %v1062, %v1064
        %1066 = vrot.lane.b32.xlu0 %v1063, 32
        %v1067 = vpop.permute.xlu0 %1066
        %1068 = vrot.lane.b32.xlu0 %v1065, 32
        %v1069 = vpop.permute.xlu0 %1068
        %vm1072 = vcmask 1041408
        %v1073 = vrot.slane %v1013, 6
        %v1074 = vrot.slane %v1009, 6
        %v1075 = vsel %vm1072, %v1073, %v1074
        %v1076 = vrot.slane %v1014, 6
        %v1077 = vsel %vm1072, %v1074, %v1076
        %1078 = vrot.lane.b32.xlu0 %v1075, 64
        %v1079 = vpop.permute.xlu0 %1078
        %1080 = vrot.lane.b32.xlu0 %v1077, 64
        %v1081 = vpop.permute.xlu0 %1080
        %vm1084 = vcmask 1040384
        %v1085 = vrot.slane %v1013, 7
        %v1086 = vrot.slane %v1009, 7
        %v1087 = vsel %vm1084, %v1085, %v1086
        %v1088 = vrot.slane %v1014, 7
        %v1089 = vsel %vm1084, %v1086, %v1088
        %1090 = vrot.lane.b32.xlu0 %v1087, 96
        %v1091 = vpop.permute.xlu0 %1090
        %1092 = vrot.lane.b32.xlu0 %v1089, 96
        %v1093 = vpop.permute.xlu0 %1092
        %v1096 = vsel %vm568, %v1013, %v1024
        %v1097 = vsel %vm568, %v1009, %v1026
        %vm1098 = vcmask 523264
        %v1099 = vsel %vm1098, %v1096, %v1036
        %v1100 = vsel %vm1098, %v1097, %v1038
        %vm1101 = vcmask 785408
        %v1102 = vsel %vm1101, %v1099, %v1048
        %v1103 = vsel %vm1101, %v1100, %v1050
        %v1104 = vsel %vm568, %v1055, %v1067
        %v1105 = vsel %vm568, %v1057, %v1069
        %v1106 = vsel %vm1098, %v1104, %v1079
        %v1107 = vsel %vm1098, %v1105, %v1081
        %v1108 = vsel %vm1101, %v1106, %v1091
        %v1109 = vsel %vm1101, %v1107, %v1093
        %v1110 = vpack.c.bf16 %v1103, %v1102
        %v1111 = vpack.c.bf16 %v1109, %v1108
        %v1112 = vpack.c.bf16 %v1014, %v1009
        %v1113 = vld [vmem:[%s8] sm:$0xf]
        %v1114 = vld [vmem:[%s8 + $0x4] sm:$0xf]
        %v1115 = vld [vmem:[%s8 + $0x8] sm:$0xf]
        %v1116 = vld [vmem:[%s8 + $0xc] sm:$0xf]
        %v1117 = vld [vmem:[%s8 + $0x10] sm:$0xf]
        %v1118 = vld [vmem:[%s8 + $0x14] sm:$0xf]
        %v1119 = vld [vmem:[%s8 + $0x18] sm:$0xf]
        %v1120 = vld [vmem:[%s8 + $0x1c] sm:$0xf]
        %v1121 = vld [vmem:[%s8 + $0x20] sm:$0xf]
        %v1122 = vld [vmem:[%s8 + $0x24] sm:$0xf]
        %v1123 = vld [vmem:[%s8 + $0x28] sm:$0xf]
        %v1124 = vld [vmem:[%s8 + $0x2c] sm:$0xf]
        %v1125 = vld [vmem:[%s8 + $0x30] sm:$0xf]
        %v1126 = vld [vmem:[%s8 + $0x34] sm:$0xf]
        %v1127 = vld [vmem:[%s8 + $0x38] sm:$0xf]
        %v1128 = vld [vmem:[%s8 + $0x3c] sm:$0xf]
        %v1129 = vld [vmem:[%s8 + $0x40] sm:$0xf]
        %v1130 = vld [vmem:[%s8 + $0x44] sm:$0xf]
        %v1131 = vld [vmem:[%s8 + $0x48] sm:$0xf]
        %v1132 = vld [vmem:[%s8 + $0x4c] sm:$0xf]
        %v1133 = vld [vmem:[%s8 + $0x50] sm:$0xf]
        %v1134 = vld [vmem:[%s8 + $0x54] sm:$0xf]
        %v1135 = vld [vmem:[%s8 + $0x58] sm:$0xf]
        %v1136 = vld [vmem:[%s8 + $0x5c] sm:$0xf]
        %v1137 = vld [vmem:[%s8 + $0x60] sm:$0xf]
        %v1138 = vld [vmem:[%s8 + $0x64] sm:$0xf]
        %v1139 = vld [vmem:[%s8 + $0x68] sm:$0xf]
        %v1140 = vld [vmem:[%s8 + $0x6c] sm:$0xf]
        %v1141 = vld [vmem:[%s8 + $0x70] sm:$0xf]
        %v1142 = vld [vmem:[%s8 + $0x74] sm:$0xf]
        %v1143 = vld [vmem:[%s8 + $0x78] sm:$0xf]
        %v1144 = vld [vmem:[%s8 + $0x7c] sm:$0xf]
        %v1145 = vld [vmem:[%s8 + $0x80] sm:$0xf]
        %v1146 = vld [vmem:[%s8 + $0x84] sm:$0xf]
        %v1147 = vld [vmem:[%s8 + $0x88] sm:$0xf]
        %v1148 = vld [vmem:[%s8 + $0x8c] sm:$0xf]
        %v1149 = vld [vmem:[%s9] sm:$0x1]
        %v1151 = vlaneseq
        %v1152 = vshrl.u32 %v1151, 7
        %v1153 = vsub.s32 0, %v1152
        %v1154 = vrot.slane %v1149, %v1153
        %v1192 = vunpack.c.l.b16 %v1113
        %v1193 = vunpack.c.l.b16 %v1114
        %v1194 = vunpack.c.l.b16 %v1115
        %v1195 = vunpack.c.l.b16 %v1116
        %v1196 = vunpack.c.l.b16 %v1117
        %v1197 = vunpack.c.l.b16 %v1118
        %v1198 = vunpack.c.l.b16 %v1119
        %v1199 = vunpack.c.l.b16 %v1120
        %v1200 = vunpack.c.l.b16 %v1121
        %v1201 = vunpack.c.l.b16 %v1122
        %v1202 = vunpack.c.l.b16 %v1123
        %v1203 = vunpack.c.l.b16 %v1124
        %v1204 = vunpack.c.l.b16 %v1125
        %v1205 = vunpack.c.l.b16 %v1126
        %v1206 = vunpack.c.l.b16 %v1127
        %v1207 = vunpack.c.l.b16 %v1128
        %v1208 = vunpack.c.l.b16 %v1129
        %v1209 = vunpack.c.l.b16 %v1130
        %v1210 = vunpack.c.l.b16 %v1131
        %v1211 = vunpack.c.l.b16 %v1132
        %v1212 = vunpack.c.l.b16 %v1133
        %v1213 = vunpack.c.l.b16 %v1134
        %v1214 = vunpack.c.l.b16 %v1135
        %v1215 = vunpack.c.l.b16 %v1136
        %v1216 = vunpack.c.l.b16 %v1137
        %v1217 = vunpack.c.l.b16 %v1138
        %v1218 = vunpack.c.l.b16 %v1139
        %v1219 = vunpack.c.l.b16 %v1140
        %v1220 = vunpack.c.l.b16 %v1141
        %v1221 = vunpack.c.l.b16 %v1142
        %v1222 = vunpack.c.l.b16 %v1143
        %v1223 = vunpack.c.l.b16 %v1144
        %v1224 = vunpack.c.l.b16 %v1145
        %v1225 = vunpack.c.l.b16 %v1146
        %v1226 = vunpack.c.l.b16 %v1147
        %v1227 = vunpack.c.l.b16 %v1148
        %v1228 = vpack.c.b16 %v1193, %v1192
        %v1229 = vpack.c.b16 %v1195, %v1194
        %v1230 = vpack.c.b16 %v1197, %v1196
        %v1231 = vpack.c.b16 %v1199, %v1198
        %v1232 = vpack.c.b16 %v1201, %v1200
        %v1233 = vpack.c.b16 %v1203, %v1202
        %v1234 = vpack.c.b16 %v1205, %v1204
        %v1235 = vpack.c.b16 %v1207, %v1206
        %v1236 = vpack.c.b16 %v1209, %v1208
        %v1237 = vpack.c.b16 %v1211, %v1210
        %v1238 = vpack.c.b16 %v1213, %v1212
        %v1239 = vpack.c.b16 %v1215, %v1214
        %v1240 = vpack.c.b16 %v1217, %v1216
        %v1241 = vpack.c.b16 %v1219, %v1218
        %v1242 = vpack.c.b16 %v1221, %v1220
        %v1243 = vpack.c.b16 %v1223, %v1222
        %v1244 = vpack.c.b16 %v1225, %v1224
        %v1245 = vpack.c.b16 %v1227, %v1226
        %v1265 = vsel %vm568, %v1112, 0
        %1267 = vmatprep.subr.bf16.mxu0 0
        %1268 = vmatpush1.bf16.msra.mxu0 %v1228
        %1269 = vmatprep.subr.bf16.mxu0 0
        %1270 = vmatpush1.bf16.msra.mxu0 %v1229
        %1271 = vmatprep.subr.bf16.mxu0 0
        %1272 = vmatpush1.bf16.msra.mxu0 %v1230
        %1273 = vmatprep.subr.bf16.mxu0 0
        %1274 = vmatpush1.bf16.msra.mxu0 %v1231
        %1275 = vmatprep.subr.bf16.mxu0 0
        %1276 = vmatpush1.bf16.msra.mxu0 %v1232
        %1277 = vmatprep.subr.bf16.mxu0 0
        %1278 = vmatpush1.bf16.msra.mxu0 %v1233
        %1279 = vmatprep.subr.bf16.mxu0 0
        %1280 = vmatpush1.bf16.msra.mxu0 %v1234
        %1281 = vmatprep.subr.bf16.mxu0 0
        %1282 = vmatpush1.bf16.msra.mxu0 %v1235
        %1283 = vmatprep.subr.bf16.mxu0 0
        %1284 = vmatpush1.bf16.msra.mxu0 %v1236
        %1285 = vmatprep.subr.bf16.mxu0 0
        %1286 = vmatpush1.bf16.msra.mxu0 %v1237
        %1287 = vmatprep.subr.bf16.mxu0 0
        %1288 = vmatpush1.bf16.msra.mxu0 %v1238
        %1289 = vmatprep.subr.bf16.mxu0 0
        %1290 = vmatpush1.bf16.msra.mxu0 %v1239
        %1291 = vmatprep.subr.bf16.mxu0 0
        %1292 = vmatpush1.bf16.msra.mxu0 %v1240
        %1293 = vmatprep.subr.bf16.mxu0 0
        %1294 = vmatpush1.bf16.msra.mxu0 %v1241
        %1295 = vmatprep.subr.bf16.mxu0 0
        %1296 = vmatpush1.bf16.msra.mxu0 %v1242
        %1297 = vmatprep.subr.bf16.mxu0 0
        %1298 = vmatpush1.bf16.msra.mxu0 %v1243
        %1299 = vmatprep.mubr.bf16.mxu0 %v1111
        %1300 = vmatmul.mubr.bf16.gmra.mrb[0].mxu0 %v1110
        %v1301 = vpop.f32.mrb[0].mxu0
        %v1302 = vadd.f32 %v1154, %v1301
        %v1303 = vpop.f32.mrb[0].mxu0
        %v1304 = vpop.f32.mrb[0].mxu0
        %v1305 = vadd.f32 %v1154, %v1304
        %v1306 = vpop.f32.mrb[0].mxu0
        %1307 = vdwg.mxu0
        %1308 = vmatprep.subr.bf16.mxu0 0
        %1309 = vmatpush1.bf16.msra.mxu0 %v1244
        %1310 = vmatprep.subr.bf16.mxu0 0
        %1311 = vmatpush1.bf16.msra.mxu0 %v1245
        %1312 = vmatprep.subr.bf16.mxu0 0
        %1313 = vmatpush1.bf16.msra.mxu0 0
        %1314 = vmatprep.subr.bf16.mxu0 0
        %1315 = vmatpush1.bf16.msra.mxu0 0
        %1316 = vmatprep.subr.bf16.mxu0 0
        %1317 = vmatpush1.bf16.msra.mxu0 0
        %1318 = vmatprep.subr.bf16.mxu0 0
        %1319 = vmatpush1.bf16.msra.mxu0 0
        %1320 = vmatprep.subr.bf16.mxu0 0
        %1321 = vmatpush1.bf16.msra.mxu0 0
        %1322 = vmatprep.subr.bf16.mxu0 0
        %1323 = vmatpush1.bf16.msra.mxu0 0
        %1324 = vmatprep.subr.bf16.mxu0 0
        %1325 = vmatpush1.bf16.msra.mxu0 0
        %1326 = vmatprep.subr.bf16.mxu0 0
        %1327 = vmatpush1.bf16.msra.mxu0 0
        %1328 = vmatprep.subr.bf16.mxu0 0
        %1329 = vmatpush1.bf16.msra.mxu0 0
        %1330 = vmatprep.subr.bf16.mxu0 0
        %1331 = vmatpush1.bf16.msra.mxu0 0
        %1332 = vmatprep.subr.bf16.mxu0 0
        %1333 = vmatpush1.bf16.msra.mxu0 0
        %1334 = vmatprep.subr.bf16.mxu0 0
        %1335 = vmatpush1.bf16.msra.mxu0 0
        %1336 = vmatprep.subr.bf16.mxu0 0
        %1337 = vmatpush1.bf16.msra.mxu0 0
        %1338 = vmatprep.subr.bf16.mxu0 0
        %1339 = vmatpush1.bf16.msra.mxu0 0
        %1340 = vmatprep.mubr.bf16.mxu0 0
        %1341 = vmatmul.mubr.bf16.gmra.mrb[0].mxu0 %v1265
        %v1342 = vpop.f32.mrb[0].mxu0
        %v1343 = vadd.f32 %v1302, %v1342
        %v1344 = vpop.f32.mrb[0].mxu0
        %v1345 = vpop.f32.mrb[0].mxu0
        %v1346 = vadd.f32 %v1305, %v1345
        %v1347 = vpop.f32.mrb[0].mxu0
        %1348 = vdwg.mxu0
        %v1349 = vmax.f32 %v1343, 0.0
        %v1350 = vmax.f32 %v1346, 0.0
        %v1351 = vpack.c.bf16 %v1350, %v1349
        %v1352 = vld [vmem:[%s10] sm:$0xf]
        %v1353 = vld [vmem:[%s10 + $0x4] sm:$0xf]
        %v1354 = vld [vmem:[%s10 + $0x8] sm:$0xf]
        %v1355 = vld [vmem:[%s10 + $0xc] sm:$0xf]
        %v1356 = vld [vmem:[%s10 + $0x10] sm:$0xf]
        %v1357 = vld [vmem:[%s10 + $0x14] sm:$0xf]
        %v1358 = vld [vmem:[%s10 + $0x18] sm:$0xf]
        %v1359 = vld [vmem:[%s10 + $0x1c] sm:$0xf]
        %v1360 = vld [vmem:[%s11] sm:$0x1]
        %v1362 = vlaneseq
        %v1363 = vshrl.u32 %v1362, 7
        %v1364 = vsub.s32 0, %v1363
        %v1365 = vrot.slane %v1360, %v1364
        %v1375 = vunpack.c.l.b16 %v1352
        %v1376 = vunpack.c.l.b16 %v1353
        %v1377 = vunpack.c.l.b16 %v1354
        %v1378 = vunpack.c.l.b16 %v1355
        %v1379 = vunpack.c.l.b16 %v1356
        %v1380 = vunpack.c.l.b16 %v1357
        %v1381 = vunpack.c.l.b16 %v1358
        %v1382 = vunpack.c.l.b16 %v1359
        %v1383 = vpack.c.b16 %v1376, %v1375
        %v1384 = vpack.c.b16 %v1378, %v1377
        %v1385 = vpack.c.b16 %v1380, %v1379
        %v1386 = vpack.c.b16 %v1382, %v1381
        %v1392 = vsel %vm1098, %v1351, 0
        %1394 = vmatprep.subr.bf16.mxu0 0
        %1395 = vmatpush1.bf16.msra.mxu0 %v1383
        %1396 = vmatprep.subr.bf16.mxu0 0
        %1397 = vmatpush1.bf16.msra.mxu0 %v1384
        %1398 = vmatprep.subr.bf16.mxu0 0
        %1399 = vmatpush1.bf16.msra.mxu0 %v1385
        %1400 = vmatprep.subr.bf16.mxu0 0
        %1401 = vmatpush1.bf16.msra.mxu0 %v1386
        %1402 = vmatprep.subr.bf16.mxu0 0
        %1403 = vmatpush1.bf16.msra.mxu0 0
        %1404 = vmatprep.subr.bf16.mxu0 0
        %1405 = vmatpush1.bf16.msra.mxu0 0
        %1406 = vmatprep.subr.bf16.mxu0 0
        %1407 = vmatpush1.bf16.msra.mxu0 0
        %1408 = vmatprep.subr.bf16.mxu0 0
        %1409 = vmatpush1.bf16.msra.mxu0 0
        %1410 = vmatprep.subr.bf16.mxu0 0
        %1411 = vmatpush1.bf16.msra.mxu0 0
        %1412 = vmatprep.subr.bf16.mxu0 0
        %1413 = vmatpush1.bf16.msra.mxu0 0
        %1414 = vmatprep.subr.bf16.mxu0 0
        %1415 = vmatpush1.bf16.msra.mxu0 0
        %1416 = vmatprep.subr.bf16.mxu0 0
        %1417 = vmatpush1.bf16.msra.mxu0 0
        %1418 = vmatprep.subr.bf16.mxu0 0
        %1419 = vmatpush1.bf16.msra.mxu0 0
        %1420 = vmatprep.subr.bf16.mxu0 0
        %1421 = vmatpush1.bf16.msra.mxu0 0
        %1422 = vmatprep.subr.bf16.mxu0 0
        %1423 = vmatpush1.bf16.msra.mxu0 0
        %1424 = vmatprep.subr.bf16.mxu0 0
        %1425 = vmatpush1.bf16.msra.mxu0 0
        %1426 = vmatprep.mubr.bf16.mxu0 0
        %1427 = vmatmul.mubr.bf16.gmra.mrb[0].mxu0 %v1392
        %v1428 = vpop.f32.mrb[0].mxu0
        %v1429 = vadd.f32 %v1365, %v1428
        %v1430 = vpop.f32.mrb[0].mxu0
        %v1431 = vpop.f32.mrb[0].mxu0
        %v1432 = vadd.f32 %v1365, %v1431
        %v1433 = vpop.f32.mrb[0].mxu0
        %1434 = vdwg.mxu0
        %v1435 = vadd.f32 %v1429, %v1002
        %v1436 = vadd.f32 %v1432, %v1003
        %v1437 = vld [vmem:[%s12] sm:$0x1]
        %v1438 = vld [vmem:[%s13] sm:$0x1]
        %v1439 = vsel %vm568, %v1435, 0.0
        %1440 = vadd.xlane.f32.xlu0 %v1439
        %v1441 = vpop.xlane.xlu0 %1440
        %v1442 = vsel %vm568, %v1436, 0.0
        %1443 = vadd.xlane.f32.xlu0 %v1442
        %v1444 = vpop.xlane.xlu0 %1443
        %v1445 = vmul.f32 %v1441, %v956
        %v1446 = vmul.f32 %v1444, %v956
        %v1447 = vsub.f32 %v1435, %v1445
        %v1448 = vsub.f32 %v1436, %v1446
        %v1449 = vmul.f32 %v1447, %v1447
        %v1450 = vmul.f32 %v1448, %v1448
        %v1451 = vsel %vm568, %v1449, 0.0
        %1452 = vadd.xlane.f32.xlu0 %v1451
        %v1453 = vpop.xlane.xlu0 %1452
        %v1454 = vsel %vm568, %v1450, 0.0
        %1455 = vadd.xlane.f32.xlu0 %v1454
        %v1456 = vpop.xlane.xlu0 %1455
        %v1457 = vmul.f32 %v1453, %v956
        %v1458 = vmul.f32 %v1456, %v956
        %v1459 = vadd.f32 %v1457, 1e-05
        %v1460 = vadd.f32 %v1458, 1e-05
        %v1461 = vrsqrt.pop %v1459
        %v1462 = vrsqrt.pop %v1460
        %v1463 = vmul.f32 %v1447, %v1461
        %v1464 = vmul.f32 %v1448, %v1462
        %v1466 = vlaneseq
        %v1467 = vshrl.u32 %v1466, 7
        %v1468 = vsub.s32 0, %v1467
        %v1469 = vrot.slane %v1437, %v1468
        %v1471 = vmul.f32 %v1463, %v1469
        %v1472 = vmul.f32 %v1464, %v1469
        %v1474 = vlaneseq
        %v1475 = vshrl.u32 %v1474, 7
        %v1476 = vsub.s32 0, %v1475
        %v1477 = vrot.slane %v1438, %v1476
        %v1479 = vadd.f32 %v1471, %v1477
        %v1480 = vadd.f32 %v1472, %v1477
        %v1481 = vsel %vm1000, 0.0, %v1479
        %v1482 = vsel %vm1001, 0.0, %v1480
        %1483 = vst.msk [vmem:[%s522] sm:$0xff] %vm568, %v1481
        %1484 = vst.msk [vmem:[%s522 + $0x8] sm:$0xff] %vm568, %v1482
        %v1485 = vpack.c.bf16 %v1482, %v1481
        %v1486 = vld [vmem:[%s14] sm:$0xf]
        %v1487 = vld [vmem:[%s14 + $0x4] sm:$0xf]
        %v1488 = vld [vmem:[%s14 + $0x8] sm:$0xf]
        %v1489 = vld [vmem:[%s14 + $0xc] sm:$0xf]
        %v1490 = vld [vmem:[%s15] sm:$0x1]
        %v1492 = vlaneseq
        %v1493 = vshrl.u32 %v1492, 7
        %v1494 = vsub.s32 0, %v1493
        %v1495 = vrot.slane %v1490, %v1494
        %v1501 = vunpack.c.l.b16 %v1486
        %v1502 = vunpack.c.l.b16 %v1487
        %v1503 = vunpack.c.l.b16 %v1488
        %v1504 = vunpack.c.l.b16 %v1489
        %v1505 = vpack.c.b16 %v1502, %v1501
        %v1506 = vpack.c.b16 %v1504, %v1503
        %v1510 = vsel %vm568, %v1485, 0
        %1512 = vmatprep.subr.bf16.mxu0 0
        %1513 = vmatpush1.bf16.msra.mxu0 %v1505
        %1514 = vmatprep.subr.bf16.mxu0 0
        %1515 = vmatpush1.bf16.msra.mxu0 %v1506
        %1516 = vmatprep.subr.bf16.mxu0 0
        %1517 = vmatpush1.bf16.msra.mxu0 0
        %1518 = vmatprep.subr.bf16.mxu0 0
        %1519 = vmatpush1.bf16.msra.mxu0 0
        %1520 = vmatprep.subr.bf16.mxu0 0
        %1521 = vmatpush1.bf16.msra.mxu0 0
        %1522 = vmatprep.subr.bf16.mxu0 0
        %1523 = vmatpush1.bf16.msra.mxu0 0
        %1524 = vmatprep.subr.bf16.mxu0 0
        %1525 = vmatpush1.bf16.msra.mxu0 0
        %1526 = vmatprep.subr.bf16.mxu0 0
        %1527 = vmatpush1.bf16.msra.mxu0 0
        %1528 = vmatprep.subr.bf16.mxu0 0
        %1529 = vmatpush1.bf16.msra.mxu0 0
        %1530 = vmatprep.subr.bf16.mxu0 0
        %1531 = vmatpush1.bf16.msra.mxu0 0
        %1532 = vmatprep.subr.bf16.mxu0 0
        %1533 = vmatpush1.bf16.msra.mxu0 0
        %1534 = vmatprep.subr.bf16.mxu0 0
        %1535 = vmatpush1.bf16.msra.mxu0 0
        %1536 = vmatprep.subr.bf16.mxu0 0
        %1537 = vmatpush1.bf16.msra.mxu0 0
        %1538 = vmatprep.subr.bf16.mxu0 0
        %1539 = vmatpush1.bf16.msra.mxu0 0
        %1540 = vmatprep.subr.bf16.mxu0 0
        %1541 = vmatpush1.bf16.msra.mxu0 0
        %1542 = vmatprep.subr.bf16.mxu0 0
        %1543 = vmatpush1.bf16.msra.mxu0 0
        %1544 = vmatprep.mubr.bf16.mxu0 0
        %1545 = vmatmul.mubr.bf16.gmra.mrb[0].mxu0 %v1510
        %v1546 = vpop.f32.mrb[0].mxu0
        %v1547 = vadd.f32 %v1495, %v1546
        %v1548 = vpop.f32.mrb[0].mxu0
        %v1549 = vpop.f32.mrb[0].mxu0
        %v1550 = vadd.f32 %v1495, %v1549
        %v1551 = vpop.f32.mrb[0].mxu0
        %1552 = vdwg.mxu0
        %1553 = vst.msk [vmem:[%s539] sm:$0xff] %vm621, %v1547
        %1554 = vst.msk [vmem:[%s539 + $0x8] sm:$0xff] %vm621, %v1550
        %s1555 = sand.u32 %s366, 1
        %s1556 = scalar_lea.sflag [#allocation5], %s1555
        %s1557 = sand.u32 %s366, 1
        %s1558 = smul.addr %s1557, 16
        %s1559 = scalar_lea.vmem [#allocation4], %s1558
        %p1560 = scmp.lt.s32.totalorder %s38, 1
        %s1561 = scalar_select %p1560, %s38, 1
        %s1562 = smul.addr %s1561, 2
        %s1563 = smul.addr %s1562, 8
        %s1564 = scalar_lea.vmem %s17, %s1563
        // Predicated region
        $region81: #{fastspeech2_forward.8} parent=79 // pred_check
          %p1565 = pneg %p376
        $region82: #{fastspeech2_forward.8} parent=79 // pred_check_branch
          %1567 = sbr.rel (%p1565) target = $region84
        $region83: #{fastspeech2_forward.8} parent=79 // pred_region
          %s1569 = ssub.s32 256, 256
          %1570 = vsyncadd %s1556, %s1569
          %s1571 = smul.addr %s38, 2
          %s1572 = smul.addr %s1571, 128
          %s1573 = scalar_lea.hbm %s16, %s1572
          %s1574 = sshll.u32 %s1559, 4
          %s1575 = int_to_ptr.vmem [resolvable:$true] %s1574
          %1580 = dma.vmem_to_hbm [thread:$0]  %s1575, 256, %s1573, %s1556, 128, 128, 8
        $region84: #{fastspeech2_forward.8} parent=79 // pred_fallthru
          _
        // Predicated region
        $region85: #{fastspeech2_forward.8} parent=79 // pred_check
          %p1581 = pneg %p402
        $region86: #{fastspeech2_forward.8} parent=79 // pred_check_branch
          %1583 = sbr.rel (%p1581) target = $region88
        $region87: #{fastspeech2_forward.8} parent=79 // pred_region
          _
        $region88: #{fastspeech2_forward.8} parent=79 // pred_fallthru
          _
      $region80: #{fastspeech2_forward.8} parent=5 // pred_fallthru
        _
      %p1584 = scmp.le.s32.totalorder 2, %s33
      // Predicated region
      $region89: #{fastspeech2_forward.8} parent=5 // pred_check
        %p1585 = pneg %p1584
      $region90: #{fastspeech2_forward.8} parent=5 // pred_check_branch
        %1587 = sbr.rel (%p1585) target = $region92
      $region91: #{fastspeech2_forward.8} parent=5 // pred_region
        %s1588 = ssub.s32 %s33, 2
        // Predicated region
        $region93: #{fastspeech2_forward.8} parent=91 // pred_check
          %p1589 = pneg %p382
        $region94: #{fastspeech2_forward.8} parent=91 // pred_check_branch
          %1591 = sbr.rel (%p1589) target = $region96
        $region95: #{fastspeech2_forward.8} parent=91 // pred_region
          %s1592 = sand.u32 %s367, 1
          %s1593 = scalar_lea.sflag [#allocation5], %s1592
          %s1594 = sand.u32 %s367, 1
          %s1595 = smul.addr %s1594, 16
          %s1596 = scalar_lea.vmem [#allocation4], %s1595
          %1597 = dma.done %s1593, 256
        $region96: #{fastspeech2_forward.8} parent=91 // pred_fallthru
          _
        // Predicated region
        $region97: #{fastspeech2_forward.8} parent=91 // pred_check
          %p1598 = pneg %p408
        $region98: #{fastspeech2_forward.8} parent=91 // pred_check_branch
          %1600 = sbr.rel (%p1598) target = $region100
        $region99: #{fastspeech2_forward.8} parent=91 // pred_region
          %p1601 = scmp.lt.s32.totalorder %s39, 1
          %s1602 = scalar_select %p1601, %s39, 1
          %s1603 = smul.addr %s1602, 2
          %s1604 = smul.addr %s1603, 8
          %s1605 = scalar_lea.vmem %s17, %s1604
        $region100: #{fastspeech2_forward.8} parent=91 // pred_fallthru
          _
      $region92: #{fastspeech2_forward.8} parent=5 // pred_fallthru
        _
    $region6: #{fastspeech2_forward.8} parent=1 // loop_footer
      %s37 = sadd.s32 1, %s33
    $region7: #{fastspeech2_forward.8} parent=1 // loop_footer_branch
      %32 = sbr.rel target = $region3
    $region8: #{fastspeech2_forward.8} parent=1 // loop_exit
      _
    %1606 = vsyncpa [#allocation5], 1
    %s1607 = scalar_lea.sflag [#allocation5], 1
    %1608 = vsyncpa %s1607, 1

// kernel: fastspeech2_forward.7
$region0: #{fastspeech2_forward.7}
  #allocation0 [shape = 'u32[]', space=smem, size = 0x4, offset = 0x4, fixed_abs, tag = 'smem constant byte address 0x4 - core index']
  #allocation1 [shape = 'u32[144,128]{1,0:T(1,128)}', space=vmem, size = 0x12000, scoped, tag = 'internal scratch']
  #allocation2 [shape = 's32[1]{0}', space=sflag, size = 0x4, scoped, tag = 'scoped memory for fastspeech2_forward.7']
  #allocation3 [shape = 'u8[512]{0}', space=smem, size = 0x200, scoped, tag = 'prefetched SMEM operand 0']
  %s0 = inlined_call_operand.vmem [shape: s32[2], index: 0, kind: input, shape index: {}]
  %s1 = inlined_call_operand.vmem [shape: f32[2,16,32], index: 1, kind: input, shape index: {}]
  %s2 = inlined_call_operand.vmem [shape: bf16[2,96,32], index: 2, kind: input, shape index: {}]
  %s3 = inlined_call_operand.vmem [shape: f32[2,1,32], index: 3, kind: input, shape index: {}]
  %s4 = inlined_call_operand.vmem [shape: f32[2,1,32], index: 4, kind: input, shape index: {}]
  %s5 = inlined_call_operand.vmem [shape: f32[2,1,32], index: 5, kind: input, shape index: {}]
  %s6 = inlined_call_operand.vmem [shape: bf16[2,96,32], index: 6, kind: input, shape index: {}]
  %s7 = inlined_call_operand.vmem [shape: f32[2,1,32], index: 7, kind: input, shape index: {}]
  %s8 = inlined_call_operand.vmem [shape: f32[2,1,32], index: 8, kind: input, shape index: {}]
  %s9 = inlined_call_operand.vmem [shape: f32[2,1,32], index: 9, kind: input, shape index: {}]
  %s10 = inlined_call_operand.vmem [shape: f32[2,1,32], index: 10, kind: input, shape index: {}]
  %s11 = inlined_call_operand.vmem [shape: f32[2,1,1], index: 11, kind: input, shape index: {}]
  %s12 = inlined_call_operand.vmem [shape: f32[2,2,16], index: 12, kind: output, shape index: {}]
  %s13 = sld [smem:[#allocation0]]
  $region77: #{fastspeech2_forward.7} parent=0
    _
  %s15 = ssub.s32 1, %s13
  %s16 = scalar_select 0, %s15, %s13
  %s17 = sshll.u32 %s0, 4
  %s18 = int_to_ptr.vmem [resolvable:$true] %s17
  %20 = dma.vmem_to_smem %s18, 16, [#allocation3], [#allocation2]
  %21 = dma.done [#allocation2], 16
  %22 = sfence
  loop: start=0, step=1, limit=4
  $region2: #{fastspeech2_forward.7} parent=0 // loop_pre_header
    _
  $region3: #{fastspeech2_forward.7} parent=0 // loop_header
    %s24 = sphi 0, %s28
    %p25 = scmp.ge.s32.totalorder %s24, 4
    %s34 = sphi 0, %s36
    %s37 = sphi 0, %s34
    %s38 = sphi 0, %s37
    %s54 = sphi 0, %s38
    %s58 = sphi 0, %s58
    %s60 = sphi 0, %s58
    %s61 = sphi 0, %s60
    %s75 = sphi 0, %s61
    %s79 = sphi 0, %s79
    %s81 = sphi 0, %s79
    %s82 = sphi 0, %s81
    %s96 = sphi 0, %s82
    %s100 = sphi 0, %s100
    %s102 = sphi 0, %s100
    %s103 = sphi 0, %s102
    %s117 = sphi 0, %s103
    %s121 = sphi 0, %s121
    %s123 = sphi 0, %s121
    %s124 = sphi 0, %s123
    %s138 = sphi 0, %s124
    %s142 = sphi 0, %s142
    %s144 = sphi 0, %s142
    %s145 = sphi 0, %s144
    %s159 = sphi 0, %s145
    %s163 = sphi 0, %s163
    %s165 = sphi 0, %s163
    %s166 = sphi 0, %s165
    %s180 = sphi 0, %s166
    %s184 = sphi 0, %s184
    %s186 = sphi 0, %s184
    %s187 = sphi 0, %s186
    %s201 = sphi 0, %s187
    %s205 = sphi 0, %s205
    %s207 = sphi 0, %s205
    %s208 = sphi 0, %s207
    %s222 = sphi 0, %s208
    %s226 = sphi 0, %s226
    %s228 = sphi 0, %s226
    %s229 = sphi 0, %s228
    %s243 = sphi 0, %s229
    %s247 = sphi 0, %s247
    %s249 = sphi 0, %s247
    %s250 = sphi 0, %s249
    %s264 = sphi 0, %s250
    %s270 = sphi 0, %s272
    %s273 = sphi 0, %s270
    %s274 = sphi 0, %s273
    %s290 = sphi 0, %s274
  $region4: #{fastspeech2_forward.7} parent=0 // loop_header_branch
    %27 = sbr.rel (%p25) target = $region8
  $region5: #{fastspeech2_forward.7} parent=0 // loop_body
    %s29 = ssub.s32 %s24, 1
    %s30 = ssub.s32 %s24, 2
    %s31 = sadd.s32 %s24, 1
    %s32 = ssub.s32 %s24, %s31
    %p33 = scmp.eq.s32.totalorder %s32, 0
    %s35 = sadd.s32 %s34, 1
    %s36 = scalar_select %p33, %s34, %s35
    %p39 = pneg %p33
    %p40 = scmp.eq.s32.totalorder %s24, 1
    %p41 = por %p39, %p40
    %p42 = scmp.ne.s32.totalorder %s34, %s37
    %p43 = scmp.eq.s32.totalorder %s24, 0
    %p44 = por %p42, %p43
    %p45 = scmp.ne.s32.totalorder %s34, %s37
    %p46 = scmp.eq.s32.totalorder %s29, 1
    %p47 = por %p45, %p46
    %p48 = scmp.ne.s32.totalorder %s37, %s38
    %p49 = scmp.eq.s32.totalorder %s29, 0
    %p50 = por %p48, %p49
    %p51 = scmp.ne.s32.totalorder %s37, %s38
    %p52 = scmp.eq.s32.totalorder %s30, 1
    %p53 = por %p51, %p52
    %p55 = scmp.ne.s32.totalorder %s38, %s54
    %p56 = scmp.eq.s32.totalorder %s30, 0
    %p57 = por %p55, %p56
    %s59 = sadd.s32 %s58, 1
    %p62 = scmp.eq.s32.totalorder %s24, 1
    %p63 = scmp.ne.s32.totalorder %s58, %s60
    %p64 = scmp.eq.s32.totalorder %s24, 0
    %p65 = por %p63, %p64
    %p66 = scmp.ne.s32.totalorder %s58, %s60
    %p67 = scmp.eq.s32.totalorder %s29, 1
    %p68 = por %p66, %p67
    %p69 = scmp.ne.s32.totalorder %s60, %s61
    %p70 = scmp.eq.s32.totalorder %s29, 0
    %p71 = por %p69, %p70
    %p72 = scmp.ne.s32.totalorder %s60, %s61
    %p73 = scmp.eq.s32.totalorder %s30, 1
    %p74 = por %p72, %p73
    %p76 = scmp.ne.s32.totalorder %s61, %s75
    %p77 = scmp.eq.s32.totalorder %s30, 0
    %p78 = por %p76, %p77
    %s80 = sadd.s32 %s79, 1
    %p83 = scmp.eq.s32.totalorder %s24, 1
    %p84 = scmp.ne.s32.totalorder %s79, %s81
    %p85 = scmp.eq.s32.totalorder %s24, 0
    %p86 = por %p84, %p85
    %p87 = scmp.ne.s32.totalorder %s79, %s81
    %p88 = scmp.eq.s32.totalorder %s29, 1
    %p89 = por %p87, %p88
    %p90 = scmp.ne.s32.totalorder %s81, %s82
    %p91 = scmp.eq.s32.totalorder %s29, 0
    %p92 = por %p90, %p91
    %p93 = scmp.ne.s32.totalorder %s81, %s82
    %p94 = scmp.eq.s32.totalorder %s30, 1
    %p95 = por %p93, %p94
    %p97 = scmp.ne.s32.totalorder %s82, %s96
    %p98 = scmp.eq.s32.totalorder %s30, 0
    %p99 = por %p97, %p98
    %s101 = sadd.s32 %s100, 1
    %p104 = scmp.eq.s32.totalorder %s24, 1
    %p105 = scmp.ne.s32.totalorder %s100, %s102
    %p106 = scmp.eq.s32.totalorder %s24, 0
    %p107 = por %p105, %p106
    %p108 = scmp.ne.s32.totalorder %s100, %s102
    %p109 = scmp.eq.s32.totalorder %s29, 1
    %p110 = por %p108, %p109
    %p111 = scmp.ne.s32.totalorder %s102, %s103
    %p112 = scmp.eq.s32.totalorder %s29, 0
    %p113 = por %p111, %p112
    %p114 = scmp.ne.s32.totalorder %s102, %s103
    %p115 = scmp.eq.s32.totalorder %s30, 1
    %p116 = por %p114, %p115
    %p118 = scmp.ne.s32.totalorder %s103, %s117
    %p119 = scmp.eq.s32.totalorder %s30, 0
    %p120 = por %p118, %p119
    %s122 = sadd.s32 %s121, 1
    %p125 = scmp.eq.s32.totalorder %s24, 1
    %p126 = scmp.ne.s32.totalorder %s121, %s123
    %p127 = scmp.eq.s32.totalorder %s24, 0
    %p128 = por %p126, %p127
    %p129 = scmp.ne.s32.totalorder %s121, %s123
    %p130 = scmp.eq.s32.totalorder %s29, 1
    %p131 = por %p129, %p130
    %p132 = scmp.ne.s32.totalorder %s123, %s124
    %p133 = scmp.eq.s32.totalorder %s29, 0
    %p134 = por %p132, %p133
    %p135 = scmp.ne.s32.totalorder %s123, %s124
    %p136 = scmp.eq.s32.totalorder %s30, 1
    %p137 = por %p135, %p136
    %p139 = scmp.ne.s32.totalorder %s124, %s138
    %p140 = scmp.eq.s32.totalorder %s30, 0
    %p141 = por %p139, %p140
    %s143 = sadd.s32 %s142, 1
    %p146 = scmp.eq.s32.totalorder %s24, 1
    %p147 = scmp.ne.s32.totalorder %s142, %s144
    %p148 = scmp.eq.s32.totalorder %s24, 0
    %p149 = por %p147, %p148
    %p150 = scmp.ne.s32.totalorder %s142, %s144
    %p151 = scmp.eq.s32.totalorder %s29, 1
    %p152 = por %p150, %p151
    %p153 = scmp.ne.s32.totalorder %s144, %s145
    %p154 = scmp.eq.s32.totalorder %s29, 0
    %p155 = por %p153, %p154
    %p156 = scmp.ne.s32.totalorder %s144, %s145
    %p157 = scmp.eq.s32.totalorder %s30, 1
    %p158 = por %p156, %p157
    %p160 = scmp.ne.s32.totalorder %s145, %s159
    %p161 = scmp.eq.s32.totalorder %s30, 0
    %p162 = por %p160, %p161
    %s164 = sadd.s32 %s163, 1
    %p167 = scmp.eq.s32.totalorder %s24, 1
    %p168 = scmp.ne.s32.totalorder %s163, %s165
    %p169 = scmp.eq.s32.totalorder %s24, 0
    %p170 = por %p168, %p169
    %p171 = scmp.ne.s32.totalorder %s163, %s165
    %p172 = scmp.eq.s32.totalorder %s29, 1
    %p173 = por %p171, %p172
    %p174 = scmp.ne.s32.totalorder %s165, %s166
    %p175 = scmp.eq.s32.totalorder %s29, 0
    %p176 = por %p174, %p175
    %p177 = scmp.ne.s32.totalorder %s165, %s166
    %p178 = scmp.eq.s32.totalorder %s30, 1
    %p179 = por %p177, %p178
    %p181 = scmp.ne.s32.totalorder %s166, %s180
    %p182 = scmp.eq.s32.totalorder %s30, 0
    %p183 = por %p181, %p182
    %s185 = sadd.s32 %s184, 1
    %p188 = scmp.eq.s32.totalorder %s24, 1
    %p189 = scmp.ne.s32.totalorder %s184, %s186
    %p190 = scmp.eq.s32.totalorder %s24, 0
    %p191 = por %p189, %p190
    %p192 = scmp.ne.s32.totalorder %s184, %s186
    %p193 = scmp.eq.s32.totalorder %s29, 1
    %p194 = por %p192, %p193
    %p195 = scmp.ne.s32.totalorder %s186, %s187
    %p196 = scmp.eq.s32.totalorder %s29, 0
    %p197 = por %p195, %p196
    %p198 = scmp.ne.s32.totalorder %s186, %s187
    %p199 = scmp.eq.s32.totalorder %s30, 1
    %p200 = por %p198, %p199
    %p202 = scmp.ne.s32.totalorder %s187, %s201
    %p203 = scmp.eq.s32.totalorder %s30, 0
    %p204 = por %p202, %p203
    %s206 = sadd.s32 %s205, 1
    %p209 = scmp.eq.s32.totalorder %s24, 1
    %p210 = scmp.ne.s32.totalorder %s205, %s207
    %p211 = scmp.eq.s32.totalorder %s24, 0
    %p212 = por %p210, %p211
    %p213 = scmp.ne.s32.totalorder %s205, %s207
    %p214 = scmp.eq.s32.totalorder %s29, 1
    %p215 = por %p213, %p214
    %p216 = scmp.ne.s32.totalorder %s207, %s208
    %p217 = scmp.eq.s32.totalorder %s29, 0
    %p218 = por %p216, %p217
    %p219 = scmp.ne.s32.totalorder %s207, %s208
    %p220 = scmp.eq.s32.totalorder %s30, 1
    %p221 = por %p219, %p220
    %p223 = scmp.ne.s32.totalorder %s208, %s222
    %p224 = scmp.eq.s32.totalorder %s30, 0
    %p225 = por %p223, %p224
    %s227 = sadd.s32 %s226, 1
    %p230 = scmp.eq.s32.totalorder %s24, 1
    %p231 = scmp.ne.s32.totalorder %s226, %s228
    %p232 = scmp.eq.s32.totalorder %s24, 0
    %p233 = por %p231, %p232
    %p234 = scmp.ne.s32.totalorder %s226, %s228
    %p235 = scmp.eq.s32.totalorder %s29, 1
    %p236 = por %p234, %p235
    %p237 = scmp.ne.s32.totalorder %s228, %s229
    %p238 = scmp.eq.s32.totalorder %s29, 0
    %p239 = por %p237, %p238
    %p240 = scmp.ne.s32.totalorder %s228, %s229
    %p241 = scmp.eq.s32.totalorder %s30, 1
    %p242 = por %p240, %p241
    %p244 = scmp.ne.s32.totalorder %s229, %s243
    %p245 = scmp.eq.s32.totalorder %s30, 0
    %p246 = por %p244, %p245
    %s248 = sadd.s32 %s247, 1
    %p251 = scmp.eq.s32.totalorder %s24, 1
    %p252 = scmp.ne.s32.totalorder %s247, %s249
    %p253 = scmp.eq.s32.totalorder %s24, 0
    %p254 = por %p252, %p253
    %p255 = scmp.ne.s32.totalorder %s247, %s249
    %p256 = scmp.eq.s32.totalorder %s29, 1
    %p257 = por %p255, %p256
    %p258 = scmp.ne.s32.totalorder %s249, %s250
    %p259 = scmp.eq.s32.totalorder %s29, 0
    %p260 = por %p258, %p259
    %p261 = scmp.ne.s32.totalorder %s249, %s250
    %p262 = scmp.eq.s32.totalorder %s30, 1
    %p263 = por %p261, %p262
    %p265 = scmp.ne.s32.totalorder %s250, %s264
    %p266 = scmp.eq.s32.totalorder %s30, 0
    %p267 = por %p265, %p266
    %s268 = ssub.s32 %s24, %s31
    %p269 = scmp.eq.s32.totalorder %s268, 0
    %s271 = sadd.s32 %s270, 1
    %s272 = scalar_select %p269, %s270, %s271
    %p275 = pneg %p269
    %p276 = scmp.eq.s32.totalorder %s24, 1
    %p277 = por %p275, %p276
    %p278 = scmp.ne.s32.totalorder %s270, %s273
    %p279 = scmp.eq.s32.totalorder %s24, 0
    %p280 = por %p278, %p279
    %p281 = scmp.ne.s32.totalorder %s270, %s273
    %p282 = scmp.eq.s32.totalorder %s29, 1
    %p283 = por %p281, %p282
    %p284 = scmp.ne.s32.totalorder %s273, %s274
    %p285 = scmp.eq.s32.totalorder %s29, 0
    %p286 = por %p284, %p285
    %p287 = scmp.ne.s32.totalorder %s273, %s274
    %p288 = scmp.eq.s32.totalorder %s30, 1
    %p289 = por %p287, %p288
    %p291 = scmp.ne.s32.totalorder %s274, %s290
    %p292 = scmp.eq.s32.totalorder %s30, 0
    %p293 = por %p291, %p292
    %p294 = scmp.le.s32.totalorder 1, %s24
    %p295 = scmp.lt.s32.totalorder %s24, 3
    %p296 = pnand %p294, %p295
    %p297 = pneg %p296
    // Predicated region
    $region9: #{fastspeech2_forward.7} parent=5 // pred_check
      _
    $region10: #{fastspeech2_forward.7} parent=5 // pred_check_branch
      %299 = sbr.rel (%p296) target = $region12
    $region11: #{fastspeech2_forward.7} parent=5 // pred_region
      %s300 = ssub.s32 %s24, 1
      // Predicated region
      $region13: #{fastspeech2_forward.7} parent=11 // pred_check
        %p301 = pneg %p71
      $region14: #{fastspeech2_forward.7} parent=11 // pred_check_branch
        %303 = sbr.rel (%p301) target = $region16
      $region15: #{fastspeech2_forward.7} parent=11 // pred_region
        _
      $region16: #{fastspeech2_forward.7} parent=11 // pred_fallthru
        _
      // Predicated region
      $region17: #{fastspeech2_forward.7} parent=11 // pred_check
        %p304 = pneg %p92
      $region18: #{fastspeech2_forward.7} parent=11 // pred_check_branch
        %306 = sbr.rel (%p304) target = $region20
      $region19: #{fastspeech2_forward.7} parent=11 // pred_region
        _
      $region20: #{fastspeech2_forward.7} parent=11 // pred_fallthru
        _
      // Predicated region
      $region21: #{fastspeech2_forward.7} parent=11 // pred_check
        %p307 = pneg %p113
      $region22: #{fastspeech2_forward.7} parent=11 // pred_check_branch
        %309 = sbr.rel (%p307) target = $region24
      $region23: #{fastspeech2_forward.7} parent=11 // pred_region
        _
      $region24: #{fastspeech2_forward.7} parent=11 // pred_fallthru
        _
      // Predicated region
      $region25: #{fastspeech2_forward.7} parent=11 // pred_check
        %p310 = pneg %p134
      $region26: #{fastspeech2_forward.7} parent=11 // pred_check_branch
        %312 = sbr.rel (%p310) target = $region28
      $region27: #{fastspeech2_forward.7} parent=11 // pred_region
        _
      $region28: #{fastspeech2_forward.7} parent=11 // pred_fallthru
        _
      // Predicated region
      $region29: #{fastspeech2_forward.7} parent=11 // pred_check
        %p313 = pneg %p155
      $region30: #{fastspeech2_forward.7} parent=11 // pred_check_branch
        %315 = sbr.rel (%p313) target = $region32
      $region31: #{fastspeech2_forward.7} parent=11 // pred_region
        _
      $region32: #{fastspeech2_forward.7} parent=11 // pred_fallthru
        _
      // Predicated region
      $region33: #{fastspeech2_forward.7} parent=11 // pred_check
        %p316 = pneg %p176
      $region34: #{fastspeech2_forward.7} parent=11 // pred_check_branch
        %318 = sbr.rel (%p316) target = $region36
      $region35: #{fastspeech2_forward.7} parent=11 // pred_region
        _
      $region36: #{fastspeech2_forward.7} parent=11 // pred_fallthru
        _
      // Predicated region
      $region37: #{fastspeech2_forward.7} parent=11 // pred_check
        %p319 = pneg %p197
      $region38: #{fastspeech2_forward.7} parent=11 // pred_check_branch
        %321 = sbr.rel (%p319) target = $region40
      $region39: #{fastspeech2_forward.7} parent=11 // pred_region
        _
      $region40: #{fastspeech2_forward.7} parent=11 // pred_fallthru
        _
      // Predicated region
      $region41: #{fastspeech2_forward.7} parent=11 // pred_check
        %p322 = pneg %p218
      $region42: #{fastspeech2_forward.7} parent=11 // pred_check_branch
        %324 = sbr.rel (%p322) target = $region44
      $region43: #{fastspeech2_forward.7} parent=11 // pred_region
        _
      $region44: #{fastspeech2_forward.7} parent=11 // pred_fallthru
        _
      // Predicated region
      $region45: #{fastspeech2_forward.7} parent=11 // pred_check
        %p325 = pneg %p239
      $region46: #{fastspeech2_forward.7} parent=11 // pred_check_branch
        %327 = sbr.rel (%p325) target = $region48
      $region47: #{fastspeech2_forward.7} parent=11 // pred_region
        _
      $region48: #{fastspeech2_forward.7} parent=11 // pred_fallthru
        _
      // Predicated region
      $region49: #{fastspeech2_forward.7} parent=11 // pred_check
        %p328 = pneg %p260
      $region50: #{fastspeech2_forward.7} parent=11 // pred_check_branch
        %330 = sbr.rel (%p328) target = $region52
      $region51: #{fastspeech2_forward.7} parent=11 // pred_region
        _
      $region52: #{fastspeech2_forward.7} parent=11 // pred_fallthru
        _
    $region12: #{fastspeech2_forward.7} parent=5 // pred_fallthru
      _
    %p331 = scmp.lt.s32.totalorder %s24, 2
    // Predicated region
    $region53: #{fastspeech2_forward.7} parent=5 // pred_check
      %p332 = pneg %p331
    $region54: #{fastspeech2_forward.7} parent=5 // pred_check_branch
      %334 = sbr.rel (%p332) target = $region56
    $region55: #{fastspeech2_forward.7} parent=5 // pred_region
      // Predicated region
      $region57: #{fastspeech2_forward.7} parent=55 // pred_check
        %p335 = pneg %p44
      $region58: #{fastspeech2_forward.7} parent=55 // pred_check_branch
        %337 = sbr.rel (%p335) target = $region60
      $region59: #{fastspeech2_forward.7} parent=55 // pred_region
        %p338 = scmp.lt.s32.totalorder %s24, 1
        %s339 = scalar_select %p338, %s24, 1
        %s340 = smul.addr %s339, 2
        %s341 = smul.addr %s340, 8
        %s342 = scalar_lea.vmem %s1, %s341
      $region60: #{fastspeech2_forward.7} parent=55 // pred_fallthru
        _
    $region56: #{fastspeech2_forward.7} parent=5 // pred_fallthru
      _
    %p343 = scmp.le.s32.totalorder 1, %s24
    %p344 = scmp.lt.s32.totalorder %s24, 3
    %p345 = pnand %p343, %p344
    %p346 = pneg %p345
    // Predicated region
    $region61: #{fastspeech2_forward.7} parent=5 // pred_check
      _
    $region62: #{fastspeech2_forward.7} parent=5 // pred_check_branch
      %348 = sbr.rel (%p345) target = $region64
    $region63: #{fastspeech2_forward.7} parent=5 // pred_region
      %s349 = ssub.s32 %s24, 1
      %p350 = scmp.lt.s32.totalorder %s29, 1
      %s351 = scalar_select %p350, %s29, 1
      %s352 = smul.addr %s351, 2
      %s353 = smul.addr %s352, 8
      %s354 = scalar_lea.vmem %s1, %s353
      %p355 = pneg %p50
      %p356 = pneg %p47
      %p357 = pneg %p71
      %p358 = pneg %p68
      %p359 = pneg %p92
      %p360 = pneg %p89
      %p361 = pneg %p113
      %p362 = pneg %p110
      %p363 = pneg %p134
      %p364 = pneg %p131
      %p365 = pneg %p155
      %p366 = pneg %p152
      %p367 = pneg %p176
      %p368 = pneg %p173
      %p369 = pneg %p197
      %p370 = pneg %p194
      %p371 = pneg %p218
      %p372 = pneg %p215
      %p373 = pneg %p239
      %p374 = pneg %p236
      %p375 = pneg %p260
      %p376 = pneg %p257
      %p377 = pneg %p286
      %p378 = pneg %p283
      %p379 = scmp.lt.s32.totalorder %s29, 1
      %s380 = scalar_select %p379, %s29, 1
      %s381 = smul.addr %s380, 2
      %s382 = scalar_lea.vmem %s12, %s381
      %p383 = scmp.lt.s32.totalorder %s29, 1
      %s384 = scalar_select %p383, %s29, 1
      %s385 = smul.addr %s384, 2
      %s386 = smul.addr %s385, 8
      %s387 = scalar_lea.vmem %s1, %s386
      %p388 = scmp.lt.s32.totalorder %s29, 1
      %s389 = scalar_select %p388, %s29, 1
      %s390 = smul.addr %s389, 2
      %s391 = scalar_lea.vmem %s12, %s390
      %s393 = sld [smem:[#allocation3 + %s29]]
      %v394 = vld [vmem:[%s387] sm:$0xff]
      %v395 = vld [vmem:[%s387 + $0x8] sm:$0xff]
      %vm398 = vcmask 1040384
      %v399 = vrot.slane %v394, 7
      %v400 = vrot.slane %v395, 7
      %v401 = vsel %vm398, %v399, %v400
      %v405 = vsel %vm398, 0.0, %v399
      %v406 = vsel %vm398, %v400, 0.0
      %vm409 = vcmask 1046528
      %v410 = vrot.slane %v405, 1
      %v411 = vrot.slane %v401, 1
      %v412 = vsel %vm409, %v410, %v411
      %v413 = vrot.slane %v406, 1
      %v414 = vsel %vm409, %v411, %v413
      %415 = vrot.lane.b32.xlu0 %v412, 32
      %v416 = vpop.permute.xlu0 %415
      %417 = vrot.lane.b32.xlu0 %v414, 32
      %v418 = vpop.permute.xlu0 %417
      %vm421 = vcmask 1045504
      %v422 = vrot.slane %v405, 2
      %v423 = vrot.slane %v401, 2
      %v424 = vsel %vm421, %v422, %v423
      %v425 = vrot.slane %v406, 2
      %v426 = vsel %vm421, %v423, %v425
      %427 = vrot.lane.b32.xlu0 %v424, 64
      %v428 = vpop.permute.xlu0 %427
      %429 = vrot.lane.b32.xlu0 %v426, 64
      %v430 = vpop.permute.xlu0 %429
      %vm433 = vcmask 261120
      %v434 = vsel %vm433, %v405, %v416
      %v435 = vsel %vm433, %v401, %v418
      %vm436 = vcmask 523264
      %v437 = vsel %vm436, %v434, %v428
      %v438 = vsel %vm436, %v435, %v430
      %v439 = vpack.c.bf16 %v438, %v437
      %v440 = vlaneseq
      %v441 = vand.u32 %v440, 127
      %v442 = vld [vmem:[%s2] sm:$0xf]
      %v443 = vld [vmem:[%s2 + $0x4] sm:$0xf]
      %v444 = vld [vmem:[%s2 + $0x8] sm:$0xf]
      %v445 = vld [vmem:[%s2 + $0xc] sm:$0xf]
      %v446 = vld [vmem:[%s2 + $0x10] sm:$0xf]
      %v447 = vld [vmem:[%s2 + $0x14] sm:$0xf]
      %v448 = vld [vmem:[%s2 + $0x18] sm:$0xf]
      %v449 = vld [vmem:[%s2 + $0x1c] sm:$0xf]
      %v450 = vld [vmem:[%s2 + $0x20] sm:$0xf]
      %v451 = vld [vmem:[%s2 + $0x24] sm:$0xf]
      %v452 = vld [vmem:[%s2 + $0x28] sm:$0xf]
      %v453 = vld [vmem:[%s2 + $0x2c] sm:$0xf]
      %v454 = vld [vmem:[%s3] sm:$0x1]
      %v456 = vlaneseq
      %v457 = vshrl.u32 %v456, 7
      %v458 = vsub.s32 0, %v457
      %v459 = vrot.slane %v454, %v458
      %v473 = vunpack.c.l.b16 %v442
      %v474 = vunpack.c.l.b16 %v443
      %v475 = vunpack.c.l.b16 %v444
      %v476 = vunpack.c.l.b16 %v445
      %v477 = vunpack.c.l.b16 %v446
      %v478 = vunpack.c.l.b16 %v447
      %v479 = vunpack.c.l.b16 %v448
      %v480 = vunpack.c.l.b16 %v449
      %v481 = vunpack.c.l.b16 %v450
      %v482 = vunpack.c.l.b16 %v451
      %v483 = vunpack.c.l.b16 %v452
      %v484 = vunpack.c.l.b16 %v453
      %v485 = vpack.c.b16 %v474, %v473
      %v486 = vpack.c.b16 %v476, %v475
      %v487 = vpack.c.b16 %v478, %v477
      %v488 = vpack.c.b16 %v480, %v479
      %v489 = vpack.c.b16 %v482, %v481
      %v490 = vpack.c.b16 %v484, %v483
      %vm497 = vcmask 785408
      %v499 = vsel %vm497, %v439, 0
      %501 = vmatprep.subr.bf16.mxu0 0
      %502 = vmatpush1.bf16.msra.mxu0 %v485
      %503 = vmatprep.subr.bf16.mxu0 0
      %504 = vmatpush1.bf16.msra.mxu0 %v486
      %505 = vmatprep.subr.bf16.mxu0 0
      %506 = vmatpush1.bf16.msra.mxu0 %v487
      %507 = vmatprep.subr.bf16.mxu0 0
      %508 = vmatpush1.bf16.msra.mxu0 %v488
      %509 = vmatprep.subr.bf16.mxu0 0
      %510 = vmatpush1.bf16.msra.mxu0 %v489
      %511 = vmatprep.subr.bf16.mxu0 0
      %512 = vmatpush1.bf16.msra.mxu0 %v490
      %513 = vmatprep.subr.bf16.mxu0 0
      %514 = vmatpush1.bf16.msra.mxu0 0
      %515 = vmatprep.subr.bf16.mxu0 0
      %516 = vmatpush1.bf16.msra.mxu0 0
      %517 = vmatprep.subr.bf16.mxu0 0
      %518 = vmatpush1.bf16.msra.mxu0 0
      %519 = vmatprep.subr.bf16.mxu0 0
      %520 = vmatpush1.bf16.msra.mxu0 0
      %521 = vmatprep.subr.bf16.mxu0 0
      %522 = vmatpush1.bf16.msra.mxu0 0
      %523 = vmatprep.subr.bf16.mxu0 0
      %524 = vmatpush1.bf16.msra.mxu0 0
      %525 = vmatprep.subr.bf16.mxu0 0
      %526 = vmatpush1.bf16.msra.mxu0 0
      %527 = vmatprep.subr.bf16.mxu0 0
      %528 = vmatpush1.bf16.msra.mxu0 0
      %529 = vmatprep.subr.bf16.mxu0 0
      %530 = vmatpush1.bf16.msra.mxu0 0
      %531 = vmatprep.subr.bf16.mxu0 0
      %532 = vmatpush1.bf16.msra.mxu0 0
      %533 = vmatprep.mubr.bf16.mxu0 0
      %534 = vmatmul.mubr.bf16.gmra.mrb[0].mxu0 %v499
      %v535 = vpop.f32.mrb[0].mxu0
      %v536 = vadd.f32 %v459, %v535
      %v537 = vpop.f32.mrb[0].mxu0
      %v538 = vpop.f32.mrb[0].mxu0
      %v539 = vadd.f32 %v459, %v538
      %v540 = vpop.f32.mrb[0].mxu0
      %541 = vdwg.mxu0
      %v542 = vmax.f32 %v536, 0.0
      %v543 = vmax.f32 %v539, 0.0
      %v544 = vld [vmem:[%s4] sm:$0x1]
      %v545 = vld [vmem:[%s5] sm:$0x1]
      %v546 = vsel %vm433, %v542, 0.0
      %547 = vadd.xlane.f32.xlu0 %v546
      %v548 = vpop.xlane.xlu0 %547
      %v549 = vsel %vm433, %v543, 0.0
      %550 = vadd.xlane.f32.xlu0 %v549
      %v551 = vpop.xlane.xlu0 %550
      %v552 = vrcp.pop 32.0
      %v553 = vmul.f32 %v548, %v552
      %v554 = vmul.f32 %v551, %v552
      %v555 = vsub.f32 %v542, %v553
      %v556 = vsub.f32 %v543, %v554
      %v557 = vmul.f32 %v555, %v555
      %v558 = vmul.f32 %v556, %v556
      %v559 = vsel %vm433, %v557, 0.0
      %560 = vadd.xlane.f32.xlu0 %v559
      %v561 = vpop.xlane.xlu0 %560
      %v562 = vsel %vm433, %v558, 0.0
      %563 = vadd.xlane.f32.xlu0 %v562
      %v564 = vpop.xlane.xlu0 %563
      %v565 = vmul.f32 %v561, %v552
      %v566 = vmul.f32 %v564, %v552
      %v567 = vadd.f32 %v565, 1e-05
      %v568 = vadd.f32 %v566, 1e-05
      %v569 = vrsqrt.pop %v567
      %v570 = vrsqrt.pop %v568
      %v571 = vmul.f32 %v555, %v569
      %v572 = vmul.f32 %v556, %v570
      %v574 = vlaneseq
      %v575 = vshrl.u32 %v574, 7
      %v576 = vsub.s32 0, %v575
      %v577 = vrot.slane %v544, %v576
      %v579 = vmul.f32 %v571, %v577
      %v580 = vmul.f32 %v572, %v577
      %v582 = vlaneseq
      %v583 = vshrl.u32 %v582, 7
      %v584 = vsub.s32 0, %v583
      %v585 = vrot.slane %v545, %v584
      %v587 = vadd.f32 %v579, %v585
      %v588 = vadd.f32 %v580, %v585
      %v591 = vrot.slane %v587, 7
      %v592 = vrot.slane %v588, 7
      %v593 = vsel %vm398, %v591, %v592
      %v597 = vsel %vm398, 0.0, %v591
      %v598 = vsel %vm398, %v592, 0.0
      %v601 = vrot.slane %v597, 1
      %v602 = vrot.slane %v593, 1
      %v603 = vsel %vm409, %v601, %v602
      %v604 = vrot.slane %v598, 1
      %v605 = vsel %vm409, %v602, %v604
      %606 = vrot.lane.b32.xlu0 %v603, 32
      %v607 = vpop.permute.xlu0 %606
      %608 = vrot.lane.b32.xlu0 %v605, 32
      %v609 = vpop.permute.xlu0 %608
      %v612 = vrot.slane %v597, 2
      %v613 = vrot.slane %v593, 2
      %v614 = vsel %vm421, %v612, %v613
      %v615 = vrot.slane %v598, 2
      %v616 = vsel %vm421, %v613, %v615
      %617 = vrot.lane.b32.xlu0 %v614, 64
      %v618 = vpop.permute.xlu0 %617
      %619 = vrot.lane.b32.xlu0 %v616, 64
      %v620 = vpop.permute.xlu0 %619
      %v623 = vsel %vm433, %v597, %v607
      %v624 = vsel %vm433, %v593, %v609
      %v625 = vsel %vm436, %v623, %v618
      %v626 = vsel %vm436, %v624, %v620
      %v627 = vpack.c.bf16 %v626, %v625
      %v628 = vld [vmem:[%s6] sm:$0xf]
      %v629 = vld [vmem:[%s6 + $0x4] sm:$0xf]
      %v630 = vld [vmem:[%s6 + $0x8] sm:$0xf]
      %v631 = vld [vmem:[%s6 + $0xc] sm:$0xf]
      %v632 = vld [vmem:[%s6 + $0x10] sm:$0xf]
      %v633 = vld [vmem:[%s6 + $0x14] sm:$0xf]
      %v634 = vld [vmem:[%s6 + $0x18] sm:$0xf]
      %v635 = vld [vmem:[%s6 + $0x1c] sm:$0xf]
      %v636 = vld [vmem:[%s6 + $0x20] sm:$0xf]
      %v637 = vld [vmem:[%s6 + $0x24] sm:$0xf]
      %v638 = vld [vmem:[%s6 + $0x28] sm:$0xf]
      %v639 = vld [vmem:[%s6 + $0x2c] sm:$0xf]
      %v640 = vld [vmem:[%s7] sm:$0x1]
      %v642 = vlaneseq
      %v643 = vshrl.u32 %v642, 7
      %v644 = vsub.s32 0, %v643
      %v645 = vrot.slane %v640, %v644
      %v659 = vunpack.c.l.b16 %v628
      %v660 = vunpack.c.l.b16 %v629
      %v661 = vunpack.c.l.b16 %v630
      %v662 = vunpack.c.l.b16 %v631
      %v663 = vunpack.c.l.b16 %v632
      %v664 = vunpack.c.l.b16 %v633
      %v665 = vunpack.c.l.b16 %v634
      %v666 = vunpack.c.l.b16 %v635
      %v667 = vunpack.c.l.b16 %v636
      %v668 = vunpack.c.l.b16 %v637
      %v669 = vunpack.c.l.b16 %v638
      %v670 = vunpack.c.l.b16 %v639
      %v671 = vpack.c.b16 %v660, %v659
      %v672 = vpack.c.b16 %v662, %v661
      %v673 = vpack.c.b16 %v664, %v663
      %v674 = vpack.c.b16 %v666, %v665
      %v675 = vpack.c.b16 %v668, %v667
      %v676 = vpack.c.b16 %v670, %v669
      %v684 = vsel %vm497, %v627, 0
      %686 = vmatprep.subr.bf16.mxu0 0
      %687 = vmatpush1.bf16.msra.mxu0 %v671
      %688 = vmatprep.subr.bf16.mxu0 0
      %689 = vmatpush1.bf16.msra.mxu0 %v672
      %690 = vmatprep.subr.bf16.mxu0 0
      %691 = vmatpush1.bf16.msra.mxu0 %v673
      %692 = vmatprep.subr.bf16.mxu0 0
      %693 = vmatpush1.bf16.msra.mxu0 %v674
      %694 = vmatprep.subr.bf16.mxu0 0
      %695 = vmatpush1.bf16.msra.mxu0 %v675
      %696 = vmatprep.subr.bf16.mxu0 0
      %697 = vmatpush1.bf16.msra.mxu0 %v676
      %698 = vmatprep.subr.bf16.mxu0 0
      %699 = vmatpush1.bf16.msra.mxu0 0
      %700 = vmatprep.subr.bf16.mxu0 0
      %701 = vmatpush1.bf16.msra.mxu0 0
      %702 = vmatprep.subr.bf16.mxu0 0
      %703 = vmatpush1.bf16.msra.mxu0 0
      %704 = vmatprep.subr.bf16.mxu0 0
      %705 = vmatpush1.bf16.msra.mxu0 0
      %706 = vmatprep.subr.bf16.mxu0 0
      %707 = vmatpush1.bf16.msra.mxu0 0
      %708 = vmatprep.subr.bf16.mxu0 0
      %709 = vmatpush1.bf16.msra.mxu0 0
      %710 = vmatprep.subr.bf16.mxu0 0
      %711 = vmatpush1.bf16.msra.mxu0 0
      %712 = vmatprep.subr.bf16.mxu0 0
      %713 = vmatpush1.bf16.msra.mxu0 0
      %714 = vmatprep.subr.bf16.mxu0 0
      %715 = vmatpush1.bf16.msra.mxu0 0
      %716 = vmatprep.subr.bf16.mxu0 0
      %717 = vmatpush1.bf16.msra.mxu0 0
      %718 = vmatprep.mubr.bf16.mxu0 0
      %719 = vmatmul.mubr.bf16.gmra.mrb[0].mxu0 %v684
      %v720 = vpop.f32.mrb[0].mxu0
      %v721 = vadd.f32 %v645, %v720
      %v722 = vpop.f32.mrb[0].mxu0
      %v723 = vpop.f32.mrb[0].mxu0
      %v724 = vadd.f32 %v645, %v723
      %v725 = vpop.f32.mrb[0].mxu0
      %726 = vdwg.mxu0
      %v727 = vmax.f32 %v721, 0.0
      %v728 = vmax.f32 %v724, 0.0
      %v729 = vld [vmem:[%s8] sm:$0x1]
      %v730 = vld [vmem:[%s9] sm:$0x1]
      %v731 = vsel %vm433, %v727, 0.0
      %732 = vadd.xlane.f32.xlu0 %v731
      %v733 = vpop.xlane.xlu0 %732
      %v734 = vsel %vm433, %v728, 0.0
      %735 = vadd.xlane.f32.xlu0 %v734
      %v736 = vpop.xlane.xlu0 %735
      %v737 = vmul.f32 %v733, %v552
      %v738 = vmul.f32 %v736, %v552
      %v739 = vsub.f32 %v727, %v737
      %v740 = vsub.f32 %v728, %v738
      %v741 = vmul.f32 %v739, %v739
      %v742 = vmul.f32 %v740, %v740
      %v743 = vsel %vm433, %v741, 0.0
      %744 = vadd.xlane.f32.xlu0 %v743
      %v745 = vpop.xlane.xlu0 %744
      %v746 = vsel %vm433, %v742, 0.0
      %747 = vadd.xlane.f32.xlu0 %v746
      %v748 = vpop.xlane.xlu0 %747
      %v749 = vmul.f32 %v745, %v552
      %v750 = vmul.f32 %v748, %v552
      %v751 = vadd.f32 %v749, 1e-05
      %v752 = vadd.f32 %v750, 1e-05
      %v753 = vrsqrt.pop %v751
      %v754 = vrsqrt.pop %v752
      %v755 = vmul.f32 %v739, %v753
      %v756 = vmul.f32 %v740, %v754
      %v758 = vlaneseq
      %v759 = vshrl.u32 %v758, 7
      %v760 = vsub.s32 0, %v759
      %v761 = vrot.slane %v729, %v760
      %v763 = vmul.f32 %v755, %v761
      %v764 = vmul.f32 %v756, %v761
      %v766 = vlaneseq
      %v767 = vshrl.u32 %v766, 7
      %v768 = vsub.s32 0, %v767
      %v769 = vrot.slane %v730, %v768
      %v771 = vadd.f32 %v763, %v769
      %v772 = vadd.f32 %v764, %v769
      %v773 = vld [vmem:[%s10] sm:$0x1]
      %v774 = vpack.c.bf16 %v773, %v773
      %v775 = vpack.c.bf16 %v772, %v771
      %v776 = vld [vmem:[%s11] sm:$0x1]
      %778 = vset.pattern.permute.xlu0 0
      %779 = vperm.xlu0 %778, %v776
      %v780 = vpop.permute.xlu0 %779
      %v782 = vlaneseq
      %v783 = vshrl.u32 %v782, 7
      %v784 = vsub.s32 0, %v783
      %v785 = vrot.slane %v780, %v784
      %v787 = vsel %vm433, %v774, 0
      %v790 = vsel %vm433, %v775, 0
      %792 = vmatprep.subr.bf16.mxu0 0
      %793 = vmatpush1.bf16.xpose.msra.mxu0 %v790
      %794 = vmatprep.subr.bf16.mxu0 0
      %795 = vmatpush1.bf16.xpose.msra.mxu0 0
      %796 = vmatprep.subr.bf16.mxu0 0
      %797 = vmatpush1.bf16.xpose.msra.mxu0 0
      %798 = vmatprep.subr.bf16.mxu0 0
      %799 = vmatpush1.bf16.xpose.msra.mxu0 0
      %800 = vmatprep.subr.bf16.mxu0 0
      %801 = vmatpush1.bf16.xpose.msra.mxu0 0
      %802 = vmatprep.subr.bf16.mxu0 0
      %803 = vmatpush1.bf16.xpose.msra.mxu0 0
      %804 = vmatprep.subr.bf16.mxu0 0
      %805 = vmatpush1.bf16.xpose.msra.mxu0 0
      %806 = vmatprep.subr.bf16.mxu0 0
      %807 = vmatpush1.bf16.xpose.msra.mxu0 0
      %808 = vmatprep.subr.bf16.mxu0 0
      %809 = vmatpush1.bf16.xpose.msra.mxu0 0
      %810 = vmatprep.subr.bf16.mxu0 0
      %811 = vmatpush1.bf16.xpose.msra.mxu0 0
      %812 = vmatprep.subr.bf16.mxu0 0
      %813 = vmatpush1.bf16.xpose.msra.mxu0 0
      %814 = vmatprep.subr.bf16.mxu0 0
      %815 = vmatpush1.bf16.xpose.msra.mxu0 0
      %816 = vmatprep.subr.bf16.mxu0 0
      %817 = vmatpush1.bf16.xpose.msra.mxu0 0
      %818 = vmatprep.subr.bf16.mxu0 0
      %819 = vmatpush1.bf16.xpose.msra.mxu0 0
      %820 = vmatprep.subr.bf16.mxu0 0
      %821 = vmatpush1.bf16.xpose.msra.mxu0 0
      %822 = vmatprep.subr.bf16.mxu0 0
      %823 = vmatpush1.bf16.xpose.msra.mxu0 0
      %824 = vmatprep.mubr.bf16.mxu0 0
      %825 = vmatmul.mubr.bf16.gmra.mrb[0].mxu0 %v787
      %v826 = vpop.f32.mrb[0].mxu0
      %v827 = vadd.f32 %v785, %v826
      %v828 = vpop.f32.mrb[0].mxu0
      %v829 = vpop.f32.mrb[0].mxu0
      %v830 = vpop.f32.mrb[0].mxu0
      %831 = vdwg.mxu0
      %v832 = vstv %s393
      %vm833 = vcmp.ge.s32.totalorder %v441, %v832
      %v834 = vsel %vm833, 0.0, %v827
      %s835 = scalar_lea.vmem %s2, 48
      %v836 = vld [vmem:[%s835] sm:$0xf]
      %v837 = vld [vmem:[%s835 + $0x4] sm:$0xf]
      %v838 = vld [vmem:[%s835 + $0x8] sm:$0xf]
      %v839 = vld [vmem:[%s835 + $0xc] sm:$0xf]
      %v840 = vld [vmem:[%s835 + $0x10] sm:$0xf]
      %v841 = vld [vmem:[%s835 + $0x14] sm:$0xf]
      %v842 = vld [vmem:[%s835 + $0x18] sm:$0xf]
      %v843 = vld [vmem:[%s835 + $0x1c] sm:$0xf]
      %v844 = vld [vmem:[%s835 + $0x20] sm:$0xf]
      %v845 = vld [vmem:[%s835 + $0x24] sm:$0xf]
      %v846 = vld [vmem:[%s835 + $0x28] sm:$0xf]
      %v847 = vld [vmem:[%s835 + $0x2c] sm:$0xf]
      %s848 = scalar_lea.vmem %s3, 1
      %v849 = vld [vmem:[%s848] sm:$0x1]
      %v851 = vlaneseq
      %v852 = vshrl.u32 %v851, 7
      %v853 = vsub.s32 0, %v852
      %v854 = vrot.slane %v849, %v853
      %v868 = vunpack.c.l.b16 %v836
      %v869 = vunpack.c.l.b16 %v837
      %v870 = vunpack.c.l.b16 %v838
      %v871 = vunpack.c.l.b16 %v839
      %v872 = vunpack.c.l.b16 %v840
      %v873 = vunpack.c.l.b16 %v841
      %v874 = vunpack.c.l.b16 %v842
      %v875 = vunpack.c.l.b16 %v843
      %v876 = vunpack.c.l.b16 %v844
      %v877 = vunpack.c.l.b16 %v845
      %v878 = vunpack.c.l.b16 %v846
      %v879 = vunpack.c.l.b16 %v847
      %v880 = vpack.c.b16 %v869, %v868
      %v881 = vpack.c.b16 %v871, %v870
      %v882 = vpack.c.b16 %v873, %v872
      %v883 = vpack.c.b16 %v875, %v874
      %v884 = vpack.c.b16 %v877, %v876
      %v885 = vpack.c.b16 %v879, %v878
      %892 = vmatprep.subr.bf16.mxu0 0
      %893 = vmatpush1.bf16.msra.mxu0 %v880
      %894 = vmatprep.subr.bf16.mxu0 0
      %895 = vmatpush1.bf16.msra.mxu0 %v881
      %896 = vmatprep.subr.bf16.mxu0 0
      %897 = vmatpush1.bf16.msra.mxu0 %v882
      %898 = vmatprep.subr.bf16.mxu0 0
      %899 = vmatpush1.bf16.msra.mxu0 %v883
      %900 = vmatprep.subr.bf16.mxu0 0
      %901 = vmatpush1.bf16.msra.mxu0 %v884
      %902 = vmatprep.subr.bf16.mxu0 0
      %903 = vmatpush1.bf16.msra.mxu0 %v885
      %904 = vmatprep.subr.bf16.mxu0 0
      %905 = vmatpush1.bf16.msra.mxu0 0
      %906 = vmatprep.subr.bf16.mxu0 0
      %907 = vmatpush1.bf16.msra.mxu0 0
      %908 = vmatprep.subr.bf16.mxu0 0
      %909 = vmatpush1.bf16.msra.mxu0 0
      %910 = vmatprep.subr.bf16.mxu0 0
      %911 = vmatpush1.bf16.msra.mxu0 0
      %912 = vmatprep.subr.bf16.mxu0 0
      %913 = vmatpush1.bf16.msra.mxu0 0
      %914 = vmatprep.subr.bf16.mxu0 0
      %915 = vmatpush1.bf16.msra.mxu0 0
      %916 = vmatprep.subr.bf16.mxu0 0
      %917 = vmatpush1.bf16.msra.mxu0 0
      %918 = vmatprep.subr.bf16.mxu0 0
      %919 = vmatpush1.bf16.msra.mxu0 0
      %920 = vmatprep.subr.bf16.mxu0 0
      %921 = vmatpush1.bf16.msra.mxu0 0
      %922 = vmatprep.subr.bf16.mxu0 0
      %923 = vmatpush1.bf16.msra.mxu0 0
      %924 = vmatprep.mubr.bf16.mxu0 0
      %925 = vmatmul.mubr.bf16.gmra.mrb[0].mxu0 %v499
      %v926 = vpop.f32.mrb[0].mxu0
      %v927 = vadd.f32 %v854, %v926
      %v928 = vpop.f32.mrb[0].mxu0
      %v929 = vpop.f32.mrb[0].mxu0
      %v930 = vadd.f32 %v854, %v929
      %v931 = vpop.f32.mrb[0].mxu0
      %932 = vdwg.mxu0
      %v933 = vmax.f32 %v927, 0.0
      %v934 = vmax.f32 %v930, 0.0
      %s935 = scalar_lea.vmem %s4, 1
      %v936 = vld [vmem:[%s935] sm:$0x1]
      %s937 = scalar_lea.vmem %s5, 1
      %v938 = vld [vmem:[%s937] sm:$0x1]
      %v939 = vsel %vm433, %v933, 0.0
      %940 = vadd.xlane.f32.xlu0 %v939
      %v941 = vpop.xlane.xlu0 %940
      %v942 = vsel %vm433, %v934, 0.0
      %943 = vadd.xlane.f32.xlu0 %v942
      %v944 = vpop.xlane.xlu0 %943
      %v945 = vmul.f32 %v941, %v552
      %v946 = vmul.f32 %v944, %v552
      %v947 = vsub.f32 %v933, %v945
      %v948 = vsub.f32 %v934, %v946
      %v949 = vmul.f32 %v947, %v947
      %v950 = vmul.f32 %v948, %v948
      %v951 = vsel %vm433, %v949, 0.0
      %952 = vadd.xlane.f32.xlu0 %v951
      %v953 = vpop.xlane.xlu0 %952
      %v954 = vsel %vm433, %v950, 0.0
      %955 = vadd.xlane.f32.xlu0 %v954
      %v956 = vpop.xlane.xlu0 %955
      %v957 = vmul.f32 %v953, %v552
      %v958 = vmul.f32 %v956, %v552
      %v959 = vadd.f32 %v957, 1e-05
      %v960 = vadd.f32 %v958, 1e-05
      %v961 = vrsqrt.pop %v959
      %v962 = vrsqrt.pop %v960
      %v963 = vmul.f32 %v947, %v961
      %v964 = vmul.f32 %v948, %v962
      %v966 = vlaneseq
      %v967 = vshrl.u32 %v966, 7
      %v968 = vsub.s32 0, %v967
      %v969 = vrot.slane %v936, %v968
      %v971 = vmul.f32 %v963, %v969
      %v972 = vmul.f32 %v964, %v969
      %v974 = vlaneseq
      %v975 = vshrl.u32 %v974, 7
      %v976 = vsub.s32 0, %v975
      %v977 = vrot.slane %v938, %v976
      %v979 = vadd.f32 %v971, %v977
      %v980 = vadd.f32 %v972, %v977
      %v983 = vrot.slane %v979, 7
      %v984 = vrot.slane %v980, 7
      %v985 = vsel %vm398, %v983, %v984
      %v989 = vsel %vm398, 0.0, %v983
      %v990 = vsel %vm398, %v984, 0.0
      %v993 = vrot.slane %v989, 1
      %v994 = vrot.slane %v985, 1
      %v995 = vsel %vm409, %v993, %v994
      %v996 = vrot.slane %v990, 1
      %v997 = vsel %vm409, %v994, %v996
      %998 = vrot.lane.b32.xlu0 %v995, 32
      %v999 = vpop.permute.xlu0 %998
      %1000 = vrot.lane.b32.xlu0 %v997, 32
      %v1001 = vpop.permute.xlu0 %1000
      %v1004 = vrot.slane %v989, 2
      %v1005 = vrot.slane %v985, 2
      %v1006 = vsel %vm421, %v1004, %v1005
      %v1007 = vrot.slane %v990, 2
      %v1008 = vsel %vm421, %v1005, %v1007
      %1009 = vrot.lane.b32.xlu0 %v1006, 64
      %v1010 = vpop.permute.xlu0 %1009
      %1011 = vrot.lane.b32.xlu0 %v1008, 64
      %v1012 = vpop.permute.xlu0 %1011
      %v1015 = vsel %vm433, %v989, %v999
      %v1016 = vsel %vm433, %v985, %v1001
      %v1017 = vsel %vm436, %v1015, %v1010
      %v1018 = vsel %vm436, %v1016, %v1012
      %v1019 = vpack.c.bf16 %v1018, %v1017
      %s1020 = scalar_lea.vmem %s6, 48
      %v1021 = vld [vmem:[%s1020] sm:$0xf]
      %v1022 = vld [vmem:[%s1020 + $0x4] sm:$0xf]
      %v1023 = vld [vmem:[%s1020 + $0x8] sm:$0xf]
      %v1024 = vld [vmem:[%s1020 + $0xc] sm:$0xf]
      %v1025 = vld [vmem:[%s1020 + $0x10] sm:$0xf]
      %v1026 = vld [vmem:[%s1020 + $0x14] sm:$0xf]
      %v1027 = vld [vmem:[%s1020 + $0x18] sm:$0xf]
      %v1028 = vld [vmem:[%s1020 + $0x1c] sm:$0xf]
      %v1029 = vld [vmem:[%s1020 + $0x20] sm:$0xf]
      %v1030 = vld [vmem:[%s1020 + $0x24] sm:$0xf]
      %v1031 = vld [vmem:[%s1020 + $0x28] sm:$0xf]
      %v1032 = vld [vmem:[%s1020 + $0x2c] sm:$0xf]
      %s1033 = scalar_lea.vmem %s7, 1
      %v1034 = vld [vmem:[%s1033] sm:$0x1]
      %v1036 = vlaneseq
      %v1037 = vshrl.u32 %v1036, 7
      %v1038 = vsub.s32 0, %v1037
      %v1039 = vrot.slane %v1034, %v1038
      %v1053 = vunpack.c.l.b16 %v1021
      %v1054 = vunpack.c.l.b16 %v1022
      %v1055 = vunpack.c.l.b16 %v1023
      %v1056 = vunpack.c.l.b16 %v1024
      %v1057 = vunpack.c.l.b16 %v1025
      %v1058 = vunpack.c.l.b16 %v1026
      %v1059 = vunpack.c.l.b16 %v1027
      %v1060 = vunpack.c.l.b16 %v1028
      %v1061 = vunpack.c.l.b16 %v1029
      %v1062 = vunpack.c.l.b16 %v1030
      %v1063 = vunpack.c.l.b16 %v1031
      %v1064 = vunpack.c.l.b16 %v1032
      %v1065 = vpack.c.b16 %v1054, %v1053
      %v1066 = vpack.c.b16 %v1056, %v1055
      %v1067 = vpack.c.b16 %v1058, %v1057
      %v1068 = vpack.c.b16 %v1060, %v1059
      %v1069 = vpack.c.b16 %v1062, %v1061
      %v1070 = vpack.c.b16 %v1064, %v1063
      %v1078 = vsel %vm497, %v1019, 0
      %1080 = vmatprep.subr.bf16.mxu0 0
      %1081 = vmatpush1.bf16.msra.mxu0 %v1065
      %1082 = vmatprep.subr.bf16.mxu0 0
      %1083 = vmatpush1.bf16.msra.mxu0 %v1066
      %1084 = vmatprep.subr.bf16.mxu0 0
      %1085 = vmatpush1.bf16.msra.mxu0 %v1067
      %1086 = vmatprep.subr.bf16.mxu0 0
      %1087 = vmatpush1.bf16.msra.mxu0 %v1068
      %1088 = vmatprep.subr.bf16.mxu0 0
      %1089 = vmatpush1.bf16.msra.mxu0 %v1069
      %1090 = vmatprep.subr.bf16.mxu0 0
      %1091 = vmatpush1.bf16.msra.mxu0 %v1070
      %1092 = vmatprep.subr.bf16.mxu0 0
      %1093 = vmatpush1.bf16.msra.mxu0 0
      %1094 = vmatprep.subr.bf16.mxu0 0
      %1095 = vmatpush1.bf16.msra.mxu0 0
      %1096 = vmatprep.subr.bf16.mxu0 0
      %1097 = vmatpush1.bf16.msra.mxu0 0
      %1098 = vmatprep.subr.bf16.mxu0 0
      %1099 = vmatpush1.bf16.msra.mxu0 0
      %1100 = vmatprep.subr.bf16.mxu0 0
      %1101 = vmatpush1.bf16.msra.mxu0 0
      %1102 = vmatprep.subr.bf16.mxu0 0
      %1103 = vmatpush1.bf16.msra.mxu0 0
      %1104 = vmatprep.subr.bf16.mxu0 0
      %1105 = vmatpush1.bf16.msra.mxu0 0
      %1106 = vmatprep.subr.bf16.mxu0 0
      %1107 = vmatpush1.bf16.msra.mxu0 0
      %1108 = vmatprep.subr.bf16.mxu0 0
      %1109 = vmatpush1.bf16.msra.mxu0 0
      %1110 = vmatprep.subr.bf16.mxu0 0
      %1111 = vmatpush1.bf16.msra.mxu0 0
      %1112 = vmatprep.mubr.bf16.mxu0 0
      %1113 = vmatmul.mubr.bf16.gmra.mrb[0].mxu0 %v1078
      %v1114 = vpop.f32.mrb[0].mxu0
      %v1115 = vadd.f32 %v1039, %v1114
      %v1116 = vpop.f32.mrb[0].mxu0
      %v1117 = vpop.f32.mrb[0].mxu0
      %v1118 = vadd.f32 %v1039, %v1117
      %v1119 = vpop.f32.mrb[0].mxu0
      %1120 = vdwg.mxu0
      %v1121 = vmax.f32 %v1115, 0.0
      %v1122 = vmax.f32 %v1118, 0.0
      %s1123 = scalar_lea.vmem %s8, 1
      %v1124 = vld [vmem:[%s1123] sm:$0x1]
      %s1125 = scalar_lea.vmem %s9, 1
      %v1126 = vld [vmem:[%s1125] sm:$0x1]
      %v1127 = vsel %vm433, %v1121, 0.0
      %1128 = vadd.xlane.f32.xlu0 %v1127
      %v1129 = vpop.xlane.xlu0 %1128
      %v1130 = vsel %vm433, %v1122, 0.0
      %1131 = vadd.xlane.f32.xlu0 %v1130
      %v1132 = vpop.xlane.xlu0 %1131
      %v1133 = vmul.f32 %v1129, %v552
      %v1134 = vmul.f32 %v1132, %v552
      %v1135 = vsub.f32 %v1121, %v1133
      %v1136 = vsub.f32 %v1122, %v1134
      %v1137 = vmul.f32 %v1135, %v1135
      %v1138 = vmul.f32 %v1136, %v1136
      %v1139 = vsel %vm433, %v1137, 0.0
      %1140 = vadd.xlane.f32.xlu0 %v1139
      %v1141 = vpop.xlane.xlu0 %1140
      %v1142 = vsel %vm433, %v1138, 0.0
      %1143 = vadd.xlane.f32.xlu0 %v1142
      %v1144 = vpop.xlane.xlu0 %1143
      %v1145 = vmul.f32 %v1141, %v552
      %v1146 = vmul.f32 %v1144, %v552
      %v1147 = vadd.f32 %v1145, 1e-05
      %v1148 = vadd.f32 %v1146, 1e-05
      %v1149 = vrsqrt.pop %v1147
      %v1150 = vrsqrt.pop %v1148
      %v1151 = vmul.f32 %v1135, %v1149
      %v1152 = vmul.f32 %v1136, %v1150
      %v1154 = vlaneseq
      %v1155 = vshrl.u32 %v1154, 7
      %v1156 = vsub.s32 0, %v1155
      %v1157 = vrot.slane %v1124, %v1156
      %v1159 = vmul.f32 %v1151, %v1157
      %v1160 = vmul.f32 %v1152, %v1157
      %v1162 = vlaneseq
      %v1163 = vshrl.u32 %v1162, 7
      %v1164 = vsub.s32 0, %v1163
      %v1165 = vrot.slane %v1126, %v1164
      %v1167 = vadd.f32 %v1159, %v1165
      %v1168 = vadd.f32 %v1160, %v1165
      %s1169 = scalar_lea.vmem %s10, 1
      %v1170 = vld [vmem:[%s1169] sm:$0x1]
      %v1171 = vpack.c.bf16 %v1170, %v1170
      %v1172 = vpack.c.bf16 %v1168, %v1167
      %s1173 = scalar_lea.vmem %s11, 1
      %v1174 = vld [vmem:[%s1173] sm:$0x1]
      %1176 = vset.pattern.permute.xlu0 0
      %1177 = vperm.xlu0 %1176, %v1174
      %v1178 = vpop.permute.xlu0 %1177
      %v1180 = vlaneseq
      %v1181 = vshrl.u32 %v1180, 7
      %v1182 = vsub.s32 0, %v1181
      %v1183 = vrot.slane %v1178, %v1182
      %v1185 = vsel %vm433, %v1171, 0
      %v1188 = vsel %vm433, %v1172, 0
      %1190 = vmatprep.subr.bf16.mxu0 0
      %1191 = vmatpush1.bf16.xpose.msra.mxu0 %v1188
      %1192 = vmatprep.subr.bf16.mxu0 0
      %1193 = vmatpush1.bf16.xpose.msra.mxu0 0
      %1194 = vmatprep.subr.bf16.mxu0 0
      %1195 = vmatpush1.bf16.xpose.msra.mxu0 0
      %1196 = vmatprep.subr.bf16.mxu0 0
      %1197 = vmatpush1.bf16.xpose.msra.mxu0 0
      %1198 = vmatprep.subr.bf16.mxu0 0
      %1199 = vmatpush1.bf16.xpose.msra.mxu0 0
      %1200 = vmatprep.subr.bf16.mxu0 0
      %1201 = vmatpush1.bf16.xpose.msra.mxu0 0
      %1202 = vmatprep.subr.bf16.mxu0 0
      %1203 = vmatpush1.bf16.xpose.msra.mxu0 0
      %1204 = vmatprep.subr.bf16.mxu0 0
      %1205 = vmatpush1.bf16.xpose.msra.mxu0 0
      %1206 = vmatprep.subr.bf16.mxu0 0
      %1207 = vmatpush1.bf16.xpose.msra.mxu0 0
      %1208 = vmatprep.subr.bf16.mxu0 0
      %1209 = vmatpush1.bf16.xpose.msra.mxu0 0
      %1210 = vmatprep.subr.bf16.mxu0 0
      %1211 = vmatpush1.bf16.xpose.msra.mxu0 0
      %1212 = vmatprep.subr.bf16.mxu0 0
      %1213 = vmatpush1.bf16.xpose.msra.mxu0 0
      %1214 = vmatprep.subr.bf16.mxu0 0
      %1215 = vmatpush1.bf16.xpose.msra.mxu0 0
      %1216 = vmatprep.subr.bf16.mxu0 0
      %1217 = vmatpush1.bf16.xpose.msra.mxu0 0
      %1218 = vmatprep.subr.bf16.mxu0 0
      %1219 = vmatpush1.bf16.xpose.msra.mxu0 0
      %1220 = vmatprep.subr.bf16.mxu0 0
      %1221 = vmatpush1.bf16.xpose.msra.mxu0 0
      %1222 = vmatprep.mubr.bf16.mxu0 0
      %1223 = vmatmul.mubr.bf16.gmra.mrb[0].mxu0 %v1185
      %v1224 = vpop.f32.mrb[0].mxu0
      %v1225 = vadd.f32 %v1183, %v1224
      %v1226 = vpop.f32.mrb[0].mxu0
      %v1227 = vpop.f32.mrb[0].mxu0
      %v1228 = vpop.f32.mrb[0].mxu0
      %1229 = vdwg.mxu0
      %v1230 = vsel %vm833, 0.0, %v1225
      %v1232 = vrot.slane %v1230, 7
      %v1234 = vsel %vm398, %v834, %v1232
      %vm1235 = vcmask 123904
      %1236 = vst.msk [vmem:[%s391] sm:$0x3] %vm1235, %v1234
      %p1237 = scmp.lt.s32.totalorder %s29, 1
      %s1238 = scalar_select %p1237, %s29, 1
      %s1239 = smul.addr %s1238, 2
      %s1240 = scalar_lea.vmem %s12, %s1239
      // Predicated region
      $region65: #{fastspeech2_forward.7} parent=63 // pred_check
        %p1241 = pneg %p283
      $region66: #{fastspeech2_forward.7} parent=63 // pred_check_branch
        %1243 = sbr.rel (%p1241) target = $region68
      $region67: #{fastspeech2_forward.7} parent=63 // pred_region
        _
      $region68: #{fastspeech2_forward.7} parent=63 // pred_fallthru
        _
    $region64: #{fastspeech2_forward.7} parent=5 // pred_fallthru
      _
    %p1244 = scmp.le.s32.totalorder 2, %s24
    // Predicated region
    $region69: #{fastspeech2_forward.7} parent=5 // pred_check
      %p1245 = pneg %p1244
    $region70: #{fastspeech2_forward.7} parent=5 // pred_check_branch
      %1247 = sbr.rel (%p1245) target = $region72
    $region71: #{fastspeech2_forward.7} parent=5 // pred_region
      %s1248 = ssub.s32 %s24, 2
      // Predicated region
      $region73: #{fastspeech2_forward.7} parent=71 // pred_check
        %p1249 = pneg %p289
      $region74: #{fastspeech2_forward.7} parent=71 // pred_check_branch
        %1251 = sbr.rel (%p1249) target = $region76
      $region75: #{fastspeech2_forward.7} parent=71 // pred_region
        %p1252 = scmp.lt.s32.totalorder %s30, 1
        %s1253 = scalar_select %p1252, %s30, 1
        %s1254 = smul.addr %s1253, 2
        %s1255 = scalar_lea.vmem %s12, %s1254
      $region76: #{fastspeech2_forward.7} parent=71 // pred_fallthru
        _
    $region72: #{fastspeech2_forward.7} parent=5 // pred_fallthru
      _
  $region6: #{fastspeech2_forward.7} parent=0 // loop_footer
    %s28 = sadd.s32 1, %s24
  $region7: #{fastspeech2_forward.7} parent=0 // loop_footer_branch
    %23 = sbr.rel target = $region3
  $region8: #{fastspeech2_forward.7} parent=0 // loop_exit
    _

// kernel: fastspeech2_forward.6
$region0: #{fastspeech2_forward.6}
  #allocation0 [shape = 'u32[]', space=smem, size = 0x4, offset = 0x4, fixed_abs, tag = 'smem constant byte address 0x4 - core index']
  #allocation1 [shape = 'u32[144,128]{1,0:T(1,128)}', space=vmem, size = 0x12000, scoped, tag = 'internal scratch']
  #allocation2 [shape = 's32[1]{0}', space=sflag, size = 0x4, scoped, tag = 'scoped memory for fastspeech2_forward.6']
  #allocation3 [shape = 'u8[512]{0}', space=smem, size = 0x200, scoped, tag = 'prefetched SMEM operand 0']
  #allocation4 [shape = 'f32[1,1,1]{2,1,0:T(1,128)S(1)}', space=vmem, size = 0x200, scoped, tag = 'scoped memory for fastspeech2_forward.6']
  %s0 = inlined_call_operand.vmem [shape: s32[2], index: 0, kind: input, shape index: {}]
  %s1 = inlined_call_operand.vmem [shape: f32[2,8,32], index: 1, kind: input, shape index: {}]
  %s2 = inlined_call_operand.vmem [shape: bf16[1,96,32], index: 2, kind: input, shape index: {}]
  %s3 = inlined_call_operand.vmem [shape: f32[1,1,32], index: 3, kind: input, shape index: {}]
  %s4 = inlined_call_operand.vmem [shape: f32[1,1,32], index: 4, kind: input, shape index: {}]
  %s5 = inlined_call_operand.vmem [shape: f32[1,1,32], index: 5, kind: input, shape index: {}]
  %s6 = inlined_call_operand.vmem [shape: bf16[1,96,32], index: 6, kind: input, shape index: {}]
  %s7 = inlined_call_operand.vmem [shape: f32[1,1,32], index: 7, kind: input, shape index: {}]
  %s8 = inlined_call_operand.vmem [shape: f32[1,1,32], index: 8, kind: input, shape index: {}]
  %s9 = inlined_call_operand.vmem [shape: f32[1,1,32], index: 9, kind: input, shape index: {}]
  %s10 = inlined_call_operand.vmem [shape: f32[1,1,32], index: 10, kind: input, shape index: {}]
  %s11 = inlined_call_operand.<no memory space> [shape: f32[1,1,1], index: 11, kind: input, shape index: {}]
  %s12 = inlined_call_operand.hbm [shape: f32[2,1,8], index: 12, kind: output, shape index: {}]
  %s13 = sld [smem:[#allocation0]]
  $region77: #{fastspeech2_forward.6} parent=0
    _
  %s15 = ssub.s32 1, %s13
  %s16 = scalar_select 0, %s15, %s13
  %s17 = sshll.u32 %s0, 4
  %s18 = int_to_ptr.vmem [resolvable:$true] %s17
  %20 = dma.vmem_to_smem %s18, 16, [#allocation3], [#allocation2]
  %v21 = vstv %s11
  %22 = vst [vmem:[#allocation4] sm:$0x1] %v21
  %23 = dma.done [#allocation2], 16
  %24 = sfence
  $region1: #{fastspeech2_forward.6} parent=0
    #allocation5 [shape = 'u8[1024]{0}', space=vmem, size = 0x400, scoped, tag = 'output window, operand 0']
    #allocation6 [shape = 's32[2]{0}', space=sflag, size = 0x8, scoped, tag = 'scoped memory for fastspeech2_forward.6']
    %25 = vsyncpa [#allocation6], 0
    %s26 = scalar_lea.sflag [#allocation6], 1
    %27 = vsyncpa %s26, 0
    loop: start=0, step=1, limit=4
    $region2: #{fastspeech2_forward.6} parent=1 // loop_pre_header
      _
    $region3: #{fastspeech2_forward.6} parent=1 // loop_header
      %s29 = sphi 0, %s33
      %p30 = scmp.ge.s32.totalorder %s29, 4
      %s39 = sphi 0, %s41
      %s42 = sphi 0, %s39
      %s43 = sphi 0, %s42
      %s59 = sphi 0, %s43
      %s63 = sphi 0, %s63
      %s65 = sphi 0, %s63
      %s66 = sphi 0, %s65
      %s80 = sphi 0, %s66
      %s84 = sphi 0, %s84
      %s86 = sphi 0, %s84
      %s87 = sphi 0, %s86
      %s101 = sphi 0, %s87
      %s105 = sphi 0, %s105
      %s107 = sphi 0, %s105
      %s108 = sphi 0, %s107
      %s122 = sphi 0, %s108
      %s126 = sphi 0, %s126
      %s128 = sphi 0, %s126
      %s129 = sphi 0, %s128
      %s143 = sphi 0, %s129
      %s147 = sphi 0, %s147
      %s149 = sphi 0, %s147
      %s150 = sphi 0, %s149
      %s164 = sphi 0, %s150
      %s168 = sphi 0, %s168
      %s170 = sphi 0, %s168
      %s171 = sphi 0, %s170
      %s185 = sphi 0, %s171
      %s189 = sphi 0, %s189
      %s191 = sphi 0, %s189
      %s192 = sphi 0, %s191
      %s206 = sphi 0, %s192
      %s210 = sphi 0, %s210
      %s212 = sphi 0, %s210
      %s213 = sphi 0, %s212
      %s227 = sphi 0, %s213
      %s231 = sphi 0, %s231
      %s233 = sphi 0, %s231
      %s234 = sphi 0, %s233
      %s248 = sphi 0, %s234
      %s252 = sphi 0, %s252
      %s254 = sphi 0, %s252
      %s255 = sphi 0, %s254
      %s269 = sphi 0, %s255
      %s275 = sphi 0, %s277
      %s278 = sphi 0, %s275
      %s279 = sphi 0, %s278
      %s295 = sphi 0, %s279
    $region4: #{fastspeech2_forward.6} parent=1 // loop_header_branch
      %32 = sbr.rel (%p30) target = $region8
    $region5: #{fastspeech2_forward.6} parent=1 // loop_body
      %s34 = ssub.s32 %s29, 1
      %s35 = ssub.s32 %s29, 2
      %s36 = sadd.s32 %s29, 1
      %s37 = ssub.s32 %s29, %s36
      %p38 = scmp.eq.s32.totalorder %s37, 0
      %s40 = sadd.s32 %s39, 1
      %s41 = scalar_select %p38, %s39, %s40
      %p44 = pneg %p38
      %p45 = scmp.eq.s32.totalorder %s29, 1
      %p46 = por %p44, %p45
      %p47 = scmp.ne.s32.totalorder %s39, %s42
      %p48 = scmp.eq.s32.totalorder %s29, 0
      %p49 = por %p47, %p48
      %p50 = scmp.ne.s32.totalorder %s39, %s42
      %p51 = scmp.eq.s32.totalorder %s34, 1
      %p52 = por %p50, %p51
      %p53 = scmp.ne.s32.totalorder %s42, %s43
      %p54 = scmp.eq.s32.totalorder %s34, 0
      %p55 = por %p53, %p54
      %p56 = scmp.ne.s32.totalorder %s42, %s43
      %p57 = scmp.eq.s32.totalorder %s35, 1
      %p58 = por %p56, %p57
      %p60 = scmp.ne.s32.totalorder %s43, %s59
      %p61 = scmp.eq.s32.totalorder %s35, 0
      %p62 = por %p60, %p61
      %s64 = sadd.s32 %s63, 1
      %p67 = scmp.eq.s32.totalorder %s29, 1
      %p68 = scmp.ne.s32.totalorder %s63, %s65
      %p69 = scmp.eq.s32.totalorder %s29, 0
      %p70 = por %p68, %p69
      %p71 = scmp.ne.s32.totalorder %s63, %s65
      %p72 = scmp.eq.s32.totalorder %s34, 1
      %p73 = por %p71, %p72
      %p74 = scmp.ne.s32.totalorder %s65, %s66
      %p75 = scmp.eq.s32.totalorder %s34, 0
      %p76 = por %p74, %p75
      %p77 = scmp.ne.s32.totalorder %s65, %s66
      %p78 = scmp.eq.s32.totalorder %s35, 1
      %p79 = por %p77, %p78
      %p81 = scmp.ne.s32.totalorder %s66, %s80
      %p82 = scmp.eq.s32.totalorder %s35, 0
      %p83 = por %p81, %p82
      %s85 = sadd.s32 %s84, 1
      %p88 = scmp.eq.s32.totalorder %s29, 1
      %p89 = scmp.ne.s32.totalorder %s84, %s86
      %p90 = scmp.eq.s32.totalorder %s29, 0
      %p91 = por %p89, %p90
      %p92 = scmp.ne.s32.totalorder %s84, %s86
      %p93 = scmp.eq.s32.totalorder %s34, 1
      %p94 = por %p92, %p93
      %p95 = scmp.ne.s32.totalorder %s86, %s87
      %p96 = scmp.eq.s32.totalorder %s34, 0
      %p97 = por %p95, %p96
      %p98 = scmp.ne.s32.totalorder %s86, %s87
      %p99 = scmp.eq.s32.totalorder %s35, 1
      %p100 = por %p98, %p99
      %p102 = scmp.ne.s32.totalorder %s87, %s101
      %p103 = scmp.eq.s32.totalorder %s35, 0
      %p104 = por %p102, %p103
      %s106 = sadd.s32 %s105, 1
      %p109 = scmp.eq.s32.totalorder %s29, 1
      %p110 = scmp.ne.s32.totalorder %s105, %s107
      %p111 = scmp.eq.s32.totalorder %s29, 0
      %p112 = por %p110, %p111
      %p113 = scmp.ne.s32.totalorder %s105, %s107
      %p114 = scmp.eq.s32.totalorder %s34, 1
      %p115 = por %p113, %p114
      %p116 = scmp.ne.s32.totalorder %s107, %s108
      %p117 = scmp.eq.s32.totalorder %s34, 0
      %p118 = por %p116, %p117
      %p119 = scmp.ne.s32.totalorder %s107, %s108
      %p120 = scmp.eq.s32.totalorder %s35, 1
      %p121 = por %p119, %p120
      %p123 = scmp.ne.s32.totalorder %s108, %s122
      %p124 = scmp.eq.s32.totalorder %s35, 0
      %p125 = por %p123, %p124
      %s127 = sadd.s32 %s126, 1
      %p130 = scmp.eq.s32.totalorder %s29, 1
      %p131 = scmp.ne.s32.totalorder %s126, %s128
      %p132 = scmp.eq.s32.totalorder %s29, 0
      %p133 = por %p131, %p132
      %p134 = scmp.ne.s32.totalorder %s126, %s128
      %p135 = scmp.eq.s32.totalorder %s34, 1
      %p136 = por %p134, %p135
      %p137 = scmp.ne.s32.totalorder %s128, %s129
      %p138 = scmp.eq.s32.totalorder %s34, 0
      %p139 = por %p137, %p138
      %p140 = scmp.ne.s32.totalorder %s128, %s129
      %p141 = scmp.eq.s32.totalorder %s35, 1
      %p142 = por %p140, %p141
      %p144 = scmp.ne.s32.totalorder %s129, %s143
      %p145 = scmp.eq.s32.totalorder %s35, 0
      %p146 = por %p144, %p145
      %s148 = sadd.s32 %s147, 1
      %p151 = scmp.eq.s32.totalorder %s29, 1
      %p152 = scmp.ne.s32.totalorder %s147, %s149
      %p153 = scmp.eq.s32.totalorder %s29, 0
      %p154 = por %p152, %p153
      %p155 = scmp.ne.s32.totalorder %s147, %s149
      %p156 = scmp.eq.s32.totalorder %s34, 1
      %p157 = por %p155, %p156
      %p158 = scmp.ne.s32.totalorder %s149, %s150
      %p159 = scmp.eq.s32.totalorder %s34, 0
      %p160 = por %p158, %p159
      %p161 = scmp.ne.s32.totalorder %s149, %s150
      %p162 = scmp.eq.s32.totalorder %s35, 1
      %p163 = por %p161, %p162
      %p165 = scmp.ne.s32.totalorder %s150, %s164
      %p166 = scmp.eq.s32.totalorder %s35, 0
      %p167 = por %p165, %p166
      %s169 = sadd.s32 %s168, 1
      %p172 = scmp.eq.s32.totalorder %s29, 1
      %p173 = scmp.ne.s32.totalorder %s168, %s170
      %p174 = scmp.eq.s32.totalorder %s29, 0
      %p175 = por %p173, %p174
      %p176 = scmp.ne.s32.totalorder %s168, %s170
      %p177 = scmp.eq.s32.totalorder %s34, 1
      %p178 = por %p176, %p177
      %p179 = scmp.ne.s32.totalorder %s170, %s171
      %p180 = scmp.eq.s32.totalorder %s34, 0
      %p181 = por %p179, %p180
      %p182 = scmp.ne.s32.totalorder %s170, %s171
      %p183 = scmp.eq.s32.totalorder %s35, 1
      %p184 = por %p182, %p183
      %p186 = scmp.ne.s32.totalorder %s171, %s185
      %p187 = scmp.eq.s32.totalorder %s35, 0
      %p188 = por %p186, %p187
      %s190 = sadd.s32 %s189, 1
      %p193 = scmp.eq.s32.totalorder %s29, 1
      %p194 = scmp.ne.s32.totalorder %s189, %s191
      %p195 = scmp.eq.s32.totalorder %s29, 0
      %p196 = por %p194, %p195
      %p197 = scmp.ne.s32.totalorder %s189, %s191
      %p198 = scmp.eq.s32.totalorder %s34, 1
      %p199 = por %p197, %p198
      %p200 = scmp.ne.s32.totalorder %s191, %s192
      %p201 = scmp.eq.s32.totalorder %s34, 0
      %p202 = por %p200, %p201
      %p203 = scmp.ne.s32.totalorder %s191, %s192
      %p204 = scmp.eq.s32.totalorder %s35, 1
      %p205 = por %p203, %p204
      %p207 = scmp.ne.s32.totalorder %s192, %s206
      %p208 = scmp.eq.s32.totalorder %s35, 0
      %p209 = por %p207, %p208
      %s211 = sadd.s32 %s210, 1
      %p214 = scmp.eq.s32.totalorder %s29, 1
      %p215 = scmp.ne.s32.totalorder %s210, %s212
      %p216 = scmp.eq.s32.totalorder %s29, 0
      %p217 = por %p215, %p216
      %p218 = scmp.ne.s32.totalorder %s210, %s212
      %p219 = scmp.eq.s32.totalorder %s34, 1
      %p220 = por %p218, %p219
      %p221 = scmp.ne.s32.totalorder %s212, %s213
      %p222 = scmp.eq.s32.totalorder %s34, 0
      %p223 = por %p221, %p222
      %p224 = scmp.ne.s32.totalorder %s212, %s213
      %p225 = scmp.eq.s32.totalorder %s35, 1
      %p226 = por %p224, %p225
      %p228 = scmp.ne.s32.totalorder %s213, %s227
      %p229 = scmp.eq.s32.totalorder %s35, 0
      %p230 = por %p228, %p229
      %s232 = sadd.s32 %s231, 1
      %p235 = scmp.eq.s32.totalorder %s29, 1
      %p236 = scmp.ne.s32.totalorder %s231, %s233
      %p237 = scmp.eq.s32.totalorder %s29, 0
      %p238 = por %p236, %p237
      %p239 = scmp.ne.s32.totalorder %s231, %s233
      %p240 = scmp.eq.s32.totalorder %s34, 1
      %p241 = por %p239, %p240
      %p242 = scmp.ne.s32.totalorder %s233, %s234
      %p243 = scmp.eq.s32.totalorder %s34, 0
      %p244 = por %p242, %p243
      %p245 = scmp.ne.s32.totalorder %s233, %s234
      %p246 = scmp.eq.s32.totalorder %s35, 1
      %p247 = por %p245, %p246
      %p249 = scmp.ne.s32.totalorder %s234, %s248
      %p250 = scmp.eq.s32.totalorder %s35, 0
      %p251 = por %p249, %p250
      %s253 = sadd.s32 %s252, 1
      %p256 = scmp.eq.s32.totalorder %s29, 1
      %p257 = scmp.ne.s32.totalorder %s252, %s254
      %p258 = scmp.eq.s32.totalorder %s29, 0
      %p259 = por %p257, %p258
      %p260 = scmp.ne.s32.totalorder %s252, %s254
      %p261 = scmp.eq.s32.totalorder %s34, 1
      %p262 = por %p260, %p261
      %p263 = scmp.ne.s32.totalorder %s254, %s255
      %p264 = scmp.eq.s32.totalorder %s34, 0
      %p265 = por %p263, %p264
      %p266 = scmp.ne.s32.totalorder %s254, %s255
      %p267 = scmp.eq.s32.totalorder %s35, 1
      %p268 = por %p266, %p267
      %p270 = scmp.ne.s32.totalorder %s255, %s269
      %p271 = scmp.eq.s32.totalorder %s35, 0
      %p272 = por %p270, %p271
      %s273 = ssub.s32 %s29, %s36
      %p274 = scmp.eq.s32.totalorder %s273, 0
      %s276 = sadd.s32 %s275, 1
      %s277 = scalar_select %p274, %s275, %s276
      %p280 = pneg %p274
      %p281 = scmp.eq.s32.totalorder %s29, 1
      %p282 = por %p280, %p281
      %p283 = scmp.ne.s32.totalorder %s275, %s278
      %p284 = scmp.eq.s32.totalorder %s29, 0
      %p285 = por %p283, %p284
      %p286 = scmp.ne.s32.totalorder %s275, %s278
      %p287 = scmp.eq.s32.totalorder %s34, 1
      %p288 = por %p286, %p287
      %p289 = scmp.ne.s32.totalorder %s278, %s279
      %p290 = scmp.eq.s32.totalorder %s34, 0
      %p291 = por %p289, %p290
      %p292 = scmp.ne.s32.totalorder %s278, %s279
      %p293 = scmp.eq.s32.totalorder %s35, 1
      %p294 = por %p292, %p293
      %p296 = scmp.ne.s32.totalorder %s279, %s295
      %p297 = scmp.eq.s32.totalorder %s35, 0
      %p298 = por %p296, %p297
      %p299 = scmp.le.s32.totalorder 1, %s29
      %p300 = scmp.lt.s32.totalorder %s29, 3
      %p301 = pnand %p299, %p300
      %p302 = pneg %p301
      // Predicated region
      $region9: #{fastspeech2_forward.6} parent=5 // pred_check
        _
      $region10: #{fastspeech2_forward.6} parent=5 // pred_check_branch
        %304 = sbr.rel (%p301) target = $region12
      $region11: #{fastspeech2_forward.6} parent=5 // pred_region
        %s305 = ssub.s32 %s29, 1
        // Predicated region
        $region13: #{fastspeech2_forward.6} parent=11 // pred_check
          %p306 = pneg %p76
        $region14: #{fastspeech2_forward.6} parent=11 // pred_check_branch
          %308 = sbr.rel (%p306) target = $region16
        $region15: #{fastspeech2_forward.6} parent=11 // pred_region
          _
        $region16: #{fastspeech2_forward.6} parent=11 // pred_fallthru
          _
        // Predicated region
        $region17: #{fastspeech2_forward.6} parent=11 // pred_check
          %p309 = pneg %p97
        $region18: #{fastspeech2_forward.6} parent=11 // pred_check_branch
          %311 = sbr.rel (%p309) target = $region20
        $region19: #{fastspeech2_forward.6} parent=11 // pred_region
          _
        $region20: #{fastspeech2_forward.6} parent=11 // pred_fallthru
          _
        // Predicated region
        $region21: #{fastspeech2_forward.6} parent=11 // pred_check
          %p312 = pneg %p118
        $region22: #{fastspeech2_forward.6} parent=11 // pred_check_branch
          %314 = sbr.rel (%p312) target = $region24
        $region23: #{fastspeech2_forward.6} parent=11 // pred_region
          _
        $region24: #{fastspeech2_forward.6} parent=11 // pred_fallthru
          _
        // Predicated region
        $region25: #{fastspeech2_forward.6} parent=11 // pred_check
          %p315 = pneg %p139
        $region26: #{fastspeech2_forward.6} parent=11 // pred_check_branch
          %317 = sbr.rel (%p315) target = $region28
        $region27: #{fastspeech2_forward.6} parent=11 // pred_region
          _
        $region28: #{fastspeech2_forward.6} parent=11 // pred_fallthru
          _
        // Predicated region
        $region29: #{fastspeech2_forward.6} parent=11 // pred_check
          %p318 = pneg %p160
        $region30: #{fastspeech2_forward.6} parent=11 // pred_check_branch
          %320 = sbr.rel (%p318) target = $region32
        $region31: #{fastspeech2_forward.6} parent=11 // pred_region
          _
        $region32: #{fastspeech2_forward.6} parent=11 // pred_fallthru
          _
        // Predicated region
        $region33: #{fastspeech2_forward.6} parent=11 // pred_check
          %p321 = pneg %p181
        $region34: #{fastspeech2_forward.6} parent=11 // pred_check_branch
          %323 = sbr.rel (%p321) target = $region36
        $region35: #{fastspeech2_forward.6} parent=11 // pred_region
          _
        $region36: #{fastspeech2_forward.6} parent=11 // pred_fallthru
          _
        // Predicated region
        $region37: #{fastspeech2_forward.6} parent=11 // pred_check
          %p324 = pneg %p202
        $region38: #{fastspeech2_forward.6} parent=11 // pred_check_branch
          %326 = sbr.rel (%p324) target = $region40
        $region39: #{fastspeech2_forward.6} parent=11 // pred_region
          _
        $region40: #{fastspeech2_forward.6} parent=11 // pred_fallthru
          _
        // Predicated region
        $region41: #{fastspeech2_forward.6} parent=11 // pred_check
          %p327 = pneg %p223
        $region42: #{fastspeech2_forward.6} parent=11 // pred_check_branch
          %329 = sbr.rel (%p327) target = $region44
        $region43: #{fastspeech2_forward.6} parent=11 // pred_region
          _
        $region44: #{fastspeech2_forward.6} parent=11 // pred_fallthru
          _
        // Predicated region
        $region45: #{fastspeech2_forward.6} parent=11 // pred_check
          %p330 = pneg %p244
        $region46: #{fastspeech2_forward.6} parent=11 // pred_check_branch
          %332 = sbr.rel (%p330) target = $region48
        $region47: #{fastspeech2_forward.6} parent=11 // pred_region
          _
        $region48: #{fastspeech2_forward.6} parent=11 // pred_fallthru
          _
        // Predicated region
        $region49: #{fastspeech2_forward.6} parent=11 // pred_check
          %p333 = pneg %p265
        $region50: #{fastspeech2_forward.6} parent=11 // pred_check_branch
          %335 = sbr.rel (%p333) target = $region52
        $region51: #{fastspeech2_forward.6} parent=11 // pred_region
          _
        $region52: #{fastspeech2_forward.6} parent=11 // pred_fallthru
          _
      $region12: #{fastspeech2_forward.6} parent=5 // pred_fallthru
        _
      %p336 = scmp.lt.s32.totalorder %s29, 2
      // Predicated region
      $region53: #{fastspeech2_forward.6} parent=5 // pred_check
        %p337 = pneg %p336
      $region54: #{fastspeech2_forward.6} parent=5 // pred_check_branch
        %339 = sbr.rel (%p337) target = $region56
      $region55: #{fastspeech2_forward.6} parent=5 // pred_region
        // Predicated region
        $region57: #{fastspeech2_forward.6} parent=55 // pred_check
          %p340 = pneg %p49
        $region58: #{fastspeech2_forward.6} parent=55 // pred_check_branch
          %342 = sbr.rel (%p340) target = $region60
        $region59: #{fastspeech2_forward.6} parent=55 // pred_region
          %p343 = scmp.lt.s32.totalorder %s29, 1
          %s344 = scalar_select %p343, %s29, 1
          %s345 = smul.addr %s344, 8
          %s346 = scalar_lea.vmem %s1, %s345
        $region60: #{fastspeech2_forward.6} parent=55 // pred_fallthru
          _
      $region56: #{fastspeech2_forward.6} parent=5 // pred_fallthru
        _
      %p347 = scmp.le.s32.totalorder 1, %s29
      %p348 = scmp.lt.s32.totalorder %s29, 3
      %p349 = pnand %p347, %p348
      %p350 = pneg %p349
      // Predicated region
      $region61: #{fastspeech2_forward.6} parent=5 // pred_check
        _
      $region62: #{fastspeech2_forward.6} parent=5 // pred_check_branch
        %352 = sbr.rel (%p349) target = $region64
      $region63: #{fastspeech2_forward.6} parent=5 // pred_region
        %s353 = ssub.s32 %s29, 1
        %p354 = scmp.lt.s32.totalorder %s34, 1
        %s355 = scalar_select %p354, %s34, 1
        %s356 = smul.addr %s355, 8
        %s357 = scalar_lea.vmem %s1, %s356
        %p358 = pneg %p55
        %p359 = pneg %p52
        %p360 = pneg %p76
        %p361 = pneg %p73
        %p362 = pneg %p97
        %p363 = pneg %p94
        %p364 = pneg %p118
        %p365 = pneg %p115
        %p366 = pneg %p139
        %p367 = pneg %p136
        %p368 = pneg %p160
        %p369 = pneg %p157
        %p370 = pneg %p181
        %p371 = pneg %p178
        %p372 = pneg %p202
        %p373 = pneg %p199
        %p374 = pneg %p223
        %p375 = pneg %p220
        %p376 = pneg %p244
        %p377 = pneg %p241
        %p378 = pneg %p265
        %p379 = pneg %p262
        %p380 = pneg %p291
        %p381 = pneg %p288
        %s382 = sand.u32 %s278, 1
        %s383 = scalar_lea.sflag [#allocation6], %s382
        %s384 = sand.u32 %s278, 1
        %s385 = scalar_lea.vmem [#allocation5], %s384
        %p386 = scmp.lt.s32.totalorder %s34, 1
        %s387 = scalar_select %p386, %s34, 1
        %s388 = smul.addr %s387, 8
        %s389 = scalar_lea.vmem %s1, %s388
        %s391 = sld [smem:[#allocation3 + %s34]]
        %v392 = vld [vmem:[%s389] sm:$0xff]
        %v394 = vrot.slane %v392, 7
        %vm396 = vcmask 1040384
        %v397 = vsel %vm396, 0.0, %v394
        %v398 = vsel %vm396, %v394, 0.0
        %vm401 = vcmask 1046528
        %v402 = vrot.slane %v397, 1
        %v403 = vrot.slane %v398, 1
        %v404 = vsel %vm401, %v402, %v403
        %405 = vrot.lane.b32.xlu0 %v404, 32
        %v406 = vpop.permute.xlu0 %405
        %vm408 = vcmask 1045504
        %v409 = vrot.slane %v397, 2
        %v410 = vrot.slane %v398, 2
        %v411 = vsel %vm408, %v409, %v410
        %412 = vrot.lane.b32.xlu0 %v411, 64
        %v413 = vpop.permute.xlu0 %412
        %vm415 = vcmask 261120
        %v416 = vsel %vm415, %v397, %v406
        %vm417 = vcmask 523264
        %v418 = vsel %vm417, %v416, %v413
        %v419 = vpack.c.bf16 %v418, %v418
        %v420 = vlaneseq
        %v421 = vand.u32 %v420, 127
        %v422 = vld [vmem:[%s2] sm:$0xf]
        %v423 = vld [vmem:[%s2 + $0x4] sm:$0xf]
        %v424 = vld [vmem:[%s2 + $0x8] sm:$0xf]
        %v425 = vld [vmem:[%s2 + $0xc] sm:$0xf]
        %v426 = vld [vmem:[%s2 + $0x10] sm:$0xf]
        %v427 = vld [vmem:[%s2 + $0x14] sm:$0xf]
        %v428 = vld [vmem:[%s2 + $0x18] sm:$0xf]
        %v429 = vld [vmem:[%s2 + $0x1c] sm:$0xf]
        %v430 = vld [vmem:[%s2 + $0x20] sm:$0xf]
        %v431 = vld [vmem:[%s2 + $0x24] sm:$0xf]
        %v432 = vld [vmem:[%s2 + $0x28] sm:$0xf]
        %v433 = vld [vmem:[%s2 + $0x2c] sm:$0xf]
        %v434 = vld [vmem:[%s3] sm:$0x1]
        %v436 = vlaneseq
        %v437 = vshrl.u32 %v436, 7
        %v438 = vsub.s32 0, %v437
        %v439 = vrot.slane %v434, %v438
        %v453 = vunpack.c.l.b16 %v422
        %v454 = vunpack.c.l.b16 %v423
        %v455 = vunpack.c.l.b16 %v424
        %v456 = vunpack.c.l.b16 %v425
        %v457 = vunpack.c.l.b16 %v426
        %v458 = vunpack.c.l.b16 %v427
        %v459 = vunpack.c.l.b16 %v428
        %v460 = vunpack.c.l.b16 %v429
        %v461 = vunpack.c.l.b16 %v430
        %v462 = vunpack.c.l.b16 %v431
        %v463 = vunpack.c.l.b16 %v432
        %v464 = vunpack.c.l.b16 %v433
        %v465 = vpack.c.b16 %v454, %v453
        %v466 = vpack.c.b16 %v456, %v455
        %v467 = vpack.c.b16 %v458, %v457
        %v468 = vpack.c.b16 %v460, %v459
        %v469 = vpack.c.b16 %v462, %v461
        %v470 = vpack.c.b16 %v464, %v463
        %vm477 = vcmask 785408
        %v479 = vsel %vm477, %v419, 0
        %481 = vmatprep.subr.bf16.mxu0 0
        %482 = vmatpush1.bf16.msra.mxu0 %v465
        %483 = vmatprep.subr.bf16.mxu0 0
        %484 = vmatpush1.bf16.msra.mxu0 %v466
        %485 = vmatprep.subr.bf16.mxu0 0
        %486 = vmatpush1.bf16.msra.mxu0 %v467
        %487 = vmatprep.subr.bf16.mxu0 0
        %488 = vmatpush1.bf16.msra.mxu0 %v468
        %489 = vmatprep.subr.bf16.mxu0 0
        %490 = vmatpush1.bf16.msra.mxu0 %v469
        %491 = vmatprep.subr.bf16.mxu0 0
        %492 = vmatpush1.bf16.msra.mxu0 %v470
        %493 = vmatprep.subr.bf16.mxu0 0
        %494 = vmatpush1.bf16.msra.mxu0 0
        %495 = vmatprep.subr.bf16.mxu0 0
        %496 = vmatpush1.bf16.msra.mxu0 0
        %497 = vmatprep.subr.bf16.mxu0 0
        %498 = vmatpush1.bf16.msra.mxu0 0
        %499 = vmatprep.subr.bf16.mxu0 0
        %500 = vmatpush1.bf16.msra.mxu0 0
        %501 = vmatprep.subr.bf16.mxu0 0
        %502 = vmatpush1.bf16.msra.mxu0 0
        %503 = vmatprep.subr.bf16.mxu0 0
        %504 = vmatpush1.bf16.msra.mxu0 0
        %505 = vmatprep.subr.bf16.mxu0 0
        %506 = vmatpush1.bf16.msra.mxu0 0
        %507 = vmatprep.subr.bf16.mxu0 0
        %508 = vmatpush1.bf16.msra.mxu0 0
        %509 = vmatprep.subr.bf16.mxu0 0
        %510 = vmatpush1.bf16.msra.mxu0 0
        %511 = vmatprep.subr.bf16.mxu0 0
        %512 = vmatpush1.bf16.msra.mxu0 0
        %513 = vmatprep.mubr.bf16.mxu0 0
        %514 = vmatmul.mubr.bf16.gmra.mrb[0].mxu0 %v479
        %v515 = vpop.f32.mrb[0].mxu0
        %v516 = vadd.f32 %v439, %v515
        %v517 = vpop.f32.mrb[0].mxu0
        %v518 = vpop.f32.mrb[0].mxu0
        %v519 = vpop.f32.mrb[0].mxu0
        %520 = vdwg.mxu0
        %v521 = vmax.f32 %v516, 0.0
        %v522 = vld [vmem:[%s4] sm:$0x1]
        %v523 = vld [vmem:[%s5] sm:$0x1]
        %v524 = vsel %vm415, %v521, 0.0
        %525 = vadd.xlane.f32.xlu0 %v524
        %v526 = vpop.xlane.xlu0 %525
        %v527 = vrcp.pop 32.0
        %v528 = vmul.f32 %v526, %v527
        %v529 = vsub.f32 %v521, %v528
        %v530 = vmul.f32 %v529, %v529
        %v531 = vsel %vm415, %v530, 0.0
        %532 = vadd.xlane.f32.xlu0 %v531
        %v533 = vpop.xlane.xlu0 %532
        %v534 = vmul.f32 %v533, %v527
        %v535 = vadd.f32 %v534, 1e-05
        %v536 = vrsqrt.pop %v535
        %v537 = vmul.f32 %v529, %v536
        %v539 = vlaneseq
        %v540 = vshrl.u32 %v539, 7
        %v541 = vsub.s32 0, %v540
        %v542 = vrot.slane %v522, %v541
        %v544 = vmul.f32 %v537, %v542
        %v546 = vlaneseq
        %v547 = vshrl.u32 %v546, 7
        %v548 = vsub.s32 0, %v547
        %v549 = vrot.slane %v523, %v548
        %v551 = vadd.f32 %v544, %v549
        %v553 = vrot.slane %v551, 7
        %v555 = vsel %vm396, 0.0, %v553
        %v556 = vsel %vm396, %v553, 0.0
        %v559 = vrot.slane %v555, 1
        %v560 = vrot.slane %v556, 1
        %v561 = vsel %vm401, %v559, %v560
        %562 = vrot.lane.b32.xlu0 %v561, 32
        %v563 = vpop.permute.xlu0 %562
        %v565 = vrot.slane %v555, 2
        %v566 = vrot.slane %v556, 2
        %v567 = vsel %vm408, %v565, %v566
        %568 = vrot.lane.b32.xlu0 %v567, 64
        %v569 = vpop.permute.xlu0 %568
        %v571 = vsel %vm415, %v555, %v563
        %v572 = vsel %vm417, %v571, %v569
        %v573 = vpack.c.bf16 %v572, %v572
        %v574 = vld [vmem:[%s6] sm:$0xf]
        %v575 = vld [vmem:[%s6 + $0x4] sm:$0xf]
        %v576 = vld [vmem:[%s6 + $0x8] sm:$0xf]
        %v577 = vld [vmem:[%s6 + $0xc] sm:$0xf]
        %v578 = vld [vmem:[%s6 + $0x10] sm:$0xf]
        %v579 = vld [vmem:[%s6 + $0x14] sm:$0xf]
        %v580 = vld [vmem:[%s6 + $0x18] sm:$0xf]
        %v581 = vld [vmem:[%s6 + $0x1c] sm:$0xf]
        %v582 = vld [vmem:[%s6 + $0x20] sm:$0xf]
        %v583 = vld [vmem:[%s6 + $0x24] sm:$0xf]
        %v584 = vld [vmem:[%s6 + $0x28] sm:$0xf]
        %v585 = vld [vmem:[%s6 + $0x2c] sm:$0xf]
        %v586 = vld [vmem:[%s7] sm:$0x1]
        %v588 = vlaneseq
        %v589 = vshrl.u32 %v588, 7
        %v590 = vsub.s32 0, %v589
        %v591 = vrot.slane %v586, %v590
        %v605 = vunpack.c.l.b16 %v574
        %v606 = vunpack.c.l.b16 %v575
        %v607 = vunpack.c.l.b16 %v576
        %v608 = vunpack.c.l.b16 %v577
        %v609 = vunpack.c.l.b16 %v578
        %v610 = vunpack.c.l.b16 %v579
        %v611 = vunpack.c.l.b16 %v580
        %v612 = vunpack.c.l.b16 %v581
        %v613 = vunpack.c.l.b16 %v582
        %v614 = vunpack.c.l.b16 %v583
        %v615 = vunpack.c.l.b16 %v584
        %v616 = vunpack.c.l.b16 %v585
        %v617 = vpack.c.b16 %v606, %v605
        %v618 = vpack.c.b16 %v608, %v607
        %v619 = vpack.c.b16 %v610, %v609
        %v620 = vpack.c.b16 %v612, %v611
        %v621 = vpack.c.b16 %v614, %v613
        %v622 = vpack.c.b16 %v616, %v615
        %v630 = vsel %vm477, %v573, 0
        %632 = vmatprep.subr.bf16.mxu0 0
        %633 = vmatpush1.bf16.msra.mxu0 %v617
        %634 = vmatprep.subr.bf16.mxu0 0
        %635 = vmatpush1.bf16.msra.mxu0 %v618
        %636 = vmatprep.subr.bf16.mxu0 0
        %637 = vmatpush1.bf16.msra.mxu0 %v619
        %638 = vmatprep.subr.bf16.mxu0 0
        %639 = vmatpush1.bf16.msra.mxu0 %v620
        %640 = vmatprep.subr.bf16.mxu0 0
        %641 = vmatpush1.bf16.msra.mxu0 %v621
        %642 = vmatprep.subr.bf16.mxu0 0
        %643 = vmatpush1.bf16.msra.mxu0 %v622
        %644 = vmatprep.subr.bf16.mxu0 0
        %645 = vmatpush1.bf16.msra.mxu0 0
        %646 = vmatprep.subr.bf16.mxu0 0
        %647 = vmatpush1.bf16.msra.mxu0 0
        %648 = vmatprep.subr.bf16.mxu0 0
        %649 = vmatpush1.bf16.msra.mxu0 0
        %650 = vmatprep.subr.bf16.mxu0 0
        %651 = vmatpush1.bf16.msra.mxu0 0
        %652 = vmatprep.subr.bf16.mxu0 0
        %653 = vmatpush1.bf16.msra.mxu0 0
        %654 = vmatprep.subr.bf16.mxu0 0
        %655 = vmatpush1.bf16.msra.mxu0 0
        %656 = vmatprep.subr.bf16.mxu0 0
        %657 = vmatpush1.bf16.msra.mxu0 0
        %658 = vmatprep.subr.bf16.mxu0 0
        %659 = vmatpush1.bf16.msra.mxu0 0
        %660 = vmatprep.subr.bf16.mxu0 0
        %661 = vmatpush1.bf16.msra.mxu0 0
        %662 = vmatprep.subr.bf16.mxu0 0
        %663 = vmatpush1.bf16.msra.mxu0 0
        %664 = vmatprep.mubr.bf16.mxu0 0
        %665 = vmatmul.mubr.bf16.gmra.mrb[0].mxu0 %v630
        %v666 = vpop.f32.mrb[0].mxu0
        %v667 = vadd.f32 %v591, %v666
        %v668 = vpop.f32.mrb[0].mxu0
        %v669 = vpop.f32.mrb[0].mxu0
        %v670 = vpop.f32.mrb[0].mxu0
        %671 = vdwg.mxu0
        %v672 = vmax.f32 %v667, 0.0
        %v673 = vld [vmem:[%s8] sm:$0x1]
        %v674 = vld [vmem:[%s9] sm:$0x1]
        %v675 = vsel %vm415, %v672, 0.0
        %676 = vadd.xlane.f32.xlu0 %v675
        %v677 = vpop.xlane.xlu0 %676
        %v678 = vmul.f32 %v677, %v527
        %v679 = vsub.f32 %v672, %v678
        %v680 = vmul.f32 %v679, %v679
        %v681 = vsel %vm415, %v680, 0.0
        %682 = vadd.xlane.f32.xlu0 %v681
        %v683 = vpop.xlane.xlu0 %682
        %v684 = vmul.f32 %v683, %v527
        %v685 = vadd.f32 %v684, 1e-05
        %v686 = vrsqrt.pop %v685
        %v687 = vmul.f32 %v679, %v686
        %v689 = vlaneseq
        %v690 = vshrl.u32 %v689, 7
        %v691 = vsub.s32 0, %v690
        %v692 = vrot.slane %v673, %v691
        %v694 = vmul.f32 %v687, %v692
        %v696 = vlaneseq
        %v697 = vshrl.u32 %v696, 7
        %v698 = vsub.s32 0, %v697
        %v699 = vrot.slane %v674, %v698
        %v701 = vadd.f32 %v694, %v699
        %v702 = vld [vmem:[%s10] sm:$0x1]
        %v703 = vpack.c.bf16 %v702, %v702
        %v704 = vpack.c.bf16 %v701, %v701
        %v705 = vld [vmem:[#allocation4] sm:$0x1]
        %707 = vset.pattern.permute.xlu0 0
        %708 = vperm.xlu0 %707, %v705
        %v709 = vpop.permute.xlu0 %708
        %v711 = vlaneseq
        %v712 = vshrl.u32 %v711, 7
        %v713 = vsub.s32 0, %v712
        %v714 = vrot.slane %v709, %v713
        %v716 = vsel %vm415, %v703, 0
        %v719 = vsel %vm415, %v704, 0
        %721 = vmatprep.subr.bf16.mxu0 0
        %722 = vmatpush1.bf16.xpose.msra.mxu0 %v719
        %723 = vmatprep.subr.bf16.mxu0 0
        %724 = vmatpush1.bf16.xpose.msra.mxu0 0
        %725 = vmatprep.subr.bf16.mxu0 0
        %726 = vmatpush1.bf16.xpose.msra.mxu0 0
        %727 = vmatprep.subr.bf16.mxu0 0
        %728 = vmatpush1.bf16.xpose.msra.mxu0 0
        %729 = vmatprep.subr.bf16.mxu0 0
        %730 = vmatpush1.bf16.xpose.msra.mxu0 0
        %731 = vmatprep.subr.bf16.mxu0 0
        %732 = vmatpush1.bf16.xpose.msra.mxu0 0
        %733 = vmatprep.subr.bf16.mxu0 0
        %734 = vmatpush1.bf16.xpose.msra.mxu0 0
        %735 = vmatprep.subr.bf16.mxu0 0
        %736 = vmatpush1.bf16.xpose.msra.mxu0 0
        %737 = vmatprep.subr.bf16.mxu0 0
        %738 = vmatpush1.bf16.xpose.msra.mxu0 0
        %739 = vmatprep.subr.bf16.mxu0 0
        %740 = vmatpush1.bf16.xpose.msra.mxu0 0
        %741 = vmatprep.subr.bf16.mxu0 0
        %742 = vmatpush1.bf16.xpose.msra.mxu0 0
        %743 = vmatprep.subr.bf16.mxu0 0
        %744 = vmatpush1.bf16.xpose.msra.mxu0 0
        %745 = vmatprep.subr.bf16.mxu0 0
        %746 = vmatpush1.bf16.xpose.msra.mxu0 0
        %747 = vmatprep.subr.bf16.mxu0 0
        %748 = vmatpush1.bf16.xpose.msra.mxu0 0
        %749 = vmatprep.subr.bf16.mxu0 0
        %750 = vmatpush1.bf16.xpose.msra.mxu0 0
        %751 = vmatprep.subr.bf16.mxu0 0
        %752 = vmatpush1.bf16.xpose.msra.mxu0 0
        %753 = vmatprep.mubr.bf16.mxu0 0
        %754 = vmatmul.mubr.bf16.gmra.mrb[0].mxu0 %v716
        %v755 = vpop.f32.mrb[0].mxu0
        %v756 = vadd.f32 %v714, %v755
        %v757 = vpop.f32.mrb[0].mxu0
        %v758 = vpop.f32.mrb[0].mxu0
        %v759 = vpop.f32.mrb[0].mxu0
        %760 = vdwg.mxu0
        %v761 = vstv %s391
        %vm762 = vcmp.ge.s32.totalorder %v421, %v761
        %v763 = vsel %vm762, 0.0, %v756
        %vm764 = vcmask 57344
        %765 = vst.msk [vmem:[%s385] sm:$0x1] %vm764, %v763
        %s766 = sand.u32 %s278, 1
        %s767 = scalar_lea.sflag [#allocation6], %s766
        %s768 = sand.u32 %s278, 1
        %s769 = scalar_lea.vmem [#allocation5], %s768
        // Predicated region
        $region65: #{fastspeech2_forward.6} parent=63 // pred_check
          %p770 = pneg %p288
        $region66: #{fastspeech2_forward.6} parent=63 // pred_check_branch
          %772 = sbr.rel (%p770) target = $region68
        $region67: #{fastspeech2_forward.6} parent=63 // pred_region
          %s774 = ssub.s32 16, 16
          %775 = vsyncadd %s767, %s774
          %s776 = smul.addr %s34, 16
          %s777 = scalar_lea.hbm %s12, %s776
          %s779 = sshll.u32 %s769, 4
          %s780 = int_to_ptr.vmem [resolvable:$true] %s779
          %782 = dma.vmem_to_hbm [thread:$0]  %s780, 16, %s777, %s767
        $region68: #{fastspeech2_forward.6} parent=63 // pred_fallthru
          _
      $region64: #{fastspeech2_forward.6} parent=5 // pred_fallthru
        _
      %p783 = scmp.le.s32.totalorder 2, %s29
      // Predicated region
      $region69: #{fastspeech2_forward.6} parent=5 // pred_check
        %p784 = pneg %p783
      $region70: #{fastspeech2_forward.6} parent=5 // pred_check_branch
        %786 = sbr.rel (%p784) target = $region72
      $region71: #{fastspeech2_forward.6} parent=5 // pred_region
        %s787 = ssub.s32 %s29, 2
        // Predicated region
        $region73: #{fastspeech2_forward.6} parent=71 // pred_check
          %p788 = pneg %p294
        $region74: #{fastspeech2_forward.6} parent=71 // pred_check_branch
          %790 = sbr.rel (%p788) target = $region76
        $region75: #{fastspeech2_forward.6} parent=71 // pred_region
          %s791 = sand.u32 %s279, 1
          %s792 = scalar_lea.sflag [#allocation6], %s791
          %s793 = sand.u32 %s279, 1
          %s794 = scalar_lea.vmem [#allocation5], %s793
          %795 = dma.done %s792, 16
        $region76: #{fastspeech2_forward.6} parent=71 // pred_fallthru
          _
      $region72: #{fastspeech2_forward.6} parent=5 // pred_fallthru
        _
    $region6: #{fastspeech2_forward.6} parent=1 // loop_footer
      %s33 = sadd.s32 1, %s29
    $region7: #{fastspeech2_forward.6} parent=1 // loop_footer_branch
      %28 = sbr.rel target = $region3
    $region8: #{fastspeech2_forward.6} parent=1 // loop_exit
      _
    %796 = vsyncpa [#allocation6], 1
    %s797 = scalar_lea.sflag [#allocation6], 1
    %798 = vsyncpa %s797, 1

</llo_original>
